<compile_context>
chip_gen: v6e
topology: v6e:2x2x1
jax: 0.10.0
libtpu: 0.0.40
codegen_flags: <defaults>
</compile_context>

<pallas_src>
import numpy as np
import jax
import jax.numpy as jnp
from jax.experimental import pallas as pl
from jax.experimental.pallas import tpu as pltpu

BN_EPS = 1e-5

_VMEM = pl.BlockSpec(memory_space=pltpu.MemorySpace.VMEM)
_SMEM = pl.BlockSpec(memory_space=pltpu.MemorySpace.SMEM)


# ----------------------------------------------------------------------------
# Fused kernel: whole network in one pallas_call
# ----------------------------------------------------------------------------
def make_fused_kernel(B, H, W, Cin, Chid, n_blocks):
    BH = B * H
    WCin = W * Cin
    WC = W * Chid

    def kernel(x_ref, wstem_ref, wblk_ref, gtr_ref, btr_ref, ptr_ref,
               wv_ref, pv_ref, wp_ref, pp_ref, gp_ref, bp_ref,
               tilev_ref, hmv_ref, tilep_ref, hmp_ref, sel_ref,
               w1_ref, b1_ref, w2_ref, b2_ref, wpf_ref, bpf_ref,
               talpha_ref, headsc_ref,                  # SMEM scalars
               val_ref, pol_ref,                        # outputs
               padx_ref, pada_ref):                     # VMEM scratch
        f32 = jnp.float32

        def bn_trunk(y, layer):
            # Batch-stats BN in (B*H, W*C) layout: reduce rows, then a tiny
            # projection matmul averages over the W lane-groups and broadcasts
            # the per-channel stats back onto all W*C lanes.
            s1 = jnp.sum(y, axis=0, keepdims=True)
            s2 = jnp.sum(y * y, axis=0, keepdims=True)
            mu = jnp.dot(s1, ptr_ref[...], preferred_element_type=f32)
            var = jnp.dot(s2, ptr_ref[...], preferred_element_type=f32) - mu * mu
            return ((y - mu) * jax.lax.rsqrt(var + BN_EPS)
                    * gtr_ref[layer:layer + 1, :] + btr_ref[layer:layer + 1, :])

        # Zero the padded-activation halos once; interiors are rewritten below.
        padx_ref[...] = jnp.zeros(padx_ref.shape, f32)
        pada_ref[...] = jnp.zeros(pada_ref.shape, f32)

        # ===================== stem: 5x5 conv + BN + PReLU =====================
        padx_ref[:, 2:H + 2, :] = x_ref[...]
        y = jnp.dot(padx_ref[:, 0:H, :].reshape(BH, WCin), wstem_ref[0],
                    preferred_element_type=f32)
        for kh in range(1, 5):
            y = y + jnp.dot(padx_ref[:, kh:kh + H, :].reshape(BH, WCin),
                            wstem_ref[kh], preferred_element_type=f32)
        y = bn_trunk(y, 0)
        a = talpha_ref[0]
        feat = jnp.where(y >= 0.0, y, a * y)             # PReLU

        # =========================== residual trunk ============================
        layer = 1
        for blk in range(n_blocks):
            block_in = feat
            h = feat
            for ci in range(2):
                widx = (2 * blk + ci) * 3
                pada_ref[:, 1:H + 1, :] = h.reshape(B, H, WC)
                y = jnp.dot(pada_ref[:, 0:H, :].reshape(BH, WC), wblk_ref[widx],
                            preferred_element_type=f32)
                for kh in range(1, 3):
                    y = y + jnp.dot(pada_ref[:, kh:kh + H, :].reshape(BH, WC),
                                    wblk_ref[widx + kh], preferred_element_type=f32)
                y = bn_trunk(y, layer)
                if ci == 0:                              # PReLU on first conv only
                    a = talpha_ref[layer]
                    y = jnp.where(y >= 0.0, y, a * y)
                layer += 1
                h = y
            feat = jnp.maximum(h + block_in, 0.0)        # skip connection + ReLU

        # ============================= value head ==============================
        yv = jnp.dot(feat, wv_ref[...], preferred_element_type=f32)     # (BH, W)
        s1 = jnp.sum(yv, axis=0, keepdims=True)
        s2 = jnp.sum(yv * yv, axis=0, keepdims=True)
        mu = jnp.dot(s1, pv_ref[...], preferred_element_type=f32)
        var = jnp.dot(s2, pv_ref[...], preferred_element_type=f32) - mu * mu
        yv = (yv - mu) * jax.lax.rsqrt(var + BN_EPS) * headsc_ref[0] + headsc_ref[1]
        yv = jnp.where(yv >= 0.0, yv, headsc_ref[2] * yv)                # PReLU
        # Flatten(B,1,H,W) + Linear(HW,128): lift row (b,h) into its h-slot
        # (tile matmul * mask), matmul with W1, then sum rows per batch.
        yv_exp = jnp.dot(yv, tilev_ref[...], preferred_element_type=f32) * hmv_ref[...]
        hv = jnp.dot(sel_ref[...],
                     jnp.dot(yv_exp, w1_ref[...], preferred_element_type=f32),
                     preferred_element_type=f32) + b1_ref[...]
        hv = jnp.maximum(hv, 0.0)                                        # ReLU
        val_ref[...] = jnp.tanh(
            jnp.dot(hv, w2_ref[...], preferred_element_type=f32) + b2_ref[...])

        # ============================= policy head =============================
        yp = jnp.dot(feat, wp_ref[...], preferred_element_type=f32)     # (BH, 2W)
        s1 = jnp.sum(yp, axis=0, keepdims=True)
        s2 = jnp.sum(yp * yp, axis=0, keepdims=True)
        mu = jnp.dot(s1, pp_ref[...], preferred_element_type=f32)
        var = jnp.dot(s2, pp_ref[...], preferred_element_type=f32) - mu * mu
        yp = (yp - mu) * jax.lax.rsqrt(var + BN_EPS) * gp_ref[...] + bp_ref[...]
        yp = jnp.where(yp >= 0.0, yp, headsc_ref[3] * yp)                # PReLU
        yp_exp = jnp.dot(yp, tilep_ref[...], preferred_element_type=f32) * hmp_ref[...]
        pol_ref[...] = (jnp.dot(
            sel_ref[...],
            jnp.dot(yp_exp, wpf_ref[...], preferred_element_type=f32),
            preferred_element_type=f32) + bpf_ref[...])

    return kernel


def alphazero_forward(x_nchw, p):
    B, Cin, H, W = x_nchw.shape
    Chid = p["wstem"].shape[2] // W
    n_blocks = p["wblk"].shape[0] // 6
    A = p["bpf"].shape[1]

    # One tiny layout op at the boundary: NCHW -> (B, H, W*Cin) lane-dense rows.
    x_rows = jnp.transpose(x_nchw, (0, 2, 3, 1)).reshape(B, H, W * Cin)

    kernel = make_fused_kernel(B, H, W, Cin, Chid, n_blocks)
    out_shapes = (jax.ShapeDtypeStruct((B, 1), jnp.float32),
                  jax.ShapeDtypeStruct((B, A), jnp.float32))
    scratch = [
        pltpu.VMEM((B, H + 4, W * Cin), jnp.float32),   # stem padded rows (halo 2)
        pltpu.VMEM((B, H + 2, W * Chid), jnp.float32),  # 3x3 padded rows (halo 1)
    ]
    return pl.pallas_call(
        kernel,
        out_shape=out_shapes,
        in_specs=[_VMEM] * 23 + [_SMEM] * 2,
        out_specs=(_VMEM, _VMEM),
        scratch_shapes=scratch,
        compiler_params=pltpu.CompilerParams(vmem_limit_bytes=32 * 1024 * 1024),
    )(x_rows, p["wstem"], p["wblk"], p["gtr"], p["btr"], p["ptr"],
      p["wv"], p["pv"], p["wp"], p["pp"], p["gp"], p["bp"],
      p["tilev"], p["hmv"], p["tilep"], p["hmp"], p["sel"],
      p["w1"], p["b1"], p["w2"], p["b2"], p["wpf"], p["bpf"],
      p["talpha"], p["headsc"])


# ----------------------------------------------------------------------------
# Parameter construction (deterministic, synthetic, pre-packed for the kernel)
# ----------------------------------------------------------------------------
def init_packed_params(key, batch, in_channels, hidden, n_blocks, H, W, action_space):
    HW = H * W
    BHW = batch * HW
    BH = batch * H
    keys = jax.random.split(key, 64)
    it = iter(keys)
    nrm = lambda k, shape: np.asarray(0.1 * jax.random.normal(k, shape, jnp.float32))

    def band(w_hwio):
        """Fold kw taps + input channels of a conv into per-kh banded weights:
        band[kh, w_in*Cin+ci, w_out*Cout+co] = w[kh, w_in-w_out+pad, ci, co]."""
        KH, KW, Ci, Co = w_hwio.shape
        pad = (KW - 1) // 2
        out = np.zeros((KH, W * Ci, W * Co), np.float32)
        for kh in range(KH):
            for w_out in range(W):
                for kw in range(KW):
                    w_in = w_out + kw - pad
                    if 0 <= w_in < W:
                        out[kh, w_in * Ci:(w_in + 1) * Ci,
                            w_out * Co:(w_out + 1) * Co] = w_hwio[kh, kw]
        return out

    # Trunk convs.  Conv biases are omitted: followed by batch-statistics
    # BatchNorm they cancel exactly in the mean subtraction (no semantic change).
    wstem = band(nrm(next(it), (5, 5, in_channels, hidden)))      # (5, W*Cin, W*Chid)
    gammas = [1.0 + nrm(next(it), (hidden,))]
    betas = [nrm(next(it), (hidden,))]
    alphas = [0.25]                                   # PReLU init (torch default)
    blk_bands = []
    for _ in range(n_blocks):
        for ci in range(2):
            blk_bands.append(band(nrm(next(it), (3, 3, hidden, hidden))))
            gammas.append(1.0 + nrm(next(it), (hidden,)))
            betas.append(nrm(next(it), (hidden,)))
            alphas.append(0.25 if ci == 0 else 0.0)   # 2nd conv of a block: no PReLU
    wblk = np.concatenate(blk_bands, axis=0)          # (2*n_blocks*3, W*Chid, W*Chid)

    # Trunk BN params tiled over the W lane-groups + BN-stats projection matrix.
    gtr = np.tile(np.stack(gammas), (1, W)).astype(np.float32)    # (L, W*Chid)
    btr = np.tile(np.stack(betas), (1, W)).astype(np.float32)
    ptr = (np.kron(np.ones((W, W), np.float32),
                   np.eye(hidden, dtype=np.float32)) / BHW)

    # Head 1x1 convs in block-diagonal form (per-w copies of the channel mix).
    wv = nrm(next(it), (hidden, 1))
    wp = nrm(next(it), (hidden, 2))
    wv_blk = np.kron(np.eye(W, dtype=np.float32), wv)             # (W*Chid, W)
    wp_blk = np.concatenate(
        [np.kron(np.eye(W, dtype=np.float32), wp[:, c:c + 1]) for c in range(2)],
        axis=1)                                                    # (W*Chid, 2W)
    pv = np.full((W, W), 1.0 / BHW, np.float32)
    pp = np.kron(np.eye(2, dtype=np.float32), np.ones((W, W), np.float32)) / BHW
    gv = float(1.0 + nrm(next(it), ()))
    bv = float(nrm(next(it), ()))
    gp = (1.0 + nrm(next(it), (2,))).astype(np.float32)
    bp = nrm(next(it), (2,)).astype(np.float32)
    gp_lanes = np.repeat(gp, W)[None, :].astype(np.float32)       # (1, 2W)
    bp_lanes = np.repeat(bp, W)[None, :].astype(np.float32)
    headsc = np.array([gv, bv, 0.25, 0.25], np.float32)  # gammaV, betaV, alphaV, alphaP

    # Flatten + Linear folding helpers (tile / h-mask / batch-selector matrices).
    hrow = np.arange(BH) % H
    tilev = np.tile(np.eye(W, dtype=np.float32), (1, H))          # (W, H*W)
    tilep = np.tile(np.eye(2 * W, dtype=np.float32), (1, H))      # (2W, H*2W)
    hmv = (np.arange(H * W)[None, :] // W == hrow[:, None]).astype(np.float32)
    hmp = (np.arange(H * 2 * W)[None, :] // (2 * W) == hrow[:, None]).astype(np.float32)
    sel = (np.arange(BH)[None, :] // H == np.arange(batch)[:, None]).astype(np.float32)

    w1 = nrm(next(it), (HW, 128))                     # Linear(board_size, 128)
    b1 = nrm(next(it), (1, 128))
    w2 = nrm(next(it), (128, 1))                      # Linear(128, 1)
    b2 = nrm(next(it), (1, 1))
    wpf = nrm(next(it), (2 * HW, action_space))       # Linear(2*board_size, A)
    bpf = nrm(next(it), (1, action_space))
    # Permute policy-FC rows to the kernel's (h, cp, w) lane order.
    idx = np.empty((H * 2 * W,), np.int64)
    for h in range(H):
        for cp in range(2):
            for w in range(W):
                idx[h * 2 * W + cp * W + w] = cp * HW + h * W + w
    wpf_fold = wpf[idx]

    to_j = lambda a: jnp.asarray(a, jnp.float32)
    return {
        "wstem": to_j(wstem), "wblk": to_j(wblk), "gtr": to_j(gtr), "btr": to_j(btr),
        "ptr": to_j(ptr), "wv": to_j(wv_blk), "pv": to_j(pv), "wp": to_j(wp_blk),
        "pp": to_j(pp), "gp": to_j(gp_lanes), "bp": to_j(bp_lanes),
        "tilev": to_j(tilev), "hmv": to_j(hmv), "tilep": to_j(tilep), "hmp": to_j(hmp),
        "sel": to_j(sel), "w1": to_j(w1), "b1": to_j(b1), "w2": to_j(w2), "b2": to_j(b2),
        "wpf": to_j(wpf_fold), "bpf": to_j(bpf),
        "talpha": jnp.asarray(np.array(alphas, np.float32)),   # trunk PReLU (SMEM)
        "headsc": to_j(headsc),                                # head scalars (SMEM)
    }


if __name__ == "__main__":
    # Small deterministic configuration: 8x8 board, 4 input planes.
    batch = 2
    in_channels = 4
    hidden_channels = 32
    n_residual_blocks = 4
    H = Wd = 8
    board_size = H * Wd            # matches nn.Linear(board_size, 128)
    action_space = board_size + 1  # e.g. 64 moves + pass

    key = jax.random.PRNGKey(0)
    k_params, k_x = jax.random.split(key)
    params = init_packed_params(k_params, batch, in_channels, hidden_channels,
                                n_residual_blocks, H, Wd, action_space)
    x = jax.random.normal(k_x, (batch, in_channels, H, Wd), jnp.float32)

    fwd = jax.jit(alphazero_forward)
    val, policy = fwd(x, params)
    jax.block_until_ready((val, policy))

    assert val.shape == (batch, 1), val.shape
    assert policy.shape == (batch, action_space), policy.shape
    assert bool(jnp.all(jnp.isfinite(val))) and bool(jnp.all(jnp.isfinite(policy)))
    print("KERNEL_OK")
</pallas_src>

<mosaic_0001>
module attributes {stable_mosaic.version = 11 : i64} {
  func.func @kernel(%arg0: memref<2x8x32xf32, #tpu.memory_space<vmem>>, %arg1: memref<5x32x256xf32, #tpu.memory_space<vmem>>, %arg2: memref<24x256x256xf32, #tpu.memory_space<vmem>>, %arg3: memref<9x256xf32, #tpu.memory_space<vmem>>, %arg4: memref<9x256xf32, #tpu.memory_space<vmem>>, %arg5: memref<256x256xf32, #tpu.memory_space<vmem>>, %arg6: memref<256x8xf32, #tpu.memory_space<vmem>>, %arg7: memref<8x8xf32, #tpu.memory_space<vmem>>, %arg8: memref<256x16xf32, #tpu.memory_space<vmem>>, %arg9: memref<16x16xf32, #tpu.memory_space<vmem>>, %arg10: memref<1x16xf32, #tpu.memory_space<vmem>>, %arg11: memref<1x16xf32, #tpu.memory_space<vmem>>, %arg12: memref<8x64xf32, #tpu.memory_space<vmem>>, %arg13: memref<16x64xf32, #tpu.memory_space<vmem>>, %arg14: memref<16x128xf32, #tpu.memory_space<vmem>>, %arg15: memref<16x128xf32, #tpu.memory_space<vmem>>, %arg16: memref<2x16xf32, #tpu.memory_space<vmem>>, %arg17: memref<64x128xf32, #tpu.memory_space<vmem>>, %arg18: memref<1x128xf32, #tpu.memory_space<vmem>>, %arg19: memref<128x1xf32, #tpu.memory_space<vmem>>, %arg20: memref<1x1xf32, #tpu.memory_space<vmem>>, %arg21: memref<128x65xf32, #tpu.memory_space<vmem>>, %arg22: memref<1x65xf32, #tpu.memory_space<vmem>>, %arg23: memref<9xf32, #tpu.memory_space<smem>>, %arg24: memref<4xf32, #tpu.memory_space<smem>>, %arg25: memref<2x1xf32, #tpu.memory_space<vmem>>, %arg26: memref<2x65xf32, #tpu.memory_space<vmem>>, %arg27: memref<2x12x32xf32, #tpu.memory_space<vmem>>, %arg28: memref<2x10x256xf32, #tpu.memory_space<vmem>>) attributes {dimension_semantics = [], scalar_prefetch = 0 : i64, scratch_operands = 2 : i64, tpu.core_type = #tpu.core_type<tc>} {
    %cst = arith.constant 0.000000e+00 : f32
    %0 = vector.broadcast %cst : f32 to vector<2x12x32xf32>
    %c0 = arith.constant 0 : index
    %c0_0 = arith.constant 0 : index
    %c0_1 = arith.constant 0 : index
    %1 = vector.load %arg27[%c0, %c0_0, %c0_1] : memref<2x12x32xf32, #tpu.memory_space<vmem>>, vector<2x12x32xf32>
    tpu.vector_store %arg27[%c0, %c0_0, %c0_1], %0 {strides = array<i32>} : memref<2x12x32xf32, #tpu.memory_space<vmem>>, vector<2x12x32xf32>,
    %cst_2 = arith.constant 0.000000e+00 : f32
    %2 = vector.broadcast %cst_2 : f32 to vector<2x10x256xf32>
    %c0_3 = arith.constant 0 : index
    %c0_4 = arith.constant 0 : index
    %c0_5 = arith.constant 0 : index
    %3 = vector.load %arg28[%c0_3, %c0_4, %c0_5] : memref<2x10x256xf32, #tpu.memory_space<vmem>>, vector<2x10x256xf32>
    tpu.vector_store %arg28[%c0_3, %c0_4, %c0_5], %2 {strides = array<i32>} : memref<2x10x256xf32, #tpu.memory_space<vmem>>, vector<2x10x256xf32>,
    %c0_6 = arith.constant 0 : index
    %c0_7 = arith.constant 0 : index
    %c0_8 = arith.constant 0 : index
    %4 = vector.load %arg0[%c0_6, %c0_7, %c0_8] : memref<2x8x32xf32, #tpu.memory_space<vmem>>, vector<2x8x32xf32>
    %c0_9 = arith.constant 0 : index
    %c2 = arith.constant 2 : index
    %c0_10 = arith.constant 0 : index
    %5 = vector.load %arg27[%c0_9, %c2, %c0_10] : memref<2x12x32xf32, #tpu.memory_space<vmem>>, vector<2x8x32xf32>
    tpu.vector_store %arg27[%c0_9, %c2, %c0_10], %4 {strides = array<i32>} : memref<2x12x32xf32, #tpu.memory_space<vmem>>, vector<2x8x32xf32>,
    %c0_11 = arith.constant 0 : index
    %c0_12 = arith.constant 0 : index
    %c0_13 = arith.constant 0 : index
    %6 = vector.load %arg27[%c0_11, %c0_12, %c0_13] : memref<2x12x32xf32, #tpu.memory_space<vmem>>, vector<2x8x32xf32>
    %7 = vector.shape_cast %6 : vector<2x8x32xf32> to vector<16x32xf32>
    %c0_14 = arith.constant 0 : index
    %c0_15 = arith.constant 0 : index
    %c0_16 = arith.constant 0 : index
    %8 = vector.load %arg1[%c0_14, %c0_15, %c0_16] : memref<5x32x256xf32, #tpu.memory_space<vmem>>, vector<1x32x256xf32>
    %9 = vector.shape_cast %8 : vector<1x32x256xf32> to vector<32x256xf32>
    %cst_17 = arith.constant dense<0.000000e+00> : vector<16x256xf32>
    %10 = tpu.matmul %7, %9, %cst_17 {dimension_numbers = #tpu.dot_dimension_numbers<[1], [0], [0], [1], [0, 0, 1, 1], [], []>} : vector<16x32xf32>, vector<32x256xf32>, vector<16x256xf32> -> vector<16x256xf32>
    %c0_18 = arith.constant 0 : index
    %c1 = arith.constant 1 : index
    %c0_19 = arith.constant 0 : index
    %11 = vector.load %arg27[%c0_18, %c1, %c0_19] : memref<2x12x32xf32, #tpu.memory_space<vmem>>, vector<2x8x32xf32>
    %12 = vector.shape_cast %11 : vector<2x8x32xf32> to vector<16x32xf32>
    %c1_20 = arith.constant 1 : index
    %c0_21 = arith.constant 0 : index
    %c0_22 = arith.constant 0 : index
    %13 = vector.load %arg1[%c1_20, %c0_21, %c0_22] : memref<5x32x256xf32, #tpu.memory_space<vmem>>, vector<1x32x256xf32>
    %14 = vector.shape_cast %13 : vector<1x32x256xf32> to vector<32x256xf32>
    %cst_23 = arith.constant dense<0.000000e+00> : vector<16x256xf32>
    %15 = tpu.matmul %12, %14, %cst_23 {dimension_numbers = #tpu.dot_dimension_numbers<[1], [0], [0], [1], [0, 0, 1, 1], [], []>} : vector<16x32xf32>, vector<32x256xf32>, vector<16x256xf32> -> vector<16x256xf32>
    %16 = arith.addf %10, %15 : vector<16x256xf32>
    %c0_24 = arith.constant 0 : index
    %c2_25 = arith.constant 2 : index
    %c0_26 = arith.constant 0 : index
    %17 = vector.load %arg27[%c0_24, %c2_25, %c0_26] : memref<2x12x32xf32, #tpu.memory_space<vmem>>, vector<2x8x32xf32>
    %18 = vector.shape_cast %17 : vector<2x8x32xf32> to vector<16x32xf32>
    %c2_27 = arith.constant 2 : index
    %c0_28 = arith.constant 0 : index
    %c0_29 = arith.constant 0 : index
    %19 = vector.load %arg1[%c2_27, %c0_28, %c0_29] : memref<5x32x256xf32, #tpu.memory_space<vmem>>, vector<1x32x256xf32>
    %20 = vector.shape_cast %19 : vector<1x32x256xf32> to vector<32x256xf32>
    %cst_30 = arith.constant dense<0.000000e+00> : vector<16x256xf32>
    %21 = tpu.matmul %18, %20, %cst_30 {dimension_numbers = #tpu.dot_dimension_numbers<[1], [0], [0], [1], [0, 0, 1, 1], [], []>} : vector<16x32xf32>, vector<32x256xf32>, vector<16x256xf32> -> vector<16x256xf32>
    %22 = arith.addf %16, %21 : vector<16x256xf32>
    %c0_31 = arith.constant 0 : index
    %c3 = arith.constant 3 : index
    %c0_32 = arith.constant 0 : index
    %23 = vector.load %arg27[%c0_31, %c3, %c0_32] : memref<2x12x32xf32, #tpu.memory_space<vmem>>, vector<2x8x32xf32>
    %24 = vector.shape_cast %23 : vector<2x8x32xf32> to vector<16x32xf32>
    %c3_33 = arith.constant 3 : index
    %c0_34 = arith.constant 0 : index
    %c0_35 = arith.constant 0 : index
    %25 = vector.load %arg1[%c3_33, %c0_34, %c0_35] : memref<5x32x256xf32, #tpu.memory_space<vmem>>, vector<1x32x256xf32>
    %26 = vector.shape_cast %25 : vector<1x32x256xf32> to vector<32x256xf32>
    %cst_36 = arith.constant dense<0.000000e+00> : vector<16x256xf32>
    %27 = tpu.matmul %24, %26, %cst_36 {dimension_numbers = #tpu.dot_dimension_numbers<[1], [0], [0], [1], [0, 0, 1, 1], [], []>} : vector<16x32xf32>, vector<32x256xf32>, vector<16x256xf32> -> vector<16x256xf32>
    %28 = arith.addf %22, %27 : vector<16x256xf32>
    %c0_37 = arith.constant 0 : index
    %c4 = arith.constant 4 : index
    %c0_38 = arith.constant 0 : index
    %29 = vector.load %arg27[%c0_37, %c4, %c0_38] : memref<2x12x32xf32, #tpu.memory_space<vmem>>, vector<2x8x32xf32>
    %30 = vector.shape_cast %29 : vector<2x8x32xf32> to vector<16x32xf32>
    %c4_39 = arith.constant 4 : index
    %c0_40 = arith.constant 0 : index
    %c0_41 = arith.constant 0 : index
    %31 = vector.load %arg1[%c4_39, %c0_40, %c0_41] : memref<5x32x256xf32, #tpu.memory_space<vmem>>, vector<1x32x256xf32>
    %32 = vector.shape_cast %31 : vector<1x32x256xf32> to vector<32x256xf32>
    %cst_42 = arith.constant dense<0.000000e+00> : vector<16x256xf32>
    %33 = tpu.matmul %30, %32, %cst_42 {dimension_numbers = #tpu.dot_dimension_numbers<[1], [0], [0], [1], [0, 0, 1, 1], [], []>} : vector<16x32xf32>, vector<32x256xf32>, vector<16x256xf32> -> vector<16x256xf32>
    %34 = arith.addf %28, %33 : vector<16x256xf32>
    %cst_43 = arith.constant dense<0.000000e+00> : vector<256xf32>
    %35 = vector.multi_reduction <add>, %34, %cst_43 [0] : vector<16x256xf32> to vector<256xf32>
    %36 = vector.shape_cast %35 : vector<256xf32> to vector<1x256xf32>
    %37 = arith.mulf %34, %34 : vector<16x256xf32>
    %cst_44 = arith.constant dense<0.000000e+00> : vector<256xf32>
    %38 = vector.multi_reduction <add>, %37, %cst_44 [0] : vector<16x256xf32> to vector<256xf32>
    %39 = vector.shape_cast %38 : vector<256xf32> to vector<1x256xf32>
    %c0_45 = arith.constant 0 : index
    %c0_46 = arith.constant 0 : index
    %40 = vector.load %arg5[%c0_45, %c0_46] : memref<256x256xf32, #tpu.memory_space<vmem>>, vector<256x256xf32>
    %cst_47 = arith.constant dense<0.000000e+00> : vector<1x256xf32>
    %41 = tpu.matmul %36, %40, %cst_47 {dimension_numbers = #tpu.dot_dimension_numbers<[1], [0], [0], [1], [0, 0, 1, 1], [], []>} : vector<1x256xf32>, vector<256x256xf32>, vector<1x256xf32> -> vector<1x256xf32>
    %c0_48 = arith.constant 0 : index
    %c0_49 = arith.constant 0 : index
    %42 = vector.load %arg5[%c0_48, %c0_49] : memref<256x256xf32, #tpu.memory_space<vmem>>, vector<256x256xf32>
    %cst_50 = arith.constant dense<0.000000e+00> : vector<1x256xf32>
    %43 = tpu.matmul %39, %42, %cst_50 {dimension_numbers = #tpu.dot_dimension_numbers<[1], [0], [0], [1], [0, 0, 1, 1], [], []>} : vector<1x256xf32>, vector<256x256xf32>, vector<1x256xf32> -> vector<1x256xf32>
    %44 = arith.mulf %41, %41 : vector<1x256xf32>
    %45 = arith.subf %43, %44 : vector<1x256xf32>
    %46 = vector.broadcast %41 : vector<1x256xf32> to vector<16x256xf32>
    %47 = arith.subf %34, %46 : vector<16x256xf32>
    %cst_51 = arith.constant 9.99999974E-6 : f32
    %48 = vector.broadcast %cst_51 : f32 to vector<1x256xf32>
    %49 = arith.addf %45, %48 : vector<1x256xf32>
    %50 = math.rsqrt %49 : vector<1x256xf32>
    %51 = vector.broadcast %50 : vector<1x256xf32> to vector<16x256xf32>
    %52 = arith.mulf %47, %51 : vector<16x256xf32>
    %c0_52 = arith.constant 0 : index
    %c0_53 = arith.constant 0 : index
    %53 = vector.load %arg3[%c0_52, %c0_53] : memref<9x256xf32, #tpu.memory_space<vmem>>, vector<1x256xf32>
    %54 = vector.broadcast %53 : vector<1x256xf32> to vector<16x256xf32>
    %55 = arith.mulf %52, %54 : vector<16x256xf32>
    %c0_54 = arith.constant 0 : index
    %c0_55 = arith.constant 0 : index
    %56 = vector.load %arg4[%c0_54, %c0_55] : memref<9x256xf32, #tpu.memory_space<vmem>>, vector<1x256xf32>
    %57 = vector.broadcast %56 : vector<1x256xf32> to vector<16x256xf32>
    %58 = arith.addf %55, %57 : vector<16x256xf32>
    %c0_56 = arith.constant 0 : index
    %59 = memref.load %arg23[%c0_56] : memref<9xf32, #tpu.memory_space<smem>>
    %cst_57 = arith.constant 0.000000e+00 : f32
    %60 = vector.broadcast %cst_57 : f32 to vector<16x256xf32>
    %61 = arith.cmpf oge, %58, %60 : vector<16x256xf32>
    %62 = vector.broadcast %59 : f32 to vector<16x256xf32>
    %63 = arith.mulf %62, %58 : vector<16x256xf32>
    %64 = arith.select %61, %58, %63 : vector<16x256xi1>, vector<16x256xf32>
    %65 = vector.shape_cast %64 : vector<16x256xf32> to vector<2x8x256xf32>
    %c0_58 = arith.constant 0 : index
    %c1_59 = arith.constant 1 : index
    %c0_60 = arith.constant 0 : index
    %66 = vector.load %arg28[%c0_58, %c1_59, %c0_60] : memref<2x10x256xf32, #tpu.memory_space<vmem>>, vector<2x8x256xf32>
    tpu.vector_store %arg28[%c0_58, %c1_59, %c0_60], %65 {strides = array<i32>} : memref<2x10x256xf32, #tpu.memory_space<vmem>>, vector<2x8x256xf32>,
    %c0_61 = arith.constant 0 : index
    %c0_62 = arith.constant 0 : index
    %c0_63 = arith.constant 0 : index
    %67 = vector.load %arg28[%c0_61, %c0_62, %c0_63] : memref<2x10x256xf32, #tpu.memory_space<vmem>>, vector<2x8x256xf32>
    %68 = vector.shape_cast %67 : vector<2x8x256xf32> to vector<16x256xf32>
    %c0_64 = arith.constant 0 : index
    %c0_65 = arith.constant 0 : index
    %c0_66 = arith.constant 0 : index
    %69 = vector.load %arg2[%c0_64, %c0_65, %c0_66] : memref<24x256x256xf32, #tpu.memory_space<vmem>>, vector<1x256x256xf32>
    %70 = vector.shape_cast %69 : vector<1x256x256xf32> to vector<256x256xf32>
    %cst_67 = arith.constant dense<0.000000e+00> : vector<16x256xf32>
    %71 = tpu.matmul %68, %70, %cst_67 {dimension_numbers = #tpu.dot_dimension_numbers<[1], [0], [0], [1], [0, 0, 1, 1], [], []>} : vector<16x256xf32>, vector<256x256xf32>, vector<16x256xf32> -> vector<16x256xf32>
    %c0_68 = arith.constant 0 : index
    %c1_69 = arith.constant 1 : index
    %c0_70 = arith.constant 0 : index
    %72 = vector.load %arg28[%c0_68, %c1_69, %c0_70] : memref<2x10x256xf32, #tpu.memory_space<vmem>>, vector<2x8x256xf32>
    %73 = vector.shape_cast %72 : vector<2x8x256xf32> to vector<16x256xf32>
    %c1_71 = arith.constant 1 : index
    %c0_72 = arith.constant 0 : index
    %c0_73 = arith.constant 0 : index
    %74 = vector.load %arg2[%c1_71, %c0_72, %c0_73] : memref<24x256x256xf32, #tpu.memory_space<vmem>>, vector<1x256x256xf32>
    %75 = vector.shape_cast %74 : vector<1x256x256xf32> to vector<256x256xf32>
    %cst_74 = arith.constant dense<0.000000e+00> : vector<16x256xf32>
    %76 = tpu.matmul %73, %75, %cst_74 {dimension_numbers = #tpu.dot_dimension_numbers<[1], [0], [0], [1], [0, 0, 1, 1], [], []>} : vector<16x256xf32>, vector<256x256xf32>, vector<16x256xf32> -> vector<16x256xf32>
    %77 = arith.addf %71, %76 : vector<16x256xf32>
    %c0_75 = arith.constant 0 : index
    %c2_76 = arith.constant 2 : index
    %c0_77 = arith.constant 0 : index
    %78 = vector.load %arg28[%c0_75, %c2_76, %c0_77] : memref<2x10x256xf32, #tpu.memory_space<vmem>>, vector<2x8x256xf32>
    %79 = vector.shape_cast %78 : vector<2x8x256xf32> to vector<16x256xf32>
    %c2_78 = arith.constant 2 : index
    %c0_79 = arith.constant 0 : index
    %c0_80 = arith.constant 0 : index
    %80 = vector.load %arg2[%c2_78, %c0_79, %c0_80] : memref<24x256x256xf32, #tpu.memory_space<vmem>>, vector<1x256x256xf32>
    %81 = vector.shape_cast %80 : vector<1x256x256xf32> to vector<256x256xf32>
    %cst_81 = arith.constant dense<0.000000e+00> : vector<16x256xf32>
    %82 = tpu.matmul %79, %81, %cst_81 {dimension_numbers = #tpu.dot_dimension_numbers<[1], [0], [0], [1], [0, 0, 1, 1], [], []>} : vector<16x256xf32>, vector<256x256xf32>, vector<16x256xf32> -> vector<16x256xf32>
    %83 = arith.addf %77, %82 : vector<16x256xf32>
    %cst_82 = arith.constant dense<0.000000e+00> : vector<256xf32>
    %84 = vector.multi_reduction <add>, %83, %cst_82 [0] : vector<16x256xf32> to vector<256xf32>
    %85 = vector.shape_cast %84 : vector<256xf32> to vector<1x256xf32>
    %86 = arith.mulf %83, %83 : vector<16x256xf32>
    %cst_83 = arith.constant dense<0.000000e+00> : vector<256xf32>
    %87 = vector.multi_reduction <add>, %86, %cst_83 [0] : vector<16x256xf32> to vector<256xf32>
    %88 = vector.shape_cast %87 : vector<256xf32> to vector<1x256xf32>
    %c0_84 = arith.constant 0 : index
    %c0_85 = arith.constant 0 : index
    %89 = vector.load %arg5[%c0_84, %c0_85] : memref<256x256xf32, #tpu.memory_space<vmem>>, vector<256x256xf32>
    %cst_86 = arith.constant dense<0.000000e+00> : vector<1x256xf32>
    %90 = tpu.matmul %85, %89, %cst_86 {dimension_numbers = #tpu.dot_dimension_numbers<[1], [0], [0], [1], [0, 0, 1, 1], [], []>} : vector<1x256xf32>, vector<256x256xf32>, vector<1x256xf32> -> vector<1x256xf32>
    %c0_87 = arith.constant 0 : index
    %c0_88 = arith.constant 0 : index
    %91 = vector.load %arg5[%c0_87, %c0_88] : memref<256x256xf32, #tpu.memory_space<vmem>>, vector<256x256xf32>
    %cst_89 = arith.constant dense<0.000000e+00> : vector<1x256xf32>
    %92 = tpu.matmul %88, %91, %cst_89 {dimension_numbers = #tpu.dot_dimension_numbers<[1], [0], [0], [1], [0, 0, 1, 1], [], []>} : vector<1x256xf32>, vector<256x256xf32>, vector<1x256xf32> -> vector<1x256xf32>
    %93 = arith.mulf %90, %90 : vector<1x256xf32>
    %94 = arith.subf %92, %93 : vector<1x256xf32>
    %95 = vector.broadcast %90 : vector<1x256xf32> to vector<16x256xf32>
    %96 = arith.subf %83, %95 : vector<16x256xf32>
    %cst_90 = arith.constant 9.99999974E-6 : f32
    %97 = vector.broadcast %cst_90 : f32 to vector<1x256xf32>
    %98 = arith.addf %94, %97 : vector<1x256xf32>
    %99 = math.rsqrt %98 : vector<1x256xf32>
    %100 = vector.broadcast %99 : vector<1x256xf32> to vector<16x256xf32>
    %101 = arith.mulf %96, %100 : vector<16x256xf32>
    %c1_91 = arith.constant 1 : index
    %c0_92 = arith.constant 0 : index
    %102 = vector.load %arg3[%c1_91, %c0_92] : memref<9x256xf32, #tpu.memory_space<vmem>>, vector<1x256xf32>
    %103 = vector.broadcast %102 : vector<1x256xf32> to vector<16x256xf32>
    %104 = arith.mulf %101, %103 : vector<16x256xf32>
    %c1_93 = arith.constant 1 : index
    %c0_94 = arith.constant 0 : index
    %105 = vector.load %arg4[%c1_93, %c0_94] : memref<9x256xf32, #tpu.memory_space<vmem>>, vector<1x256xf32>
    %106 = vector.broadcast %105 : vector<1x256xf32> to vector<16x256xf32>
    %107 = arith.addf %104, %106 : vector<16x256xf32>
    %c1_95 = arith.constant 1 : index
    %108 = memref.load %arg23[%c1_95] : memref<9xf32, #tpu.memory_space<smem>>
    %cst_96 = arith.constant 0.000000e+00 : f32
    %109 = vector.broadcast %cst_96 : f32 to vector<16x256xf32>
    %110 = arith.cmpf oge, %107, %109 : vector<16x256xf32>
    %111 = vector.broadcast %108 : f32 to vector<16x256xf32>
    %112 = arith.mulf %111, %107 : vector<16x256xf32>
    %113 = arith.select %110, %107, %112 : vector<16x256xi1>, vector<16x256xf32>
    %114 = vector.shape_cast %113 : vector<16x256xf32> to vector<2x8x256xf32>
    %c0_97 = arith.constant 0 : index
    %c1_98 = arith.constant 1 : index
    %c0_99 = arith.constant 0 : index
    %115 = vector.load %arg28[%c0_97, %c1_98, %c0_99] : memref<2x10x256xf32, #tpu.memory_space<vmem>>, vector<2x8x256xf32>
    tpu.vector_store %arg28[%c0_97, %c1_98, %c0_99], %114 {strides = array<i32>} : memref<2x10x256xf32, #tpu.memory_space<vmem>>, vector<2x8x256xf32>,
    %c0_100 = arith.constant 0 : index
    %c0_101 = arith.constant 0 : index
    %c0_102 = arith.constant 0 : index
    %116 = vector.load %arg28[%c0_100, %c0_101, %c0_102] : memref<2x10x256xf32, #tpu.memory_space<vmem>>, vector<2x8x256xf32>
    %117 = vector.shape_cast %116 : vector<2x8x256xf32> to vector<16x256xf32>
    %c3_103 = arith.constant 3 : index
    %c0_104 = arith.constant 0 : index
    %c0_105 = arith.constant 0 : index
    %118 = vector.load %arg2[%c3_103, %c0_104, %c0_105] : memref<24x256x256xf32, #tpu.memory_space<vmem>>, vector<1x256x256xf32>
    %119 = vector.shape_cast %118 : vector<1x256x256xf32> to vector<256x256xf32>
    %cst_106 = arith.constant dense<0.000000e+00> : vector<16x256xf32>
    %120 = tpu.matmul %117, %119, %cst_106 {dimension_numbers = #tpu.dot_dimension_numbers<[1], [0], [0], [1], [0, 0, 1, 1], [], []>} : vector<16x256xf32>, vector<256x256xf32>, vector<16x256xf32> -> vector<16x256xf32>
    %c0_107 = arith.constant 0 : index
    %c1_108 = arith.constant 1 : index
    %c0_109 = arith.constant 0 : index
    %121 = vector.load %arg28[%c0_107, %c1_108, %c0_109] : memref<2x10x256xf32, #tpu.memory_space<vmem>>, vector<2x8x256xf32>
    %122 = vector.shape_cast %121 : vector<2x8x256xf32> to vector<16x256xf32>
    %c4_110 = arith.constant 4 : index
    %c0_111 = arith.constant 0 : index
    %c0_112 = arith.constant 0 : index
    %123 = vector.load %arg2[%c4_110, %c0_111, %c0_112] : memref<24x256x256xf32, #tpu.memory_space<vmem>>, vector<1x256x256xf32>
    %124 = vector.shape_cast %123 : vector<1x256x256xf32> to vector<256x256xf32>
    %cst_113 = arith.constant dense<0.000000e+00> : vector<16x256xf32>
    %125 = tpu.matmul %122, %124, %cst_113 {dimension_numbers = #tpu.dot_dimension_numbers<[1], [0], [0], [1], [0, 0, 1, 1], [], []>} : vector<16x256xf32>, vector<256x256xf32>, vector<16x256xf32> -> vector<16x256xf32>
    %126 = arith.addf %120, %125 : vector<16x256xf32>
    %c0_114 = arith.constant 0 : index
    %c2_115 = arith.constant 2 : index
    %c0_116 = arith.constant 0 : index
    %127 = vector.load %arg28[%c0_114, %c2_115, %c0_116] : memref<2x10x256xf32, #tpu.memory_space<vmem>>, vector<2x8x256xf32>
    %128 = vector.shape_cast %127 : vector<2x8x256xf32> to vector<16x256xf32>
    %c5 = arith.constant 5 : index
    %c0_117 = arith.constant 0 : index
    %c0_118 = arith.constant 0 : index
    %129 = vector.load %arg2[%c5, %c0_117, %c0_118] : memref<24x256x256xf32, #tpu.memory_space<vmem>>, vector<1x256x256xf32>
    %130 = vector.shape_cast %129 : vector<1x256x256xf32> to vector<256x256xf32>
    %cst_119 = arith.constant dense<0.000000e+00> : vector<16x256xf32>
    %131 = tpu.matmul %128, %130, %cst_119 {dimension_numbers = #tpu.dot_dimension_numbers<[1], [0], [0], [1], [0, 0, 1, 1], [], []>} : vector<16x256xf32>, vector<256x256xf32>, vector<16x256xf32> -> vector<16x256xf32>
    %132 = arith.addf %126, %131 : vector<16x256xf32>
    %cst_120 = arith.constant dense<0.000000e+00> : vector<256xf32>
    %133 = vector.multi_reduction <add>, %132, %cst_120 [0] : vector<16x256xf32> to vector<256xf32>
    %134 = vector.shape_cast %133 : vector<256xf32> to vector<1x256xf32>
    %135 = arith.mulf %132, %132 : vector<16x256xf32>
    %cst_121 = arith.constant dense<0.000000e+00> : vector<256xf32>
    %136 = vector.multi_reduction <add>, %135, %cst_121 [0] : vector<16x256xf32> to vector<256xf32>
    %137 = vector.shape_cast %136 : vector<256xf32> to vector<1x256xf32>
    %c0_122 = arith.constant 0 : index
    %c0_123 = arith.constant 0 : index
    %138 = vector.load %arg5[%c0_122, %c0_123] : memref<256x256xf32, #tpu.memory_space<vmem>>, vector<256x256xf32>
    %cst_124 = arith.constant dense<0.000000e+00> : vector<1x256xf32>
    %139 = tpu.matmul %134, %138, %cst_124 {dimension_numbers = #tpu.dot_dimension_numbers<[1], [0], [0], [1], [0, 0, 1, 1], [], []>} : vector<1x256xf32>, vector<256x256xf32>, vector<1x256xf32> -> vector<1x256xf32>
    %c0_125 = arith.constant 0 : index
    %c0_126 = arith.constant 0 : index
    %140 = vector.load %arg5[%c0_125, %c0_126] : memref<256x256xf32, #tpu.memory_space<vmem>>, vector<256x256xf32>
    %cst_127 = arith.constant dense<0.000000e+00> : vector<1x256xf32>
    %141 = tpu.matmul %137, %140, %cst_127 {dimension_numbers = #tpu.dot_dimension_numbers<[1], [0], [0], [1], [0, 0, 1, 1], [], []>} : vector<1x256xf32>, vector<256x256xf32>, vector<1x256xf32> -> vector<1x256xf32>
    %142 = arith.mulf %139, %139 : vector<1x256xf32>
    %143 = arith.subf %141, %142 : vector<1x256xf32>
    %144 = vector.broadcast %139 : vector<1x256xf32> to vector<16x256xf32>
    %145 = arith.subf %132, %144 : vector<16x256xf32>
    %cst_128 = arith.constant 9.99999974E-6 : f32
    %146 = vector.broadcast %cst_128 : f32 to vector<1x256xf32>
    %147 = arith.addf %143, %146 : vector<1x256xf32>
    %148 = math.rsqrt %147 : vector<1x256xf32>
    %149 = vector.broadcast %148 : vector<1x256xf32> to vector<16x256xf32>
    %150 = arith.mulf %145, %149 : vector<16x256xf32>
    %c2_129 = arith.constant 2 : index
    %c0_130 = arith.constant 0 : index
    %151 = vector.load %arg3[%c2_129, %c0_130] : memref<9x256xf32, #tpu.memory_space<vmem>>, vector<1x256xf32>
    %152 = vector.broadcast %151 : vector<1x256xf32> to vector<16x256xf32>
    %153 = arith.mulf %150, %152 : vector<16x256xf32>
    %c2_131 = arith.constant 2 : index
    %c0_132 = arith.constant 0 : index
    %154 = vector.load %arg4[%c2_131, %c0_132] : memref<9x256xf32, #tpu.memory_space<vmem>>, vector<1x256xf32>
    %155 = vector.broadcast %154 : vector<1x256xf32> to vector<16x256xf32>
    %156 = arith.addf %153, %155 : vector<16x256xf32>
    %157 = arith.addf %156, %64 : vector<16x256xf32>
    %cst_133 = arith.constant 0.000000e+00 : f32
    %158 = vector.broadcast %cst_133 : f32 to vector<16x256xf32>
    %159 = arith.maximumf %157, %158 : vector<16x256xf32>
    %160 = vector.shape_cast %159 : vector<16x256xf32> to vector<2x8x256xf32>
    %c0_134 = arith.constant 0 : index
    %c1_135 = arith.constant 1 : index
    %c0_136 = arith.constant 0 : index
    %161 = vector.load %arg28[%c0_134, %c1_135, %c0_136] : memref<2x10x256xf32, #tpu.memory_space<vmem>>, vector<2x8x256xf32>
    tpu.vector_store %arg28[%c0_134, %c1_135, %c0_136], %160 {strides = array<i32>} : memref<2x10x256xf32, #tpu.memory_space<vmem>>, vector<2x8x256xf32>,
    %c0_137 = arith.constant 0 : index
    %c0_138 = arith.constant 0 : index
    %c0_139 = arith.constant 0 : index
    %162 = vector.load %arg28[%c0_137, %c0_138, %c0_139] : memref<2x10x256xf32, #tpu.memory_space<vmem>>, vector<2x8x256xf32>
    %163 = vector.shape_cast %162 : vector<2x8x256xf32> to vector<16x256xf32>
    %c6 = arith.constant 6 : index
    %c0_140 = arith.constant 0 : index
    %c0_141 = arith.constant 0 : index
    %164 = vector.load %arg2[%c6, %c0_140, %c0_141] : memref<24x256x256xf32, #tpu.memory_space<vmem>>, vector<1x256x256xf32>
    %165 = vector.shape_cast %164 : vector<1x256x256xf32> to vector<256x256xf32>
    %cst_142 = arith.constant dense<0.000000e+00> : vector<16x256xf32>
    %166 = tpu.matmul %163, %165, %cst_142 {dimension_numbers = #tpu.dot_dimension_numbers<[1], [0], [0], [1], [0, 0, 1, 1], [], []>} : vector<16x256xf32>, vector<256x256xf32>, vector<16x256xf32> -> vector<16x256xf32>
    %c0_143 = arith.constant 0 : index
    %c1_144 = arith.constant 1 : index
    %c0_145 = arith.constant 0 : index
    %167 = vector.load %arg28[%c0_143, %c1_144, %c0_145] : memref<2x10x256xf32, #tpu.memory_space<vmem>>, vector<2x8x256xf32>
    %168 = vector.shape_cast %167 : vector<2x8x256xf32> to vector<16x256xf32>
    %c7 = arith.constant 7 : index
    %c0_146 = arith.constant 0 : index
    %c0_147 = arith.constant 0 : index
    %169 = vector.load %arg2[%c7, %c0_146, %c0_147] : memref<24x256x256xf32, #tpu.memory_space<vmem>>, vector<1x256x256xf32>
    %170 = vector.shape_cast %169 : vector<1x256x256xf32> to vector<256x256xf32>
    %cst_148 = arith.constant dense<0.000000e+00> : vector<16x256xf32>
    %171 = tpu.matmul %168, %170, %cst_148 {dimension_numbers = #tpu.dot_dimension_numbers<[1], [0], [0], [1], [0, 0, 1, 1], [], []>} : vector<16x256xf32>, vector<256x256xf32>, vector<16x256xf32> -> vector<16x256xf32>
    %172 = arith.addf %166, %171 : vector<16x256xf32>
    %c0_149 = arith.constant 0 : index
    %c2_150 = arith.constant 2 : index
    %c0_151 = arith.constant 0 : index
    %173 = vector.load %arg28[%c0_149, %c2_150, %c0_151] : memref<2x10x256xf32, #tpu.memory_space<vmem>>, vector<2x8x256xf32>
    %174 = vector.shape_cast %173 : vector<2x8x256xf32> to vector<16x256xf32>
    %c8 = arith.constant 8 : index
    %c0_152 = arith.constant 0 : index
    %c0_153 = arith.constant 0 : index
    %175 = vector.load %arg2[%c8, %c0_152, %c0_153] : memref<24x256x256xf32, #tpu.memory_space<vmem>>, vector<1x256x256xf32>
    %176 = vector.shape_cast %175 : vector<1x256x256xf32> to vector<256x256xf32>
    %cst_154 = arith.constant dense<0.000000e+00> : vector<16x256xf32>
    %177 = tpu.matmul %174, %176, %cst_154 {dimension_numbers = #tpu.dot_dimension_numbers<[1], [0], [0], [1], [0, 0, 1, 1], [], []>} : vector<16x256xf32>, vector<256x256xf32>, vector<16x256xf32> -> vector<16x256xf32>
    %178 = arith.addf %172, %177 : vector<16x256xf32>
    %cst_155 = arith.constant dense<0.000000e+00> : vector<256xf32>
    %179 = vector.multi_reduction <add>, %178, %cst_155 [0] : vector<16x256xf32> to vector<256xf32>
    %180 = vector.shape_cast %179 : vector<256xf32> to vector<1x256xf32>
    %181 = arith.mulf %178, %178 : vector<16x256xf32>
    %cst_156 = arith.constant dense<0.000000e+00> : vector<256xf32>
    %182 = vector.multi_reduction <add>, %181, %cst_156 [0] : vector<16x256xf32> to vector<256xf32>
    %183 = vector.shape_cast %182 : vector<256xf32> to vector<1x256xf32>
    %c0_157 = arith.constant 0 : index
    %c0_158 = arith.constant 0 : index
    %184 = vector.load %arg5[%c0_157, %c0_158] : memref<256x256xf32, #tpu.memory_space<vmem>>, vector<256x256xf32>
    %cst_159 = arith.constant dense<0.000000e+00> : vector<1x256xf32>
    %185 = tpu.matmul %180, %184, %cst_159 {dimension_numbers = #tpu.dot_dimension_numbers<[1], [0], [0], [1], [0, 0, 1, 1], [], []>} : vector<1x256xf32>, vector<256x256xf32>, vector<1x256xf32> -> vector<1x256xf32>
    %c0_160 = arith.constant 0 : index
    %c0_161 = arith.constant 0 : index
    %186 = vector.load %arg5[%c0_160, %c0_161] : memref<256x256xf32, #tpu.memory_space<vmem>>, vector<256x256xf32>
    %cst_162 = arith.constant dense<0.000000e+00> : vector<1x256xf32>
    %187 = tpu.matmul %183, %186, %cst_162 {dimension_numbers = #tpu.dot_dimension_numbers<[1], [0], [0], [1], [0, 0, 1, 1], [], []>} : vector<1x256xf32>, vector<256x256xf32>, vector<1x256xf32> -> vector<1x256xf32>
    %188 = arith.mulf %185, %185 : vector<1x256xf32>
    %189 = arith.subf %187, %188 : vector<1x256xf32>
    %190 = vector.broadcast %185 : vector<1x256xf32> to vector<16x256xf32>
    %191 = arith.subf %178, %190 : vector<16x256xf32>
    %cst_163 = arith.constant 9.99999974E-6 : f32
    %192 = vector.broadcast %cst_163 : f32 to vector<1x256xf32>
    %193 = arith.addf %189, %192 : vector<1x256xf32>
    %194 = math.rsqrt %193 : vector<1x256xf32>
    %195 = vector.broadcast %194 : vector<1x256xf32> to vector<16x256xf32>
    %196 = arith.mulf %191, %195 : vector<16x256xf32>
    %c3_164 = arith.constant 3 : index
    %c0_165 = arith.constant 0 : index
    %197 = vector.load %arg3[%c3_164, %c0_165] : memref<9x256xf32, #tpu.memory_space<vmem>>, vector<1x256xf32>
    %198 = vector.broadcast %197 : vector<1x256xf32> to vector<16x256xf32>
    %199 = arith.mulf %196, %198 : vector<16x256xf32>
    %c3_166 = arith.constant 3 : index
    %c0_167 = arith.constant 0 : index
    %200 = vector.load %arg4[%c3_166, %c0_167] : memref<9x256xf32, #tpu.memory_space<vmem>>, vector<1x256xf32>
    %201 = vector.broadcast %200 : vector<1x256xf32> to vector<16x256xf32>
    %202 = arith.addf %199, %201 : vector<16x256xf32>
    %c3_168 = arith.constant 3 : index
    %203 = memref.load %arg23[%c3_168] : memref<9xf32, #tpu.memory_space<smem>>
    %cst_169 = arith.constant 0.000000e+00 : f32
    %204 = vector.broadcast %cst_169 : f32 to vector<16x256xf32>
    %205 = arith.cmpf oge, %202, %204 : vector<16x256xf32>
    %206 = vector.broadcast %203 : f32 to vector<16x256xf32>
    %207 = arith.mulf %206, %202 : vector<16x256xf32>
    %208 = arith.select %205, %202, %207 : vector<16x256xi1>, vector<16x256xf32>
    %209 = vector.shape_cast %208 : vector<16x256xf32> to vector<2x8x256xf32>
    %c0_170 = arith.constant 0 : index
    %c1_171 = arith.constant 1 : index
    %c0_172 = arith.constant 0 : index
    %210 = vector.load %arg28[%c0_170, %c1_171, %c0_172] : memref<2x10x256xf32, #tpu.memory_space<vmem>>, vector<2x8x256xf32>
    tpu.vector_store %arg28[%c0_170, %c1_171, %c0_172], %209 {strides = array<i32>} : memref<2x10x256xf32, #tpu.memory_space<vmem>>, vector<2x8x256xf32>,
    %c0_173 = arith.constant 0 : index
    %c0_174 = arith.constant 0 : index
    %c0_175 = arith.constant 0 : index
    %211 = vector.load %arg28[%c0_173, %c0_174, %c0_175] : memref<2x10x256xf32, #tpu.memory_space<vmem>>, vector<2x8x256xf32>
    %212 = vector.shape_cast %211 : vector<2x8x256xf32> to vector<16x256xf32>
    %c9 = arith.constant 9 : index
    %c0_176 = arith.constant 0 : index
    %c0_177 = arith.constant 0 : index
    %213 = vector.load %arg2[%c9, %c0_176, %c0_177] : memref<24x256x256xf32, #tpu.memory_space<vmem>>, vector<1x256x256xf32>
    %214 = vector.shape_cast %213 : vector<1x256x256xf32> to vector<256x256xf32>
    %cst_178 = arith.constant dense<0.000000e+00> : vector<16x256xf32>
    %215 = tpu.matmul %212, %214, %cst_178 {dimension_numbers = #tpu.dot_dimension_numbers<[1], [0], [0], [1], [0, 0, 1, 1], [], []>} : vector<16x256xf32>, vector<256x256xf32>, vector<16x256xf32> -> vector<16x256xf32>
    %c0_179 = arith.constant 0 : index
    %c1_180 = arith.constant 1 : index
    %c0_181 = arith.constant 0 : index
    %216 = vector.load %arg28[%c0_179, %c1_180, %c0_181] : memref<2x10x256xf32, #tpu.memory_space<vmem>>, vector<2x8x256xf32>
    %217 = vector.shape_cast %216 : vector<2x8x256xf32> to vector<16x256xf32>
    %c10 = arith.constant 10 : index
    %c0_182 = arith.constant 0 : index
    %c0_183 = arith.constant 0 : index
    %218 = vector.load %arg2[%c10, %c0_182, %c0_183] : memref<24x256x256xf32, #tpu.memory_space<vmem>>, vector<1x256x256xf32>
    %219 = vector.shape_cast %218 : vector<1x256x256xf32> to vector<256x256xf32>
    %cst_184 = arith.constant dense<0.000000e+00> : vector<16x256xf32>
    %220 = tpu.matmul %217, %219, %cst_184 {dimension_numbers = #tpu.dot_dimension_numbers<[1], [0], [0], [1], [0, 0, 1, 1], [], []>} : vector<16x256xf32>, vector<256x256xf32>, vector<16x256xf32> -> vector<16x256xf32>
    %221 = arith.addf %215, %220 : vector<16x256xf32>
    %c0_185 = arith.constant 0 : index
    %c2_186 = arith.constant 2 : index
    %c0_187 = arith.constant 0 : index
    %222 = vector.load %arg28[%c0_185, %c2_186, %c0_187] : memref<2x10x256xf32, #tpu.memory_space<vmem>>, vector<2x8x256xf32>
    %223 = vector.shape_cast %222 : vector<2x8x256xf32> to vector<16x256xf32>
    %c11 = arith.constant 11 : index
    %c0_188 = arith.constant 0 : index
    %c0_189 = arith.constant 0 : index
    %224 = vector.load %arg2[%c11, %c0_188, %c0_189] : memref<24x256x256xf32, #tpu.memory_space<vmem>>, vector<1x256x256xf32>
    %225 = vector.shape_cast %224 : vector<1x256x256xf32> to vector<256x256xf32>
    %cst_190 = arith.constant dense<0.000000e+00> : vector<16x256xf32>
    %226 = tpu.matmul %223, %225, %cst_190 {dimension_numbers = #tpu.dot_dimension_numbers<[1], [0], [0], [1], [0, 0, 1, 1], [], []>} : vector<16x256xf32>, vector<256x256xf32>, vector<16x256xf32> -> vector<16x256xf32>
    %227 = arith.addf %221, %226 : vector<16x256xf32>
    %cst_191 = arith.constant dense<0.000000e+00> : vector<256xf32>
    %228 = vector.multi_reduction <add>, %227, %cst_191 [0] : vector<16x256xf32> to vector<256xf32>
    %229 = vector.shape_cast %228 : vector<256xf32> to vector<1x256xf32>
    %230 = arith.mulf %227, %227 : vector<16x256xf32>
    %cst_192 = arith.constant dense<0.000000e+00> : vector<256xf32>
    %231 = vector.multi_reduction <add>, %230, %cst_192 [0] : vector<16x256xf32> to vector<256xf32>
    %232 = vector.shape_cast %231 : vector<256xf32> to vector<1x256xf32>
    %c0_193 = arith.constant 0 : index
    %c0_194 = arith.constant 0 : index
    %233 = vector.load %arg5[%c0_193, %c0_194] : memref<256x256xf32, #tpu.memory_space<vmem>>, vector<256x256xf32>
    %cst_195 = arith.constant dense<0.000000e+00> : vector<1x256xf32>
    %234 = tpu.matmul %229, %233, %cst_195 {dimension_numbers = #tpu.dot_dimension_numbers<[1], [0], [0], [1], [0, 0, 1, 1], [], []>} : vector<1x256xf32>, vector<256x256xf32>, vector<1x256xf32> -> vector<1x256xf32>
    %c0_196 = arith.constant 0 : index
    %c0_197 = arith.constant 0 : index
    %235 = vector.load %arg5[%c0_196, %c0_197] : memref<256x256xf32, #tpu.memory_space<vmem>>, vector<256x256xf32>
    %cst_198 = arith.constant dense<0.000000e+00> : vector<1x256xf32>
    %236 = tpu.matmul %232, %235, %cst_198 {dimension_numbers = #tpu.dot_dimension_numbers<[1], [0], [0], [1], [0, 0, 1, 1], [], []>} : vector<1x256xf32>, vector<256x256xf32>, vector<1x256xf32> -> vector<1x256xf32>
    %237 = arith.mulf %234, %234 : vector<1x256xf32>
    %238 = arith.subf %236, %237 : vector<1x256xf32>
    %239 = vector.broadcast %234 : vector<1x256xf32> to vector<16x256xf32>
    %240 = arith.subf %227, %239 : vector<16x256xf32>
    %cst_199 = arith.constant 9.99999974E-6 : f32
    %241 = vector.broadcast %cst_199 : f32 to vector<1x256xf32>
    %242 = arith.addf %238, %241 : vector<1x256xf32>
    %243 = math.rsqrt %242 : vector<1x256xf32>
    %244 = vector.broadcast %243 : vector<1x256xf32> to vector<16x256xf32>
    %245 = arith.mulf %240, %244 : vector<16x256xf32>
    %c4_200 = arith.constant 4 : index
    %c0_201 = arith.constant 0 : index
    %246 = vector.load %arg3[%c4_200, %c0_201] : memref<9x256xf32, #tpu.memory_space<vmem>>, vector<1x256xf32>
    %247 = vector.broadcast %246 : vector<1x256xf32> to vector<16x256xf32>
    %248 = arith.mulf %245, %247 : vector<16x256xf32>
    %c4_202 = arith.constant 4 : index
    %c0_203 = arith.constant 0 : index
    %249 = vector.load %arg4[%c4_202, %c0_203] : memref<9x256xf32, #tpu.memory_space<vmem>>, vector<1x256xf32>
    %250 = vector.broadcast %249 : vector<1x256xf32> to vector<16x256xf32>
    %251 = arith.addf %248, %250 : vector<16x256xf32>
    %252 = arith.addf %251, %159 : vector<16x256xf32>
    %cst_204 = arith.constant 0.000000e+00 : f32
    %253 = vector.broadcast %cst_204 : f32 to vector<16x256xf32>
    %254 = arith.maximumf %252, %253 : vector<16x256xf32>
    %255 = vector.shape_cast %254 : vector<16x256xf32> to vector<2x8x256xf32>
    %c0_205 = arith.constant 0 : index
    %c1_206 = arith.constant 1 : index
    %c0_207 = arith.constant 0 : index
    %256 = vector.load %arg28[%c0_205, %c1_206, %c0_207] : memref<2x10x256xf32, #tpu.memory_space<vmem>>, vector<2x8x256xf32>
    tpu.vector_store %arg28[%c0_205, %c1_206, %c0_207], %255 {strides = array<i32>} : memref<2x10x256xf32, #tpu.memory_space<vmem>>, vector<2x8x256xf32>,
    %c0_208 = arith.constant 0 : index
    %c0_209 = arith.constant 0 : index
    %c0_210 = arith.constant 0 : index
    %257 = vector.load %arg28[%c0_208, %c0_209, %c0_210] : memref<2x10x256xf32, #tpu.memory_space<vmem>>, vector<2x8x256xf32>
    %258 = vector.shape_cast %257 : vector<2x8x256xf32> to vector<16x256xf32>
    %c12 = arith.constant 12 : index
    %c0_211 = arith.constant 0 : index
    %c0_212 = arith.constant 0 : index
    %259 = vector.load %arg2[%c12, %c0_211, %c0_212] : memref<24x256x256xf32, #tpu.memory_space<vmem>>, vector<1x256x256xf32>
    %260 = vector.shape_cast %259 : vector<1x256x256xf32> to vector<256x256xf32>
    %cst_213 = arith.constant dense<0.000000e+00> : vector<16x256xf32>
    %261 = tpu.matmul %258, %260, %cst_213 {dimension_numbers = #tpu.dot_dimension_numbers<[1], [0], [0], [1], [0, 0, 1, 1], [], []>} : vector<16x256xf32>, vector<256x256xf32>, vector<16x256xf32> -> vector<16x256xf32>
    %c0_214 = arith.constant 0 : index
    %c1_215 = arith.constant 1 : index
    %c0_216 = arith.constant 0 : index
    %262 = vector.load %arg28[%c0_214, %c1_215, %c0_216] : memref<2x10x256xf32, #tpu.memory_space<vmem>>, vector<2x8x256xf32>
    %263 = vector.shape_cast %262 : vector<2x8x256xf32> to vector<16x256xf32>
    %c13 = arith.constant 13 : index
    %c0_217 = arith.constant 0 : index
    %c0_218 = arith.constant 0 : index
    %264 = vector.load %arg2[%c13, %c0_217, %c0_218] : memref<24x256x256xf32, #tpu.memory_space<vmem>>, vector<1x256x256xf32>
    %265 = vector.shape_cast %264 : vector<1x256x256xf32> to vector<256x256xf32>
    %cst_219 = arith.constant dense<0.000000e+00> : vector<16x256xf32>
    %266 = tpu.matmul %263, %265, %cst_219 {dimension_numbers = #tpu.dot_dimension_numbers<[1], [0], [0], [1], [0, 0, 1, 1], [], []>} : vector<16x256xf32>, vector<256x256xf32>, vector<16x256xf32> -> vector<16x256xf32>
    %267 = arith.addf %261, %266 : vector<16x256xf32>
    %c0_220 = arith.constant 0 : index
    %c2_221 = arith.constant 2 : index
    %c0_222 = arith.constant 0 : index
    %268 = vector.load %arg28[%c0_220, %c2_221, %c0_222] : memref<2x10x256xf32, #tpu.memory_space<vmem>>, vector<2x8x256xf32>
    %269 = vector.shape_cast %268 : vector<2x8x256xf32> to vector<16x256xf32>
    %c14 = arith.constant 14 : index
    %c0_223 = arith.constant 0 : index
    %c0_224 = arith.constant 0 : index
    %270 = vector.load %arg2[%c14, %c0_223, %c0_224] : memref<24x256x256xf32, #tpu.memory_space<vmem>>, vector<1x256x256xf32>
    %271 = vector.shape_cast %270 : vector<1x256x256xf32> to vector<256x256xf32>
    %cst_225 = arith.constant dense<0.000000e+00> : vector<16x256xf32>
    %272 = tpu.matmul %269, %271, %cst_225 {dimension_numbers = #tpu.dot_dimension_numbers<[1], [0], [0], [1], [0, 0, 1, 1], [], []>} : vector<16x256xf32>, vector<256x256xf32>, vector<16x256xf32> -> vector<16x256xf32>
    %273 = arith.addf %267, %272 : vector<16x256xf32>
    %cst_226 = arith.constant dense<0.000000e+00> : vector<256xf32>
    %274 = vector.multi_reduction <add>, %273, %cst_226 [0] : vector<16x256xf32> to vector<256xf32>
    %275 = vector.shape_cast %274 : vector<256xf32> to vector<1x256xf32>
    %276 = arith.mulf %273, %273 : vector<16x256xf32>
    %cst_227 = arith.constant dense<0.000000e+00> : vector<256xf32>
    %277 = vector.multi_reduction <add>, %276, %cst_227 [0] : vector<16x256xf32> to vector<256xf32>
    %278 = vector.shape_cast %277 : vector<256xf32> to vector<1x256xf32>
    %c0_228 = arith.constant 0 : index
    %c0_229 = arith.constant 0 : index
    %279 = vector.load %arg5[%c0_228, %c0_229] : memref<256x256xf32, #tpu.memory_space<vmem>>, vector<256x256xf32>
    %cst_230 = arith.constant dense<0.000000e+00> : vector<1x256xf32>
    %280 = tpu.matmul %275, %279, %cst_230 {dimension_numbers = #tpu.dot_dimension_numbers<[1], [0], [0], [1], [0, 0, 1, 1], [], []>} : vector<1x256xf32>, vector<256x256xf32>, vector<1x256xf32> -> vector<1x256xf32>
    %c0_231 = arith.constant 0 : index
    %c0_232 = arith.constant 0 : index
    %281 = vector.load %arg5[%c0_231, %c0_232] : memref<256x256xf32, #tpu.memory_space<vmem>>, vector<256x256xf32>
    %cst_233 = arith.constant dense<0.000000e+00> : vector<1x256xf32>
    %282 = tpu.matmul %278, %281, %cst_233 {dimension_numbers = #tpu.dot_dimension_numbers<[1], [0], [0], [1], [0, 0, 1, 1], [], []>} : vector<1x256xf32>, vector<256x256xf32>, vector<1x256xf32> -> vector<1x256xf32>
    %283 = arith.mulf %280, %280 : vector<1x256xf32>
    %284 = arith.subf %282, %283 : vector<1x256xf32>
    %285 = vector.broadcast %280 : vector<1x256xf32> to vector<16x256xf32>
    %286 = arith.subf %273, %285 : vector<16x256xf32>
    %cst_234 = arith.constant 9.99999974E-6 : f32
    %287 = vector.broadcast %cst_234 : f32 to vector<1x256xf32>
    %288 = arith.addf %284, %287 : vector<1x256xf32>
    %289 = math.rsqrt %288 : vector<1x256xf32>
    %290 = vector.broadcast %289 : vector<1x256xf32> to vector<16x256xf32>
    %291 = arith.mulf %286, %290 : vector<16x256xf32>
    %c5_235 = arith.constant 5 : index
    %c0_236 = arith.constant 0 : index
    %292 = vector.load %arg3[%c5_235, %c0_236] : memref<9x256xf32, #tpu.memory_space<vmem>>, vector<1x256xf32>
    %293 = vector.broadcast %292 : vector<1x256xf32> to vector<16x256xf32>
    %294 = arith.mulf %291, %293 : vector<16x256xf32>
    %c5_237 = arith.constant 5 : index
    %c0_238 = arith.constant 0 : index
    %295 = vector.load %arg4[%c5_237, %c0_238] : memref<9x256xf32, #tpu.memory_space<vmem>>, vector<1x256xf32>
    %296 = vector.broadcast %295 : vector<1x256xf32> to vector<16x256xf32>
    %297 = arith.addf %294, %296 : vector<16x256xf32>
    %c5_239 = arith.constant 5 : index
    %298 = memref.load %arg23[%c5_239] : memref<9xf32, #tpu.memory_space<smem>>
    %cst_240 = arith.constant 0.000000e+00 : f32
    %299 = vector.broadcast %cst_240 : f32 to vector<16x256xf32>
    %300 = arith.cmpf oge, %297, %299 : vector<16x256xf32>
    %301 = vector.broadcast %298 : f32 to vector<16x256xf32>
    %302 = arith.mulf %301, %297 : vector<16x256xf32>
    %303 = arith.select %300, %297, %302 : vector<16x256xi1>, vector<16x256xf32>
    %304 = vector.shape_cast %303 : vector<16x256xf32> to vector<2x8x256xf32>
    %c0_241 = arith.constant 0 : index
    %c1_242 = arith.constant 1 : index
    %c0_243 = arith.constant 0 : index
    %305 = vector.load %arg28[%c0_241, %c1_242, %c0_243] : memref<2x10x256xf32, #tpu.memory_space<vmem>>, vector<2x8x256xf32>
    tpu.vector_store %arg28[%c0_241, %c1_242, %c0_243], %304 {strides = array<i32>} : memref<2x10x256xf32, #tpu.memory_space<vmem>>, vector<2x8x256xf32>,
    %c0_244 = arith.constant 0 : index
    %c0_245 = arith.constant 0 : index
    %c0_246 = arith.constant 0 : index
    %306 = vector.load %arg28[%c0_244, %c0_245, %c0_246] : memref<2x10x256xf32, #tpu.memory_space<vmem>>, vector<2x8x256xf32>
    %307 = vector.shape_cast %306 : vector<2x8x256xf32> to vector<16x256xf32>
    %c15 = arith.constant 15 : index
    %c0_247 = arith.constant 0 : index
    %c0_248 = arith.constant 0 : index
    %308 = vector.load %arg2[%c15, %c0_247, %c0_248] : memref<24x256x256xf32, #tpu.memory_space<vmem>>, vector<1x256x256xf32>
    %309 = vector.shape_cast %308 : vector<1x256x256xf32> to vector<256x256xf32>
    %cst_249 = arith.constant dense<0.000000e+00> : vector<16x256xf32>
    %310 = tpu.matmul %307, %309, %cst_249 {dimension_numbers = #tpu.dot_dimension_numbers<[1], [0], [0], [1], [0, 0, 1, 1], [], []>} : vector<16x256xf32>, vector<256x256xf32>, vector<16x256xf32> -> vector<16x256xf32>
    %c0_250 = arith.constant 0 : index
    %c1_251 = arith.constant 1 : index
    %c0_252 = arith.constant 0 : index
    %311 = vector.load %arg28[%c0_250, %c1_251, %c0_252] : memref<2x10x256xf32, #tpu.memory_space<vmem>>, vector<2x8x256xf32>
    %312 = vector.shape_cast %311 : vector<2x8x256xf32> to vector<16x256xf32>
    %c16 = arith.constant 16 : index
    %c0_253 = arith.constant 0 : index
    %c0_254 = arith.constant 0 : index
    %313 = vector.load %arg2[%c16, %c0_253, %c0_254] : memref<24x256x256xf32, #tpu.memory_space<vmem>>, vector<1x256x256xf32>
    %314 = vector.shape_cast %313 : vector<1x256x256xf32> to vector<256x256xf32>
    %cst_255 = arith.constant dense<0.000000e+00> : vector<16x256xf32>
    %315 = tpu.matmul %312, %314, %cst_255 {dimension_numbers = #tpu.dot_dimension_numbers<[1], [0], [0], [1], [0, 0, 1, 1], [], []>} : vector<16x256xf32>, vector<256x256xf32>, vector<16x256xf32> -> vector<16x256xf32>
    %316 = arith.addf %310, %315 : vector<16x256xf32>
    %c0_256 = arith.constant 0 : index
    %c2_257 = arith.constant 2 : index
    %c0_258 = arith.constant 0 : index
    %317 = vector.load %arg28[%c0_256, %c2_257, %c0_258] : memref<2x10x256xf32, #tpu.memory_space<vmem>>, vector<2x8x256xf32>
    %318 = vector.shape_cast %317 : vector<2x8x256xf32> to vector<16x256xf32>
    %c17 = arith.constant 17 : index
    %c0_259 = arith.constant 0 : index
    %c0_260 = arith.constant 0 : index
    %319 = vector.load %arg2[%c17, %c0_259, %c0_260] : memref<24x256x256xf32, #tpu.memory_space<vmem>>, vector<1x256x256xf32>
    %320 = vector.shape_cast %319 : vector<1x256x256xf32> to vector<256x256xf32>
    %cst_261 = arith.constant dense<0.000000e+00> : vector<16x256xf32>
    %321 = tpu.matmul %318, %320, %cst_261 {dimension_numbers = #tpu.dot_dimension_numbers<[1], [0], [0], [1], [0, 0, 1, 1], [], []>} : vector<16x256xf32>, vector<256x256xf32>, vector<16x256xf32> -> vector<16x256xf32>
    %322 = arith.addf %316, %321 : vector<16x256xf32>
    %cst_262 = arith.constant dense<0.000000e+00> : vector<256xf32>
    %323 = vector.multi_reduction <add>, %322, %cst_262 [0] : vector<16x256xf32> to vector<256xf32>
    %324 = vector.shape_cast %323 : vector<256xf32> to vector<1x256xf32>
    %325 = arith.mulf %322, %322 : vector<16x256xf32>
    %cst_263 = arith.constant dense<0.000000e+00> : vector<256xf32>
    %326 = vector.multi_reduction <add>, %325, %cst_263 [0] : vector<16x256xf32> to vector<256xf32>
    %327 = vector.shape_cast %326 : vector<256xf32> to vector<1x256xf32>
    %c0_264 = arith.constant 0 : index
    %c0_265 = arith.constant 0 : index
    %328 = vector.load %arg5[%c0_264, %c0_265] : memref<256x256xf32, #tpu.memory_space<vmem>>, vector<256x256xf32>
    %cst_266 = arith.constant dense<0.000000e+00> : vector<1x256xf32>
    %329 = tpu.matmul %324, %328, %cst_266 {dimension_numbers = #tpu.dot_dimension_numbers<[1], [0], [0], [1], [0, 0, 1, 1], [], []>} : vector<1x256xf32>, vector<256x256xf32>, vector<1x256xf32> -> vector<1x256xf32>
    %c0_267 = arith.constant 0 : index
    %c0_268 = arith.constant 0 : index
    %330 = vector.load %arg5[%c0_267, %c0_268] : memref<256x256xf32, #tpu.memory_space<vmem>>, vector<256x256xf32>
    %cst_269 = arith.constant dense<0.000000e+00> : vector<1x256xf32>
    %331 = tpu.matmul %327, %330, %cst_269 {dimension_numbers = #tpu.dot_dimension_numbers<[1], [0], [0], [1], [0, 0, 1, 1], [], []>} : vector<1x256xf32>, vector<256x256xf32>, vector<1x256xf32> -> vector<1x256xf32>
    %332 = arith.mulf %329, %329 : vector<1x256xf32>
    %333 = arith.subf %331, %332 : vector<1x256xf32>
    %334 = vector.broadcast %329 : vector<1x256xf32> to vector<16x256xf32>
    %335 = arith.subf %322, %334 : vector<16x256xf32>
    %cst_270 = arith.constant 9.99999974E-6 : f32
    %336 = vector.broadcast %cst_270 : f32 to vector<1x256xf32>
    %337 = arith.addf %333, %336 : vector<1x256xf32>
    %338 = math.rsqrt %337 : vector<1x256xf32>
    %339 = vector.broadcast %338 : vector<1x256xf32> to vector<16x256xf32>
    %340 = arith.mulf %335, %339 : vector<16x256xf32>
    %c6_271 = arith.constant 6 : index
    %c0_272 = arith.constant 0 : index
    %341 = vector.load %arg3[%c6_271, %c0_272] : memref<9x256xf32, #tpu.memory_space<vmem>>, vector<1x256xf32>
    %342 = vector.broadcast %341 : vector<1x256xf32> to vector<16x256xf32>
    %343 = arith.mulf %340, %342 : vector<16x256xf32>
    %c6_273 = arith.constant 6 : index
    %c0_274 = arith.constant 0 : index
    %344 = vector.load %arg4[%c6_273, %c0_274] : memref<9x256xf32, #tpu.memory_space<vmem>>, vector<1x256xf32>
    %345 = vector.broadcast %344 : vector<1x256xf32> to vector<16x256xf32>
    %346 = arith.addf %343, %345 : vector<16x256xf32>
    %347 = arith.addf %346, %254 : vector<16x256xf32>
    %cst_275 = arith.constant 0.000000e+00 : f32
    %348 = vector.broadcast %cst_275 : f32 to vector<16x256xf32>
    %349 = arith.maximumf %347, %348 : vector<16x256xf32>
    %350 = vector.shape_cast %349 : vector<16x256xf32> to vector<2x8x256xf32>
    %c0_276 = arith.constant 0 : index
    %c1_277 = arith.constant 1 : index
    %c0_278 = arith.constant 0 : index
    %351 = vector.load %arg28[%c0_276, %c1_277, %c0_278] : memref<2x10x256xf32, #tpu.memory_space<vmem>>, vector<2x8x256xf32>
    tpu.vector_store %arg28[%c0_276, %c1_277, %c0_278], %350 {strides = array<i32>} : memref<2x10x256xf32, #tpu.memory_space<vmem>>, vector<2x8x256xf32>,
    %c0_279 = arith.constant 0 : index
    %c0_280 = arith.constant 0 : index
    %c0_281 = arith.constant 0 : index
    %352 = vector.load %arg28[%c0_279, %c0_280, %c0_281] : memref<2x10x256xf32, #tpu.memory_space<vmem>>, vector<2x8x256xf32>
    %353 = vector.shape_cast %352 : vector<2x8x256xf32> to vector<16x256xf32>
    %c18 = arith.constant 18 : index
    %c0_282 = arith.constant 0 : index
    %c0_283 = arith.constant 0 : index
    %354 = vector.load %arg2[%c18, %c0_282, %c0_283] : memref<24x256x256xf32, #tpu.memory_space<vmem>>, vector<1x256x256xf32>
    %355 = vector.shape_cast %354 : vector<1x256x256xf32> to vector<256x256xf32>
    %cst_284 = arith.constant dense<0.000000e+00> : vector<16x256xf32>
    %356 = tpu.matmul %353, %355, %cst_284 {dimension_numbers = #tpu.dot_dimension_numbers<[1], [0], [0], [1], [0, 0, 1, 1], [], []>} : vector<16x256xf32>, vector<256x256xf32>, vector<16x256xf32> -> vector<16x256xf32>
    %c0_285 = arith.constant 0 : index
    %c1_286 = arith.constant 1 : index
    %c0_287 = arith.constant 0 : index
    %357 = vector.load %arg28[%c0_285, %c1_286, %c0_287] : memref<2x10x256xf32, #tpu.memory_space<vmem>>, vector<2x8x256xf32>
    %358 = vector.shape_cast %357 : vector<2x8x256xf32> to vector<16x256xf32>
    %c19 = arith.constant 19 : index
    %c0_288 = arith.constant 0 : index
    %c0_289 = arith.constant 0 : index
    %359 = vector.load %arg2[%c19, %c0_288, %c0_289] : memref<24x256x256xf32, #tpu.memory_space<vmem>>, vector<1x256x256xf32>
    %360 = vector.shape_cast %359 : vector<1x256x256xf32> to vector<256x256xf32>
    %cst_290 = arith.constant dense<0.000000e+00> : vector<16x256xf32>
    %361 = tpu.matmul %358, %360, %cst_290 {dimension_numbers = #tpu.dot_dimension_numbers<[1], [0], [0], [1], [0, 0, 1, 1], [], []>} : vector<16x256xf32>, vector<256x256xf32>, vector<16x256xf32> -> vector<16x256xf32>
    %362 = arith.addf %356, %361 : vector<16x256xf32>
    %c0_291 = arith.constant 0 : index
    %c2_292 = arith.constant 2 : index
    %c0_293 = arith.constant 0 : index
    %363 = vector.load %arg28[%c0_291, %c2_292, %c0_293] : memref<2x10x256xf32, #tpu.memory_space<vmem>>, vector<2x8x256xf32>
    %364 = vector.shape_cast %363 : vector<2x8x256xf32> to vector<16x256xf32>
    %c20 = arith.constant 20 : index
    %c0_294 = arith.constant 0 : index
    %c0_295 = arith.constant 0 : index
    %365 = vector.load %arg2[%c20, %c0_294, %c0_295] : memref<24x256x256xf32, #tpu.memory_space<vmem>>, vector<1x256x256xf32>
    %366 = vector.shape_cast %365 : vector<1x256x256xf32> to vector<256x256xf32>
    %cst_296 = arith.constant dense<0.000000e+00> : vector<16x256xf32>
    %367 = tpu.matmul %364, %366, %cst_296 {dimension_numbers = #tpu.dot_dimension_numbers<[1], [0], [0], [1], [0, 0, 1, 1], [], []>} : vector<16x256xf32>, vector<256x256xf32>, vector<16x256xf32> -> vector<16x256xf32>
    %368 = arith.addf %362, %367 : vector<16x256xf32>
    %cst_297 = arith.constant dense<0.000000e+00> : vector<256xf32>
    %369 = vector.multi_reduction <add>, %368, %cst_297 [0] : vector<16x256xf32> to vector<256xf32>
    %370 = vector.shape_cast %369 : vector<256xf32> to vector<1x256xf32>
    %371 = arith.mulf %368, %368 : vector<16x256xf32>
    %cst_298 = arith.constant dense<0.000000e+00> : vector<256xf32>
    %372 = vector.multi_reduction <add>, %371, %cst_298 [0] : vector<16x256xf32> to vector<256xf32>
    %373 = vector.shape_cast %372 : vector<256xf32> to vector<1x256xf32>
    %c0_299 = arith.constant 0 : index
    %c0_300 = arith.constant 0 : index
    %374 = vector.load %arg5[%c0_299, %c0_300] : memref<256x256xf32, #tpu.memory_space<vmem>>, vector<256x256xf32>
    %cst_301 = arith.constant dense<0.000000e+00> : vector<1x256xf32>
    %375 = tpu.matmul %370, %374, %cst_301 {dimension_numbers = #tpu.dot_dimension_numbers<[1], [0], [0], [1], [0, 0, 1, 1], [], []>} : vector<1x256xf32>, vector<256x256xf32>, vector<1x256xf32> -> vector<1x256xf32>
    %c0_302 = arith.constant 0 : index
    %c0_303 = arith.constant 0 : index
    %376 = vector.load %arg5[%c0_302, %c0_303] : memref<256x256xf32, #tpu.memory_space<vmem>>, vector<256x256xf32>
    %cst_304 = arith.constant dense<0.000000e+00> : vector<1x256xf32>
    %377 = tpu.matmul %373, %376, %cst_304 {dimension_numbers = #tpu.dot_dimension_numbers<[1], [0], [0], [1], [0, 0, 1, 1], [], []>} : vector<1x256xf32>, vector<256x256xf32>, vector<1x256xf32> -> vector<1x256xf32>
    %378 = arith.mulf %375, %375 : vector<1x256xf32>
    %379 = arith.subf %377, %378 : vector<1x256xf32>
    %380 = vector.broadcast %375 : vector<1x256xf32> to vector<16x256xf32>
    %381 = arith.subf %368, %380 : vector<16x256xf32>
    %cst_305 = arith.constant 9.99999974E-6 : f32
    %382 = vector.broadcast %cst_305 : f32 to vector<1x256xf32>
    %383 = arith.addf %379, %382 : vector<1x256xf32>
    %384 = math.rsqrt %383 : vector<1x256xf32>
    %385 = vector.broadcast %384 : vector<1x256xf32> to vector<16x256xf32>
    %386 = arith.mulf %381, %385 : vector<16x256xf32>
    %c7_306 = arith.constant 7 : index
    %c0_307 = arith.constant 0 : index
    %387 = vector.load %arg3[%c7_306, %c0_307] : memref<9x256xf32, #tpu.memory_space<vmem>>, vector<1x256xf32>
    %388 = vector.broadcast %387 : vector<1x256xf32> to vector<16x256xf32>
    %389 = arith.mulf %386, %388 : vector<16x256xf32>
    %c7_308 = arith.constant 7 : index
    %c0_309 = arith.constant 0 : index
    %390 = vector.load %arg4[%c7_308, %c0_309] : memref<9x256xf32, #tpu.memory_space<vmem>>, vector<1x256xf32>
    %391 = vector.broadcast %390 : vector<1x256xf32> to vector<16x256xf32>
    %392 = arith.addf %389, %391 : vector<16x256xf32>
    %c7_310 = arith.constant 7 : index
    %393 = memref.load %arg23[%c7_310] : memref<9xf32, #tpu.memory_space<smem>>
    %cst_311 = arith.constant 0.000000e+00 : f32
    %394 = vector.broadcast %cst_311 : f32 to vector<16x256xf32>
    %395 = arith.cmpf oge, %392, %394 : vector<16x256xf32>
    %396 = vector.broadcast %393 : f32 to vector<16x256xf32>
    %397 = arith.mulf %396, %392 : vector<16x256xf32>
    %398 = arith.select %395, %392, %397 : vector<16x256xi1>, vector<16x256xf32>
    %399 = vector.shape_cast %398 : vector<16x256xf32> to vector<2x8x256xf32>
    %c0_312 = arith.constant 0 : index
    %c1_313 = arith.constant 1 : index
    %c0_314 = arith.constant 0 : index
    %400 = vector.load %arg28[%c0_312, %c1_313, %c0_314] : memref<2x10x256xf32, #tpu.memory_space<vmem>>, vector<2x8x256xf32>
    tpu.vector_store %arg28[%c0_312, %c1_313, %c0_314], %399 {strides = array<i32>} : memref<2x10x256xf32, #tpu.memory_space<vmem>>, vector<2x8x256xf32>,
    %c0_315 = arith.constant 0 : index
    %c0_316 = arith.constant 0 : index
    %c0_317 = arith.constant 0 : index
    %401 = vector.load %arg28[%c0_315, %c0_316, %c0_317] : memref<2x10x256xf32, #tpu.memory_space<vmem>>, vector<2x8x256xf32>
    %402 = vector.shape_cast %401 : vector<2x8x256xf32> to vector<16x256xf32>
    %c21 = arith.constant 21 : index
    %c0_318 = arith.constant 0 : index
    %c0_319 = arith.constant 0 : index
    %403 = vector.load %arg2[%c21, %c0_318, %c0_319] : memref<24x256x256xf32, #tpu.memory_space<vmem>>, vector<1x256x256xf32>
    %404 = vector.shape_cast %403 : vector<1x256x256xf32> to vector<256x256xf32>
    %cst_320 = arith.constant dense<0.000000e+00> : vector<16x256xf32>
    %405 = tpu.matmul %402, %404, %cst_320 {dimension_numbers = #tpu.dot_dimension_numbers<[1], [0], [0], [1], [0, 0, 1, 1], [], []>} : vector<16x256xf32>, vector<256x256xf32>, vector<16x256xf32> -> vector<16x256xf32>
    %c0_321 = arith.constant 0 : index
    %c1_322 = arith.constant 1 : index
    %c0_323 = arith.constant 0 : index
    %406 = vector.load %arg28[%c0_321, %c1_322, %c0_323] : memref<2x10x256xf32, #tpu.memory_space<vmem>>, vector<2x8x256xf32>
    %407 = vector.shape_cast %406 : vector<2x8x256xf32> to vector<16x256xf32>
    %c22 = arith.constant 22 : index
    %c0_324 = arith.constant 0 : index
    %c0_325 = arith.constant 0 : index
    %408 = vector.load %arg2[%c22, %c0_324, %c0_325] : memref<24x256x256xf32, #tpu.memory_space<vmem>>, vector<1x256x256xf32>
    %409 = vector.shape_cast %408 : vector<1x256x256xf32> to vector<256x256xf32>
    %cst_326 = arith.constant dense<0.000000e+00> : vector<16x256xf32>
    %410 = tpu.matmul %407, %409, %cst_326 {dimension_numbers = #tpu.dot_dimension_numbers<[1], [0], [0], [1], [0, 0, 1, 1], [], []>} : vector<16x256xf32>, vector<256x256xf32>, vector<16x256xf32> -> vector<16x256xf32>
    %411 = arith.addf %405, %410 : vector<16x256xf32>
    %c0_327 = arith.constant 0 : index
    %c2_328 = arith.constant 2 : index
    %c0_329 = arith.constant 0 : index
    %412 = vector.load %arg28[%c0_327, %c2_328, %c0_329] : memref<2x10x256xf32, #tpu.memory_space<vmem>>, vector<2x8x256xf32>
    %413 = vector.shape_cast %412 : vector<2x8x256xf32> to vector<16x256xf32>
    %c23 = arith.constant 23 : index
    %c0_330 = arith.constant 0 : index
    %c0_331 = arith.constant 0 : index
    %414 = vector.load %arg2[%c23, %c0_330, %c0_331] : memref<24x256x256xf32, #tpu.memory_space<vmem>>, vector<1x256x256xf32>
    %415 = vector.shape_cast %414 : vector<1x256x256xf32> to vector<256x256xf32>
    %cst_332 = arith.constant dense<0.000000e+00> : vector<16x256xf32>
    %416 = tpu.matmul %413, %415, %cst_332 {dimension_numbers = #tpu.dot_dimension_numbers<[1], [0], [0], [1], [0, 0, 1, 1], [], []>} : vector<16x256xf32>, vector<256x256xf32>, vector<16x256xf32> -> vector<16x256xf32>
    %417 = arith.addf %411, %416 : vector<16x256xf32>
    %cst_333 = arith.constant dense<0.000000e+00> : vector<256xf32>
    %418 = vector.multi_reduction <add>, %417, %cst_333 [0] : vector<16x256xf32> to vector<256xf32>
    %419 = vector.shape_cast %418 : vector<256xf32> to vector<1x256xf32>
    %420 = arith.mulf %417, %417 : vector<16x256xf32>
    %cst_334 = arith.constant dense<0.000000e+00> : vector<256xf32>
    %421 = vector.multi_reduction <add>, %420, %cst_334 [0] : vector<16x256xf32> to vector<256xf32>
    %422 = vector.shape_cast %421 : vector<256xf32> to vector<1x256xf32>
    %c0_335 = arith.constant 0 : index
    %c0_336 = arith.constant 0 : index
    %423 = vector.load %arg5[%c0_335, %c0_336] : memref<256x256xf32, #tpu.memory_space<vmem>>, vector<256x256xf32>
    %cst_337 = arith.constant dense<0.000000e+00> : vector<1x256xf32>
    %424 = tpu.matmul %419, %423, %cst_337 {dimension_numbers = #tpu.dot_dimension_numbers<[1], [0], [0], [1], [0, 0, 1, 1], [], []>} : vector<1x256xf32>, vector<256x256xf32>, vector<1x256xf32> -> vector<1x256xf32>
    %c0_338 = arith.constant 0 : index
    %c0_339 = arith.constant 0 : index
    %425 = vector.load %arg5[%c0_338, %c0_339] : memref<256x256xf32, #tpu.memory_space<vmem>>, vector<256x256xf32>
    %cst_340 = arith.constant dense<0.000000e+00> : vector<1x256xf32>
    %426 = tpu.matmul %422, %425, %cst_340 {dimension_numbers = #tpu.dot_dimension_numbers<[1], [0], [0], [1], [0, 0, 1, 1], [], []>} : vector<1x256xf32>, vector<256x256xf32>, vector<1x256xf32> -> vector<1x256xf32>
    %427 = arith.mulf %424, %424 : vector<1x256xf32>
    %428 = arith.subf %426, %427 : vector<1x256xf32>
    %429 = vector.broadcast %424 : vector<1x256xf32> to vector<16x256xf32>
    %430 = arith.subf %417, %429 : vector<16x256xf32>
    %cst_341 = arith.constant 9.99999974E-6 : f32
    %431 = vector.broadcast %cst_341 : f32 to vector<1x256xf32>
    %432 = arith.addf %428, %431 : vector<1x256xf32>
    %433 = math.rsqrt %432 : vector<1x256xf32>
    %434 = vector.broadcast %433 : vector<1x256xf32> to vector<16x256xf32>
    %435 = arith.mulf %430, %434 : vector<16x256xf32>
    %c8_342 = arith.constant 8 : index
    %c0_343 = arith.constant 0 : index
    %436 = vector.load %arg3[%c8_342, %c0_343] : memref<9x256xf32, #tpu.memory_space<vmem>>, vector<1x256xf32>
    %437 = vector.broadcast %436 : vector<1x256xf32> to vector<16x256xf32>
    %438 = arith.mulf %435, %437 : vector<16x256xf32>
    %c8_344 = arith.constant 8 : index
    %c0_345 = arith.constant 0 : index
    %439 = vector.load %arg4[%c8_344, %c0_345] : memref<9x256xf32, #tpu.memory_space<vmem>>, vector<1x256xf32>
    %440 = vector.broadcast %439 : vector<1x256xf32> to vector<16x256xf32>
    %441 = arith.addf %438, %440 : vector<16x256xf32>
    %442 = arith.addf %441, %349 : vector<16x256xf32>
    %cst_346 = arith.constant 0.000000e+00 : f32
    %443 = vector.broadcast %cst_346 : f32 to vector<16x256xf32>
    %444 = arith.maximumf %442, %443 : vector<16x256xf32>
    %c0_347 = arith.constant 0 : index
    %c0_348 = arith.constant 0 : index
    %445 = vector.load %arg6[%c0_347, %c0_348] : memref<256x8xf32, #tpu.memory_space<vmem>>, vector<256x8xf32>
    %cst_349 = arith.constant dense<0.000000e+00> : vector<16x8xf32>
    %446 = tpu.matmul %444, %445, %cst_349 {dimension_numbers = #tpu.dot_dimension_numbers<[1], [0], [0], [1], [0, 0, 1, 1], [], []>} : vector<16x256xf32>, vector<256x8xf32>, vector<16x8xf32> -> vector<16x8xf32>
    %cst_350 = arith.constant dense<0.000000e+00> : vector<8xf32>
    %447 = vector.multi_reduction <add>, %446, %cst_350 [0] : vector<16x8xf32> to vector<8xf32>
    %448 = vector.shape_cast %447 : vector<8xf32> to vector<1x8xf32>
    %449 = arith.mulf %446, %446 : vector<16x8xf32>
    %cst_351 = arith.constant dense<0.000000e+00> : vector<8xf32>
    %450 = vector.multi_reduction <add>, %449, %cst_351 [0] : vector<16x8xf32> to vector<8xf32>
    %451 = vector.shape_cast %450 : vector<8xf32> to vector<1x8xf32>
    %c0_352 = arith.constant 0 : index
    %c0_353 = arith.constant 0 : index
    %452 = vector.load %arg7[%c0_352, %c0_353] : memref<8x8xf32, #tpu.memory_space<vmem>>, vector<8x8xf32>
    %cst_354 = arith.constant dense<0.000000e+00> : vector<1x8xf32>
    %453 = tpu.matmul %448, %452, %cst_354 {dimension_numbers = #tpu.dot_dimension_numbers<[1], [0], [0], [1], [0, 0, 1, 1], [], []>} : vector<1x8xf32>, vector<8x8xf32>, vector<1x8xf32> -> vector<1x8xf32>
    %c0_355 = arith.constant 0 : index
    %c0_356 = arith.constant 0 : index
    %454 = vector.load %arg7[%c0_355, %c0_356] : memref<8x8xf32, #tpu.memory_space<vmem>>, vector<8x8xf32>
    %cst_357 = arith.constant dense<0.000000e+00> : vector<1x8xf32>
    %455 = tpu.matmul %451, %454, %cst_357 {dimension_numbers = #tpu.dot_dimension_numbers<[1], [0], [0], [1], [0, 0, 1, 1], [], []>} : vector<1x8xf32>, vector<8x8xf32>, vector<1x8xf32> -> vector<1x8xf32>
    %456 = arith.mulf %453, %453 : vector<1x8xf32>
    %457 = arith.subf %455, %456 : vector<1x8xf32>
    %458 = vector.broadcast %453 : vector<1x8xf32> to vector<16x8xf32>
    %459 = arith.subf %446, %458 : vector<16x8xf32>
    %cst_358 = arith.constant 9.99999974E-6 : f32
    %460 = vector.broadcast %cst_358 : f32 to vector<1x8xf32>
    %461 = arith.addf %457, %460 : vector<1x8xf32>
    %462 = math.rsqrt %461 : vector<1x8xf32>
    %463 = vector.broadcast %462 : vector<1x8xf32> to vector<16x8xf32>
    %464 = arith.mulf %459, %463 : vector<16x8xf32>
    %c0_359 = arith.constant 0 : index
    %465 = memref.load %arg24[%c0_359] : memref<4xf32, #tpu.memory_space<smem>>
    %466 = vector.broadcast %465 : f32 to vector<16x8xf32>
    %467 = arith.mulf %464, %466 : vector<16x8xf32>
    %c1_360 = arith.constant 1 : index
    %468 = memref.load %arg24[%c1_360] : memref<4xf32, #tpu.memory_space<smem>>
    %469 = vector.broadcast %468 : f32 to vector<16x8xf32>
    %470 = arith.addf %467, %469 : vector<16x8xf32>
    %cst_361 = arith.constant 0.000000e+00 : f32
    %471 = vector.broadcast %cst_361 : f32 to vector<16x8xf32>
    %472 = arith.cmpf oge, %470, %471 : vector<16x8xf32>
    %c2_362 = arith.constant 2 : index
    %473 = memref.load %arg24[%c2_362] : memref<4xf32, #tpu.memory_space<smem>>
    %474 = vector.broadcast %473 : f32 to vector<16x8xf32>
    %475 = arith.mulf %474, %470 : vector<16x8xf32>
    %476 = arith.select %472, %470, %475 : vector<16x8xi1>, vector<16x8xf32>
    %c0_363 = arith.constant 0 : index
    %c0_364 = arith.constant 0 : index
    %477 = vector.load %arg12[%c0_363, %c0_364] : memref<8x64xf32, #tpu.memory_space<vmem>>, vector<8x64xf32>
    %cst_365 = arith.constant dense<0.000000e+00> : vector<16x64xf32>
    %478 = tpu.matmul %476, %477, %cst_365 {dimension_numbers = #tpu.dot_dimension_numbers<[1], [0], [0], [1], [0, 0, 1, 1], [], []>} : vector<16x8xf32>, vector<8x64xf32>, vector<16x64xf32> -> vector<16x64xf32>
    %c0_366 = arith.constant 0 : index
    %c0_367 = arith.constant 0 : index
    %479 = vector.load %arg13[%c0_366, %c0_367] : memref<16x64xf32, #tpu.memory_space<vmem>>, vector<16x64xf32>
    %480 = arith.mulf %478, %479 : vector<16x64xf32>
    %c0_368 = arith.constant 0 : index
    %c0_369 = arith.constant 0 : index
    %481 = vector.load %arg16[%c0_368, %c0_369] : memref<2x16xf32, #tpu.memory_space<vmem>>, vector<2x16xf32>
    %c0_370 = arith.constant 0 : index
    %c0_371 = arith.constant 0 : index
    %482 = vector.load %arg17[%c0_370, %c0_371] : memref<64x128xf32, #tpu.memory_space<vmem>>, vector<64x128xf32>
    %cst_372 = arith.constant dense<0.000000e+00> : vector<16x128xf32>
    %483 = tpu.matmul %480, %482, %cst_372 {dimension_numbers = #tpu.dot_dimension_numbers<[1], [0], [0], [1], [0, 0, 1, 1], [], []>} : vector<16x64xf32>, vector<64x128xf32>, vector<16x128xf32> -> vector<16x128xf32>
    %cst_373 = arith.constant dense<0.000000e+00> : vector<2x128xf32>
    %484 = tpu.matmul %481, %483, %cst_373 {dimension_numbers = #tpu.dot_dimension_numbers<[1], [0], [0], [1], [0, 0, 1, 1], [], []>} : vector<2x16xf32>, vector<16x128xf32>, vector<2x128xf32> -> vector<2x128xf32>
    %c0_374 = arith.constant 0 : index
    %c0_375 = arith.constant 0 : index
    %485 = vector.load %arg18[%c0_374, %c0_375] : memref<1x128xf32, #tpu.memory_space<vmem>>, vector<1x128xf32>
    %486 = vector.broadcast %485 : vector<1x128xf32> to vector<2x128xf32>
    %487 = arith.addf %484, %486 : vector<2x128xf32>
    %cst_376 = arith.constant 0.000000e+00 : f32
    %488 = vector.broadcast %cst_376 : f32 to vector<2x128xf32>
    %489 = arith.maximumf %487, %488 : vector<2x128xf32>
    %c0_377 = arith.constant 0 : index
    %c0_378 = arith.constant 0 : index
    %490 = vector.load %arg19[%c0_377, %c0_378] : memref<128x1xf32, #tpu.memory_space<vmem>>, vector<128x1xf32>
    %cst_379 = arith.constant dense<0.000000e+00> : vector<2x1xf32>
    %491 = tpu.matmul %489, %490, %cst_379 {dimension_numbers = #tpu.dot_dimension_numbers<[1], [0], [0], [1], [0, 0, 1, 1], [], []>} : vector<2x128xf32>, vector<128x1xf32>, vector<2x1xf32> -> vector<2x1xf32>
    %c0_380 = arith.constant 0 : index
    %c0_381 = arith.constant 0 : index
    %492 = vector.load %arg20[%c0_380, %c0_381] : memref<1x1xf32, #tpu.memory_space<vmem>>, vector<1x1xf32>
    %493 = vector.broadcast %492 : vector<1x1xf32> to vector<2x1xf32>
    %494 = arith.addf %491, %493 : vector<2x1xf32>
    %495 = math.tanh %494 : vector<2x1xf32>
    %c0_382 = arith.constant 0 : index
    %c0_383 = arith.constant 0 : index
    %496 = vector.load %arg25[%c0_382, %c0_383] : memref<2x1xf32, #tpu.memory_space<vmem>>, vector<2x1xf32>
    tpu.vector_store %arg25[%c0_382, %c0_383], %495 {strides = array<i32>} : memref<2x1xf32, #tpu.memory_space<vmem>>, vector<2x1xf32>,
    %c0_384 = arith.constant 0 : index
    %c0_385 = arith.constant 0 : index
    %497 = vector.load %arg8[%c0_384, %c0_385] : memref<256x16xf32, #tpu.memory_space<vmem>>, vector<256x16xf32>
    %cst_386 = arith.constant dense<0.000000e+00> : vector<16x16xf32>
    %498 = tpu.matmul %444, %497, %cst_386 {dimension_numbers = #tpu.dot_dimension_numbers<[1], [0], [0], [1], [0, 0, 1, 1], [], []>} : vector<16x256xf32>, vector<256x16xf32>, vector<16x16xf32> -> vector<16x16xf32>
    %cst_387 = arith.constant dense<0.000000e+00> : vector<16xf32>
    %499 = vector.multi_reduction <add>, %498, %cst_387 [0] : vector<16x16xf32> to vector<16xf32>
    %500 = vector.shape_cast %499 : vector<16xf32> to vector<1x16xf32>
    %501 = arith.mulf %498, %498 : vector<16x16xf32>
    %cst_388 = arith.constant dense<0.000000e+00> : vector<16xf32>
    %502 = vector.multi_reduction <add>, %501, %cst_388 [0] : vector<16x16xf32> to vector<16xf32>
    %503 = vector.shape_cast %502 : vector<16xf32> to vector<1x16xf32>
    %c0_389 = arith.constant 0 : index
    %c0_390 = arith.constant 0 : index
    %504 = vector.load %arg9[%c0_389, %c0_390] : memref<16x16xf32, #tpu.memory_space<vmem>>, vector<16x16xf32>
    %cst_391 = arith.constant dense<0.000000e+00> : vector<1x16xf32>
    %505 = tpu.matmul %500, %504, %cst_391 {dimension_numbers = #tpu.dot_dimension_numbers<[1], [0], [0], [1], [0, 0, 1, 1], [], []>} : vector<1x16xf32>, vector<16x16xf32>, vector<1x16xf32> -> vector<1x16xf32>
    %c0_392 = arith.constant 0 : index
    %c0_393 = arith.constant 0 : index
    %506 = vector.load %arg9[%c0_392, %c0_393] : memref<16x16xf32, #tpu.memory_space<vmem>>, vector<16x16xf32>
    %cst_394 = arith.constant dense<0.000000e+00> : vector<1x16xf32>
    %507 = tpu.matmul %503, %506, %cst_394 {dimension_numbers = #tpu.dot_dimension_numbers<[1], [0], [0], [1], [0, 0, 1, 1], [], []>} : vector<1x16xf32>, vector<16x16xf32>, vector<1x16xf32> -> vector<1x16xf32>
    %508 = arith.mulf %505, %505 : vector<1x16xf32>
    %509 = arith.subf %507, %508 : vector<1x16xf32>
    %510 = vector.broadcast %505 : vector<1x16xf32> to vector<16x16xf32>
    %511 = arith.subf %498, %510 : vector<16x16xf32>
    %cst_395 = arith.constant 9.99999974E-6 : f32
    %512 = vector.broadcast %cst_395 : f32 to vector<1x16xf32>
    %513 = arith.addf %509, %512 : vector<1x16xf32>
    %514 = math.rsqrt %513 : vector<1x16xf32>
    %515 = vector.broadcast %514 : vector<1x16xf32> to vector<16x16xf32>
    %516 = arith.mulf %511, %515 : vector<16x16xf32>
    %c0_396 = arith.constant 0 : index
    %c0_397 = arith.constant 0 : index
    %517 = vector.load %arg10[%c0_396, %c0_397] : memref<1x16xf32, #tpu.memory_space<vmem>>, vector<1x16xf32>
    %518 = vector.broadcast %517 : vector<1x16xf32> to vector<16x16xf32>
    %519 = arith.mulf %516, %518 : vector<16x16xf32>
    %c0_398 = arith.constant 0 : index
    %c0_399 = arith.constant 0 : index
    %520 = vector.load %arg11[%c0_398, %c0_399] : memref<1x16xf32, #tpu.memory_space<vmem>>, vector<1x16xf32>
    %521 = vector.broadcast %520 : vector<1x16xf32> to vector<16x16xf32>
    %522 = arith.addf %519, %521 : vector<16x16xf32>
    %cst_400 = arith.constant 0.000000e+00 : f32
    %523 = vector.broadcast %cst_400 : f32 to vector<16x16xf32>
    %524 = arith.cmpf oge, %522, %523 : vector<16x16xf32>
    %c3_401 = arith.constant 3 : index
    %525 = memref.load %arg24[%c3_401] : memref<4xf32, #tpu.memory_space<smem>>
    %526 = vector.broadcast %525 : f32 to vector<16x16xf32>
    %527 = arith.mulf %526, %522 : vector<16x16xf32>
    %528 = arith.select %524, %522, %527 : vector<16x16xi1>, vector<16x16xf32>
    %c0_402 = arith.constant 0 : index
    %c0_403 = arith.constant 0 : index
    %529 = vector.load %arg14[%c0_402, %c0_403] : memref<16x128xf32, #tpu.memory_space<vmem>>, vector<16x128xf32>
    %cst_404 = arith.constant dense<0.000000e+00> : vector<16x128xf32>
    %530 = tpu.matmul %528, %529, %cst_404 {dimension_numbers = #tpu.dot_dimension_numbers<[1], [0], [0], [1], [0, 0, 1, 1], [], []>} : vector<16x16xf32>, vector<16x128xf32>, vector<16x128xf32> -> vector<16x128xf32>
    %c0_405 = arith.constant 0 : index
    %c0_406 = arith.constant 0 : index
    %531 = vector.load %arg15[%c0_405, %c0_406] : memref<16x128xf32, #tpu.memory_space<vmem>>, vector<16x128xf32>
    %532 = arith.mulf %530, %531 : vector<16x128xf32>
    %c0_407 = arith.constant 0 : index
    %c0_408 = arith.constant 0 : index
    %533 = vector.load %arg16[%c0_407, %c0_408] : memref<2x16xf32, #tpu.memory_space<vmem>>, vector<2x16xf32>
    %c0_409 = arith.constant 0 : index
    %c0_410 = arith.constant 0 : index
    %534 = vector.load %arg21[%c0_409, %c0_410] : memref<128x65xf32, #tpu.memory_space<vmem>>, vector<128x65xf32>
    %cst_411 = arith.constant dense<0.000000e+00> : vector<16x65xf32>
    %535 = tpu.matmul %532, %534, %cst_411 {dimension_numbers = #tpu.dot_dimension_numbers<[1], [0], [0], [1], [0, 0, 1, 1], [], []>} : vector<16x128xf32>, vector<128x65xf32>, vector<16x65xf32> -> vector<16x65xf32>
    %cst_412 = arith.constant dense<0.000000e+00> : vector<2x65xf32>
    %536 = tpu.matmul %533, %535, %cst_412 {dimension_numbers = #tpu.dot_dimension_numbers<[1], [0], [0], [1], [0, 0, 1, 1], [], []>} : vector<2x16xf32>, vector<16x65xf32>, vector<2x65xf32> -> vector<2x65xf32>
    %c0_413 = arith.constant 0 : index
    %c0_414 = arith.constant 0 : index
    %537 = vector.load %arg22[%c0_413, %c0_414] : memref<1x65xf32, #tpu.memory_space<vmem>>, vector<1x65xf32>
    %538 = vector.broadcast %537 : vector<1x65xf32> to vector<2x65xf32>
    %539 = arith.addf %536, %538 : vector<2x65xf32>
    %c0_415 = arith.constant 0 : index
    %c0_416 = arith.constant 0 : index
    %540 = vector.load %arg26[%c0_415, %c0_416] : memref<2x65xf32, #tpu.memory_space<vmem>>, vector<2x65xf32>
    tpu.vector_store %arg26[%c0_415, %c0_416], %539 {strides = array<i32>} : memref<2x65xf32, #tpu.memory_space<vmem>>, vector<2x65xf32>,
    return
  }
}

</mosaic_0001>

<llo_original>
// kernel: alphazero_forward.1
$region0: #{alphazero_forward.1}
  #allocation0 [shape = 'u32[]', space=smem, size = 0x4, offset = 0x4, fixed_abs, tag = 'smem constant byte address 0x4 - core index']
  #allocation1 [shape = 'u32[144,128]{1,0:T(1,128)}', space=vmem, size = 0x12000, scoped, tag = 'internal scratch']
  #allocation2 [shape = 'f32[2,12,32]{2,1,0:T(8,128)}', space=vmem, size = 0x4000, scoped, tag = 'scratch operand']
  #allocation3 [shape = 'f32[2,10,256]{2,1,0:T(8,128)}', space=vmem, size = 0x8000, scoped, tag = 'scratch operand']
  #allocation4 [shape = 'f32[1,1]{1,0:T(1,128)S(1)}', space=vmem, size = 0x200, scoped, tag = 'scoped memory for alphazero_forward.1']
  %s0 = inlined_call_operand.vmem [shape: f32[2,8,32], index: 0, kind: input, shape index: {}]
  %s1 = inlined_call_operand.hbm [shape: f32[5,32,256], index: 1, kind: input, shape index: {}]
  %s2 = inlined_call_operand.hbm [shape: f32[24,256,256], index: 2, kind: input, shape index: {}]
  %s3 = inlined_call_operand.hbm [shape: f32[9,256], index: 3, kind: input, shape index: {}]
  %s4 = inlined_call_operand.hbm [shape: f32[9,256], index: 4, kind: input, shape index: {}]
  %s5 = inlined_call_operand.hbm [shape: f32[256,256], index: 5, kind: input, shape index: {}]
  %s6 = inlined_call_operand.vmem [shape: f32[256,8], index: 6, kind: input, shape index: {}]
  %s7 = inlined_call_operand.hbm [shape: f32[8,8], index: 7, kind: input, shape index: {}]
  %s8 = inlined_call_operand.vmem [shape: f32[256,16], index: 8, kind: input, shape index: {}]
  %s9 = inlined_call_operand.hbm [shape: f32[16,16], index: 9, kind: input, shape index: {}]
  %s10 = inlined_call_operand.hbm [shape: f32[1,16], index: 10, kind: input, shape index: {}]
  %s11 = inlined_call_operand.hbm [shape: f32[1,16], index: 11, kind: input, shape index: {}]
  %s12 = inlined_call_operand.hbm [shape: f32[8,64], index: 12, kind: input, shape index: {}]
  %s13 = inlined_call_operand.hbm [shape: f32[16,64], index: 13, kind: input, shape index: {}]
  %s14 = inlined_call_operand.hbm [shape: f32[16,128], index: 14, kind: input, shape index: {}]
  %s15 = inlined_call_operand.hbm [shape: f32[16,128], index: 15, kind: input, shape index: {}]
  %s16 = inlined_call_operand.hbm [shape: f32[2,16], index: 16, kind: input, shape index: {}]
  %s17 = inlined_call_operand.hbm [shape: f32[64,128], index: 17, kind: input, shape index: {}]
  %s18 = inlined_call_operand.hbm [shape: f32[1,128], index: 18, kind: input, shape index: {}]
  %s19 = inlined_call_operand.vmem [shape: f32[128,1], index: 19, kind: input, shape index: {}]
  %s20 = inlined_call_operand.<no memory space> [shape: f32[1,1], index: 20, kind: input, shape index: {}]
  %s21 = inlined_call_operand.vmem [shape: f32[128,65], index: 21, kind: input, shape index: {}]
  %s22 = inlined_call_operand.hbm [shape: f32[1,65], index: 22, kind: input, shape index: {}]
  %s23 = inlined_call_operand.hbm [shape: f32[9], index: 23, kind: input, shape index: {}]
  %s24 = inlined_call_operand.hbm [shape: f32[4], index: 24, kind: input, shape index: {}]
  %s25 = inlined_call_operand.vmem [shape: f32[2,1], index: 25, kind: output, shape index: {0}]
  %s26 = inlined_call_operand.hbm [shape: f32[2,65], index: 26, kind: output, shape index: {1}]
  %27 = xla_tuple %s25, %s26
  %s28 = sld [smem:[#allocation0]]
  $region194: #{alphazero_forward.1} parent=0
    _
  %s30 = ssub.s32 1, %s28
  %s31 = scalar_select 0, %s30, %s28
  %v32 = vstv %s20
  %33 = vst [vmem:[#allocation4] sm:$0x1] %v32
  $region1: #{alphazero_forward.1} parent=0
    #allocation5 [shape = 'u8[163840]{0}', space=vmem, size = 0x28000, scoped, tag = 'input window, operand 1, single buffered']
    #allocation6 [shape = 's32[1]{0}', space=sflag, size = 0x4, scoped, tag = 'scoped memory for alphazero_forward.1']
    #allocation7 [shape = 's32[1]{0}', space=sflag, size = 0x4, scoped, tag = 'scoped memory for alphazero_forward.1']
    #allocation8 [shape = 's32[1]{0}', space=sflag, size = 0x4, scoped, tag = 'scoped memory for alphazero_forward.1']
    #allocation9 [shape = 'u8[6291456]{0}', space=vmem, size = 0x600000, scoped, tag = 'input window, operand 2, single buffered']
    #allocation10 [shape = 's32[1]{0}', space=sflag, size = 0x4, scoped, tag = 'scoped memory for alphazero_forward.1']
    #allocation11 [shape = 'u8[16384]{0}', space=vmem, size = 0x4000, scoped, tag = 'input window, operand 3, single buffered']
    #allocation12 [shape = 'u8[16384]{0}', space=vmem, size = 0x4000, scoped, tag = 'input window, operand 4, single buffered']
    #allocation13 [shape = 's32[1]{0}', space=sflag, size = 0x4, scoped, tag = 'scoped memory for alphazero_forward.1']
    #allocation14 [shape = 'u8[262144]{0}', space=vmem, size = 0x40000, scoped, tag = 'input window, operand 5, single buffered']
    #allocation15 [shape = 'u8[4096]{0}', space=vmem, size = 0x1000, scoped, tag = 'input window, operand 7, single buffered']
    #allocation16 [shape = 's32[1]{0}', space=sflag, size = 0x4, scoped, tag = 'scoped memory for alphazero_forward.1']
    #allocation17 [shape = 'u8[8192]{0}', space=vmem, size = 0x2000, scoped, tag = 'input window, operand 9, single buffered']
    #allocation18 [shape = 'u8[512]{0}', space=vmem, size = 0x400, scoped, tag = 'input window, operand 10, single buffered']
    #allocation19 [shape = 's32[1]{0}', space=sflag, size = 0x4, scoped, tag = 'scoped memory for alphazero_forward.1']
    #allocation20 [shape = 'u8[512]{0}', space=vmem, size = 0x400, scoped, tag = 'input window, operand 11, single buffered']
    #allocation21 [shape = 'u8[4096]{0}', space=vmem, size = 0x1000, scoped, tag = 'input window, operand 12, single buffered']
    #allocation22 [shape = 's32[1]{0}', space=sflag, size = 0x4, scoped, tag = 'scoped memory for alphazero_forward.1']
    #allocation23 [shape = 'u8[8192]{0}', space=vmem, size = 0x2000, scoped, tag = 'input window, operand 13, single buffered']
    #allocation24 [shape = 'u8[8192]{0}', space=vmem, size = 0x2000, scoped, tag = 'input window, operand 14, single buffered']
    #allocation25 [shape = 's32[1]{0}', space=sflag, size = 0x4, scoped, tag = 'scoped memory for alphazero_forward.1']
    #allocation26 [shape = 'u8[8192]{0}', space=vmem, size = 0x2000, scoped, tag = 'input window, operand 15, single buffered']
    #allocation27 [shape = 'u8[1024]{0}', space=vmem, size = 0x400, scoped, tag = 'input window, operand 16, single buffered']
    #allocation28 [shape = 's32[1]{0}', space=sflag, size = 0x4, scoped, tag = 'scoped memory for alphazero_forward.1']
    #allocation29 [shape = 'u8[32768]{0}', space=vmem, size = 0x8000, scoped, tag = 'input window, operand 17, single buffered']
    #allocation30 [shape = 'u8[512]{0}', space=vmem, size = 0x400, scoped, tag = 'input window, operand 18, single buffered']
    #allocation31 [shape = 's32[1]{0}', space=sflag, size = 0x4, scoped, tag = 'scoped memory for alphazero_forward.1']
    #allocation32 [shape = 'u8[512]{0}', space=vmem, size = 0x400, scoped, tag = 'input window, operand 22, single buffered']
    #allocation33 [shape = 'u8[512]{0}', space=smem, size = 0x200, scoped, tag = 'input window, operand 23, single buffered']
    #allocation34 [shape = 'u8[512]{0}', space=smem, size = 0x200, scoped, tag = 'input window, operand 24, single buffered']
    #allocation35 [shape = 's32[1]{0}', space=sflag, size = 0x4, scoped, tag = 'scoped memory for alphazero_forward.1']
    #allocation36 [shape = 'u8[1024]{0}', space=vmem, size = 0x400, scoped, tag = 'output window, operand 1, single buffered']
    %34 = vsyncpa [#allocation6], 0
    %35 = vsyncpa [#allocation10], 0
    %36 = vsyncpa [#allocation13], 0
    %37 = vsyncpa [#allocation16], 0
    %38 = vsyncpa [#allocation19], 0
    %39 = vsyncpa [#allocation22], 0
    %40 = vsyncpa [#allocation25], 0
    %41 = vsyncpa [#allocation28], 0
    %42 = vsyncpa [#allocation31], 0
    %43 = vsyncpa [#allocation8], 0
    %44 = vsyncpa [#allocation35], 0
    %45 = vsyncpa [#allocation7], 0
    // Predicated region
    $region2: #{alphazero_forward.1} parent=1 // pred_check
      _
    $region3: #{alphazero_forward.1} parent=1 // pred_check_branch
      %47 = sbr.rel (0) target = $region5
    $region4: #{alphazero_forward.1} parent=1 // pred_region
      _
    $region5: #{alphazero_forward.1} parent=1 // pred_fallthru
      _
    // Predicated region
    $region6: #{alphazero_forward.1} parent=1 // pred_check
      _
    $region7: #{alphazero_forward.1} parent=1 // pred_check_branch
      %49 = sbr.rel (0) target = $region9
    $region8: #{alphazero_forward.1} parent=1 // pred_region
      %s51 = ssub.s32 5120, 5120
      %52 = vsyncadd [#allocation6], %s51
      %s53 = sshll.u32 [#allocation5], 4
      %s54 = int_to_ptr.vmem [resolvable:$true] %s53
      %59 = dma.hbm_to_vmem [thread:$0]  %s1, 5120, %s54, [#allocation6], 256, 256, 16
    $region9: #{alphazero_forward.1} parent=1 // pred_fallthru
      _
    // Predicated region
    $region10: #{alphazero_forward.1} parent=1 // pred_check
      _
    $region11: #{alphazero_forward.1} parent=1 // pred_check_branch
      %61 = sbr.rel (0) target = $region13
    $region12: #{alphazero_forward.1} parent=1 // pred_region
      %s63 = ssub.s32 196608, 196608
      %64 = vsyncadd [#allocation10], %s63
      %s65 = sshll.u32 [#allocation9], 4
      %s66 = int_to_ptr.vmem [resolvable:$true] %s65
      %71 = dma.hbm_to_vmem [thread:$0]  %s2, 196608, %s66, [#allocation10], 256, 256, 16
    $region13: #{alphazero_forward.1} parent=1 // pred_fallthru
      _
    // Predicated region
    $region14: #{alphazero_forward.1} parent=1 // pred_check
      _
    $region15: #{alphazero_forward.1} parent=1 // pred_check_branch
      %73 = sbr.rel (0) target = $region17
    $region16: #{alphazero_forward.1} parent=1 // pred_region
      %s75 = ssub.s32 512, 512
      %76 = vsyncadd [#allocation10], %s75
      %s77 = sshll.u32 [#allocation11], 4
      %s78 = int_to_ptr.vmem [resolvable:$true] %s77
      %83 = dma.hbm_to_vmem [thread:$0]  %s3, 512, %s78, [#allocation10], 256, 256, 16
    $region17: #{alphazero_forward.1} parent=1 // pred_fallthru
      _
    // Predicated region
    $region18: #{alphazero_forward.1} parent=1 // pred_check
      _
    $region19: #{alphazero_forward.1} parent=1 // pred_check_branch
      %85 = sbr.rel (0) target = $region21
    $region20: #{alphazero_forward.1} parent=1 // pred_region
      %s87 = ssub.s32 512, 512
      %88 = vsyncadd [#allocation13], %s87
      %s89 = sshll.u32 [#allocation12], 4
      %s90 = int_to_ptr.vmem [resolvable:$true] %s89
      %95 = dma.hbm_to_vmem [thread:$0]  %s4, 512, %s90, [#allocation13], 256, 256, 16
    $region21: #{alphazero_forward.1} parent=1 // pred_fallthru
      _
    // Predicated region
    $region22: #{alphazero_forward.1} parent=1 // pred_check
      _
    $region23: #{alphazero_forward.1} parent=1 // pred_check_branch
      %97 = sbr.rel (0) target = $region25
    $region24: #{alphazero_forward.1} parent=1 // pred_region
      %s99 = ssub.s32 8192, 8192
      %100 = vsyncadd [#allocation13], %s99
      %s101 = sshll.u32 [#allocation14], 4
      %s102 = int_to_ptr.vmem [resolvable:$true] %s101
      %107 = dma.hbm_to_vmem [thread:$0]  %s5, 8192, %s102, [#allocation13], 256, 256, 16
    $region25: #{alphazero_forward.1} parent=1 // pred_fallthru
      _
    // Predicated region
    $region26: #{alphazero_forward.1} parent=1 // pred_check
      _
    $region27: #{alphazero_forward.1} parent=1 // pred_check_branch
      %109 = sbr.rel (0) target = $region29
    $region28: #{alphazero_forward.1} parent=1 // pred_region
      _
    $region29: #{alphazero_forward.1} parent=1 // pred_fallthru
      _
    // Predicated region
    $region30: #{alphazero_forward.1} parent=1 // pred_check
      _
    $region31: #{alphazero_forward.1} parent=1 // pred_check_branch
      %111 = sbr.rel (0) target = $region33
    $region32: #{alphazero_forward.1} parent=1 // pred_region
      %s113 = ssub.s32 128, 128
      %114 = vsyncadd [#allocation16], %s113
      %s116 = sshll.u32 [#allocation15], 4
      %s117 = int_to_ptr.vmem [resolvable:$true] %s116
      %119 = dma.hbm_to_vmem [thread:$0]  %s7, 128, %s117, [#allocation16]
    $region33: #{alphazero_forward.1} parent=1 // pred_fallthru
      _
    // Predicated region
    $region34: #{alphazero_forward.1} parent=1 // pred_check
      _
    $region35: #{alphazero_forward.1} parent=1 // pred_check_branch
      %121 = sbr.rel (0) target = $region37
    $region36: #{alphazero_forward.1} parent=1 // pred_region
      _
    $region37: #{alphazero_forward.1} parent=1 // pred_fallthru
      _
    // Predicated region
    $region38: #{alphazero_forward.1} parent=1 // pred_check
      _
    $region39: #{alphazero_forward.1} parent=1 // pred_check_branch
      %123 = sbr.rel (0) target = $region41
    $region40: #{alphazero_forward.1} parent=1 // pred_region
      %s125 = ssub.s32 256, 256
      %126 = vsyncadd [#allocation16], %s125
      %s127 = sshll.u32 [#allocation17], 4
      %s128 = int_to_ptr.vmem [resolvable:$true] %s127
      %133 = dma.hbm_to_vmem [thread:$0]  %s9, 256, %s128, [#allocation16], 128, 128, 8
    $region41: #{alphazero_forward.1} parent=1 // pred_fallthru
      _
    // Predicated region
    $region42: #{alphazero_forward.1} parent=1 // pred_check
      _
    $region43: #{alphazero_forward.1} parent=1 // pred_check_branch
      %135 = sbr.rel (0) target = $region45
    $region44: #{alphazero_forward.1} parent=1 // pred_region
      %s137 = ssub.s32 16, 16
      %138 = vsyncadd [#allocation19], %s137
      %s140 = sshll.u32 [#allocation18], 4
      %s141 = int_to_ptr.vmem [resolvable:$true] %s140
      %143 = dma.hbm_to_vmem [thread:$0]  %s10, 16, %s141, [#allocation19]
    $region45: #{alphazero_forward.1} parent=1 // pred_fallthru
      _
    // Predicated region
    $region46: #{alphazero_forward.1} parent=1 // pred_check
      _
    $region47: #{alphazero_forward.1} parent=1 // pred_check_branch
      %145 = sbr.rel (0) target = $region49
    $region48: #{alphazero_forward.1} parent=1 // pred_region
      %s147 = ssub.s32 16, 16
      %148 = vsyncadd [#allocation19], %s147
      %s150 = sshll.u32 [#allocation20], 4
      %s151 = int_to_ptr.vmem [resolvable:$true] %s150
      %153 = dma.hbm_to_vmem [thread:$0]  %s11, 16, %s151, [#allocation19]
    $region49: #{alphazero_forward.1} parent=1 // pred_fallthru
      _
    // Predicated region
    $region50: #{alphazero_forward.1} parent=1 // pred_check
      _
    $region51: #{alphazero_forward.1} parent=1 // pred_check_branch
      %155 = sbr.rel (0) target = $region53
    $region52: #{alphazero_forward.1} parent=1 // pred_region
      %s157 = ssub.s32 128, 128
      %158 = vsyncadd [#allocation22], %s157
      %s160 = sshll.u32 [#allocation21], 4
      %s161 = int_to_ptr.vmem [resolvable:$true] %s160
      %163 = dma.hbm_to_vmem [thread:$0]  %s12, 128, %s161, [#allocation22]
    $region53: #{alphazero_forward.1} parent=1 // pred_fallthru
      _
    // Predicated region
    $region54: #{alphazero_forward.1} parent=1 // pred_check
      _
    $region55: #{alphazero_forward.1} parent=1 // pred_check_branch
      %165 = sbr.rel (0) target = $region57
    $region56: #{alphazero_forward.1} parent=1 // pred_region
      %s167 = ssub.s32 256, 256
      %168 = vsyncadd [#allocation22], %s167
      %s169 = sshll.u32 [#allocation23], 4
      %s170 = int_to_ptr.vmem [resolvable:$true] %s169
      %175 = dma.hbm_to_vmem [thread:$0]  %s13, 256, %s170, [#allocation22], 128, 128, 8
    $region57: #{alphazero_forward.1} parent=1 // pred_fallthru
      _
    // Predicated region
    $region58: #{alphazero_forward.1} parent=1 // pred_check
      _
    $region59: #{alphazero_forward.1} parent=1 // pred_check_branch
      %177 = sbr.rel (0) target = $region61
    $region60: #{alphazero_forward.1} parent=1 // pred_region
      %s179 = ssub.s32 256, 256
      %180 = vsyncadd [#allocation25], %s179
      %s181 = sshll.u32 [#allocation24], 4
      %s182 = int_to_ptr.vmem [resolvable:$true] %s181
      %187 = dma.hbm_to_vmem [thread:$0]  %s14, 256, %s182, [#allocation25], 128, 128, 8
    $region61: #{alphazero_forward.1} parent=1 // pred_fallthru
      _
    // Predicated region
    $region62: #{alphazero_forward.1} parent=1 // pred_check
      _
    $region63: #{alphazero_forward.1} parent=1 // pred_check_branch
      %189 = sbr.rel (0) target = $region65
    $region64: #{alphazero_forward.1} parent=1 // pred_region
      %s191 = ssub.s32 256, 256
      %192 = vsyncadd [#allocation25], %s191
      %s193 = sshll.u32 [#allocation26], 4
      %s194 = int_to_ptr.vmem [resolvable:$true] %s193
      %199 = dma.hbm_to_vmem [thread:$0]  %s15, 256, %s194, [#allocation25], 128, 128, 8
    $region65: #{alphazero_forward.1} parent=1 // pred_fallthru
      _
    // Predicated region
    $region66: #{alphazero_forward.1} parent=1 // pred_check
      _
    $region67: #{alphazero_forward.1} parent=1 // pred_check_branch
      %201 = sbr.rel (0) target = $region69
    $region68: #{alphazero_forward.1} parent=1 // pred_region
      %s203 = ssub.s32 32, 32
      %204 = vsyncadd [#allocation28], %s203
      %s206 = sshll.u32 [#allocation27], 4
      %s207 = int_to_ptr.vmem [resolvable:$true] %s206
      %209 = dma.hbm_to_vmem [thread:$0]  %s16, 32, %s207, [#allocation28]
    $region69: #{alphazero_forward.1} parent=1 // pred_fallthru
      _
    // Predicated region
    $region70: #{alphazero_forward.1} parent=1 // pred_check
      _
    $region71: #{alphazero_forward.1} parent=1 // pred_check_branch
      %211 = sbr.rel (0) target = $region73
    $region72: #{alphazero_forward.1} parent=1 // pred_region
      %s213 = ssub.s32 1024, 1024
      %214 = vsyncadd [#allocation28], %s213
      %s215 = sshll.u32 [#allocation29], 4
      %s216 = int_to_ptr.vmem [resolvable:$true] %s215
      %221 = dma.hbm_to_vmem [thread:$0]  %s17, 1024, %s216, [#allocation28], 128, 128, 8
    $region73: #{alphazero_forward.1} parent=1 // pred_fallthru
      _
    // Predicated region
    $region74: #{alphazero_forward.1} parent=1 // pred_check
      _
    $region75: #{alphazero_forward.1} parent=1 // pred_check_branch
      %223 = sbr.rel (0) target = $region77
    $region76: #{alphazero_forward.1} parent=1 // pred_region
      %s225 = ssub.s32 16, 16
      %226 = vsyncadd [#allocation31], %s225
      %s228 = sshll.u32 [#allocation30], 4
      %s229 = int_to_ptr.vmem [resolvable:$true] %s228
      %231 = dma.hbm_to_vmem [thread:$0]  %s18, 16, %s229, [#allocation31]
    $region77: #{alphazero_forward.1} parent=1 // pred_fallthru
      _
    // Predicated region
    $region78: #{alphazero_forward.1} parent=1 // pred_check
      _
    $region79: #{alphazero_forward.1} parent=1 // pred_check_branch
      %233 = sbr.rel (0) target = $region81
    $region80: #{alphazero_forward.1} parent=1 // pred_region
      _
    $region81: #{alphazero_forward.1} parent=1 // pred_fallthru
      _
    // Predicated region
    $region82: #{alphazero_forward.1} parent=1 // pred_check
      _
    $region83: #{alphazero_forward.1} parent=1 // pred_check_branch
      %235 = sbr.rel (0) target = $region85
    $region84: #{alphazero_forward.1} parent=1 // pred_region
      _
    $region85: #{alphazero_forward.1} parent=1 // pred_fallthru
      _
    // Predicated region
    $region86: #{alphazero_forward.1} parent=1 // pred_check
      _
    $region87: #{alphazero_forward.1} parent=1 // pred_check_branch
      %237 = sbr.rel (0) target = $region89
    $region88: #{alphazero_forward.1} parent=1 // pred_region
      _
    $region89: #{alphazero_forward.1} parent=1 // pred_fallthru
      _
    // Predicated region
    $region90: #{alphazero_forward.1} parent=1 // pred_check
      _
    $region91: #{alphazero_forward.1} parent=1 // pred_check_branch
      %239 = sbr.rel (0) target = $region93
    $region92: #{alphazero_forward.1} parent=1 // pred_region
      %s241 = ssub.s32 16, 16
      %242 = vsyncadd [#allocation31], %s241
      %s244 = sshll.u32 [#allocation32], 4
      %s245 = int_to_ptr.vmem [resolvable:$true] %s244
      %247 = dma.hbm_to_vmem [thread:$0]  %s22, 16, %s245, [#allocation31]
    $region93: #{alphazero_forward.1} parent=1 // pred_fallthru
      _
    // Predicated region
    $region94: #{alphazero_forward.1} parent=1 // pred_check
      _
    $region95: #{alphazero_forward.1} parent=1 // pred_check_branch
      %249 = sbr.rel (0) target = $region97
    $region96: #{alphazero_forward.1} parent=1 // pred_region
      %s251 = ssub.s32 16, 16
      %252 = vsyncadd [#allocation8], %s251
      %255 = dma.hbm_to_smem %s23, 16, [#allocation33], [#allocation8]
    $region97: #{alphazero_forward.1} parent=1 // pred_fallthru
      _
    // Predicated region
    $region98: #{alphazero_forward.1} parent=1 // pred_check
      _
    $region99: #{alphazero_forward.1} parent=1 // pred_check_branch
      %257 = sbr.rel (0) target = $region101
    $region100: #{alphazero_forward.1} parent=1 // pred_region
      %s259 = ssub.s32 16, 16
      %260 = vsyncadd [#allocation35], %s259
      %263 = dma.hbm_to_smem %s24, 16, [#allocation34], [#allocation35]
    $region101: #{alphazero_forward.1} parent=1 // pred_fallthru
      _
    // Predicated region
    $region102: #{alphazero_forward.1} parent=1 // pred_check
      _
    $region103: #{alphazero_forward.1} parent=1 // pred_check_branch
      %265 = sbr.rel (0) target = $region105
    $region104: #{alphazero_forward.1} parent=1 // pred_region
      %266 = dma.done [#allocation6], 5120
    $region105: #{alphazero_forward.1} parent=1 // pred_fallthru
      _
    // Predicated region
    $region106: #{alphazero_forward.1} parent=1 // pred_check
      _
    $region107: #{alphazero_forward.1} parent=1 // pred_check_branch
      %268 = sbr.rel (0) target = $region109
    $region108: #{alphazero_forward.1} parent=1 // pred_region
      %269 = dma.done [#allocation10], 196608
    $region109: #{alphazero_forward.1} parent=1 // pred_fallthru
      _
    // Predicated region
    $region110: #{alphazero_forward.1} parent=1 // pred_check
      _
    $region111: #{alphazero_forward.1} parent=1 // pred_check_branch
      %271 = sbr.rel (0) target = $region113
    $region112: #{alphazero_forward.1} parent=1 // pred_region
      %272 = dma.done [#allocation10], 512
    $region113: #{alphazero_forward.1} parent=1 // pred_fallthru
      _
    // Predicated region
    $region114: #{alphazero_forward.1} parent=1 // pred_check
      _
    $region115: #{alphazero_forward.1} parent=1 // pred_check_branch
      %274 = sbr.rel (0) target = $region117
    $region116: #{alphazero_forward.1} parent=1 // pred_region
      %275 = dma.done [#allocation13], 512
    $region117: #{alphazero_forward.1} parent=1 // pred_fallthru
      _
    // Predicated region
    $region118: #{alphazero_forward.1} parent=1 // pred_check
      _
    $region119: #{alphazero_forward.1} parent=1 // pred_check_branch
      %277 = sbr.rel (0) target = $region121
    $region120: #{alphazero_forward.1} parent=1 // pred_region
      %278 = dma.done [#allocation13], 8192
    $region121: #{alphazero_forward.1} parent=1 // pred_fallthru
      _
    // Predicated region
    $region122: #{alphazero_forward.1} parent=1 // pred_check
      _
    $region123: #{alphazero_forward.1} parent=1 // pred_check_branch
      %280 = sbr.rel (0) target = $region125
    $region124: #{alphazero_forward.1} parent=1 // pred_region
      %281 = dma.done [#allocation16], 128
    $region125: #{alphazero_forward.1} parent=1 // pred_fallthru
      _
    // Predicated region
    $region126: #{alphazero_forward.1} parent=1 // pred_check
      _
    $region127: #{alphazero_forward.1} parent=1 // pred_check_branch
      %283 = sbr.rel (0) target = $region129
    $region128: #{alphazero_forward.1} parent=1 // pred_region
      %284 = dma.done [#allocation16], 256
    $region129: #{alphazero_forward.1} parent=1 // pred_fallthru
      _
    // Predicated region
    $region130: #{alphazero_forward.1} parent=1 // pred_check
      _
    $region131: #{alphazero_forward.1} parent=1 // pred_check_branch
      %286 = sbr.rel (0) target = $region133
    $region132: #{alphazero_forward.1} parent=1 // pred_region
      %287 = dma.done [#allocation19], 16
    $region133: #{alphazero_forward.1} parent=1 // pred_fallthru
      _
    // Predicated region
    $region134: #{alphazero_forward.1} parent=1 // pred_check
      _
    $region135: #{alphazero_forward.1} parent=1 // pred_check_branch
      %289 = sbr.rel (0) target = $region137
    $region136: #{alphazero_forward.1} parent=1 // pred_region
      %290 = dma.done [#allocation19], 16
    $region137: #{alphazero_forward.1} parent=1 // pred_fallthru
      _
    // Predicated region
    $region138: #{alphazero_forward.1} parent=1 // pred_check
      _
    $region139: #{alphazero_forward.1} parent=1 // pred_check_branch
      %292 = sbr.rel (0) target = $region141
    $region140: #{alphazero_forward.1} parent=1 // pred_region
      %293 = dma.done [#allocation22], 128
    $region141: #{alphazero_forward.1} parent=1 // pred_fallthru
      _
    // Predicated region
    $region142: #{alphazero_forward.1} parent=1 // pred_check
      _
    $region143: #{alphazero_forward.1} parent=1 // pred_check_branch
      %295 = sbr.rel (0) target = $region145
    $region144: #{alphazero_forward.1} parent=1 // pred_region
      %296 = dma.done [#allocation22], 256
    $region145: #{alphazero_forward.1} parent=1 // pred_fallthru
      _
    // Predicated region
    $region146: #{alphazero_forward.1} parent=1 // pred_check
      _
    $region147: #{alphazero_forward.1} parent=1 // pred_check_branch
      %298 = sbr.rel (0) target = $region149
    $region148: #{alphazero_forward.1} parent=1 // pred_region
      %299 = dma.done [#allocation25], 256
    $region149: #{alphazero_forward.1} parent=1 // pred_fallthru
      _
    // Predicated region
    $region150: #{alphazero_forward.1} parent=1 // pred_check
      _
    $region151: #{alphazero_forward.1} parent=1 // pred_check_branch
      %301 = sbr.rel (0) target = $region153
    $region152: #{alphazero_forward.1} parent=1 // pred_region
      %302 = dma.done [#allocation25], 256
    $region153: #{alphazero_forward.1} parent=1 // pred_fallthru
      _
    // Predicated region
    $region154: #{alphazero_forward.1} parent=1 // pred_check
      _
    $region155: #{alphazero_forward.1} parent=1 // pred_check_branch
      %304 = sbr.rel (0) target = $region157
    $region156: #{alphazero_forward.1} parent=1 // pred_region
      %305 = dma.done [#allocation28], 32
    $region157: #{alphazero_forward.1} parent=1 // pred_fallthru
      _
    // Predicated region
    $region158: #{alphazero_forward.1} parent=1 // pred_check
      _
    $region159: #{alphazero_forward.1} parent=1 // pred_check_branch
      %307 = sbr.rel (0) target = $region161
    $region160: #{alphazero_forward.1} parent=1 // pred_region
      %308 = dma.done [#allocation28], 1024
    $region161: #{alphazero_forward.1} parent=1 // pred_fallthru
      _
    // Predicated region
    $region162: #{alphazero_forward.1} parent=1 // pred_check
      _
    $region163: #{alphazero_forward.1} parent=1 // pred_check_branch
      %310 = sbr.rel (0) target = $region165
    $region164: #{alphazero_forward.1} parent=1 // pred_region
      %311 = dma.done [#allocation31], 16
    $region165: #{alphazero_forward.1} parent=1 // pred_fallthru
      _
    // Predicated region
    $region166: #{alphazero_forward.1} parent=1 // pred_check
      _
    $region167: #{alphazero_forward.1} parent=1 // pred_check_branch
      %313 = sbr.rel (0) target = $region169
    $region168: #{alphazero_forward.1} parent=1 // pred_region
      %314 = dma.done [#allocation31], 16
    $region169: #{alphazero_forward.1} parent=1 // pred_fallthru
      _
    // Predicated region
    $region170: #{alphazero_forward.1} parent=1 // pred_check
      _
    $region171: #{alphazero_forward.1} parent=1 // pred_check_branch
      %316 = sbr.rel (0) target = $region173
    $region172: #{alphazero_forward.1} parent=1 // pred_region
      %317 = dma.done [#allocation8], 16
    $region173: #{alphazero_forward.1} parent=1 // pred_fallthru
      _
    // Predicated region
    $region174: #{alphazero_forward.1} parent=1 // pred_check
      _
    $region175: #{alphazero_forward.1} parent=1 // pred_check_branch
      %319 = sbr.rel (0) target = $region177
    $region176: #{alphazero_forward.1} parent=1 // pred_region
      %320 = dma.done [#allocation35], 16
    $region177: #{alphazero_forward.1} parent=1 // pred_fallthru
      _
    %321 = sfence
    %vm322 = vcmask 261120
    %323 = vst.msk [vmem:[#allocation2] sm:$0xff] %vm322, 0.0
    %vm324 = vcmask 257024
    %325 = vst.msk [vmem:[#allocation2 + $0x8] sm:$0xf] %vm324, 0.0
    %326 = vst.msk [vmem:[#allocation2 + $0x10] sm:$0xff] %vm322, 0.0
    %327 = vst.msk [vmem:[#allocation2 + $0x18] sm:$0xf] %vm324, 0.0
    %328 = vst [vmem:[#allocation3] sm:$0xff] 0.0
    %329 = vst [vmem:[#allocation3 + $0x8] sm:$0xff] 0.0
    %330 = vst [vmem:[#allocation3 + $0x10] sm:$0x3] 0.0
    %331 = vst [vmem:[#allocation3 + $0x18] sm:$0x3] 0.0
    %332 = vst [vmem:[#allocation3 + $0x20] sm:$0xff] 0.0
    %333 = vst [vmem:[#allocation3 + $0x28] sm:$0xff] 0.0
    %334 = vst [vmem:[#allocation3 + $0x30] sm:$0x3] 0.0
    %335 = vst [vmem:[#allocation3 + $0x38] sm:$0x3] 0.0
    %v336 = vld [vmem:[%s0] sm:$0xff]
    %v337 = vld [vmem:[%s0 + $0x8] sm:$0xff]
    %338 = vst.msk [vmem:[#allocation2 + $0x2] sm:$0xff] %vm322, %v336
    %339 = vst.msk [vmem:[#allocation2 + $0x12] sm:$0xff] %vm322, %v337
    %v340 = vld [vmem:[#allocation2] sm:$0xff]
    %v341 = vld [vmem:[#allocation2 + $0x10] sm:$0xff]
    %v342 = vld [vmem:[#allocation5] sm:$0xff]
    %v343 = vld [vmem:[#allocation5 + $0x8] sm:$0xff]
    %v344 = vld [vmem:[#allocation5 + $0x10] sm:$0xff]
    %v345 = vld [vmem:[#allocation5 + $0x18] sm:$0xff]
    %v346 = vld [vmem:[#allocation5 + $0x20] sm:$0xff]
    %v347 = vld [vmem:[#allocation5 + $0x28] sm:$0xff]
    %v348 = vld [vmem:[#allocation5 + $0x30] sm:$0xff]
    %v349 = vld [vmem:[#allocation5 + $0x38] sm:$0xff]
    %v350 = vld [vmem:[#allocation2 + $0x1] sm:$0xff]
    %v351 = vld [vmem:[#allocation2 + $0x11] sm:$0xff]
    %s352 = scalar_lea.vmem [#allocation5], 64
    %v353 = vld [vmem:[%s352] sm:$0xff]
    %v354 = vld [vmem:[%s352 + $0x8] sm:$0xff]
    %v355 = vld [vmem:[%s352 + $0x10] sm:$0xff]
    %v356 = vld [vmem:[%s352 + $0x18] sm:$0xff]
    %v357 = vld [vmem:[%s352 + $0x20] sm:$0xff]
    %v358 = vld [vmem:[%s352 + $0x28] sm:$0xff]
    %v359 = vld [vmem:[%s352 + $0x30] sm:$0xff]
    %v360 = vld [vmem:[%s352 + $0x38] sm:$0xff]
    %v362 = vsel %vm322, %v350, 0
    %v365 = vsel %vm322, %v351, 0
    %367 = vmatprep.subr.mxu0 0.0
    %368 = vmatpush1.msra.mxu0 0.0
    %369 = vmatprep.subr.mxu0 0.0
    %370 = vmatpush1.msra.mxu0 0.0
    %371 = vmatprep.subr.mxu0 0.0
    %372 = vmatpush1.msra.mxu0 0.0
    %373 = vmatprep.subr.mxu0 0.0
    %374 = vmatpush1.msra.mxu0 0.0
    %375 = vmatprep.subr.mxu0 0.0
    %376 = vmatpush1.msra.mxu0 0.0
    %377 = vmatprep.subr.mxu0 0.0
    %378 = vmatpush1.msra.mxu0 0.0
    %379 = vmatprep.subr.mxu0 0.0
    %380 = vmatpush1.msra.mxu0 0.0
    %381 = vmatprep.subr.mxu0 0.0
    %382 = vmatpush1.msra.mxu0 0.0
    %383 = vmatprep.subr.mxu0 0.0
    %384 = vmatpush1.msra.mxu0 0.0
    %385 = vmatprep.subr.mxu0 0.0
    %386 = vmatpush1.msra.mxu0 0.0
    %387 = vmatprep.subr.mxu0 0.0
    %388 = vmatpush1.msra.mxu0 0.0
    %389 = vmatprep.subr.mxu0 0.0
    %390 = vmatpush1.msra.mxu0 0.0
    %391 = vmatprep.subr.mxu0 %v360
    %392 = vmatpush1.msra.mxu0 %v359
    %393 = vmatprep.subr.mxu0 %v358
    %394 = vmatpush1.msra.mxu0 %v357
    %395 = vmatprep.subr.mxu0 %v356
    %396 = vmatpush1.msra.mxu0 %v355
    %397 = vmatprep.subr.mxu0 %v354
    %398 = vmatpush1.msra.mxu0 %v353
    %399 = vmatprep.subr.mxu0 0.0
    %400 = vmatpush2.msra.mxu0 0.0
    %401 = vmatprep.subr.mxu0 0.0
    %402 = vmatpush2.msra.mxu0 0.0
    %403 = vmatprep.subr.mxu0 0.0
    %404 = vmatpush2.msra.mxu0 0.0
    %405 = vmatprep.subr.mxu0 0.0
    %406 = vmatpush2.msra.mxu0 0.0
    %407 = vmatprep.subr.mxu0 0.0
    %408 = vmatpush2.msra.mxu0 0.0
    %409 = vmatprep.subr.mxu0 0.0
    %410 = vmatpush2.msra.mxu0 0.0
    %411 = vmatprep.subr.mxu0 0.0
    %412 = vmatpush2.msra.mxu0 0.0
    %413 = vmatprep.subr.mxu0 0.0
    %414 = vmatpush2.msra.mxu0 0.0
    %415 = vmatprep.subr.mxu0 0.0
    %416 = vmatpush2.msra.mxu0 0.0
    %417 = vmatprep.subr.mxu0 0.0
    %418 = vmatpush2.msra.mxu0 0.0
    %419 = vmatprep.subr.mxu0 0.0
    %420 = vmatpush2.msra.mxu0 0.0
    %421 = vmatprep.subr.mxu0 0.0
    %422 = vmatpush2.msra.mxu0 0.0
    %423 = vmatprep.subr.mxu0 0.0
    %424 = vmatpush2.msra.mxu0 0.0
    %425 = vmatprep.subr.mxu0 0.0
    %426 = vmatpush2.msra.mxu0 0.0
    %427 = vmatprep.subr.mxu0 0.0
    %428 = vmatpush2.msra.mxu0 0.0
    %429 = vmatprep.subr.mxu0 0.0
    %430 = vmatpush2.msra.mxu0 0.0
    %431 = vmatprep.mubr.f32.mxu0 0.0
    %432 = vmatmul.mubr.f32.gmra.mxu0 %v362
    %v433 = vpop.f32.mrf.mxu0
    %v434 = vadd.f32 0.0, %v433
    %v435 = vpop.f32.mrf.mxu0
    %v436 = vadd.f32 0.0, %v435
    %437 = vmatprep.mubr.f32.mxu0 0.0
    %438 = vmatmul.mubr.f32.gmra.mxu0 %v365
    %v439 = vpop.f32.mrf.mxu0
    %v440 = vadd.f32 0.0, %v439
    %v441 = vpop.f32.mrf.mxu0
    %v442 = vadd.f32 0.0, %v441
    %443 = vdwg.mxu0
    %v445 = vsel %vm322, %v340, 0
    %v448 = vsel %vm322, %v341, 0
    %450 = vmatprep.subr.mxu0 0.0
    %451 = vmatpush1.msra.mxu0 0.0
    %452 = vmatprep.subr.mxu0 0.0
    %453 = vmatpush1.msra.mxu0 0.0
    %454 = vmatprep.subr.mxu0 0.0
    %455 = vmatpush1.msra.mxu0 0.0
    %456 = vmatprep.subr.mxu0 0.0
    %457 = vmatpush1.msra.mxu0 0.0
    %458 = vmatprep.subr.mxu0 0.0
    %459 = vmatpush1.msra.mxu0 0.0
    %460 = vmatprep.subr.mxu0 0.0
    %461 = vmatpush1.msra.mxu0 0.0
    %462 = vmatprep.subr.mxu0 0.0
    %463 = vmatpush1.msra.mxu0 0.0
    %464 = vmatprep.subr.mxu0 0.0
    %465 = vmatpush1.msra.mxu0 0.0
    %466 = vmatprep.subr.mxu0 0.0
    %467 = vmatpush1.msra.mxu0 0.0
    %468 = vmatprep.subr.mxu0 0.0
    %469 = vmatpush1.msra.mxu0 0.0
    %470 = vmatprep.subr.mxu0 0.0
    %471 = vmatpush1.msra.mxu0 0.0
    %472 = vmatprep.subr.mxu0 0.0
    %473 = vmatpush1.msra.mxu0 0.0
    %474 = vmatprep.subr.mxu0 %v349
    %475 = vmatpush1.msra.mxu0 %v348
    %476 = vmatprep.subr.mxu0 %v347
    %477 = vmatpush1.msra.mxu0 %v346
    %478 = vmatprep.subr.mxu0 %v345
    %479 = vmatpush1.msra.mxu0 %v344
    %480 = vmatprep.subr.mxu0 %v343
    %481 = vmatpush1.msra.mxu0 %v342
    %482 = vmatprep.subr.mxu0 0.0
    %483 = vmatpush2.msra.mxu0 0.0
    %484 = vmatprep.subr.mxu0 0.0
    %485 = vmatpush2.msra.mxu0 0.0
    %486 = vmatprep.subr.mxu0 0.0
    %487 = vmatpush2.msra.mxu0 0.0
    %488 = vmatprep.subr.mxu0 0.0
    %489 = vmatpush2.msra.mxu0 0.0
    %490 = vmatprep.subr.mxu0 0.0
    %491 = vmatpush2.msra.mxu0 0.0
    %492 = vmatprep.subr.mxu0 0.0
    %493 = vmatpush2.msra.mxu0 0.0
    %494 = vmatprep.subr.mxu0 0.0
    %495 = vmatpush2.msra.mxu0 0.0
    %496 = vmatprep.subr.mxu0 0.0
    %497 = vmatpush2.msra.mxu0 0.0
    %498 = vmatprep.subr.mxu0 0.0
    %499 = vmatpush2.msra.mxu0 0.0
    %500 = vmatprep.subr.mxu0 0.0
    %501 = vmatpush2.msra.mxu0 0.0
    %502 = vmatprep.subr.mxu0 0.0
    %503 = vmatpush2.msra.mxu0 0.0
    %504 = vmatprep.subr.mxu0 0.0
    %505 = vmatpush2.msra.mxu0 0.0
    %506 = vmatprep.subr.mxu0 0.0
    %507 = vmatpush2.msra.mxu0 0.0
    %508 = vmatprep.subr.mxu0 0.0
    %509 = vmatpush2.msra.mxu0 0.0
    %510 = vmatprep.subr.mxu0 0.0
    %511 = vmatpush2.msra.mxu0 0.0
    %512 = vmatprep.subr.mxu0 0.0
    %513 = vmatpush2.msra.mxu0 0.0
    %514 = vmatprep.mubr.f32.mxu0 0.0
    %515 = vmatmul.mubr.f32.gmra.mxu0 %v445
    %v516 = vpop.f32.mrf.mxu0
    %v517 = vadd.f32 %v434, %v516
    %v518 = vpop.f32.mrf.mxu0
    %v519 = vadd.f32 %v436, %v518
    %520 = vmatprep.mubr.f32.mxu0 0.0
    %521 = vmatmul.mubr.f32.gmra.mxu0 %v448
    %v522 = vpop.f32.mrf.mxu0
    %v523 = vadd.f32 %v440, %v522
    %v524 = vpop.f32.mrf.mxu0
    %v525 = vadd.f32 %v442, %v524
    %526 = vdwg.mxu0
    %v527 = vld [vmem:[#allocation2 + $0x2] sm:$0xff]
    %v528 = vld [vmem:[#allocation2 + $0x12] sm:$0xff]
    %s529 = scalar_lea.vmem [#allocation5], 128
    %v530 = vld [vmem:[%s529] sm:$0xff]
    %v531 = vld [vmem:[%s529 + $0x8] sm:$0xff]
    %v532 = vld [vmem:[%s529 + $0x10] sm:$0xff]
    %v533 = vld [vmem:[%s529 + $0x18] sm:$0xff]
    %v534 = vld [vmem:[%s529 + $0x20] sm:$0xff]
    %v535 = vld [vmem:[%s529 + $0x28] sm:$0xff]
    %v536 = vld [vmem:[%s529 + $0x30] sm:$0xff]
    %v537 = vld [vmem:[%s529 + $0x38] sm:$0xff]
    %v539 = vsel %vm322, %v527, 0
    %v542 = vsel %vm322, %v528, 0
    %544 = vmatprep.subr.mxu0 0.0
    %545 = vmatpush1.msra.mxu0 0.0
    %546 = vmatprep.subr.mxu0 0.0
    %547 = vmatpush1.msra.mxu0 0.0
    %548 = vmatprep.subr.mxu0 0.0
    %549 = vmatpush1.msra.mxu0 0.0
    %550 = vmatprep.subr.mxu0 0.0
    %551 = vmatpush1.msra.mxu0 0.0
    %552 = vmatprep.subr.mxu0 0.0
    %553 = vmatpush1.msra.mxu0 0.0
    %554 = vmatprep.subr.mxu0 0.0
    %555 = vmatpush1.msra.mxu0 0.0
    %556 = vmatprep.subr.mxu0 0.0
    %557 = vmatpush1.msra.mxu0 0.0
    %558 = vmatprep.subr.mxu0 0.0
    %559 = vmatpush1.msra.mxu0 0.0
    %560 = vmatprep.subr.mxu0 0.0
    %561 = vmatpush1.msra.mxu0 0.0
    %562 = vmatprep.subr.mxu0 0.0
    %563 = vmatpush1.msra.mxu0 0.0
    %564 = vmatprep.subr.mxu0 0.0
    %565 = vmatpush1.msra.mxu0 0.0
    %566 = vmatprep.subr.mxu0 0.0
    %567 = vmatpush1.msra.mxu0 0.0
    %568 = vmatprep.subr.mxu0 %v537
    %569 = vmatpush1.msra.mxu0 %v536
    %570 = vmatprep.subr.mxu0 %v535
    %571 = vmatpush1.msra.mxu0 %v534
    %572 = vmatprep.subr.mxu0 %v533
    %573 = vmatpush1.msra.mxu0 %v532
    %574 = vmatprep.subr.mxu0 %v531
    %575 = vmatpush1.msra.mxu0 %v530
    %576 = vmatprep.subr.mxu0 0.0
    %577 = vmatpush2.msra.mxu0 0.0
    %578 = vmatprep.subr.mxu0 0.0
    %579 = vmatpush2.msra.mxu0 0.0
    %580 = vmatprep.subr.mxu0 0.0
    %581 = vmatpush2.msra.mxu0 0.0
    %582 = vmatprep.subr.mxu0 0.0
    %583 = vmatpush2.msra.mxu0 0.0
    %584 = vmatprep.subr.mxu0 0.0
    %585 = vmatpush2.msra.mxu0 0.0
    %586 = vmatprep.subr.mxu0 0.0
    %587 = vmatpush2.msra.mxu0 0.0
    %588 = vmatprep.subr.mxu0 0.0
    %589 = vmatpush2.msra.mxu0 0.0
    %590 = vmatprep.subr.mxu0 0.0
    %591 = vmatpush2.msra.mxu0 0.0
    %592 = vmatprep.subr.mxu0 0.0
    %593 = vmatpush2.msra.mxu0 0.0
    %594 = vmatprep.subr.mxu0 0.0
    %595 = vmatpush2.msra.mxu0 0.0
    %596 = vmatprep.subr.mxu0 0.0
    %597 = vmatpush2.msra.mxu0 0.0
    %598 = vmatprep.subr.mxu0 0.0
    %599 = vmatpush2.msra.mxu0 0.0
    %600 = vmatprep.subr.mxu0 0.0
    %601 = vmatpush2.msra.mxu0 0.0
    %602 = vmatprep.subr.mxu0 0.0
    %603 = vmatpush2.msra.mxu0 0.0
    %604 = vmatprep.subr.mxu0 0.0
    %605 = vmatpush2.msra.mxu0 0.0
    %606 = vmatprep.subr.mxu0 0.0
    %607 = vmatpush2.msra.mxu0 0.0
    %608 = vmatprep.mubr.f32.mxu0 0.0
    %609 = vmatmul.mubr.f32.gmra.mxu0 %v539
    %v610 = vpop.f32.mrf.mxu0
    %v611 = vadd.f32 0.0, %v610
    %v612 = vpop.f32.mrf.mxu0
    %v613 = vadd.f32 0.0, %v612
    %614 = vmatprep.mubr.f32.mxu0 0.0
    %615 = vmatmul.mubr.f32.gmra.mxu0 %v542
    %v616 = vpop.f32.mrf.mxu0
    %v617 = vadd.f32 0.0, %v616
    %v618 = vpop.f32.mrf.mxu0
    %v619 = vadd.f32 0.0, %v618
    %620 = vdwg.mxu0
    %v621 = vadd.f32 %v517, %v611
    %v622 = vadd.f32 %v519, %v613
    %v623 = vadd.f32 %v523, %v617
    %v624 = vadd.f32 %v525, %v619
    %v625 = vld [vmem:[#allocation2 + $0x3] sm:$0xff]
    %v626 = vld [vmem:[#allocation2 + $0x13] sm:$0xff]
    %s627 = scalar_lea.vmem [#allocation5], 192
    %v628 = vld [vmem:[%s627] sm:$0xff]
    %v629 = vld [vmem:[%s627 + $0x8] sm:$0xff]
    %v630 = vld [vmem:[%s627 + $0x10] sm:$0xff]
    %v631 = vld [vmem:[%s627 + $0x18] sm:$0xff]
    %v632 = vld [vmem:[%s627 + $0x20] sm:$0xff]
    %v633 = vld [vmem:[%s627 + $0x28] sm:$0xff]
    %v634 = vld [vmem:[%s627 + $0x30] sm:$0xff]
    %v635 = vld [vmem:[%s627 + $0x38] sm:$0xff]
    %v637 = vsel %vm322, %v625, 0
    %v640 = vsel %vm322, %v626, 0
    %642 = vmatprep.subr.mxu0 0.0
    %643 = vmatpush1.msra.mxu0 0.0
    %644 = vmatprep.subr.mxu0 0.0
    %645 = vmatpush1.msra.mxu0 0.0
    %646 = vmatprep.subr.mxu0 0.0
    %647 = vmatpush1.msra.mxu0 0.0
    %648 = vmatprep.subr.mxu0 0.0
    %649 = vmatpush1.msra.mxu0 0.0
    %650 = vmatprep.subr.mxu0 0.0
    %651 = vmatpush1.msra.mxu0 0.0
    %652 = vmatprep.subr.mxu0 0.0
    %653 = vmatpush1.msra.mxu0 0.0
    %654 = vmatprep.subr.mxu0 0.0
    %655 = vmatpush1.msra.mxu0 0.0
    %656 = vmatprep.subr.mxu0 0.0
    %657 = vmatpush1.msra.mxu0 0.0
    %658 = vmatprep.subr.mxu0 0.0
    %659 = vmatpush1.msra.mxu0 0.0
    %660 = vmatprep.subr.mxu0 0.0
    %661 = vmatpush1.msra.mxu0 0.0
    %662 = vmatprep.subr.mxu0 0.0
    %663 = vmatpush1.msra.mxu0 0.0
    %664 = vmatprep.subr.mxu0 0.0
    %665 = vmatpush1.msra.mxu0 0.0
    %666 = vmatprep.subr.mxu0 %v635
    %667 = vmatpush1.msra.mxu0 %v634
    %668 = vmatprep.subr.mxu0 %v633
    %669 = vmatpush1.msra.mxu0 %v632
    %670 = vmatprep.subr.mxu0 %v631
    %671 = vmatpush1.msra.mxu0 %v630
    %672 = vmatprep.subr.mxu0 %v629
    %673 = vmatpush1.msra.mxu0 %v628
    %674 = vmatprep.subr.mxu0 0.0
    %675 = vmatpush2.msra.mxu0 0.0
    %676 = vmatprep.subr.mxu0 0.0
    %677 = vmatpush2.msra.mxu0 0.0
    %678 = vmatprep.subr.mxu0 0.0
    %679 = vmatpush2.msra.mxu0 0.0
    %680 = vmatprep.subr.mxu0 0.0
    %681 = vmatpush2.msra.mxu0 0.0
    %682 = vmatprep.subr.mxu0 0.0
    %683 = vmatpush2.msra.mxu0 0.0
    %684 = vmatprep.subr.mxu0 0.0
    %685 = vmatpush2.msra.mxu0 0.0
    %686 = vmatprep.subr.mxu0 0.0
    %687 = vmatpush2.msra.mxu0 0.0
    %688 = vmatprep.subr.mxu0 0.0
    %689 = vmatpush2.msra.mxu0 0.0
    %690 = vmatprep.subr.mxu0 0.0
    %691 = vmatpush2.msra.mxu0 0.0
    %692 = vmatprep.subr.mxu0 0.0
    %693 = vmatpush2.msra.mxu0 0.0
    %694 = vmatprep.subr.mxu0 0.0
    %695 = vmatpush2.msra.mxu0 0.0
    %696 = vmatprep.subr.mxu0 0.0
    %697 = vmatpush2.msra.mxu0 0.0
    %698 = vmatprep.subr.mxu0 0.0
    %699 = vmatpush2.msra.mxu0 0.0
    %700 = vmatprep.subr.mxu0 0.0
    %701 = vmatpush2.msra.mxu0 0.0
    %702 = vmatprep.subr.mxu0 0.0
    %703 = vmatpush2.msra.mxu0 0.0
    %704 = vmatprep.subr.mxu0 0.0
    %705 = vmatpush2.msra.mxu0 0.0
    %706 = vmatprep.mubr.f32.mxu0 0.0
    %707 = vmatmul.mubr.f32.gmra.mxu0 %v637
    %v708 = vpop.f32.mrf.mxu0
    %v709 = vadd.f32 0.0, %v708
    %v710 = vpop.f32.mrf.mxu0
    %v711 = vadd.f32 0.0, %v710
    %712 = vmatprep.mubr.f32.mxu0 0.0
    %713 = vmatmul.mubr.f32.gmra.mxu0 %v640
    %v714 = vpop.f32.mrf.mxu0
    %v715 = vadd.f32 0.0, %v714
    %v716 = vpop.f32.mrf.mxu0
    %v717 = vadd.f32 0.0, %v716
    %718 = vdwg.mxu0
    %v719 = vadd.f32 %v621, %v709
    %v720 = vadd.f32 %v622, %v711
    %v721 = vadd.f32 %v623, %v715
    %v722 = vadd.f32 %v624, %v717
    %v723 = vld [vmem:[#allocation2 + $0x4] sm:$0xff]
    %v724 = vld [vmem:[#allocation2 + $0x14] sm:$0xff]
    %s725 = scalar_lea.vmem [#allocation5], 256
    %v726 = vld [vmem:[%s725] sm:$0xff]
    %v727 = vld [vmem:[%s725 + $0x8] sm:$0xff]
    %v728 = vld [vmem:[%s725 + $0x10] sm:$0xff]
    %v729 = vld [vmem:[%s725 + $0x18] sm:$0xff]
    %v730 = vld [vmem:[%s725 + $0x20] sm:$0xff]
    %v731 = vld [vmem:[%s725 + $0x28] sm:$0xff]
    %v732 = vld [vmem:[%s725 + $0x30] sm:$0xff]
    %v733 = vld [vmem:[%s725 + $0x38] sm:$0xff]
    %v735 = vsel %vm322, %v723, 0
    %v738 = vsel %vm322, %v724, 0
    %740 = vmatprep.subr.mxu0 0.0
    %741 = vmatpush1.msra.mxu0 0.0
    %742 = vmatprep.subr.mxu0 0.0
    %743 = vmatpush1.msra.mxu0 0.0
    %744 = vmatprep.subr.mxu0 0.0
    %745 = vmatpush1.msra.mxu0 0.0
    %746 = vmatprep.subr.mxu0 0.0
    %747 = vmatpush1.msra.mxu0 0.0
    %748 = vmatprep.subr.mxu0 0.0
    %749 = vmatpush1.msra.mxu0 0.0
    %750 = vmatprep.subr.mxu0 0.0
    %751 = vmatpush1.msra.mxu0 0.0
    %752 = vmatprep.subr.mxu0 0.0
    %753 = vmatpush1.msra.mxu0 0.0
    %754 = vmatprep.subr.mxu0 0.0
    %755 = vmatpush1.msra.mxu0 0.0
    %756 = vmatprep.subr.mxu0 0.0
    %757 = vmatpush1.msra.mxu0 0.0
    %758 = vmatprep.subr.mxu0 0.0
    %759 = vmatpush1.msra.mxu0 0.0
    %760 = vmatprep.subr.mxu0 0.0
    %761 = vmatpush1.msra.mxu0 0.0
    %762 = vmatprep.subr.mxu0 0.0
    %763 = vmatpush1.msra.mxu0 0.0
    %764 = vmatprep.subr.mxu0 %v733
    %765 = vmatpush1.msra.mxu0 %v732
    %766 = vmatprep.subr.mxu0 %v731
    %767 = vmatpush1.msra.mxu0 %v730
    %768 = vmatprep.subr.mxu0 %v729
    %769 = vmatpush1.msra.mxu0 %v728
    %770 = vmatprep.subr.mxu0 %v727
    %771 = vmatpush1.msra.mxu0 %v726
    %772 = vmatprep.subr.mxu0 0.0
    %773 = vmatpush2.msra.mxu0 0.0
    %774 = vmatprep.subr.mxu0 0.0
    %775 = vmatpush2.msra.mxu0 0.0
    %776 = vmatprep.subr.mxu0 0.0
    %777 = vmatpush2.msra.mxu0 0.0
    %778 = vmatprep.subr.mxu0 0.0
    %779 = vmatpush2.msra.mxu0 0.0
    %780 = vmatprep.subr.mxu0 0.0
    %781 = vmatpush2.msra.mxu0 0.0
    %782 = vmatprep.subr.mxu0 0.0
    %783 = vmatpush2.msra.mxu0 0.0
    %784 = vmatprep.subr.mxu0 0.0
    %785 = vmatpush2.msra.mxu0 0.0
    %786 = vmatprep.subr.mxu0 0.0
    %787 = vmatpush2.msra.mxu0 0.0
    %788 = vmatprep.subr.mxu0 0.0
    %789 = vmatpush2.msra.mxu0 0.0
    %790 = vmatprep.subr.mxu0 0.0
    %791 = vmatpush2.msra.mxu0 0.0
    %792 = vmatprep.subr.mxu0 0.0
    %793 = vmatpush2.msra.mxu0 0.0
    %794 = vmatprep.subr.mxu0 0.0
    %795 = vmatpush2.msra.mxu0 0.0
    %796 = vmatprep.subr.mxu0 0.0
    %797 = vmatpush2.msra.mxu0 0.0
    %798 = vmatprep.subr.mxu0 0.0
    %799 = vmatpush2.msra.mxu0 0.0
    %800 = vmatprep.subr.mxu0 0.0
    %801 = vmatpush2.msra.mxu0 0.0
    %802 = vmatprep.subr.mxu0 0.0
    %803 = vmatpush2.msra.mxu0 0.0
    %804 = vmatprep.mubr.f32.mxu0 0.0
    %805 = vmatmul.mubr.f32.gmra.mxu0 %v735
    %v806 = vpop.f32.mrf.mxu0
    %v807 = vadd.f32 0.0, %v806
    %v808 = vpop.f32.mrf.mxu0
    %v809 = vadd.f32 0.0, %v808
    %810 = vmatprep.mubr.f32.mxu0 0.0
    %811 = vmatmul.mubr.f32.gmra.mxu0 %v738
    %v812 = vpop.f32.mrf.mxu0
    %v813 = vadd.f32 0.0, %v812
    %v814 = vpop.f32.mrf.mxu0
    %v815 = vadd.f32 0.0, %v814
    %816 = vdwg.mxu0
    %v817 = vadd.f32 %v719, %v807
    %v818 = vadd.f32 %v720, %v809
    %v819 = vadd.f32 %v721, %v813
    %v820 = vadd.f32 %v722, %v815
    %v821 = vadd.f32 %v817, %v819
    %v822 = vrot.slane %v821, 4
    %v823 = vadd.f32 %v821, %v822
    %v824 = vrot.slane %v823, 2
    %v825 = vadd.f32 %v823, %v824
    %v826 = vrot.slane %v825, 1
    %v827 = vadd.f32 %v825, %v826
    %v828 = vadd.f32 %v818, %v820
    %v829 = vrot.slane %v828, 4
    %v830 = vadd.f32 %v828, %v829
    %v831 = vrot.slane %v830, 2
    %v832 = vadd.f32 %v830, %v831
    %v833 = vrot.slane %v832, 1
    %v834 = vadd.f32 %v832, %v833
    %v835 = vmul.f32 %v817, %v817
    %v836 = vmul.f32 %v818, %v818
    %v837 = vmul.f32 %v819, %v819
    %v838 = vmul.f32 %v820, %v820
    %v839 = vadd.f32 %v835, %v837
    %v840 = vrot.slane %v839, 4
    %v841 = vadd.f32 %v839, %v840
    %v842 = vrot.slane %v841, 2
    %v843 = vadd.f32 %v841, %v842
    %v844 = vrot.slane %v843, 1
    %v845 = vadd.f32 %v843, %v844
    %v846 = vadd.f32 %v836, %v838
    %v847 = vrot.slane %v846, 4
    %v848 = vadd.f32 %v846, %v847
    %v849 = vrot.slane %v848, 2
    %v850 = vadd.f32 %v848, %v849
    %v851 = vrot.slane %v850, 1
    %v852 = vadd.f32 %v850, %v851
    %v853 = vld [vmem:[#allocation14] sm:$0xff]
    %v854 = vld [vmem:[#allocation14 + $0x8] sm:$0xff]
    %v855 = vld [vmem:[#allocation14 + $0x10] sm:$0xff]
    %v856 = vld [vmem:[#allocation14 + $0x18] sm:$0xff]
    %v857 = vld [vmem:[#allocation14 + $0x20] sm:$0xff]
    %v858 = vld [vmem:[#allocation14 + $0x28] sm:$0xff]
    %v859 = vld [vmem:[#allocation14 + $0x30] sm:$0xff]
    %v860 = vld [vmem:[#allocation14 + $0x38] sm:$0xff]
    %v861 = vld [vmem:[#allocation14 + $0x40] sm:$0xff]
    %v862 = vld [vmem:[#allocation14 + $0x48] sm:$0xff]
    %v863 = vld [vmem:[#allocation14 + $0x50] sm:$0xff]
    %v864 = vld [vmem:[#allocation14 + $0x58] sm:$0xff]
    %v865 = vld [vmem:[#allocation14 + $0x60] sm:$0xff]
    %v866 = vld [vmem:[#allocation14 + $0x68] sm:$0xff]
    %v867 = vld [vmem:[#allocation14 + $0x70] sm:$0xff]
    %v868 = vld [vmem:[#allocation14 + $0x78] sm:$0xff]
    %v869 = vld [vmem:[#allocation14 + $0x80] sm:$0xff]
    %v870 = vld [vmem:[#allocation14 + $0x88] sm:$0xff]
    %v871 = vld [vmem:[#allocation14 + $0x90] sm:$0xff]
    %v872 = vld [vmem:[#allocation14 + $0x98] sm:$0xff]
    %v873 = vld [vmem:[#allocation14 + $0xa0] sm:$0xff]
    %v874 = vld [vmem:[#allocation14 + $0xa8] sm:$0xff]
    %v875 = vld [vmem:[#allocation14 + $0xb0] sm:$0xff]
    %v876 = vld [vmem:[#allocation14 + $0xb8] sm:$0xff]
    %v877 = vld [vmem:[#allocation14 + $0xc0] sm:$0xff]
    %v878 = vld [vmem:[#allocation14 + $0xc8] sm:$0xff]
    %v879 = vld [vmem:[#allocation14 + $0xd0] sm:$0xff]
    %v880 = vld [vmem:[#allocation14 + $0xd8] sm:$0xff]
    %v881 = vld [vmem:[#allocation14 + $0xe0] sm:$0xff]
    %v882 = vld [vmem:[#allocation14 + $0xe8] sm:$0xff]
    %v883 = vld [vmem:[#allocation14 + $0xf0] sm:$0xff]
    %v884 = vld [vmem:[#allocation14 + $0xf8] sm:$0xff]
    %v885 = vld [vmem:[#allocation14 + $0x100] sm:$0xff]
    %v886 = vld [vmem:[#allocation14 + $0x108] sm:$0xff]
    %v887 = vld [vmem:[#allocation14 + $0x110] sm:$0xff]
    %v888 = vld [vmem:[#allocation14 + $0x118] sm:$0xff]
    %v889 = vld [vmem:[#allocation14 + $0x120] sm:$0xff]
    %v890 = vld [vmem:[#allocation14 + $0x128] sm:$0xff]
    %v891 = vld [vmem:[#allocation14 + $0x130] sm:$0xff]
    %v892 = vld [vmem:[#allocation14 + $0x138] sm:$0xff]
    %v893 = vld [vmem:[#allocation14 + $0x140] sm:$0xff]
    %v894 = vld [vmem:[#allocation14 + $0x148] sm:$0xff]
    %v895 = vld [vmem:[#allocation14 + $0x150] sm:$0xff]
    %v896 = vld [vmem:[#allocation14 + $0x158] sm:$0xff]
    %v897 = vld [vmem:[#allocation14 + $0x160] sm:$0xff]
    %v898 = vld [vmem:[#allocation14 + $0x168] sm:$0xff]
    %v899 = vld [vmem:[#allocation14 + $0x170] sm:$0xff]
    %v900 = vld [vmem:[#allocation14 + $0x178] sm:$0xff]
    %v901 = vld [vmem:[#allocation14 + $0x180] sm:$0xff]
    %v902 = vld [vmem:[#allocation14 + $0x188] sm:$0xff]
    %v903 = vld [vmem:[#allocation14 + $0x190] sm:$0xff]
    %v904 = vld [vmem:[#allocation14 + $0x198] sm:$0xff]
    %v905 = vld [vmem:[#allocation14 + $0x1a0] sm:$0xff]
    %v906 = vld [vmem:[#allocation14 + $0x1a8] sm:$0xff]
    %v907 = vld [vmem:[#allocation14 + $0x1b0] sm:$0xff]
    %v908 = vld [vmem:[#allocation14 + $0x1b8] sm:$0xff]
    %v909 = vld [vmem:[#allocation14 + $0x1c0] sm:$0xff]
    %v910 = vld [vmem:[#allocation14 + $0x1c8] sm:$0xff]
    %v911 = vld [vmem:[#allocation14 + $0x1d0] sm:$0xff]
    %v912 = vld [vmem:[#allocation14 + $0x1d8] sm:$0xff]
    %v913 = vld [vmem:[#allocation14 + $0x1e0] sm:$0xff]
    %v914 = vld [vmem:[#allocation14 + $0x1e8] sm:$0xff]
    %v915 = vld [vmem:[#allocation14 + $0x1f0] sm:$0xff]
    %v916 = vld [vmem:[#allocation14 + $0x1f8] sm:$0xff]
    %917 = vmatprep.subr.mxu0 %v884
    %918 = vmatpush1.msra.mxu0 %v883
    %919 = vmatprep.subr.mxu0 %v882
    %920 = vmatpush1.msra.mxu0 %v881
    %921 = vmatprep.subr.mxu0 %v880
    %922 = vmatpush1.msra.mxu0 %v879
    %923 = vmatprep.subr.mxu0 %v878
    %924 = vmatpush1.msra.mxu0 %v877
    %925 = vmatprep.subr.mxu0 %v876
    %926 = vmatpush1.msra.mxu0 %v875
    %927 = vmatprep.subr.mxu0 %v874
    %928 = vmatpush1.msra.mxu0 %v873
    %929 = vmatprep.subr.mxu0 %v872
    %930 = vmatpush1.msra.mxu0 %v871
    %931 = vmatprep.subr.mxu0 %v870
    %932 = vmatpush1.msra.mxu0 %v869
    %933 = vmatprep.subr.mxu0 %v868
    %934 = vmatpush1.msra.mxu0 %v867
    %935 = vmatprep.subr.mxu0 %v866
    %936 = vmatpush1.msra.mxu0 %v865
    %937 = vmatprep.subr.mxu0 %v864
    %938 = vmatpush1.msra.mxu0 %v863
    %939 = vmatprep.subr.mxu0 %v862
    %940 = vmatpush1.msra.mxu0 %v861
    %941 = vmatprep.subr.mxu0 %v860
    %942 = vmatpush1.msra.mxu0 %v859
    %943 = vmatprep.subr.mxu0 %v858
    %944 = vmatpush1.msra.mxu0 %v857
    %945 = vmatprep.subr.mxu0 %v856
    %946 = vmatpush1.msra.mxu0 %v855
    %947 = vmatprep.subr.mxu0 %v854
    %948 = vmatpush1.msra.mxu0 %v853
    %949 = vmatprep.subr.mxu0 %v916
    %950 = vmatpush2.msra.mxu0 %v915
    %951 = vmatprep.subr.mxu0 %v914
    %952 = vmatpush2.msra.mxu0 %v913
    %953 = vmatprep.subr.mxu0 %v912
    %954 = vmatpush2.msra.mxu0 %v911
    %955 = vmatprep.subr.mxu0 %v910
    %956 = vmatpush2.msra.mxu0 %v909
    %957 = vmatprep.subr.mxu0 %v908
    %958 = vmatpush2.msra.mxu0 %v907
    %959 = vmatprep.subr.mxu0 %v906
    %960 = vmatpush2.msra.mxu0 %v905
    %961 = vmatprep.subr.mxu0 %v904
    %962 = vmatpush2.msra.mxu0 %v903
    %963 = vmatprep.subr.mxu0 %v902
    %964 = vmatpush2.msra.mxu0 %v901
    %965 = vmatprep.subr.mxu0 %v900
    %966 = vmatpush2.msra.mxu0 %v899
    %967 = vmatprep.subr.mxu0 %v898
    %968 = vmatpush2.msra.mxu0 %v897
    %969 = vmatprep.subr.mxu0 %v896
    %970 = vmatpush2.msra.mxu0 %v895
    %971 = vmatprep.subr.mxu0 %v894
    %972 = vmatpush2.msra.mxu0 %v893
    %973 = vmatprep.subr.mxu0 %v892
    %974 = vmatpush2.msra.mxu0 %v891
    %975 = vmatprep.subr.mxu0 %v890
    %976 = vmatpush2.msra.mxu0 %v889
    %977 = vmatprep.subr.mxu0 %v888
    %978 = vmatpush2.msra.mxu0 %v887
    %979 = vmatprep.subr.mxu0 %v886
    %980 = vmatpush2.msra.mxu0 %v885
    %981 = vmatprep.mubr.f32.mxu0 %v834
    %982 = vmatmul.mubr.f32.gmra.mxu0 %v827
    %v983 = vpop.f32.mrf.mxu0
    %v984 = vadd.f32 0.0, %v983
    %v985 = vpop.f32.mrf.mxu0
    %v986 = vadd.f32 0.0, %v985
    %987 = vdwg.mxu0
    %988 = vmatprep.subr.mxu0 %v884
    %989 = vmatpush1.msra.mxu0 %v883
    %990 = vmatprep.subr.mxu0 %v882
    %991 = vmatpush1.msra.mxu0 %v881
    %992 = vmatprep.subr.mxu0 %v880
    %993 = vmatpush1.msra.mxu0 %v879
    %994 = vmatprep.subr.mxu0 %v878
    %995 = vmatpush1.msra.mxu0 %v877
    %996 = vmatprep.subr.mxu0 %v876
    %997 = vmatpush1.msra.mxu0 %v875
    %998 = vmatprep.subr.mxu0 %v874
    %999 = vmatpush1.msra.mxu0 %v873
    %1000 = vmatprep.subr.mxu0 %v872
    %1001 = vmatpush1.msra.mxu0 %v871
    %1002 = vmatprep.subr.mxu0 %v870
    %1003 = vmatpush1.msra.mxu0 %v869
    %1004 = vmatprep.subr.mxu0 %v868
    %1005 = vmatpush1.msra.mxu0 %v867
    %1006 = vmatprep.subr.mxu0 %v866
    %1007 = vmatpush1.msra.mxu0 %v865
    %1008 = vmatprep.subr.mxu0 %v864
    %1009 = vmatpush1.msra.mxu0 %v863
    %1010 = vmatprep.subr.mxu0 %v862
    %1011 = vmatpush1.msra.mxu0 %v861
    %1012 = vmatprep.subr.mxu0 %v860
    %1013 = vmatpush1.msra.mxu0 %v859
    %1014 = vmatprep.subr.mxu0 %v858
    %1015 = vmatpush1.msra.mxu0 %v857
    %1016 = vmatprep.subr.mxu0 %v856
    %1017 = vmatpush1.msra.mxu0 %v855
    %1018 = vmatprep.subr.mxu0 %v854
    %1019 = vmatpush1.msra.mxu0 %v853
    %1020 = vmatprep.subr.mxu0 %v916
    %1021 = vmatpush2.msra.mxu0 %v915
    %1022 = vmatprep.subr.mxu0 %v914
    %1023 = vmatpush2.msra.mxu0 %v913
    %1024 = vmatprep.subr.mxu0 %v912
    %1025 = vmatpush2.msra.mxu0 %v911
    %1026 = vmatprep.subr.mxu0 %v910
    %1027 = vmatpush2.msra.mxu0 %v909
    %1028 = vmatprep.subr.mxu0 %v908
    %1029 = vmatpush2.msra.mxu0 %v907
    %1030 = vmatprep.subr.mxu0 %v906
    %1031 = vmatpush2.msra.mxu0 %v905
    %1032 = vmatprep.subr.mxu0 %v904
    %1033 = vmatpush2.msra.mxu0 %v903
    %1034 = vmatprep.subr.mxu0 %v902
    %1035 = vmatpush2.msra.mxu0 %v901
    %1036 = vmatprep.subr.mxu0 %v900
    %1037 = vmatpush2.msra.mxu0 %v899
    %1038 = vmatprep.subr.mxu0 %v898
    %1039 = vmatpush2.msra.mxu0 %v897
    %1040 = vmatprep.subr.mxu0 %v896
    %1041 = vmatpush2.msra.mxu0 %v895
    %1042 = vmatprep.subr.mxu0 %v894
    %1043 = vmatpush2.msra.mxu0 %v893
    %1044 = vmatprep.subr.mxu0 %v892
    %1045 = vmatpush2.msra.mxu0 %v891
    %1046 = vmatprep.subr.mxu0 %v890
    %1047 = vmatpush2.msra.mxu0 %v889
    %1048 = vmatprep.subr.mxu0 %v888
    %1049 = vmatpush2.msra.mxu0 %v887
    %1050 = vmatprep.subr.mxu0 %v886
    %1051 = vmatpush2.msra.mxu0 %v885
    %1052 = vmatprep.mubr.f32.mxu0 %v852
    %1053 = vmatmul.mubr.f32.gmra.mxu0 %v845
    %v1054 = vpop.f32.mrf.mxu0
    %v1055 = vadd.f32 0.0, %v1054
    %v1056 = vpop.f32.mrf.mxu0
    %v1057 = vadd.f32 0.0, %v1056
    %1058 = vdwg.mxu0
    %v1059 = vmul.f32 %v984, %v984
    %v1060 = vmul.f32 %v986, %v986
    %v1061 = vsub.f32 %v1055, %v1059
    %v1062 = vsub.f32 %v1057, %v1060
    %v1063 = vlaneseq
    %v1064 = vshrl.u32 %v1063, 7
    %v1065 = vsub.s32 0, %v1064
    %v1066 = vrot.slane %v984, %v1065
    %v1067 = vlaneseq
    %v1068 = vshrl.u32 %v1067, 7
    %v1069 = vsub.s32 0, %v1068
    %v1070 = vrot.slane %v986, %v1069
    %v1071 = vsub.f32 %v817, %v1066
    %v1072 = vsub.f32 %v818, %v1070
    %v1073 = vsub.f32 %v819, %v1066
    %v1074 = vsub.f32 %v820, %v1070
    %v1075 = vadd.f32 %v1061, 1e-05
    %v1076 = vadd.f32 %v1062, 1e-05
    %v1077 = vrsqrt.pop %v1075
    %v1078 = vrsqrt.pop %v1076
    %v1079 = vlaneseq
    %v1080 = vshrl.u32 %v1079, 7
    %v1081 = vsub.s32 0, %v1080
    %v1082 = vrot.slane %v1077, %v1081
    %v1083 = vlaneseq
    %v1084 = vshrl.u32 %v1083, 7
    %v1085 = vsub.s32 0, %v1084
    %v1086 = vrot.slane %v1078, %v1085
    %v1087 = vmul.f32 %v1071, %v1082
    %v1088 = vmul.f32 %v1072, %v1086
    %v1089 = vmul.f32 %v1073, %v1082
    %v1090 = vmul.f32 %v1074, %v1086
    %v1091 = vld [vmem:[#allocation11] ss:$8 sm:$0x3]
    %v1093 = vlaneseq
    %v1094 = vshrl.u32 %v1093, 7
    %v1095 = vsub.s32 0, %v1094
    %v1096 = vrot.slane %v1091, %v1095
    %v1097 = vlaneseq
    %v1098 = vshrl.u32 %v1097, 7
    %v1099 = vsub.s32 1, %v1098
    %v1100 = vrot.slane %v1091, %v1099
    %v1103 = vmul.f32 %v1087, %v1096
    %v1104 = vmul.f32 %v1088, %v1100
    %v1105 = vmul.f32 %v1089, %v1096
    %v1106 = vmul.f32 %v1090, %v1100
    %v1107 = vld [vmem:[#allocation12] ss:$8 sm:$0x3]
    %v1109 = vlaneseq
    %v1110 = vshrl.u32 %v1109, 7
    %v1111 = vsub.s32 0, %v1110
    %v1112 = vrot.slane %v1107, %v1111
    %v1113 = vlaneseq
    %v1114 = vshrl.u32 %v1113, 7
    %v1115 = vsub.s32 1, %v1114
    %v1116 = vrot.slane %v1107, %v1115
    %v1119 = vadd.f32 %v1103, %v1112
    %v1120 = vadd.f32 %v1104, %v1116
    %v1121 = vadd.f32 %v1105, %v1112
    %v1122 = vadd.f32 %v1106, %v1116
    %s1123 = sld [smem:[#allocation33]]
    %vm1124 = vcmp.ge.f32.partialorder %v1119, 0.0
    %vm1125 = vcmp.ge.f32.partialorder %v1120, 0.0
    %vm1126 = vcmp.ge.f32.partialorder %v1121, 0.0
    %vm1127 = vcmp.ge.f32.partialorder %v1122, 0.0
    %v1128 = vstv %s1123
    %v1129 = vmul.f32 %v1128, %v1119
    %v1130 = vmul.f32 %v1128, %v1120
    %v1131 = vmul.f32 %v1128, %v1121
    %v1132 = vmul.f32 %v1128, %v1122
    %v1133 = vsel %vm1124, %v1119, %v1129
    %v1134 = vsel %vm1125, %v1120, %v1130
    %v1135 = vsel %vm1126, %v1121, %v1131
    %v1136 = vsel %vm1127, %v1122, %v1132
    %v1141 = vrot.slane %v1133, 7
    %v1142 = vrot.slane %v1134, 7
    %v1143 = vrot.slane %v1135, 7
    %v1144 = vrot.slane %v1136, 7
    %1149 = vst [vmem:[#allocation3] sm:$0xfe] %v1141
    %1150 = vst [vmem:[#allocation3 + $0x8] sm:$0xfe] %v1142
    %1151 = vst [vmem:[#allocation3 + $0x10] sm:$0x1] %v1141
    %1152 = vst [vmem:[#allocation3 + $0x18] sm:$0x1] %v1142
    %1153 = vst [vmem:[#allocation3 + $0x20] sm:$0xfe] %v1143
    %1154 = vst [vmem:[#allocation3 + $0x28] sm:$0xfe] %v1144
    %1155 = vst [vmem:[#allocation3 + $0x30] sm:$0x1] %v1143
    %1156 = vst [vmem:[#allocation3 + $0x38] sm:$0x1] %v1144
    %v1157 = vld [vmem:[#allocation3] sm:$0xff]
    %v1158 = vld [vmem:[#allocation3 + $0x8] sm:$0xff]
    %v1159 = vld [vmem:[#allocation3 + $0x20] sm:$0xff]
    %v1160 = vld [vmem:[#allocation3 + $0x28] sm:$0xff]
    %v1161 = vld [vmem:[#allocation9] sm:$0xff]
    %v1162 = vld [vmem:[#allocation9 + $0x8] sm:$0xff]
    %v1163 = vld [vmem:[#allocation9 + $0x10] sm:$0xff]
    %v1164 = vld [vmem:[#allocation9 + $0x18] sm:$0xff]
    %v1165 = vld [vmem:[#allocation9 + $0x20] sm:$0xff]
    %v1166 = vld [vmem:[#allocation9 + $0x28] sm:$0xff]
    %v1167 = vld [vmem:[#allocation9 + $0x30] sm:$0xff]
    %v1168 = vld [vmem:[#allocation9 + $0x38] sm:$0xff]
    %v1169 = vld [vmem:[#allocation9 + $0x40] sm:$0xff]
    %v1170 = vld [vmem:[#allocation9 + $0x48] sm:$0xff]
    %v1171 = vld [vmem:[#allocation9 + $0x50] sm:$0xff]
    %v1172 = vld [vmem:[#allocation9 + $0x58] sm:$0xff]
    %v1173 = vld [vmem:[#allocation9 + $0x60] sm:$0xff]
    %v1174 = vld [vmem:[#allocation9 + $0x68] sm:$0xff]
    %v1175 = vld [vmem:[#allocation9 + $0x70] sm:$0xff]
    %v1176 = vld [vmem:[#allocation9 + $0x78] sm:$0xff]
    %v1177 = vld [vmem:[#allocation9 + $0x80] sm:$0xff]
    %v1178 = vld [vmem:[#allocation9 + $0x88] sm:$0xff]
    %v1179 = vld [vmem:[#allocation9 + $0x90] sm:$0xff]
    %v1180 = vld [vmem:[#allocation9 + $0x98] sm:$0xff]
    %v1181 = vld [vmem:[#allocation9 + $0xa0] sm:$0xff]
    %v1182 = vld [vmem:[#allocation9 + $0xa8] sm:$0xff]
    %v1183 = vld [vmem:[#allocation9 + $0xb0] sm:$0xff]
    %v1184 = vld [vmem:[#allocation9 + $0xb8] sm:$0xff]
    %v1185 = vld [vmem:[#allocation9 + $0xc0] sm:$0xff]
    %v1186 = vld [vmem:[#allocation9 + $0xc8] sm:$0xff]
    %v1187 = vld [vmem:[#allocation9 + $0xd0] sm:$0xff]
    %v1188 = vld [vmem:[#allocation9 + $0xd8] sm:$0xff]
    %v1189 = vld [vmem:[#allocation9 + $0xe0] sm:$0xff]
    %v1190 = vld [vmem:[#allocation9 + $0xe8] sm:$0xff]
    %v1191 = vld [vmem:[#allocation9 + $0xf0] sm:$0xff]
    %v1192 = vld [vmem:[#allocation9 + $0xf8] sm:$0xff]
    %v1193 = vld [vmem:[#allocation9 + $0x100] sm:$0xff]
    %v1194 = vld [vmem:[#allocation9 + $0x108] sm:$0xff]
    %v1195 = vld [vmem:[#allocation9 + $0x110] sm:$0xff]
    %v1196 = vld [vmem:[#allocation9 + $0x118] sm:$0xff]
    %v1197 = vld [vmem:[#allocation9 + $0x120] sm:$0xff]
    %v1198 = vld [vmem:[#allocation9 + $0x128] sm:$0xff]
    %v1199 = vld [vmem:[#allocation9 + $0x130] sm:$0xff]
    %v1200 = vld [vmem:[#allocation9 + $0x138] sm:$0xff]
    %v1201 = vld [vmem:[#allocation9 + $0x140] sm:$0xff]
    %v1202 = vld [vmem:[#allocation9 + $0x148] sm:$0xff]
    %v1203 = vld [vmem:[#allocation9 + $0x150] sm:$0xff]
    %v1204 = vld [vmem:[#allocation9 + $0x158] sm:$0xff]
    %v1205 = vld [vmem:[#allocation9 + $0x160] sm:$0xff]
    %v1206 = vld [vmem:[#allocation9 + $0x168] sm:$0xff]
    %v1207 = vld [vmem:[#allocation9 + $0x170] sm:$0xff]
    %v1208 = vld [vmem:[#allocation9 + $0x178] sm:$0xff]
    %v1209 = vld [vmem:[#allocation9 + $0x180] sm:$0xff]
    %v1210 = vld [vmem:[#allocation9 + $0x188] sm:$0xff]
    %v1211 = vld [vmem:[#allocation9 + $0x190] sm:$0xff]
    %v1212 = vld [vmem:[#allocation9 + $0x198] sm:$0xff]
    %v1213 = vld [vmem:[#allocation9 + $0x1a0] sm:$0xff]
    %v1214 = vld [vmem:[#allocation9 + $0x1a8] sm:$0xff]
    %v1215 = vld [vmem:[#allocation9 + $0x1b0] sm:$0xff]
    %v1216 = vld [vmem:[#allocation9 + $0x1b8] sm:$0xff]
    %v1217 = vld [vmem:[#allocation9 + $0x1c0] sm:$0xff]
    %v1218 = vld [vmem:[#allocation9 + $0x1c8] sm:$0xff]
    %v1219 = vld [vmem:[#allocation9 + $0x1d0] sm:$0xff]
    %v1220 = vld [vmem:[#allocation9 + $0x1d8] sm:$0xff]
    %v1221 = vld [vmem:[#allocation9 + $0x1e0] sm:$0xff]
    %v1222 = vld [vmem:[#allocation9 + $0x1e8] sm:$0xff]
    %v1223 = vld [vmem:[#allocation9 + $0x1f0] sm:$0xff]
    %v1224 = vld [vmem:[#allocation9 + $0x1f8] sm:$0xff]
    %v1225 = vld [vmem:[#allocation3] sm:$0xfe]
    %v1226 = vld [vmem:[#allocation3 + $0x8] sm:$0xfe]
    %v1227 = vld [vmem:[#allocation3 + $0x10] sm:$0x1]
    %v1228 = vld [vmem:[#allocation3 + $0x18] sm:$0x1]
    %v1229 = vld [vmem:[#allocation3 + $0x20] sm:$0xfe]
    %v1230 = vld [vmem:[#allocation3 + $0x28] sm:$0xfe]
    %v1231 = vld [vmem:[#allocation3 + $0x30] sm:$0x1]
    %v1232 = vld [vmem:[#allocation3 + $0x38] sm:$0x1]
    %vm1241 = vcmask 1046528
    %v1242 = vrot.slane %v1225, 1
    %v1243 = vrot.slane %v1227, 1
    %v1244 = vsel %vm1241, %v1242, %v1243
    %v1245 = vrot.slane %v1226, 1
    %v1246 = vrot.slane %v1228, 1
    %v1247 = vsel %vm1241, %v1245, %v1246
    %v1248 = vrot.slane %v1229, 1
    %v1249 = vrot.slane %v1231, 1
    %v1250 = vsel %vm1241, %v1248, %v1249
    %v1251 = vrot.slane %v1230, 1
    %v1252 = vrot.slane %v1232, 1
    %v1253 = vsel %vm1241, %v1251, %v1252
    %s1258 = scalar_lea.vmem [#allocation9], 512
    %v1259 = vld [vmem:[%s1258] sm:$0xff]
    %v1260 = vld [vmem:[%s1258 + $0x8] sm:$0xff]
    %v1261 = vld [vmem:[%s1258 + $0x10] sm:$0xff]
    %v1262 = vld [vmem:[%s1258 + $0x18] sm:$0xff]
    %v1263 = vld [vmem:[%s1258 + $0x20] sm:$0xff]
    %v1264 = vld [vmem:[%s1258 + $0x28] sm:$0xff]
    %v1265 = vld [vmem:[%s1258 + $0x30] sm:$0xff]
    %v1266 = vld [vmem:[%s1258 + $0x38] sm:$0xff]
    %v1267 = vld [vmem:[%s1258 + $0x40] sm:$0xff]
    %v1268 = vld [vmem:[%s1258 + $0x48] sm:$0xff]
    %v1269 = vld [vmem:[%s1258 + $0x50] sm:$0xff]
    %v1270 = vld [vmem:[%s1258 + $0x58] sm:$0xff]
    %v1271 = vld [vmem:[%s1258 + $0x60] sm:$0xff]
    %v1272 = vld [vmem:[%s1258 + $0x68] sm:$0xff]
    %v1273 = vld [vmem:[%s1258 + $0x70] sm:$0xff]
    %v1274 = vld [vmem:[%s1258 + $0x78] sm:$0xff]
    %v1275 = vld [vmem:[%s1258 + $0x80] sm:$0xff]
    %v1276 = vld [vmem:[%s1258 + $0x88] sm:$0xff]
    %v1277 = vld [vmem:[%s1258 + $0x90] sm:$0xff]
    %v1278 = vld [vmem:[%s1258 + $0x98] sm:$0xff]
    %v1279 = vld [vmem:[%s1258 + $0xa0] sm:$0xff]
    %v1280 = vld [vmem:[%s1258 + $0xa8] sm:$0xff]
    %v1281 = vld [vmem:[%s1258 + $0xb0] sm:$0xff]
    %v1282 = vld [vmem:[%s1258 + $0xb8] sm:$0xff]
    %v1283 = vld [vmem:[%s1258 + $0xc0] sm:$0xff]
    %v1284 = vld [vmem:[%s1258 + $0xc8] sm:$0xff]
    %v1285 = vld [vmem:[%s1258 + $0xd0] sm:$0xff]
    %v1286 = vld [vmem:[%s1258 + $0xd8] sm:$0xff]
    %v1287 = vld [vmem:[%s1258 + $0xe0] sm:$0xff]
    %v1288 = vld [vmem:[%s1258 + $0xe8] sm:$0xff]
    %v1289 = vld [vmem:[%s1258 + $0xf0] sm:$0xff]
    %v1290 = vld [vmem:[%s1258 + $0xf8] sm:$0xff]
    %v1291 = vld [vmem:[%s1258 + $0x100] sm:$0xff]
    %v1292 = vld [vmem:[%s1258 + $0x108] sm:$0xff]
    %v1293 = vld [vmem:[%s1258 + $0x110] sm:$0xff]
    %v1294 = vld [vmem:[%s1258 + $0x118] sm:$0xff]
    %v1295 = vld [vmem:[%s1258 + $0x120] sm:$0xff]
    %v1296 = vld [vmem:[%s1258 + $0x128] sm:$0xff]
    %v1297 = vld [vmem:[%s1258 + $0x130] sm:$0xff]
    %v1298 = vld [vmem:[%s1258 + $0x138] sm:$0xff]
    %v1299 = vld [vmem:[%s1258 + $0x140] sm:$0xff]
    %v1300 = vld [vmem:[%s1258 + $0x148] sm:$0xff]
    %v1301 = vld [vmem:[%s1258 + $0x150] sm:$0xff]
    %v1302 = vld [vmem:[%s1258 + $0x158] sm:$0xff]
    %v1303 = vld [vmem:[%s1258 + $0x160] sm:$0xff]
    %v1304 = vld [vmem:[%s1258 + $0x168] sm:$0xff]
    %v1305 = vld [vmem:[%s1258 + $0x170] sm:$0xff]
    %v1306 = vld [vmem:[%s1258 + $0x178] sm:$0xff]
    %v1307 = vld [vmem:[%s1258 + $0x180] sm:$0xff]
    %v1308 = vld [vmem:[%s1258 + $0x188] sm:$0xff]
    %v1309 = vld [vmem:[%s1258 + $0x190] sm:$0xff]
    %v1310 = vld [vmem:[%s1258 + $0x198] sm:$0xff]
    %v1311 = vld [vmem:[%s1258 + $0x1a0] sm:$0xff]
    %v1312 = vld [vmem:[%s1258 + $0x1a8] sm:$0xff]
    %v1313 = vld [vmem:[%s1258 + $0x1b0] sm:$0xff]
    %v1314 = vld [vmem:[%s1258 + $0x1b8] sm:$0xff]
    %v1315 = vld [vmem:[%s1258 + $0x1c0] sm:$0xff]
    %v1316 = vld [vmem:[%s1258 + $0x1c8] sm:$0xff]
    %v1317 = vld [vmem:[%s1258 + $0x1d0] sm:$0xff]
    %v1318 = vld [vmem:[%s1258 + $0x1d8] sm:$0xff]
    %v1319 = vld [vmem:[%s1258 + $0x1e0] sm:$0xff]
    %v1320 = vld [vmem:[%s1258 + $0x1e8] sm:$0xff]
    %v1321 = vld [vmem:[%s1258 + $0x1f0] sm:$0xff]
    %v1322 = vld [vmem:[%s1258 + $0x1f8] sm:$0xff]
    %1323 = vmatprep.subr.mxu0 %v1290
    %1324 = vmatpush1.msra.mxu0 %v1289
    %1325 = vmatprep.subr.mxu0 %v1288
    %1326 = vmatpush1.msra.mxu0 %v1287
    %1327 = vmatprep.subr.mxu0 %v1286
    %1328 = vmatpush1.msra.mxu0 %v1285
    %1329 = vmatprep.subr.mxu0 %v1284
    %1330 = vmatpush1.msra.mxu0 %v1283
    %1331 = vmatprep.subr.mxu0 %v1282
    %1332 = vmatpush1.msra.mxu0 %v1281
    %1333 = vmatprep.subr.mxu0 %v1280
    %1334 = vmatpush1.msra.mxu0 %v1279
    %1335 = vmatprep.subr.mxu0 %v1278
    %1336 = vmatpush1.msra.mxu0 %v1277
    %1337 = vmatprep.subr.mxu0 %v1276
    %1338 = vmatpush1.msra.mxu0 %v1275
    %1339 = vmatprep.subr.mxu0 %v1274
    %1340 = vmatpush1.msra.mxu0 %v1273
    %1341 = vmatprep.subr.mxu0 %v1272
    %1342 = vmatpush1.msra.mxu0 %v1271
    %1343 = vmatprep.subr.mxu0 %v1270
    %1344 = vmatpush1.msra.mxu0 %v1269
    %1345 = vmatprep.subr.mxu0 %v1268
    %1346 = vmatpush1.msra.mxu0 %v1267
    %1347 = vmatprep.subr.mxu0 %v1266
    %1348 = vmatpush1.msra.mxu0 %v1265
    %1349 = vmatprep.subr.mxu0 %v1264
    %1350 = vmatpush1.msra.mxu0 %v1263
    %1351 = vmatprep.subr.mxu0 %v1262
    %1352 = vmatpush1.msra.mxu0 %v1261
    %1353 = vmatprep.subr.mxu0 %v1260
    %1354 = vmatpush1.msra.mxu0 %v1259
    %1355 = vmatprep.subr.mxu0 %v1322
    %1356 = vmatpush2.msra.mxu0 %v1321
    %1357 = vmatprep.subr.mxu0 %v1320
    %1358 = vmatpush2.msra.mxu0 %v1319
    %1359 = vmatprep.subr.mxu0 %v1318
    %1360 = vmatpush2.msra.mxu0 %v1317
    %1361 = vmatprep.subr.mxu0 %v1316
    %1362 = vmatpush2.msra.mxu0 %v1315
    %1363 = vmatprep.subr.mxu0 %v1314
    %1364 = vmatpush2.msra.mxu0 %v1313
    %1365 = vmatprep.subr.mxu0 %v1312
    %1366 = vmatpush2.msra.mxu0 %v1311
    %1367 = vmatprep.subr.mxu0 %v1310
    %1368 = vmatpush2.msra.mxu0 %v1309
    %1369 = vmatprep.subr.mxu0 %v1308
    %1370 = vmatpush2.msra.mxu0 %v1307
    %1371 = vmatprep.subr.mxu0 %v1306
    %1372 = vmatpush2.msra.mxu0 %v1305
    %1373 = vmatprep.subr.mxu0 %v1304
    %1374 = vmatpush2.msra.mxu0 %v1303
    %1375 = vmatprep.subr.mxu0 %v1302
    %1376 = vmatpush2.msra.mxu0 %v1301
    %1377 = vmatprep.subr.mxu0 %v1300
    %1378 = vmatpush2.msra.mxu0 %v1299
    %1379 = vmatprep.subr.mxu0 %v1298
    %1380 = vmatpush2.msra.mxu0 %v1297
    %1381 = vmatprep.subr.mxu0 %v1296
    %1382 = vmatpush2.msra.mxu0 %v1295
    %1383 = vmatprep.subr.mxu0 %v1294
    %1384 = vmatpush2.msra.mxu0 %v1293
    %1385 = vmatprep.subr.mxu0 %v1292
    %1386 = vmatpush2.msra.mxu0 %v1291
    %1387 = vmatprep.mubr.f32.mxu0 %v1247
    %1388 = vmatmul.mubr.f32.gmra.mxu0 %v1244
    %v1389 = vpop.f32.mrf.mxu0
    %v1390 = vadd.f32 0.0, %v1389
    %v1391 = vpop.f32.mrf.mxu0
    %v1392 = vadd.f32 0.0, %v1391
    %1393 = vmatprep.mubr.f32.mxu0 %v1253
    %1394 = vmatmul.mubr.f32.gmra.mxu0 %v1250
    %v1395 = vpop.f32.mrf.mxu0
    %v1396 = vadd.f32 0.0, %v1395
    %v1397 = vpop.f32.mrf.mxu0
    %v1398 = vadd.f32 0.0, %v1397
    %1399 = vdwg.mxu0
    %1400 = vmatprep.subr.mxu0 %v1192
    %1401 = vmatpush1.msra.mxu0 %v1191
    %1402 = vmatprep.subr.mxu0 %v1190
    %1403 = vmatpush1.msra.mxu0 %v1189
    %1404 = vmatprep.subr.mxu0 %v1188
    %1405 = vmatpush1.msra.mxu0 %v1187
    %1406 = vmatprep.subr.mxu0 %v1186
    %1407 = vmatpush1.msra.mxu0 %v1185
    %1408 = vmatprep.subr.mxu0 %v1184
    %1409 = vmatpush1.msra.mxu0 %v1183
    %1410 = vmatprep.subr.mxu0 %v1182
    %1411 = vmatpush1.msra.mxu0 %v1181
    %1412 = vmatprep.subr.mxu0 %v1180
    %1413 = vmatpush1.msra.mxu0 %v1179
    %1414 = vmatprep.subr.mxu0 %v1178
    %1415 = vmatpush1.msra.mxu0 %v1177
    %1416 = vmatprep.subr.mxu0 %v1176
    %1417 = vmatpush1.msra.mxu0 %v1175
    %1418 = vmatprep.subr.mxu0 %v1174
    %1419 = vmatpush1.msra.mxu0 %v1173
    %1420 = vmatprep.subr.mxu0 %v1172
    %1421 = vmatpush1.msra.mxu0 %v1171
    %1422 = vmatprep.subr.mxu0 %v1170
    %1423 = vmatpush1.msra.mxu0 %v1169
    %1424 = vmatprep.subr.mxu0 %v1168
    %1425 = vmatpush1.msra.mxu0 %v1167
    %1426 = vmatprep.subr.mxu0 %v1166
    %1427 = vmatpush1.msra.mxu0 %v1165
    %1428 = vmatprep.subr.mxu0 %v1164
    %1429 = vmatpush1.msra.mxu0 %v1163
    %1430 = vmatprep.subr.mxu0 %v1162
    %1431 = vmatpush1.msra.mxu0 %v1161
    %1432 = vmatprep.subr.mxu0 %v1224
    %1433 = vmatpush2.msra.mxu0 %v1223
    %1434 = vmatprep.subr.mxu0 %v1222
    %1435 = vmatpush2.msra.mxu0 %v1221
    %1436 = vmatprep.subr.mxu0 %v1220
    %1437 = vmatpush2.msra.mxu0 %v1219
    %1438 = vmatprep.subr.mxu0 %v1218
    %1439 = vmatpush2.msra.mxu0 %v1217
    %1440 = vmatprep.subr.mxu0 %v1216
    %1441 = vmatpush2.msra.mxu0 %v1215
    %1442 = vmatprep.subr.mxu0 %v1214
    %1443 = vmatpush2.msra.mxu0 %v1213
    %1444 = vmatprep.subr.mxu0 %v1212
    %1445 = vmatpush2.msra.mxu0 %v1211
    %1446 = vmatprep.subr.mxu0 %v1210
    %1447 = vmatpush2.msra.mxu0 %v1209
    %1448 = vmatprep.subr.mxu0 %v1208
    %1449 = vmatpush2.msra.mxu0 %v1207
    %1450 = vmatprep.subr.mxu0 %v1206
    %1451 = vmatpush2.msra.mxu0 %v1205
    %1452 = vmatprep.subr.mxu0 %v1204
    %1453 = vmatpush2.msra.mxu0 %v1203
    %1454 = vmatprep.subr.mxu0 %v1202
    %1455 = vmatpush2.msra.mxu0 %v1201
    %1456 = vmatprep.subr.mxu0 %v1200
    %1457 = vmatpush2.msra.mxu0 %v1199
    %1458 = vmatprep.subr.mxu0 %v1198
    %1459 = vmatpush2.msra.mxu0 %v1197
    %1460 = vmatprep.subr.mxu0 %v1196
    %1461 = vmatpush2.msra.mxu0 %v1195
    %1462 = vmatprep.subr.mxu0 %v1194
    %1463 = vmatpush2.msra.mxu0 %v1193
    %1464 = vmatprep.mubr.f32.mxu0 %v1158
    %1465 = vmatmul.mubr.f32.gmra.mxu0 %v1157
    %v1466 = vpop.f32.mrf.mxu0
    %v1467 = vadd.f32 %v1390, %v1466
    %v1468 = vpop.f32.mrf.mxu0
    %v1469 = vadd.f32 %v1392, %v1468
    %1470 = vmatprep.mubr.f32.mxu0 %v1160
    %1471 = vmatmul.mubr.f32.gmra.mxu0 %v1159
    %v1472 = vpop.f32.mrf.mxu0
    %v1473 = vadd.f32 %v1396, %v1472
    %v1474 = vpop.f32.mrf.mxu0
    %v1475 = vadd.f32 %v1398, %v1474
    %1476 = vdwg.mxu0
    %v1477 = vld [vmem:[#allocation3] sm:$0xfc]
    %v1478 = vld [vmem:[#allocation3 + $0x8] sm:$0xfc]
    %v1479 = vld [vmem:[#allocation3 + $0x10] sm:$0x3]
    %v1480 = vld [vmem:[#allocation3 + $0x18] sm:$0x3]
    %v1481 = vld [vmem:[#allocation3 + $0x20] sm:$0xfc]
    %v1482 = vld [vmem:[#allocation3 + $0x28] sm:$0xfc]
    %v1483 = vld [vmem:[#allocation3 + $0x30] sm:$0x3]
    %v1484 = vld [vmem:[#allocation3 + $0x38] sm:$0x3]
    %vm1493 = vcmask 1045504
    %v1494 = vrot.slane %v1477, 2
    %v1495 = vrot.slane %v1479, 2
    %v1496 = vsel %vm1493, %v1494, %v1495
    %v1497 = vrot.slane %v1478, 2
    %v1498 = vrot.slane %v1480, 2
    %v1499 = vsel %vm1493, %v1497, %v1498
    %v1500 = vrot.slane %v1481, 2
    %v1501 = vrot.slane %v1483, 2
    %v1502 = vsel %vm1493, %v1500, %v1501
    %v1503 = vrot.slane %v1482, 2
    %v1504 = vrot.slane %v1484, 2
    %v1505 = vsel %vm1493, %v1503, %v1504
    %s1510 = scalar_lea.vmem [#allocation9], 1024
    %v1511 = vld [vmem:[%s1510] sm:$0xff]
    %v1512 = vld [vmem:[%s1510 + $0x8] sm:$0xff]
    %v1513 = vld [vmem:[%s1510 + $0x10] sm:$0xff]
    %v1514 = vld [vmem:[%s1510 + $0x18] sm:$0xff]
    %v1515 = vld [vmem:[%s1510 + $0x20] sm:$0xff]
    %v1516 = vld [vmem:[%s1510 + $0x28] sm:$0xff]
    %v1517 = vld [vmem:[%s1510 + $0x30] sm:$0xff]
    %v1518 = vld [vmem:[%s1510 + $0x38] sm:$0xff]
    %v1519 = vld [vmem:[%s1510 + $0x40] sm:$0xff]
    %v1520 = vld [vmem:[%s1510 + $0x48] sm:$0xff]
    %v1521 = vld [vmem:[%s1510 + $0x50] sm:$0xff]
    %v1522 = vld [vmem:[%s1510 + $0x58] sm:$0xff]
    %v1523 = vld [vmem:[%s1510 + $0x60] sm:$0xff]
    %v1524 = vld [vmem:[%s1510 + $0x68] sm:$0xff]
    %v1525 = vld [vmem:[%s1510 + $0x70] sm:$0xff]
    %v1526 = vld [vmem:[%s1510 + $0x78] sm:$0xff]
    %v1527 = vld [vmem:[%s1510 + $0x80] sm:$0xff]
    %v1528 = vld [vmem:[%s1510 + $0x88] sm:$0xff]
    %v1529 = vld [vmem:[%s1510 + $0x90] sm:$0xff]
    %v1530 = vld [vmem:[%s1510 + $0x98] sm:$0xff]
    %v1531 = vld [vmem:[%s1510 + $0xa0] sm:$0xff]
    %v1532 = vld [vmem:[%s1510 + $0xa8] sm:$0xff]
    %v1533 = vld [vmem:[%s1510 + $0xb0] sm:$0xff]
    %v1534 = vld [vmem:[%s1510 + $0xb8] sm:$0xff]
    %v1535 = vld [vmem:[%s1510 + $0xc0] sm:$0xff]
    %v1536 = vld [vmem:[%s1510 + $0xc8] sm:$0xff]
    %v1537 = vld [vmem:[%s1510 + $0xd0] sm:$0xff]
    %v1538 = vld [vmem:[%s1510 + $0xd8] sm:$0xff]
    %v1539 = vld [vmem:[%s1510 + $0xe0] sm:$0xff]
    %v1540 = vld [vmem:[%s1510 + $0xe8] sm:$0xff]
    %v1541 = vld [vmem:[%s1510 + $0xf0] sm:$0xff]
    %v1542 = vld [vmem:[%s1510 + $0xf8] sm:$0xff]
    %v1543 = vld [vmem:[%s1510 + $0x100] sm:$0xff]
    %v1544 = vld [vmem:[%s1510 + $0x108] sm:$0xff]
    %v1545 = vld [vmem:[%s1510 + $0x110] sm:$0xff]
    %v1546 = vld [vmem:[%s1510 + $0x118] sm:$0xff]
    %v1547 = vld [vmem:[%s1510 + $0x120] sm:$0xff]
    %v1548 = vld [vmem:[%s1510 + $0x128] sm:$0xff]
    %v1549 = vld [vmem:[%s1510 + $0x130] sm:$0xff]
    %v1550 = vld [vmem:[%s1510 + $0x138] sm:$0xff]
    %v1551 = vld [vmem:[%s1510 + $0x140] sm:$0xff]
    %v1552 = vld [vmem:[%s1510 + $0x148] sm:$0xff]
    %v1553 = vld [vmem:[%s1510 + $0x150] sm:$0xff]
    %v1554 = vld [vmem:[%s1510 + $0x158] sm:$0xff]
    %v1555 = vld [vmem:[%s1510 + $0x160] sm:$0xff]
    %v1556 = vld [vmem:[%s1510 + $0x168] sm:$0xff]
    %v1557 = vld [vmem:[%s1510 + $0x170] sm:$0xff]
    %v1558 = vld [vmem:[%s1510 + $0x178] sm:$0xff]
    %v1559 = vld [vmem:[%s1510 + $0x180] sm:$0xff]
    %v1560 = vld [vmem:[%s1510 + $0x188] sm:$0xff]
    %v1561 = vld [vmem:[%s1510 + $0x190] sm:$0xff]
    %v1562 = vld [vmem:[%s1510 + $0x198] sm:$0xff]
    %v1563 = vld [vmem:[%s1510 + $0x1a0] sm:$0xff]
    %v1564 = vld [vmem:[%s1510 + $0x1a8] sm:$0xff]
    %v1565 = vld [vmem:[%s1510 + $0x1b0] sm:$0xff]
    %v1566 = vld [vmem:[%s1510 + $0x1b8] sm:$0xff]
    %v1567 = vld [vmem:[%s1510 + $0x1c0] sm:$0xff]
    %v1568 = vld [vmem:[%s1510 + $0x1c8] sm:$0xff]
    %v1569 = vld [vmem:[%s1510 + $0x1d0] sm:$0xff]
    %v1570 = vld [vmem:[%s1510 + $0x1d8] sm:$0xff]
    %v1571 = vld [vmem:[%s1510 + $0x1e0] sm:$0xff]
    %v1572 = vld [vmem:[%s1510 + $0x1e8] sm:$0xff]
    %v1573 = vld [vmem:[%s1510 + $0x1f0] sm:$0xff]
    %v1574 = vld [vmem:[%s1510 + $0x1f8] sm:$0xff]
    %1575 = vmatprep.subr.mxu0 %v1542
    %1576 = vmatpush1.msra.mxu0 %v1541
    %1577 = vmatprep.subr.mxu0 %v1540
    %1578 = vmatpush1.msra.mxu0 %v1539
    %1579 = vmatprep.subr.mxu0 %v1538
    %1580 = vmatpush1.msra.mxu0 %v1537
    %1581 = vmatprep.subr.mxu0 %v1536
    %1582 = vmatpush1.msra.mxu0 %v1535
    %1583 = vmatprep.subr.mxu0 %v1534
    %1584 = vmatpush1.msra.mxu0 %v1533
    %1585 = vmatprep.subr.mxu0 %v1532
    %1586 = vmatpush1.msra.mxu0 %v1531
    %1587 = vmatprep.subr.mxu0 %v1530
    %1588 = vmatpush1.msra.mxu0 %v1529
    %1589 = vmatprep.subr.mxu0 %v1528
    %1590 = vmatpush1.msra.mxu0 %v1527
    %1591 = vmatprep.subr.mxu0 %v1526
    %1592 = vmatpush1.msra.mxu0 %v1525
    %1593 = vmatprep.subr.mxu0 %v1524
    %1594 = vmatpush1.msra.mxu0 %v1523
    %1595 = vmatprep.subr.mxu0 %v1522
    %1596 = vmatpush1.msra.mxu0 %v1521
    %1597 = vmatprep.subr.mxu0 %v1520
    %1598 = vmatpush1.msra.mxu0 %v1519
    %1599 = vmatprep.subr.mxu0 %v1518
    %1600 = vmatpush1.msra.mxu0 %v1517
    %1601 = vmatprep.subr.mxu0 %v1516
    %1602 = vmatpush1.msra.mxu0 %v1515
    %1603 = vmatprep.subr.mxu0 %v1514
    %1604 = vmatpush1.msra.mxu0 %v1513
    %1605 = vmatprep.subr.mxu0 %v1512
    %1606 = vmatpush1.msra.mxu0 %v1511
    %1607 = vmatprep.subr.mxu0 %v1574
    %1608 = vmatpush2.msra.mxu0 %v1573
    %1609 = vmatprep.subr.mxu0 %v1572
    %1610 = vmatpush2.msra.mxu0 %v1571
    %1611 = vmatprep.subr.mxu0 %v1570
    %1612 = vmatpush2.msra.mxu0 %v1569
    %1613 = vmatprep.subr.mxu0 %v1568
    %1614 = vmatpush2.msra.mxu0 %v1567
    %1615 = vmatprep.subr.mxu0 %v1566
    %1616 = vmatpush2.msra.mxu0 %v1565
    %1617 = vmatprep.subr.mxu0 %v1564
    %1618 = vmatpush2.msra.mxu0 %v1563
    %1619 = vmatprep.subr.mxu0 %v1562
    %1620 = vmatpush2.msra.mxu0 %v1561
    %1621 = vmatprep.subr.mxu0 %v1560
    %1622 = vmatpush2.msra.mxu0 %v1559
    %1623 = vmatprep.subr.mxu0 %v1558
    %1624 = vmatpush2.msra.mxu0 %v1557
    %1625 = vmatprep.subr.mxu0 %v1556
    %1626 = vmatpush2.msra.mxu0 %v1555
    %1627 = vmatprep.subr.mxu0 %v1554
    %1628 = vmatpush2.msra.mxu0 %v1553
    %1629 = vmatprep.subr.mxu0 %v1552
    %1630 = vmatpush2.msra.mxu0 %v1551
    %1631 = vmatprep.subr.mxu0 %v1550
    %1632 = vmatpush2.msra.mxu0 %v1549
    %1633 = vmatprep.subr.mxu0 %v1548
    %1634 = vmatpush2.msra.mxu0 %v1547
    %1635 = vmatprep.subr.mxu0 %v1546
    %1636 = vmatpush2.msra.mxu0 %v1545
    %1637 = vmatprep.subr.mxu0 %v1544
    %1638 = vmatpush2.msra.mxu0 %v1543
    %1639 = vmatprep.mubr.f32.mxu0 %v1499
    %1640 = vmatmul.mubr.f32.gmra.mxu0 %v1496
    %v1641 = vpop.f32.mrf.mxu0
    %v1642 = vadd.f32 0.0, %v1641
    %v1643 = vpop.f32.mrf.mxu0
    %v1644 = vadd.f32 0.0, %v1643
    %1645 = vmatprep.mubr.f32.mxu0 %v1505
    %1646 = vmatmul.mubr.f32.gmra.mxu0 %v1502
    %v1647 = vpop.f32.mrf.mxu0
    %v1648 = vadd.f32 0.0, %v1647
    %v1649 = vpop.f32.mrf.mxu0
    %v1650 = vadd.f32 0.0, %v1649
    %1651 = vdwg.mxu0
    %v1652 = vadd.f32 %v1467, %v1642
    %v1653 = vadd.f32 %v1469, %v1644
    %v1654 = vadd.f32 %v1473, %v1648
    %v1655 = vadd.f32 %v1475, %v1650
    %v1656 = vadd.f32 %v1652, %v1654
    %v1657 = vrot.slane %v1656, 4
    %v1658 = vadd.f32 %v1656, %v1657
    %v1659 = vrot.slane %v1658, 2
    %v1660 = vadd.f32 %v1658, %v1659
    %v1661 = vrot.slane %v1660, 1
    %v1662 = vadd.f32 %v1660, %v1661
    %v1663 = vadd.f32 %v1653, %v1655
    %v1664 = vrot.slane %v1663, 4
    %v1665 = vadd.f32 %v1663, %v1664
    %v1666 = vrot.slane %v1665, 2
    %v1667 = vadd.f32 %v1665, %v1666
    %v1668 = vrot.slane %v1667, 1
    %v1669 = vadd.f32 %v1667, %v1668
    %v1670 = vmul.f32 %v1652, %v1652
    %v1671 = vmul.f32 %v1653, %v1653
    %v1672 = vmul.f32 %v1654, %v1654
    %v1673 = vmul.f32 %v1655, %v1655
    %v1674 = vadd.f32 %v1670, %v1672
    %v1675 = vrot.slane %v1674, 4
    %v1676 = vadd.f32 %v1674, %v1675
    %v1677 = vrot.slane %v1676, 2
    %v1678 = vadd.f32 %v1676, %v1677
    %v1679 = vrot.slane %v1678, 1
    %v1680 = vadd.f32 %v1678, %v1679
    %v1681 = vadd.f32 %v1671, %v1673
    %v1682 = vrot.slane %v1681, 4
    %v1683 = vadd.f32 %v1681, %v1682
    %v1684 = vrot.slane %v1683, 2
    %v1685 = vadd.f32 %v1683, %v1684
    %v1686 = vrot.slane %v1685, 1
    %v1687 = vadd.f32 %v1685, %v1686
    %v1688 = vld [vmem:[#allocation14] sm:$0xff]
    %v1689 = vld [vmem:[#allocation14 + $0x8] sm:$0xff]
    %v1690 = vld [vmem:[#allocation14 + $0x10] sm:$0xff]
    %v1691 = vld [vmem:[#allocation14 + $0x18] sm:$0xff]
    %v1692 = vld [vmem:[#allocation14 + $0x20] sm:$0xff]
    %v1693 = vld [vmem:[#allocation14 + $0x28] sm:$0xff]
    %v1694 = vld [vmem:[#allocation14 + $0x30] sm:$0xff]
    %v1695 = vld [vmem:[#allocation14 + $0x38] sm:$0xff]
    %v1696 = vld [vmem:[#allocation14 + $0x40] sm:$0xff]
    %v1697 = vld [vmem:[#allocation14 + $0x48] sm:$0xff]
    %v1698 = vld [vmem:[#allocation14 + $0x50] sm:$0xff]
    %v1699 = vld [vmem:[#allocation14 + $0x58] sm:$0xff]
    %v1700 = vld [vmem:[#allocation14 + $0x60] sm:$0xff]
    %v1701 = vld [vmem:[#allocation14 + $0x68] sm:$0xff]
    %v1702 = vld [vmem:[#allocation14 + $0x70] sm:$0xff]
    %v1703 = vld [vmem:[#allocation14 + $0x78] sm:$0xff]
    %v1704 = vld [vmem:[#allocation14 + $0x80] sm:$0xff]
    %v1705 = vld [vmem:[#allocation14 + $0x88] sm:$0xff]
    %v1706 = vld [vmem:[#allocation14 + $0x90] sm:$0xff]
    %v1707 = vld [vmem:[#allocation14 + $0x98] sm:$0xff]
    %v1708 = vld [vmem:[#allocation14 + $0xa0] sm:$0xff]
    %v1709 = vld [vmem:[#allocation14 + $0xa8] sm:$0xff]
    %v1710 = vld [vmem:[#allocation14 + $0xb0] sm:$0xff]
    %v1711 = vld [vmem:[#allocation14 + $0xb8] sm:$0xff]
    %v1712 = vld [vmem:[#allocation14 + $0xc0] sm:$0xff]
    %v1713 = vld [vmem:[#allocation14 + $0xc8] sm:$0xff]
    %v1714 = vld [vmem:[#allocation14 + $0xd0] sm:$0xff]
    %v1715 = vld [vmem:[#allocation14 + $0xd8] sm:$0xff]
    %v1716 = vld [vmem:[#allocation14 + $0xe0] sm:$0xff]
    %v1717 = vld [vmem:[#allocation14 + $0xe8] sm:$0xff]
    %v1718 = vld [vmem:[#allocation14 + $0xf0] sm:$0xff]
    %v1719 = vld [vmem:[#allocation14 + $0xf8] sm:$0xff]
    %v1720 = vld [vmem:[#allocation14 + $0x100] sm:$0xff]
    %v1721 = vld [vmem:[#allocation14 + $0x108] sm:$0xff]
    %v1722 = vld [vmem:[#allocation14 + $0x110] sm:$0xff]
    %v1723 = vld [vmem:[#allocation14 + $0x118] sm:$0xff]
    %v1724 = vld [vmem:[#allocation14 + $0x120] sm:$0xff]
    %v1725 = vld [vmem:[#allocation14 + $0x128] sm:$0xff]
    %v1726 = vld [vmem:[#allocation14 + $0x130] sm:$0xff]
    %v1727 = vld [vmem:[#allocation14 + $0x138] sm:$0xff]
    %v1728 = vld [vmem:[#allocation14 + $0x140] sm:$0xff]
    %v1729 = vld [vmem:[#allocation14 + $0x148] sm:$0xff]
    %v1730 = vld [vmem:[#allocation14 + $0x150] sm:$0xff]
    %v1731 = vld [vmem:[#allocation14 + $0x158] sm:$0xff]
    %v1732 = vld [vmem:[#allocation14 + $0x160] sm:$0xff]
    %v1733 = vld [vmem:[#allocation14 + $0x168] sm:$0xff]
    %v1734 = vld [vmem:[#allocation14 + $0x170] sm:$0xff]
    %v1735 = vld [vmem:[#allocation14 + $0x178] sm:$0xff]
    %v1736 = vld [vmem:[#allocation14 + $0x180] sm:$0xff]
    %v1737 = vld [vmem:[#allocation14 + $0x188] sm:$0xff]
    %v1738 = vld [vmem:[#allocation14 + $0x190] sm:$0xff]
    %v1739 = vld [vmem:[#allocation14 + $0x198] sm:$0xff]
    %v1740 = vld [vmem:[#allocation14 + $0x1a0] sm:$0xff]
    %v1741 = vld [vmem:[#allocation14 + $0x1a8] sm:$0xff]
    %v1742 = vld [vmem:[#allocation14 + $0x1b0] sm:$0xff]
    %v1743 = vld [vmem:[#allocation14 + $0x1b8] sm:$0xff]
    %v1744 = vld [vmem:[#allocation14 + $0x1c0] sm:$0xff]
    %v1745 = vld [vmem:[#allocation14 + $0x1c8] sm:$0xff]
    %v1746 = vld [vmem:[#allocation14 + $0x1d0] sm:$0xff]
    %v1747 = vld [vmem:[#allocation14 + $0x1d8] sm:$0xff]
    %v1748 = vld [vmem:[#allocation14 + $0x1e0] sm:$0xff]
    %v1749 = vld [vmem:[#allocation14 + $0x1e8] sm:$0xff]
    %v1750 = vld [vmem:[#allocation14 + $0x1f0] sm:$0xff]
    %v1751 = vld [vmem:[#allocation14 + $0x1f8] sm:$0xff]
    %1752 = vmatprep.subr.mxu0 %v1719
    %1753 = vmatpush1.msra.mxu0 %v1718
    %1754 = vmatprep.subr.mxu0 %v1717
    %1755 = vmatpush1.msra.mxu0 %v1716
    %1756 = vmatprep.subr.mxu0 %v1715
    %1757 = vmatpush1.msra.mxu0 %v1714
    %1758 = vmatprep.subr.mxu0 %v1713
    %1759 = vmatpush1.msra.mxu0 %v1712
    %1760 = vmatprep.subr.mxu0 %v1711
    %1761 = vmatpush1.msra.mxu0 %v1710
    %1762 = vmatprep.subr.mxu0 %v1709
    %1763 = vmatpush1.msra.mxu0 %v1708
    %1764 = vmatprep.subr.mxu0 %v1707
    %1765 = vmatpush1.msra.mxu0 %v1706
    %1766 = vmatprep.subr.mxu0 %v1705
    %1767 = vmatpush1.msra.mxu0 %v1704
    %1768 = vmatprep.subr.mxu0 %v1703
    %1769 = vmatpush1.msra.mxu0 %v1702
    %1770 = vmatprep.subr.mxu0 %v1701
    %1771 = vmatpush1.msra.mxu0 %v1700
    %1772 = vmatprep.subr.mxu0 %v1699
    %1773 = vmatpush1.msra.mxu0 %v1698
    %1774 = vmatprep.subr.mxu0 %v1697
    %1775 = vmatpush1.msra.mxu0 %v1696
    %1776 = vmatprep.subr.mxu0 %v1695
    %1777 = vmatpush1.msra.mxu0 %v1694
    %1778 = vmatprep.subr.mxu0 %v1693
    %1779 = vmatpush1.msra.mxu0 %v1692
    %1780 = vmatprep.subr.mxu0 %v1691
    %1781 = vmatpush1.msra.mxu0 %v1690
    %1782 = vmatprep.subr.mxu0 %v1689
    %1783 = vmatpush1.msra.mxu0 %v1688
    %1784 = vmatprep.subr.mxu0 %v1751
    %1785 = vmatpush2.msra.mxu0 %v1750
    %1786 = vmatprep.subr.mxu0 %v1749
    %1787 = vmatpush2.msra.mxu0 %v1748
    %1788 = vmatprep.subr.mxu0 %v1747
    %1789 = vmatpush2.msra.mxu0 %v1746
    %1790 = vmatprep.subr.mxu0 %v1745
    %1791 = vmatpush2.msra.mxu0 %v1744
    %1792 = vmatprep.subr.mxu0 %v1743
    %1793 = vmatpush2.msra.mxu0 %v1742
    %1794 = vmatprep.subr.mxu0 %v1741
    %1795 = vmatpush2.msra.mxu0 %v1740
    %1796 = vmatprep.subr.mxu0 %v1739
    %1797 = vmatpush2.msra.mxu0 %v1738
    %1798 = vmatprep.subr.mxu0 %v1737
    %1799 = vmatpush2.msra.mxu0 %v1736
    %1800 = vmatprep.subr.mxu0 %v1735
    %1801 = vmatpush2.msra.mxu0 %v1734
    %1802 = vmatprep.subr.mxu0 %v1733
    %1803 = vmatpush2.msra.mxu0 %v1732
    %1804 = vmatprep.subr.mxu0 %v1731
    %1805 = vmatpush2.msra.mxu0 %v1730
    %1806 = vmatprep.subr.mxu0 %v1729
    %1807 = vmatpush2.msra.mxu0 %v1728
    %1808 = vmatprep.subr.mxu0 %v1727
    %1809 = vmatpush2.msra.mxu0 %v1726
    %1810 = vmatprep.subr.mxu0 %v1725
    %1811 = vmatpush2.msra.mxu0 %v1724
    %1812 = vmatprep.subr.mxu0 %v1723
    %1813 = vmatpush2.msra.mxu0 %v1722
    %1814 = vmatprep.subr.mxu0 %v1721
    %1815 = vmatpush2.msra.mxu0 %v1720
    %1816 = vmatprep.mubr.f32.mxu0 %v1669
    %1817 = vmatmul.mubr.f32.gmra.mxu0 %v1662
    %v1818 = vpop.f32.mrf.mxu0
    %v1819 = vadd.f32 0.0, %v1818
    %v1820 = vpop.f32.mrf.mxu0
    %v1821 = vadd.f32 0.0, %v1820
    %1822 = vdwg.mxu0
    %1823 = vmatprep.subr.mxu0 %v1719
    %1824 = vmatpush1.msra.mxu0 %v1718
    %1825 = vmatprep.subr.mxu0 %v1717
    %1826 = vmatpush1.msra.mxu0 %v1716
    %1827 = vmatprep.subr.mxu0 %v1715
    %1828 = vmatpush1.msra.mxu0 %v1714
    %1829 = vmatprep.subr.mxu0 %v1713
    %1830 = vmatpush1.msra.mxu0 %v1712
    %1831 = vmatprep.subr.mxu0 %v1711
    %1832 = vmatpush1.msra.mxu0 %v1710
    %1833 = vmatprep.subr.mxu0 %v1709
    %1834 = vmatpush1.msra.mxu0 %v1708
    %1835 = vmatprep.subr.mxu0 %v1707
    %1836 = vmatpush1.msra.mxu0 %v1706
    %1837 = vmatprep.subr.mxu0 %v1705
    %1838 = vmatpush1.msra.mxu0 %v1704
    %1839 = vmatprep.subr.mxu0 %v1703
    %1840 = vmatpush1.msra.mxu0 %v1702
    %1841 = vmatprep.subr.mxu0 %v1701
    %1842 = vmatpush1.msra.mxu0 %v1700
    %1843 = vmatprep.subr.mxu0 %v1699
    %1844 = vmatpush1.msra.mxu0 %v1698
    %1845 = vmatprep.subr.mxu0 %v1697
    %1846 = vmatpush1.msra.mxu0 %v1696
    %1847 = vmatprep.subr.mxu0 %v1695
    %1848 = vmatpush1.msra.mxu0 %v1694
    %1849 = vmatprep.subr.mxu0 %v1693
    %1850 = vmatpush1.msra.mxu0 %v1692
    %1851 = vmatprep.subr.mxu0 %v1691
    %1852 = vmatpush1.msra.mxu0 %v1690
    %1853 = vmatprep.subr.mxu0 %v1689
    %1854 = vmatpush1.msra.mxu0 %v1688
    %1855 = vmatprep.subr.mxu0 %v1751
    %1856 = vmatpush2.msra.mxu0 %v1750
    %1857 = vmatprep.subr.mxu0 %v1749
    %1858 = vmatpush2.msra.mxu0 %v1748
    %1859 = vmatprep.subr.mxu0 %v1747
    %1860 = vmatpush2.msra.mxu0 %v1746
    %1861 = vmatprep.subr.mxu0 %v1745
    %1862 = vmatpush2.msra.mxu0 %v1744
    %1863 = vmatprep.subr.mxu0 %v1743
    %1864 = vmatpush2.msra.mxu0 %v1742
    %1865 = vmatprep.subr.mxu0 %v1741
    %1866 = vmatpush2.msra.mxu0 %v1740
    %1867 = vmatprep.subr.mxu0 %v1739
    %1868 = vmatpush2.msra.mxu0 %v1738
    %1869 = vmatprep.subr.mxu0 %v1737
    %1870 = vmatpush2.msra.mxu0 %v1736
    %1871 = vmatprep.subr.mxu0 %v1735
    %1872 = vmatpush2.msra.mxu0 %v1734
    %1873 = vmatprep.subr.mxu0 %v1733
    %1874 = vmatpush2.msra.mxu0 %v1732
    %1875 = vmatprep.subr.mxu0 %v1731
    %1876 = vmatpush2.msra.mxu0 %v1730
    %1877 = vmatprep.subr.mxu0 %v1729
    %1878 = vmatpush2.msra.mxu0 %v1728
    %1879 = vmatprep.subr.mxu0 %v1727
    %1880 = vmatpush2.msra.mxu0 %v1726
    %1881 = vmatprep.subr.mxu0 %v1725
    %1882 = vmatpush2.msra.mxu0 %v1724
    %1883 = vmatprep.subr.mxu0 %v1723
    %1884 = vmatpush2.msra.mxu0 %v1722
    %1885 = vmatprep.subr.mxu0 %v1721
    %1886 = vmatpush2.msra.mxu0 %v1720
    %1887 = vmatprep.mubr.f32.mxu0 %v1687
    %1888 = vmatmul.mubr.f32.gmra.mxu0 %v1680
    %v1889 = vpop.f32.mrf.mxu0
    %v1890 = vadd.f32 0.0, %v1889
    %v1891 = vpop.f32.mrf.mxu0
    %v1892 = vadd.f32 0.0, %v1891
    %1893 = vdwg.mxu0
    %v1894 = vmul.f32 %v1819, %v1819
    %v1895 = vmul.f32 %v1821, %v1821
    %v1896 = vsub.f32 %v1890, %v1894
    %v1897 = vsub.f32 %v1892, %v1895
    %v1898 = vlaneseq
    %v1899 = vshrl.u32 %v1898, 7
    %v1900 = vsub.s32 0, %v1899
    %v1901 = vrot.slane %v1819, %v1900
    %v1902 = vlaneseq
    %v1903 = vshrl.u32 %v1902, 7
    %v1904 = vsub.s32 0, %v1903
    %v1905 = vrot.slane %v1821, %v1904
    %v1906 = vsub.f32 %v1652, %v1901
    %v1907 = vsub.f32 %v1653, %v1905
    %v1908 = vsub.f32 %v1654, %v1901
    %v1909 = vsub.f32 %v1655, %v1905
    %v1910 = vadd.f32 %v1896, 1e-05
    %v1911 = vadd.f32 %v1897, 1e-05
    %v1912 = vrsqrt.pop %v1910
    %v1913 = vrsqrt.pop %v1911
    %v1914 = vlaneseq
    %v1915 = vshrl.u32 %v1914, 7
    %v1916 = vsub.s32 0, %v1915
    %v1917 = vrot.slane %v1912, %v1916
    %v1918 = vlaneseq
    %v1919 = vshrl.u32 %v1918, 7
    %v1920 = vsub.s32 0, %v1919
    %v1921 = vrot.slane %v1913, %v1920
    %v1922 = vmul.f32 %v1906, %v1917
    %v1923 = vmul.f32 %v1907, %v1921
    %v1924 = vmul.f32 %v1908, %v1917
    %v1925 = vmul.f32 %v1909, %v1921
    %s1926 = scalar_lea.vmem [#allocation11], 1
    %v1927 = vld [vmem:[%s1926] ss:$8 sm:$0x3]
    %v1929 = vlaneseq
    %v1930 = vshrl.u32 %v1929, 7
    %v1931 = vsub.s32 0, %v1930
    %v1932 = vrot.slane %v1927, %v1931
    %v1933 = vlaneseq
    %v1934 = vshrl.u32 %v1933, 7
    %v1935 = vsub.s32 1, %v1934
    %v1936 = vrot.slane %v1927, %v1935
    %v1939 = vmul.f32 %v1922, %v1932
    %v1940 = vmul.f32 %v1923, %v1936
    %v1941 = vmul.f32 %v1924, %v1932
    %v1942 = vmul.f32 %v1925, %v1936
    %s1943 = scalar_lea.vmem [#allocation12], 1
    %v1944 = vld [vmem:[%s1943] ss:$8 sm:$0x3]
    %v1946 = vlaneseq
    %v1947 = vshrl.u32 %v1946, 7
    %v1948 = vsub.s32 0, %v1947
    %v1949 = vrot.slane %v1944, %v1948
    %v1950 = vlaneseq
    %v1951 = vshrl.u32 %v1950, 7
    %v1952 = vsub.s32 1, %v1951
    %v1953 = vrot.slane %v1944, %v1952
    %v1956 = vadd.f32 %v1939, %v1949
    %v1957 = vadd.f32 %v1940, %v1953
    %v1958 = vadd.f32 %v1941, %v1949
    %v1959 = vadd.f32 %v1942, %v1953
    %s1960 = sld [smem:[#allocation33 + $0x1]]
    %vm1961 = vcmp.ge.f32.partialorder %v1956, 0.0
    %vm1962 = vcmp.ge.f32.partialorder %v1957, 0.0
    %vm1963 = vcmp.ge.f32.partialorder %v1958, 0.0
    %vm1964 = vcmp.ge.f32.partialorder %v1959, 0.0
    %v1965 = vstv %s1960
    %v1966 = vmul.f32 %v1965, %v1956
    %v1967 = vmul.f32 %v1965, %v1957
    %v1968 = vmul.f32 %v1965, %v1958
    %v1969 = vmul.f32 %v1965, %v1959
    %v1970 = vsel %vm1961, %v1956, %v1966
    %v1971 = vsel %vm1962, %v1957, %v1967
    %v1972 = vsel %vm1963, %v1958, %v1968
    %v1973 = vsel %vm1964, %v1959, %v1969
    %v1978 = vrot.slane %v1970, 7
    %v1979 = vrot.slane %v1971, 7
    %v1980 = vrot.slane %v1972, 7
    %v1981 = vrot.slane %v1973, 7
    %1986 = vst [vmem:[#allocation3] sm:$0xfe] %v1978
    %1987 = vst [vmem:[#allocation3 + $0x8] sm:$0xfe] %v1979
    %1988 = vst [vmem:[#allocation3 + $0x10] sm:$0x1] %v1978
    %1989 = vst [vmem:[#allocation3 + $0x18] sm:$0x1] %v1979
    %1990 = vst [vmem:[#allocation3 + $0x20] sm:$0xfe] %v1980
    %1991 = vst [vmem:[#allocation3 + $0x28] sm:$0xfe] %v1981
    %1992 = vst [vmem:[#allocation3 + $0x30] sm:$0x1] %v1980
    %1993 = vst [vmem:[#allocation3 + $0x38] sm:$0x1] %v1981
    %v1994 = vld [vmem:[#allocation3] sm:$0xff]
    %v1995 = vld [vmem:[#allocation3 + $0x8] sm:$0xff]
    %v1996 = vld [vmem:[#allocation3 + $0x20] sm:$0xff]
    %v1997 = vld [vmem:[#allocation3 + $0x28] sm:$0xff]
    %s1998 = scalar_lea.vmem [#allocation9], 1536
    %v1999 = vld [vmem:[%s1998] sm:$0xff]
    %v2000 = vld [vmem:[%s1998 + $0x8] sm:$0xff]
    %v2001 = vld [vmem:[%s1998 + $0x10] sm:$0xff]
    %v2002 = vld [vmem:[%s1998 + $0x18] sm:$0xff]
    %v2003 = vld [vmem:[%s1998 + $0x20] sm:$0xff]
    %v2004 = vld [vmem:[%s1998 + $0x28] sm:$0xff]
    %v2005 = vld [vmem:[%s1998 + $0x30] sm:$0xff]
    %v2006 = vld [vmem:[%s1998 + $0x38] sm:$0xff]
    %v2007 = vld [vmem:[%s1998 + $0x40] sm:$0xff]
    %v2008 = vld [vmem:[%s1998 + $0x48] sm:$0xff]
    %v2009 = vld [vmem:[%s1998 + $0x50] sm:$0xff]
    %v2010 = vld [vmem:[%s1998 + $0x58] sm:$0xff]
    %v2011 = vld [vmem:[%s1998 + $0x60] sm:$0xff]
    %v2012 = vld [vmem:[%s1998 + $0x68] sm:$0xff]
    %v2013 = vld [vmem:[%s1998 + $0x70] sm:$0xff]
    %v2014 = vld [vmem:[%s1998 + $0x78] sm:$0xff]
    %v2015 = vld [vmem:[%s1998 + $0x80] sm:$0xff]
    %v2016 = vld [vmem:[%s1998 + $0x88] sm:$0xff]
    %v2017 = vld [vmem:[%s1998 + $0x90] sm:$0xff]
    %v2018 = vld [vmem:[%s1998 + $0x98] sm:$0xff]
    %v2019 = vld [vmem:[%s1998 + $0xa0] sm:$0xff]
    %v2020 = vld [vmem:[%s1998 + $0xa8] sm:$0xff]
    %v2021 = vld [vmem:[%s1998 + $0xb0] sm:$0xff]
    %v2022 = vld [vmem:[%s1998 + $0xb8] sm:$0xff]
    %v2023 = vld [vmem:[%s1998 + $0xc0] sm:$0xff]
    %v2024 = vld [vmem:[%s1998 + $0xc8] sm:$0xff]
    %v2025 = vld [vmem:[%s1998 + $0xd0] sm:$0xff]
    %v2026 = vld [vmem:[%s1998 + $0xd8] sm:$0xff]
    %v2027 = vld [vmem:[%s1998 + $0xe0] sm:$0xff]
    %v2028 = vld [vmem:[%s1998 + $0xe8] sm:$0xff]
    %v2029 = vld [vmem:[%s1998 + $0xf0] sm:$0xff]
    %v2030 = vld [vmem:[%s1998 + $0xf8] sm:$0xff]
    %v2031 = vld [vmem:[%s1998 + $0x100] sm:$0xff]
    %v2032 = vld [vmem:[%s1998 + $0x108] sm:$0xff]
    %v2033 = vld [vmem:[%s1998 + $0x110] sm:$0xff]
    %v2034 = vld [vmem:[%s1998 + $0x118] sm:$0xff]
    %v2035 = vld [vmem:[%s1998 + $0x120] sm:$0xff]
    %v2036 = vld [vmem:[%s1998 + $0x128] sm:$0xff]
    %v2037 = vld [vmem:[%s1998 + $0x130] sm:$0xff]
    %v2038 = vld [vmem:[%s1998 + $0x138] sm:$0xff]
    %v2039 = vld [vmem:[%s1998 + $0x140] sm:$0xff]
    %v2040 = vld [vmem:[%s1998 + $0x148] sm:$0xff]
    %v2041 = vld [vmem:[%s1998 + $0x150] sm:$0xff]
    %v2042 = vld [vmem:[%s1998 + $0x158] sm:$0xff]
    %v2043 = vld [vmem:[%s1998 + $0x160] sm:$0xff]
    %v2044 = vld [vmem:[%s1998 + $0x168] sm:$0xff]
    %v2045 = vld [vmem:[%s1998 + $0x170] sm:$0xff]
    %v2046 = vld [vmem:[%s1998 + $0x178] sm:$0xff]
    %v2047 = vld [vmem:[%s1998 + $0x180] sm:$0xff]
    %v2048 = vld [vmem:[%s1998 + $0x188] sm:$0xff]
    %v2049 = vld [vmem:[%s1998 + $0x190] sm:$0xff]
    %v2050 = vld [vmem:[%s1998 + $0x198] sm:$0xff]
    %v2051 = vld [vmem:[%s1998 + $0x1a0] sm:$0xff]
    %v2052 = vld [vmem:[%s1998 + $0x1a8] sm:$0xff]
    %v2053 = vld [vmem:[%s1998 + $0x1b0] sm:$0xff]
    %v2054 = vld [vmem:[%s1998 + $0x1b8] sm:$0xff]
    %v2055 = vld [vmem:[%s1998 + $0x1c0] sm:$0xff]
    %v2056 = vld [vmem:[%s1998 + $0x1c8] sm:$0xff]
    %v2057 = vld [vmem:[%s1998 + $0x1d0] sm:$0xff]
    %v2058 = vld [vmem:[%s1998 + $0x1d8] sm:$0xff]
    %v2059 = vld [vmem:[%s1998 + $0x1e0] sm:$0xff]
    %v2060 = vld [vmem:[%s1998 + $0x1e8] sm:$0xff]
    %v2061 = vld [vmem:[%s1998 + $0x1f0] sm:$0xff]
    %v2062 = vld [vmem:[%s1998 + $0x1f8] sm:$0xff]
    %v2063 = vld [vmem:[#allocation3] sm:$0xfe]
    %v2064 = vld [vmem:[#allocation3 + $0x8] sm:$0xfe]
    %v2065 = vld [vmem:[#allocation3 + $0x10] sm:$0x1]
    %v2066 = vld [vmem:[#allocation3 + $0x18] sm:$0x1]
    %v2067 = vld [vmem:[#allocation3 + $0x20] sm:$0xfe]
    %v2068 = vld [vmem:[#allocation3 + $0x28] sm:$0xfe]
    %v2069 = vld [vmem:[#allocation3 + $0x30] sm:$0x1]
    %v2070 = vld [vmem:[#allocation3 + $0x38] sm:$0x1]
    %v2079 = vrot.slane %v2063, 1
    %v2080 = vrot.slane %v2065, 1
    %v2081 = vsel %vm1241, %v2079, %v2080
    %v2082 = vrot.slane %v2064, 1
    %v2083 = vrot.slane %v2066, 1
    %v2084 = vsel %vm1241, %v2082, %v2083
    %v2085 = vrot.slane %v2067, 1
    %v2086 = vrot.slane %v2069, 1
    %v2087 = vsel %vm1241, %v2085, %v2086
    %v2088 = vrot.slane %v2068, 1
    %v2089 = vrot.slane %v2070, 1
    %v2090 = vsel %vm1241, %v2088, %v2089
    %s2095 = scalar_lea.vmem [#allocation9], 2048
    %v2096 = vld [vmem:[%s2095] sm:$0xff]
    %v2097 = vld [vmem:[%s2095 + $0x8] sm:$0xff]
    %v2098 = vld [vmem:[%s2095 + $0x10] sm:$0xff]
    %v2099 = vld [vmem:[%s2095 + $0x18] sm:$0xff]
    %v2100 = vld [vmem:[%s2095 + $0x20] sm:$0xff]
    %v2101 = vld [vmem:[%s2095 + $0x28] sm:$0xff]
    %v2102 = vld [vmem:[%s2095 + $0x30] sm:$0xff]
    %v2103 = vld [vmem:[%s2095 + $0x38] sm:$0xff]
    %v2104 = vld [vmem:[%s2095 + $0x40] sm:$0xff]
    %v2105 = vld [vmem:[%s2095 + $0x48] sm:$0xff]
    %v2106 = vld [vmem:[%s2095 + $0x50] sm:$0xff]
    %v2107 = vld [vmem:[%s2095 + $0x58] sm:$0xff]
    %v2108 = vld [vmem:[%s2095 + $0x60] sm:$0xff]
    %v2109 = vld [vmem:[%s2095 + $0x68] sm:$0xff]
    %v2110 = vld [vmem:[%s2095 + $0x70] sm:$0xff]
    %v2111 = vld [vmem:[%s2095 + $0x78] sm:$0xff]
    %v2112 = vld [vmem:[%s2095 + $0x80] sm:$0xff]
    %v2113 = vld [vmem:[%s2095 + $0x88] sm:$0xff]
    %v2114 = vld [vmem:[%s2095 + $0x90] sm:$0xff]
    %v2115 = vld [vmem:[%s2095 + $0x98] sm:$0xff]
    %v2116 = vld [vmem:[%s2095 + $0xa0] sm:$0xff]
    %v2117 = vld [vmem:[%s2095 + $0xa8] sm:$0xff]
    %v2118 = vld [vmem:[%s2095 + $0xb0] sm:$0xff]
    %v2119 = vld [vmem:[%s2095 + $0xb8] sm:$0xff]
    %v2120 = vld [vmem:[%s2095 + $0xc0] sm:$0xff]
    %v2121 = vld [vmem:[%s2095 + $0xc8] sm:$0xff]
    %v2122 = vld [vmem:[%s2095 + $0xd0] sm:$0xff]
    %v2123 = vld [vmem:[%s2095 + $0xd8] sm:$0xff]
    %v2124 = vld [vmem:[%s2095 + $0xe0] sm:$0xff]
    %v2125 = vld [vmem:[%s2095 + $0xe8] sm:$0xff]
    %v2126 = vld [vmem:[%s2095 + $0xf0] sm:$0xff]
    %v2127 = vld [vmem:[%s2095 + $0xf8] sm:$0xff]
    %v2128 = vld [vmem:[%s2095 + $0x100] sm:$0xff]
    %v2129 = vld [vmem:[%s2095 + $0x108] sm:$0xff]
    %v2130 = vld [vmem:[%s2095 + $0x110] sm:$0xff]
    %v2131 = vld [vmem:[%s2095 + $0x118] sm:$0xff]
    %v2132 = vld [vmem:[%s2095 + $0x120] sm:$0xff]
    %v2133 = vld [vmem:[%s2095 + $0x128] sm:$0xff]
    %v2134 = vld [vmem:[%s2095 + $0x130] sm:$0xff]
    %v2135 = vld [vmem:[%s2095 + $0x138] sm:$0xff]
    %v2136 = vld [vmem:[%s2095 + $0x140] sm:$0xff]
    %v2137 = vld [vmem:[%s2095 + $0x148] sm:$0xff]
    %v2138 = vld [vmem:[%s2095 + $0x150] sm:$0xff]
    %v2139 = vld [vmem:[%s2095 + $0x158] sm:$0xff]
    %v2140 = vld [vmem:[%s2095 + $0x160] sm:$0xff]
    %v2141 = vld [vmem:[%s2095 + $0x168] sm:$0xff]
    %v2142 = vld [vmem:[%s2095 + $0x170] sm:$0xff]
    %v2143 = vld [vmem:[%s2095 + $0x178] sm:$0xff]
    %v2144 = vld [vmem:[%s2095 + $0x180] sm:$0xff]
    %v2145 = vld [vmem:[%s2095 + $0x188] sm:$0xff]
    %v2146 = vld [vmem:[%s2095 + $0x190] sm:$0xff]
    %v2147 = vld [vmem:[%s2095 + $0x198] sm:$0xff]
    %v2148 = vld [vmem:[%s2095 + $0x1a0] sm:$0xff]
    %v2149 = vld [vmem:[%s2095 + $0x1a8] sm:$0xff]
    %v2150 = vld [vmem:[%s2095 + $0x1b0] sm:$0xff]
    %v2151 = vld [vmem:[%s2095 + $0x1b8] sm:$0xff]
    %v2152 = vld [vmem:[%s2095 + $0x1c0] sm:$0xff]
    %v2153 = vld [vmem:[%s2095 + $0x1c8] sm:$0xff]
    %v2154 = vld [vmem:[%s2095 + $0x1d0] sm:$0xff]
    %v2155 = vld [vmem:[%s2095 + $0x1d8] sm:$0xff]
    %v2156 = vld [vmem:[%s2095 + $0x1e0] sm:$0xff]
    %v2157 = vld [vmem:[%s2095 + $0x1e8] sm:$0xff]
    %v2158 = vld [vmem:[%s2095 + $0x1f0] sm:$0xff]
    %v2159 = vld [vmem:[%s2095 + $0x1f8] sm:$0xff]
    %2160 = vmatprep.subr.mxu0 %v2127
    %2161 = vmatpush1.msra.mxu0 %v2126
    %2162 = vmatprep.subr.mxu0 %v2125
    %2163 = vmatpush1.msra.mxu0 %v2124
    %2164 = vmatprep.subr.mxu0 %v2123
    %2165 = vmatpush1.msra.mxu0 %v2122
    %2166 = vmatprep.subr.mxu0 %v2121
    %2167 = vmatpush1.msra.mxu0 %v2120
    %2168 = vmatprep.subr.mxu0 %v2119
    %2169 = vmatpush1.msra.mxu0 %v2118
    %2170 = vmatprep.subr.mxu0 %v2117
    %2171 = vmatpush1.msra.mxu0 %v2116
    %2172 = vmatprep.subr.mxu0 %v2115
    %2173 = vmatpush1.msra.mxu0 %v2114
    %2174 = vmatprep.subr.mxu0 %v2113
    %2175 = vmatpush1.msra.mxu0 %v2112
    %2176 = vmatprep.subr.mxu0 %v2111
    %2177 = vmatpush1.msra.mxu0 %v2110
    %2178 = vmatprep.subr.mxu0 %v2109
    %2179 = vmatpush1.msra.mxu0 %v2108
    %2180 = vmatprep.subr.mxu0 %v2107
    %2181 = vmatpush1.msra.mxu0 %v2106
    %2182 = vmatprep.subr.mxu0 %v2105
    %2183 = vmatpush1.msra.mxu0 %v2104
    %2184 = vmatprep.subr.mxu0 %v2103
    %2185 = vmatpush1.msra.mxu0 %v2102
    %2186 = vmatprep.subr.mxu0 %v2101
    %2187 = vmatpush1.msra.mxu0 %v2100
    %2188 = vmatprep.subr.mxu0 %v2099
    %2189 = vmatpush1.msra.mxu0 %v2098
    %2190 = vmatprep.subr.mxu0 %v2097
    %2191 = vmatpush1.msra.mxu0 %v2096
    %2192 = vmatprep.subr.mxu0 %v2159
    %2193 = vmatpush2.msra.mxu0 %v2158
    %2194 = vmatprep.subr.mxu0 %v2157
    %2195 = vmatpush2.msra.mxu0 %v2156
    %2196 = vmatprep.subr.mxu0 %v2155
    %2197 = vmatpush2.msra.mxu0 %v2154
    %2198 = vmatprep.subr.mxu0 %v2153
    %2199 = vmatpush2.msra.mxu0 %v2152
    %2200 = vmatprep.subr.mxu0 %v2151
    %2201 = vmatpush2.msra.mxu0 %v2150
    %2202 = vmatprep.subr.mxu0 %v2149
    %2203 = vmatpush2.msra.mxu0 %v2148
    %2204 = vmatprep.subr.mxu0 %v2147
    %2205 = vmatpush2.msra.mxu0 %v2146
    %2206 = vmatprep.subr.mxu0 %v2145
    %2207 = vmatpush2.msra.mxu0 %v2144
    %2208 = vmatprep.subr.mxu0 %v2143
    %2209 = vmatpush2.msra.mxu0 %v2142
    %2210 = vmatprep.subr.mxu0 %v2141
    %2211 = vmatpush2.msra.mxu0 %v2140
    %2212 = vmatprep.subr.mxu0 %v2139
    %2213 = vmatpush2.msra.mxu0 %v2138
    %2214 = vmatprep.subr.mxu0 %v2137
    %2215 = vmatpush2.msra.mxu0 %v2136
    %2216 = vmatprep.subr.mxu0 %v2135
    %2217 = vmatpush2.msra.mxu0 %v2134
    %2218 = vmatprep.subr.mxu0 %v2133
    %2219 = vmatpush2.msra.mxu0 %v2132
    %2220 = vmatprep.subr.mxu0 %v2131
    %2221 = vmatpush2.msra.mxu0 %v2130
    %2222 = vmatprep.subr.mxu0 %v2129
    %2223 = vmatpush2.msra.mxu0 %v2128
    %2224 = vmatprep.mubr.f32.mxu0 %v2084
    %2225 = vmatmul.mubr.f32.gmra.mxu0 %v2081
    %v2226 = vpop.f32.mrf.mxu0
    %v2227 = vadd.f32 0.0, %v2226
    %v2228 = vpop.f32.mrf.mxu0
    %v2229 = vadd.f32 0.0, %v2228
    %2230 = vmatprep.mubr.f32.mxu0 %v2090
    %2231 = vmatmul.mubr.f32.gmra.mxu0 %v2087
    %v2232 = vpop.f32.mrf.mxu0
    %v2233 = vadd.f32 0.0, %v2232
    %v2234 = vpop.f32.mrf.mxu0
    %v2235 = vadd.f32 0.0, %v2234
    %2236 = vdwg.mxu0
    %2237 = vmatprep.subr.mxu0 %v2030
    %2238 = vmatpush1.msra.mxu0 %v2029
    %2239 = vmatprep.subr.mxu0 %v2028
    %2240 = vmatpush1.msra.mxu0 %v2027
    %2241 = vmatprep.subr.mxu0 %v2026
    %2242 = vmatpush1.msra.mxu0 %v2025
    %2243 = vmatprep.subr.mxu0 %v2024
    %2244 = vmatpush1.msra.mxu0 %v2023
    %2245 = vmatprep.subr.mxu0 %v2022
    %2246 = vmatpush1.msra.mxu0 %v2021
    %2247 = vmatprep.subr.mxu0 %v2020
    %2248 = vmatpush1.msra.mxu0 %v2019
    %2249 = vmatprep.subr.mxu0 %v2018
    %2250 = vmatpush1.msra.mxu0 %v2017
    %2251 = vmatprep.subr.mxu0 %v2016
    %2252 = vmatpush1.msra.mxu0 %v2015
    %2253 = vmatprep.subr.mxu0 %v2014
    %2254 = vmatpush1.msra.mxu0 %v2013
    %2255 = vmatprep.subr.mxu0 %v2012
    %2256 = vmatpush1.msra.mxu0 %v2011
    %2257 = vmatprep.subr.mxu0 %v2010
    %2258 = vmatpush1.msra.mxu0 %v2009
    %2259 = vmatprep.subr.mxu0 %v2008
    %2260 = vmatpush1.msra.mxu0 %v2007
    %2261 = vmatprep.subr.mxu0 %v2006
    %2262 = vmatpush1.msra.mxu0 %v2005
    %2263 = vmatprep.subr.mxu0 %v2004
    %2264 = vmatpush1.msra.mxu0 %v2003
    %2265 = vmatprep.subr.mxu0 %v2002
    %2266 = vmatpush1.msra.mxu0 %v2001
    %2267 = vmatprep.subr.mxu0 %v2000
    %2268 = vmatpush1.msra.mxu0 %v1999
    %2269 = vmatprep.subr.mxu0 %v2062
    %2270 = vmatpush2.msra.mxu0 %v2061
    %2271 = vmatprep.subr.mxu0 %v2060
    %2272 = vmatpush2.msra.mxu0 %v2059
    %2273 = vmatprep.subr.mxu0 %v2058
    %2274 = vmatpush2.msra.mxu0 %v2057
    %2275 = vmatprep.subr.mxu0 %v2056
    %2276 = vmatpush2.msra.mxu0 %v2055
    %2277 = vmatprep.subr.mxu0 %v2054
    %2278 = vmatpush2.msra.mxu0 %v2053
    %2279 = vmatprep.subr.mxu0 %v2052
    %2280 = vmatpush2.msra.mxu0 %v2051
    %2281 = vmatprep.subr.mxu0 %v2050
    %2282 = vmatpush2.msra.mxu0 %v2049
    %2283 = vmatprep.subr.mxu0 %v2048
    %2284 = vmatpush2.msra.mxu0 %v2047
    %2285 = vmatprep.subr.mxu0 %v2046
    %2286 = vmatpush2.msra.mxu0 %v2045
    %2287 = vmatprep.subr.mxu0 %v2044
    %2288 = vmatpush2.msra.mxu0 %v2043
    %2289 = vmatprep.subr.mxu0 %v2042
    %2290 = vmatpush2.msra.mxu0 %v2041
    %2291 = vmatprep.subr.mxu0 %v2040
    %2292 = vmatpush2.msra.mxu0 %v2039
    %2293 = vmatprep.subr.mxu0 %v2038
    %2294 = vmatpush2.msra.mxu0 %v2037
    %2295 = vmatprep.subr.mxu0 %v2036
    %2296 = vmatpush2.msra.mxu0 %v2035
    %2297 = vmatprep.subr.mxu0 %v2034
    %2298 = vmatpush2.msra.mxu0 %v2033
    %2299 = vmatprep.subr.mxu0 %v2032
    %2300 = vmatpush2.msra.mxu0 %v2031
    %2301 = vmatprep.mubr.f32.mxu0 %v1995
    %2302 = vmatmul.mubr.f32.gmra.mxu0 %v1994
    %v2303 = vpop.f32.mrf.mxu0
    %v2304 = vadd.f32 %v2227, %v2303
    %v2305 = vpop.f32.mrf.mxu0
    %v2306 = vadd.f32 %v2229, %v2305
    %2307 = vmatprep.mubr.f32.mxu0 %v1997
    %2308 = vmatmul.mubr.f32.gmra.mxu0 %v1996
    %v2309 = vpop.f32.mrf.mxu0
    %v2310 = vadd.f32 %v2233, %v2309
    %v2311 = vpop.f32.mrf.mxu0
    %v2312 = vadd.f32 %v2235, %v2311
    %2313 = vdwg.mxu0
    %v2314 = vld [vmem:[#allocation3] sm:$0xfc]
    %v2315 = vld [vmem:[#allocation3 + $0x8] sm:$0xfc]
    %v2316 = vld [vmem:[#allocation3 + $0x10] sm:$0x3]
    %v2317 = vld [vmem:[#allocation3 + $0x18] sm:$0x3]
    %v2318 = vld [vmem:[#allocation3 + $0x20] sm:$0xfc]
    %v2319 = vld [vmem:[#allocation3 + $0x28] sm:$0xfc]
    %v2320 = vld [vmem:[#allocation3 + $0x30] sm:$0x3]
    %v2321 = vld [vmem:[#allocation3 + $0x38] sm:$0x3]
    %v2330 = vrot.slane %v2314, 2
    %v2331 = vrot.slane %v2316, 2
    %v2332 = vsel %vm1493, %v2330, %v2331
    %v2333 = vrot.slane %v2315, 2
    %v2334 = vrot.slane %v2317, 2
    %v2335 = vsel %vm1493, %v2333, %v2334
    %v2336 = vrot.slane %v2318, 2
    %v2337 = vrot.slane %v2320, 2
    %v2338 = vsel %vm1493, %v2336, %v2337
    %v2339 = vrot.slane %v2319, 2
    %v2340 = vrot.slane %v2321, 2
    %v2341 = vsel %vm1493, %v2339, %v2340
    %s2346 = scalar_lea.vmem [#allocation9], 2560
    %v2347 = vld [vmem:[%s2346] sm:$0xff]
    %v2348 = vld [vmem:[%s2346 + $0x8] sm:$0xff]
    %v2349 = vld [vmem:[%s2346 + $0x10] sm:$0xff]
    %v2350 = vld [vmem:[%s2346 + $0x18] sm:$0xff]
    %v2351 = vld [vmem:[%s2346 + $0x20] sm:$0xff]
    %v2352 = vld [vmem:[%s2346 + $0x28] sm:$0xff]
    %v2353 = vld [vmem:[%s2346 + $0x30] sm:$0xff]
    %v2354 = vld [vmem:[%s2346 + $0x38] sm:$0xff]
    %v2355 = vld [vmem:[%s2346 + $0x40] sm:$0xff]
    %v2356 = vld [vmem:[%s2346 + $0x48] sm:$0xff]
    %v2357 = vld [vmem:[%s2346 + $0x50] sm:$0xff]
    %v2358 = vld [vmem:[%s2346 + $0x58] sm:$0xff]
    %v2359 = vld [vmem:[%s2346 + $0x60] sm:$0xff]
    %v2360 = vld [vmem:[%s2346 + $0x68] sm:$0xff]
    %v2361 = vld [vmem:[%s2346 + $0x70] sm:$0xff]
    %v2362 = vld [vmem:[%s2346 + $0x78] sm:$0xff]
    %v2363 = vld [vmem:[%s2346 + $0x80] sm:$0xff]
    %v2364 = vld [vmem:[%s2346 + $0x88] sm:$0xff]
    %v2365 = vld [vmem:[%s2346 + $0x90] sm:$0xff]
    %v2366 = vld [vmem:[%s2346 + $0x98] sm:$0xff]
    %v2367 = vld [vmem:[%s2346 + $0xa0] sm:$0xff]
    %v2368 = vld [vmem:[%s2346 + $0xa8] sm:$0xff]
    %v2369 = vld [vmem:[%s2346 + $0xb0] sm:$0xff]
    %v2370 = vld [vmem:[%s2346 + $0xb8] sm:$0xff]
    %v2371 = vld [vmem:[%s2346 + $0xc0] sm:$0xff]
    %v2372 = vld [vmem:[%s2346 + $0xc8] sm:$0xff]
    %v2373 = vld [vmem:[%s2346 + $0xd0] sm:$0xff]
    %v2374 = vld [vmem:[%s2346 + $0xd8] sm:$0xff]
    %v2375 = vld [vmem:[%s2346 + $0xe0] sm:$0xff]
    %v2376 = vld [vmem:[%s2346 + $0xe8] sm:$0xff]
    %v2377 = vld [vmem:[%s2346 + $0xf0] sm:$0xff]
    %v2378 = vld [vmem:[%s2346 + $0xf8] sm:$0xff]
    %v2379 = vld [vmem:[%s2346 + $0x100] sm:$0xff]
    %v2380 = vld [vmem:[%s2346 + $0x108] sm:$0xff]
    %v2381 = vld [vmem:[%s2346 + $0x110] sm:$0xff]
    %v2382 = vld [vmem:[%s2346 + $0x118] sm:$0xff]
    %v2383 = vld [vmem:[%s2346 + $0x120] sm:$0xff]
    %v2384 = vld [vmem:[%s2346 + $0x128] sm:$0xff]
    %v2385 = vld [vmem:[%s2346 + $0x130] sm:$0xff]
    %v2386 = vld [vmem:[%s2346 + $0x138] sm:$0xff]
    %v2387 = vld [vmem:[%s2346 + $0x140] sm:$0xff]
    %v2388 = vld [vmem:[%s2346 + $0x148] sm:$0xff]
    %v2389 = vld [vmem:[%s2346 + $0x150] sm:$0xff]
    %v2390 = vld [vmem:[%s2346 + $0x158] sm:$0xff]
    %v2391 = vld [vmem:[%s2346 + $0x160] sm:$0xff]
    %v2392 = vld [vmem:[%s2346 + $0x168] sm:$0xff]
    %v2393 = vld [vmem:[%s2346 + $0x170] sm:$0xff]
    %v2394 = vld [vmem:[%s2346 + $0x178] sm:$0xff]
    %v2395 = vld [vmem:[%s2346 + $0x180] sm:$0xff]
    %v2396 = vld [vmem:[%s2346 + $0x188] sm:$0xff]
    %v2397 = vld [vmem:[%s2346 + $0x190] sm:$0xff]
    %v2398 = vld [vmem:[%s2346 + $0x198] sm:$0xff]
    %v2399 = vld [vmem:[%s2346 + $0x1a0] sm:$0xff]
    %v2400 = vld [vmem:[%s2346 + $0x1a8] sm:$0xff]
    %v2401 = vld [vmem:[%s2346 + $0x1b0] sm:$0xff]
    %v2402 = vld [vmem:[%s2346 + $0x1b8] sm:$0xff]
    %v2403 = vld [vmem:[%s2346 + $0x1c0] sm:$0xff]
    %v2404 = vld [vmem:[%s2346 + $0x1c8] sm:$0xff]
    %v2405 = vld [vmem:[%s2346 + $0x1d0] sm:$0xff]
    %v2406 = vld [vmem:[%s2346 + $0x1d8] sm:$0xff]
    %v2407 = vld [vmem:[%s2346 + $0x1e0] sm:$0xff]
    %v2408 = vld [vmem:[%s2346 + $0x1e8] sm:$0xff]
    %v2409 = vld [vmem:[%s2346 + $0x1f0] sm:$0xff]
    %v2410 = vld [vmem:[%s2346 + $0x1f8] sm:$0xff]
    %2411 = vmatprep.subr.mxu0 %v2378
    %2412 = vmatpush1.msra.mxu0 %v2377
    %2413 = vmatprep.subr.mxu0 %v2376
    %2414 = vmatpush1.msra.mxu0 %v2375
    %2415 = vmatprep.subr.mxu0 %v2374
    %2416 = vmatpush1.msra.mxu0 %v2373
    %2417 = vmatprep.subr.mxu0 %v2372
    %2418 = vmatpush1.msra.mxu0 %v2371
    %2419 = vmatprep.subr.mxu0 %v2370
    %2420 = vmatpush1.msra.mxu0 %v2369
    %2421 = vmatprep.subr.mxu0 %v2368
    %2422 = vmatpush1.msra.mxu0 %v2367
    %2423 = vmatprep.subr.mxu0 %v2366
    %2424 = vmatpush1.msra.mxu0 %v2365
    %2425 = vmatprep.subr.mxu0 %v2364
    %2426 = vmatpush1.msra.mxu0 %v2363
    %2427 = vmatprep.subr.mxu0 %v2362
    %2428 = vmatpush1.msra.mxu0 %v2361
    %2429 = vmatprep.subr.mxu0 %v2360
    %2430 = vmatpush1.msra.mxu0 %v2359
    %2431 = vmatprep.subr.mxu0 %v2358
    %2432 = vmatpush1.msra.mxu0 %v2357
    %2433 = vmatprep.subr.mxu0 %v2356
    %2434 = vmatpush1.msra.mxu0 %v2355
    %2435 = vmatprep.subr.mxu0 %v2354
    %2436 = vmatpush1.msra.mxu0 %v2353
    %2437 = vmatprep.subr.mxu0 %v2352
    %2438 = vmatpush1.msra.mxu0 %v2351
    %2439 = vmatprep.subr.mxu0 %v2350
    %2440 = vmatpush1.msra.mxu0 %v2349
    %2441 = vmatprep.subr.mxu0 %v2348
    %2442 = vmatpush1.msra.mxu0 %v2347
    %2443 = vmatprep.subr.mxu0 %v2410
    %2444 = vmatpush2.msra.mxu0 %v2409
    %2445 = vmatprep.subr.mxu0 %v2408
    %2446 = vmatpush2.msra.mxu0 %v2407
    %2447 = vmatprep.subr.mxu0 %v2406
    %2448 = vmatpush2.msra.mxu0 %v2405
    %2449 = vmatprep.subr.mxu0 %v2404
    %2450 = vmatpush2.msra.mxu0 %v2403
    %2451 = vmatprep.subr.mxu0 %v2402
    %2452 = vmatpush2.msra.mxu0 %v2401
    %2453 = vmatprep.subr.mxu0 %v2400
    %2454 = vmatpush2.msra.mxu0 %v2399
    %2455 = vmatprep.subr.mxu0 %v2398
    %2456 = vmatpush2.msra.mxu0 %v2397
    %2457 = vmatprep.subr.mxu0 %v2396
    %2458 = vmatpush2.msra.mxu0 %v2395
    %2459 = vmatprep.subr.mxu0 %v2394
    %2460 = vmatpush2.msra.mxu0 %v2393
    %2461 = vmatprep.subr.mxu0 %v2392
    %2462 = vmatpush2.msra.mxu0 %v2391
    %2463 = vmatprep.subr.mxu0 %v2390
    %2464 = vmatpush2.msra.mxu0 %v2389
    %2465 = vmatprep.subr.mxu0 %v2388
    %2466 = vmatpush2.msra.mxu0 %v2387
    %2467 = vmatprep.subr.mxu0 %v2386
    %2468 = vmatpush2.msra.mxu0 %v2385
    %2469 = vmatprep.subr.mxu0 %v2384
    %2470 = vmatpush2.msra.mxu0 %v2383
    %2471 = vmatprep.subr.mxu0 %v2382
    %2472 = vmatpush2.msra.mxu0 %v2381
    %2473 = vmatprep.subr.mxu0 %v2380
    %2474 = vmatpush2.msra.mxu0 %v2379
    %2475 = vmatprep.mubr.f32.mxu0 %v2335
    %2476 = vmatmul.mubr.f32.gmra.mxu0 %v2332
    %v2477 = vpop.f32.mrf.mxu0
    %v2478 = vadd.f32 0.0, %v2477
    %v2479 = vpop.f32.mrf.mxu0
    %v2480 = vadd.f32 0.0, %v2479
    %2481 = vmatprep.mubr.f32.mxu0 %v2341
    %2482 = vmatmul.mubr.f32.gmra.mxu0 %v2338
    %v2483 = vpop.f32.mrf.mxu0
    %v2484 = vadd.f32 0.0, %v2483
    %v2485 = vpop.f32.mrf.mxu0
    %v2486 = vadd.f32 0.0, %v2485
    %2487 = vdwg.mxu0
    %v2488 = vadd.f32 %v2304, %v2478
    %v2489 = vadd.f32 %v2306, %v2480
    %v2490 = vadd.f32 %v2310, %v2484
    %v2491 = vadd.f32 %v2312, %v2486
    %v2492 = vadd.f32 %v2488, %v2490
    %v2493 = vrot.slane %v2492, 4
    %v2494 = vadd.f32 %v2492, %v2493
    %v2495 = vrot.slane %v2494, 2
    %v2496 = vadd.f32 %v2494, %v2495
    %v2497 = vrot.slane %v2496, 1
    %v2498 = vadd.f32 %v2496, %v2497
    %v2499 = vadd.f32 %v2489, %v2491
    %v2500 = vrot.slane %v2499, 4
    %v2501 = vadd.f32 %v2499, %v2500
    %v2502 = vrot.slane %v2501, 2
    %v2503 = vadd.f32 %v2501, %v2502
    %v2504 = vrot.slane %v2503, 1
    %v2505 = vadd.f32 %v2503, %v2504
    %v2506 = vmul.f32 %v2488, %v2488
    %v2507 = vmul.f32 %v2489, %v2489
    %v2508 = vmul.f32 %v2490, %v2490
    %v2509 = vmul.f32 %v2491, %v2491
    %v2510 = vadd.f32 %v2506, %v2508
    %v2511 = vrot.slane %v2510, 4
    %v2512 = vadd.f32 %v2510, %v2511
    %v2513 = vrot.slane %v2512, 2
    %v2514 = vadd.f32 %v2512, %v2513
    %v2515 = vrot.slane %v2514, 1
    %v2516 = vadd.f32 %v2514, %v2515
    %v2517 = vadd.f32 %v2507, %v2509
    %v2518 = vrot.slane %v2517, 4
    %v2519 = vadd.f32 %v2517, %v2518
    %v2520 = vrot.slane %v2519, 2
    %v2521 = vadd.f32 %v2519, %v2520
    %v2522 = vrot.slane %v2521, 1
    %v2523 = vadd.f32 %v2521, %v2522
    %v2524 = vld [vmem:[#allocation14] sm:$0xff]
    %v2525 = vld [vmem:[#allocation14 + $0x8] sm:$0xff]
    %v2526 = vld [vmem:[#allocation14 + $0x10] sm:$0xff]
    %v2527 = vld [vmem:[#allocation14 + $0x18] sm:$0xff]
    %v2528 = vld [vmem:[#allocation14 + $0x20] sm:$0xff]
    %v2529 = vld [vmem:[#allocation14 + $0x28] sm:$0xff]
    %v2530 = vld [vmem:[#allocation14 + $0x30] sm:$0xff]
    %v2531 = vld [vmem:[#allocation14 + $0x38] sm:$0xff]
    %v2532 = vld [vmem:[#allocation14 + $0x40] sm:$0xff]
    %v2533 = vld [vmem:[#allocation14 + $0x48] sm:$0xff]
    %v2534 = vld [vmem:[#allocation14 + $0x50] sm:$0xff]
    %v2535 = vld [vmem:[#allocation14 + $0x58] sm:$0xff]
    %v2536 = vld [vmem:[#allocation14 + $0x60] sm:$0xff]
    %v2537 = vld [vmem:[#allocation14 + $0x68] sm:$0xff]
    %v2538 = vld [vmem:[#allocation14 + $0x70] sm:$0xff]
    %v2539 = vld [vmem:[#allocation14 + $0x78] sm:$0xff]
    %v2540 = vld [vmem:[#allocation14 + $0x80] sm:$0xff]
    %v2541 = vld [vmem:[#allocation14 + $0x88] sm:$0xff]
    %v2542 = vld [vmem:[#allocation14 + $0x90] sm:$0xff]
    %v2543 = vld [vmem:[#allocation14 + $0x98] sm:$0xff]
    %v2544 = vld [vmem:[#allocation14 + $0xa0] sm:$0xff]
    %v2545 = vld [vmem:[#allocation14 + $0xa8] sm:$0xff]
    %v2546 = vld [vmem:[#allocation14 + $0xb0] sm:$0xff]
    %v2547 = vld [vmem:[#allocation14 + $0xb8] sm:$0xff]
    %v2548 = vld [vmem:[#allocation14 + $0xc0] sm:$0xff]
    %v2549 = vld [vmem:[#allocation14 + $0xc8] sm:$0xff]
    %v2550 = vld [vmem:[#allocation14 + $0xd0] sm:$0xff]
    %v2551 = vld [vmem:[#allocation14 + $0xd8] sm:$0xff]
    %v2552 = vld [vmem:[#allocation14 + $0xe0] sm:$0xff]
    %v2553 = vld [vmem:[#allocation14 + $0xe8] sm:$0xff]
    %v2554 = vld [vmem:[#allocation14 + $0xf0] sm:$0xff]
    %v2555 = vld [vmem:[#allocation14 + $0xf8] sm:$0xff]
    %v2556 = vld [vmem:[#allocation14 + $0x100] sm:$0xff]
    %v2557 = vld [vmem:[#allocation14 + $0x108] sm:$0xff]
    %v2558 = vld [vmem:[#allocation14 + $0x110] sm:$0xff]
    %v2559 = vld [vmem:[#allocation14 + $0x118] sm:$0xff]
    %v2560 = vld [vmem:[#allocation14 + $0x120] sm:$0xff]
    %v2561 = vld [vmem:[#allocation14 + $0x128] sm:$0xff]
    %v2562 = vld [vmem:[#allocation14 + $0x130] sm:$0xff]
    %v2563 = vld [vmem:[#allocation14 + $0x138] sm:$0xff]
    %v2564 = vld [vmem:[#allocation14 + $0x140] sm:$0xff]
    %v2565 = vld [vmem:[#allocation14 + $0x148] sm:$0xff]
    %v2566 = vld [vmem:[#allocation14 + $0x150] sm:$0xff]
    %v2567 = vld [vmem:[#allocation14 + $0x158] sm:$0xff]
    %v2568 = vld [vmem:[#allocation14 + $0x160] sm:$0xff]
    %v2569 = vld [vmem:[#allocation14 + $0x168] sm:$0xff]
    %v2570 = vld [vmem:[#allocation14 + $0x170] sm:$0xff]
    %v2571 = vld [vmem:[#allocation14 + $0x178] sm:$0xff]
    %v2572 = vld [vmem:[#allocation14 + $0x180] sm:$0xff]
    %v2573 = vld [vmem:[#allocation14 + $0x188] sm:$0xff]
    %v2574 = vld [vmem:[#allocation14 + $0x190] sm:$0xff]
    %v2575 = vld [vmem:[#allocation14 + $0x198] sm:$0xff]
    %v2576 = vld [vmem:[#allocation14 + $0x1a0] sm:$0xff]
    %v2577 = vld [vmem:[#allocation14 + $0x1a8] sm:$0xff]
    %v2578 = vld [vmem:[#allocation14 + $0x1b0] sm:$0xff]
    %v2579 = vld [vmem:[#allocation14 + $0x1b8] sm:$0xff]
    %v2580 = vld [vmem:[#allocation14 + $0x1c0] sm:$0xff]
    %v2581 = vld [vmem:[#allocation14 + $0x1c8] sm:$0xff]
    %v2582 = vld [vmem:[#allocation14 + $0x1d0] sm:$0xff]
    %v2583 = vld [vmem:[#allocation14 + $0x1d8] sm:$0xff]
    %v2584 = vld [vmem:[#allocation14 + $0x1e0] sm:$0xff]
    %v2585 = vld [vmem:[#allocation14 + $0x1e8] sm:$0xff]
    %v2586 = vld [vmem:[#allocation14 + $0x1f0] sm:$0xff]
    %v2587 = vld [vmem:[#allocation14 + $0x1f8] sm:$0xff]
    %2588 = vmatprep.subr.mxu0 %v2555
    %2589 = vmatpush1.msra.mxu0 %v2554
    %2590 = vmatprep.subr.mxu0 %v2553
    %2591 = vmatpush1.msra.mxu0 %v2552
    %2592 = vmatprep.subr.mxu0 %v2551
    %2593 = vmatpush1.msra.mxu0 %v2550
    %2594 = vmatprep.subr.mxu0 %v2549
    %2595 = vmatpush1.msra.mxu0 %v2548
    %2596 = vmatprep.subr.mxu0 %v2547
    %2597 = vmatpush1.msra.mxu0 %v2546
    %2598 = vmatprep.subr.mxu0 %v2545
    %2599 = vmatpush1.msra.mxu0 %v2544
    %2600 = vmatprep.subr.mxu0 %v2543
    %2601 = vmatpush1.msra.mxu0 %v2542
    %2602 = vmatprep.subr.mxu0 %v2541
    %2603 = vmatpush1.msra.mxu0 %v2540
    %2604 = vmatprep.subr.mxu0 %v2539
    %2605 = vmatpush1.msra.mxu0 %v2538
    %2606 = vmatprep.subr.mxu0 %v2537
    %2607 = vmatpush1.msra.mxu0 %v2536
    %2608 = vmatprep.subr.mxu0 %v2535
    %2609 = vmatpush1.msra.mxu0 %v2534
    %2610 = vmatprep.subr.mxu0 %v2533
    %2611 = vmatpush1.msra.mxu0 %v2532
    %2612 = vmatprep.subr.mxu0 %v2531
    %2613 = vmatpush1.msra.mxu0 %v2530
    %2614 = vmatprep.subr.mxu0 %v2529
    %2615 = vmatpush1.msra.mxu0 %v2528
    %2616 = vmatprep.subr.mxu0 %v2527
    %2617 = vmatpush1.msra.mxu0 %v2526
    %2618 = vmatprep.subr.mxu0 %v2525
    %2619 = vmatpush1.msra.mxu0 %v2524
    %2620 = vmatprep.subr.mxu0 %v2587
    %2621 = vmatpush2.msra.mxu0 %v2586
    %2622 = vmatprep.subr.mxu0 %v2585
    %2623 = vmatpush2.msra.mxu0 %v2584
    %2624 = vmatprep.subr.mxu0 %v2583
    %2625 = vmatpush2.msra.mxu0 %v2582
    %2626 = vmatprep.subr.mxu0 %v2581
    %2627 = vmatpush2.msra.mxu0 %v2580
    %2628 = vmatprep.subr.mxu0 %v2579
    %2629 = vmatpush2.msra.mxu0 %v2578
    %2630 = vmatprep.subr.mxu0 %v2577
    %2631 = vmatpush2.msra.mxu0 %v2576
    %2632 = vmatprep.subr.mxu0 %v2575
    %2633 = vmatpush2.msra.mxu0 %v2574
    %2634 = vmatprep.subr.mxu0 %v2573
    %2635 = vmatpush2.msra.mxu0 %v2572
    %2636 = vmatprep.subr.mxu0 %v2571
    %2637 = vmatpush2.msra.mxu0 %v2570
    %2638 = vmatprep.subr.mxu0 %v2569
    %2639 = vmatpush2.msra.mxu0 %v2568
    %2640 = vmatprep.subr.mxu0 %v2567
    %2641 = vmatpush2.msra.mxu0 %v2566
    %2642 = vmatprep.subr.mxu0 %v2565
    %2643 = vmatpush2.msra.mxu0 %v2564
    %2644 = vmatprep.subr.mxu0 %v2563
    %2645 = vmatpush2.msra.mxu0 %v2562
    %2646 = vmatprep.subr.mxu0 %v2561
    %2647 = vmatpush2.msra.mxu0 %v2560
    %2648 = vmatprep.subr.mxu0 %v2559
    %2649 = vmatpush2.msra.mxu0 %v2558
    %2650 = vmatprep.subr.mxu0 %v2557
    %2651 = vmatpush2.msra.mxu0 %v2556
    %2652 = vmatprep.mubr.f32.mxu0 %v2505
    %2653 = vmatmul.mubr.f32.gmra.mxu0 %v2498
    %v2654 = vpop.f32.mrf.mxu0
    %v2655 = vadd.f32 0.0, %v2654
    %v2656 = vpop.f32.mrf.mxu0
    %v2657 = vadd.f32 0.0, %v2656
    %2658 = vdwg.mxu0
    %2659 = vmatprep.subr.mxu0 %v2555
    %2660 = vmatpush1.msra.mxu0 %v2554
    %2661 = vmatprep.subr.mxu0 %v2553
    %2662 = vmatpush1.msra.mxu0 %v2552
    %2663 = vmatprep.subr.mxu0 %v2551
    %2664 = vmatpush1.msra.mxu0 %v2550
    %2665 = vmatprep.subr.mxu0 %v2549
    %2666 = vmatpush1.msra.mxu0 %v2548
    %2667 = vmatprep.subr.mxu0 %v2547
    %2668 = vmatpush1.msra.mxu0 %v2546
    %2669 = vmatprep.subr.mxu0 %v2545
    %2670 = vmatpush1.msra.mxu0 %v2544
    %2671 = vmatprep.subr.mxu0 %v2543
    %2672 = vmatpush1.msra.mxu0 %v2542
    %2673 = vmatprep.subr.mxu0 %v2541
    %2674 = vmatpush1.msra.mxu0 %v2540
    %2675 = vmatprep.subr.mxu0 %v2539
    %2676 = vmatpush1.msra.mxu0 %v2538
    %2677 = vmatprep.subr.mxu0 %v2537
    %2678 = vmatpush1.msra.mxu0 %v2536
    %2679 = vmatprep.subr.mxu0 %v2535
    %2680 = vmatpush1.msra.mxu0 %v2534
    %2681 = vmatprep.subr.mxu0 %v2533
    %2682 = vmatpush1.msra.mxu0 %v2532
    %2683 = vmatprep.subr.mxu0 %v2531
    %2684 = vmatpush1.msra.mxu0 %v2530
    %2685 = vmatprep.subr.mxu0 %v2529
    %2686 = vmatpush1.msra.mxu0 %v2528
    %2687 = vmatprep.subr.mxu0 %v2527
    %2688 = vmatpush1.msra.mxu0 %v2526
    %2689 = vmatprep.subr.mxu0 %v2525
    %2690 = vmatpush1.msra.mxu0 %v2524
    %2691 = vmatprep.subr.mxu0 %v2587
    %2692 = vmatpush2.msra.mxu0 %v2586
    %2693 = vmatprep.subr.mxu0 %v2585
    %2694 = vmatpush2.msra.mxu0 %v2584
    %2695 = vmatprep.subr.mxu0 %v2583
    %2696 = vmatpush2.msra.mxu0 %v2582
    %2697 = vmatprep.subr.mxu0 %v2581
    %2698 = vmatpush2.msra.mxu0 %v2580
    %2699 = vmatprep.subr.mxu0 %v2579
    %2700 = vmatpush2.msra.mxu0 %v2578
    %2701 = vmatprep.subr.mxu0 %v2577
    %2702 = vmatpush2.msra.mxu0 %v2576
    %2703 = vmatprep.subr.mxu0 %v2575
    %2704 = vmatpush2.msra.mxu0 %v2574
    %2705 = vmatprep.subr.mxu0 %v2573
    %2706 = vmatpush2.msra.mxu0 %v2572
    %2707 = vmatprep.subr.mxu0 %v2571
    %2708 = vmatpush2.msra.mxu0 %v2570
    %2709 = vmatprep.subr.mxu0 %v2569
    %2710 = vmatpush2.msra.mxu0 %v2568
    %2711 = vmatprep.subr.mxu0 %v2567
    %2712 = vmatpush2.msra.mxu0 %v2566
    %2713 = vmatprep.subr.mxu0 %v2565
    %2714 = vmatpush2.msra.mxu0 %v2564
    %2715 = vmatprep.subr.mxu0 %v2563
    %2716 = vmatpush2.msra.mxu0 %v2562
    %2717 = vmatprep.subr.mxu0 %v2561
    %2718 = vmatpush2.msra.mxu0 %v2560
    %2719 = vmatprep.subr.mxu0 %v2559
    %2720 = vmatpush2.msra.mxu0 %v2558
    %2721 = vmatprep.subr.mxu0 %v2557
    %2722 = vmatpush2.msra.mxu0 %v2556
    %2723 = vmatprep.mubr.f32.mxu0 %v2523
    %2724 = vmatmul.mubr.f32.gmra.mxu0 %v2516
    %v2725 = vpop.f32.mrf.mxu0
    %v2726 = vadd.f32 0.0, %v2725
    %v2727 = vpop.f32.mrf.mxu0
    %v2728 = vadd.f32 0.0, %v2727
    %2729 = vdwg.mxu0
    %v2730 = vmul.f32 %v2655, %v2655
    %v2731 = vmul.f32 %v2657, %v2657
    %v2732 = vsub.f32 %v2726, %v2730
    %v2733 = vsub.f32 %v2728, %v2731
    %v2734 = vlaneseq
    %v2735 = vshrl.u32 %v2734, 7
    %v2736 = vsub.s32 0, %v2735
    %v2737 = vrot.slane %v2655, %v2736
    %v2738 = vlaneseq
    %v2739 = vshrl.u32 %v2738, 7
    %v2740 = vsub.s32 0, %v2739
    %v2741 = vrot.slane %v2657, %v2740
    %v2742 = vsub.f32 %v2488, %v2737
    %v2743 = vsub.f32 %v2489, %v2741
    %v2744 = vsub.f32 %v2490, %v2737
    %v2745 = vsub.f32 %v2491, %v2741
    %v2746 = vadd.f32 %v2732, 1e-05
    %v2747 = vadd.f32 %v2733, 1e-05
    %v2748 = vrsqrt.pop %v2746
    %v2749 = vrsqrt.pop %v2747
    %v2750 = vlaneseq
    %v2751 = vshrl.u32 %v2750, 7
    %v2752 = vsub.s32 0, %v2751
    %v2753 = vrot.slane %v2748, %v2752
    %v2754 = vlaneseq
    %v2755 = vshrl.u32 %v2754, 7
    %v2756 = vsub.s32 0, %v2755
    %v2757 = vrot.slane %v2749, %v2756
    %v2758 = vmul.f32 %v2742, %v2753
    %v2759 = vmul.f32 %v2743, %v2757
    %v2760 = vmul.f32 %v2744, %v2753
    %v2761 = vmul.f32 %v2745, %v2757
    %s2762 = scalar_lea.vmem [#allocation11], 2
    %v2763 = vld [vmem:[%s2762] ss:$8 sm:$0x3]
    %v2765 = vlaneseq
    %v2766 = vshrl.u32 %v2765, 7
    %v2767 = vsub.s32 0, %v2766
    %v2768 = vrot.slane %v2763, %v2767
    %v2769 = vlaneseq
    %v2770 = vshrl.u32 %v2769, 7
    %v2771 = vsub.s32 1, %v2770
    %v2772 = vrot.slane %v2763, %v2771
    %v2775 = vmul.f32 %v2758, %v2768
    %v2776 = vmul.f32 %v2759, %v2772
    %v2777 = vmul.f32 %v2760, %v2768
    %v2778 = vmul.f32 %v2761, %v2772
    %s2779 = scalar_lea.vmem [#allocation12], 2
    %v2780 = vld [vmem:[%s2779] ss:$8 sm:$0x3]
    %v2782 = vlaneseq
    %v2783 = vshrl.u32 %v2782, 7
    %v2784 = vsub.s32 0, %v2783
    %v2785 = vrot.slane %v2780, %v2784
    %v2786 = vlaneseq
    %v2787 = vshrl.u32 %v2786, 7
    %v2788 = vsub.s32 1, %v2787
    %v2789 = vrot.slane %v2780, %v2788
    %v2792 = vadd.f32 %v2775, %v2785
    %v2793 = vadd.f32 %v2776, %v2789
    %v2794 = vadd.f32 %v2777, %v2785
    %v2795 = vadd.f32 %v2778, %v2789
    %v2796 = vadd.f32 %v2792, %v1133
    %v2797 = vadd.f32 %v2793, %v1134
    %v2798 = vadd.f32 %v2794, %v1135
    %v2799 = vadd.f32 %v2795, %v1136
    %v2800 = vmax.f32 %v2796, 0.0
    %v2801 = vmax.f32 %v2797, 0.0
    %v2802 = vmax.f32 %v2798, 0.0
    %v2803 = vmax.f32 %v2799, 0.0
    %v2808 = vrot.slane %v2800, 7
    %v2809 = vrot.slane %v2801, 7
    %v2810 = vrot.slane %v2802, 7
    %v2811 = vrot.slane %v2803, 7
    %2816 = vst [vmem:[#allocation3] sm:$0xfe] %v2808
    %2817 = vst [vmem:[#allocation3 + $0x8] sm:$0xfe] %v2809
    %2818 = vst [vmem:[#allocation3 + $0x10] sm:$0x1] %v2808
    %2819 = vst [vmem:[#allocation3 + $0x18] sm:$0x1] %v2809
    %2820 = vst [vmem:[#allocation3 + $0x20] sm:$0xfe] %v2810
    %2821 = vst [vmem:[#allocation3 + $0x28] sm:$0xfe] %v2811
    %2822 = vst [vmem:[#allocation3 + $0x30] sm:$0x1] %v2810
    %2823 = vst [vmem:[#allocation3 + $0x38] sm:$0x1] %v2811
    %v2824 = vld [vmem:[#allocation3] sm:$0xff]
    %v2825 = vld [vmem:[#allocation3 + $0x8] sm:$0xff]
    %v2826 = vld [vmem:[#allocation3 + $0x20] sm:$0xff]
    %v2827 = vld [vmem:[#allocation3 + $0x28] sm:$0xff]
    %s2828 = scalar_lea.vmem [#allocation9], 3072
    %v2829 = vld [vmem:[%s2828] sm:$0xff]
    %v2830 = vld [vmem:[%s2828 + $0x8] sm:$0xff]
    %v2831 = vld [vmem:[%s2828 + $0x10] sm:$0xff]
    %v2832 = vld [vmem:[%s2828 + $0x18] sm:$0xff]
    %v2833 = vld [vmem:[%s2828 + $0x20] sm:$0xff]
    %v2834 = vld [vmem:[%s2828 + $0x28] sm:$0xff]
    %v2835 = vld [vmem:[%s2828 + $0x30] sm:$0xff]
    %v2836 = vld [vmem:[%s2828 + $0x38] sm:$0xff]
    %v2837 = vld [vmem:[%s2828 + $0x40] sm:$0xff]
    %v2838 = vld [vmem:[%s2828 + $0x48] sm:$0xff]
    %v2839 = vld [vmem:[%s2828 + $0x50] sm:$0xff]
    %v2840 = vld [vmem:[%s2828 + $0x58] sm:$0xff]
    %v2841 = vld [vmem:[%s2828 + $0x60] sm:$0xff]
    %v2842 = vld [vmem:[%s2828 + $0x68] sm:$0xff]
    %v2843 = vld [vmem:[%s2828 + $0x70] sm:$0xff]
    %v2844 = vld [vmem:[%s2828 + $0x78] sm:$0xff]
    %v2845 = vld [vmem:[%s2828 + $0x80] sm:$0xff]
    %v2846 = vld [vmem:[%s2828 + $0x88] sm:$0xff]
    %v2847 = vld [vmem:[%s2828 + $0x90] sm:$0xff]
    %v2848 = vld [vmem:[%s2828 + $0x98] sm:$0xff]
    %v2849 = vld [vmem:[%s2828 + $0xa0] sm:$0xff]
    %v2850 = vld [vmem:[%s2828 + $0xa8] sm:$0xff]
    %v2851 = vld [vmem:[%s2828 + $0xb0] sm:$0xff]
    %v2852 = vld [vmem:[%s2828 + $0xb8] sm:$0xff]
    %v2853 = vld [vmem:[%s2828 + $0xc0] sm:$0xff]
    %v2854 = vld [vmem:[%s2828 + $0xc8] sm:$0xff]
    %v2855 = vld [vmem:[%s2828 + $0xd0] sm:$0xff]
    %v2856 = vld [vmem:[%s2828 + $0xd8] sm:$0xff]
    %v2857 = vld [vmem:[%s2828 + $0xe0] sm:$0xff]
    %v2858 = vld [vmem:[%s2828 + $0xe8] sm:$0xff]
    %v2859 = vld [vmem:[%s2828 + $0xf0] sm:$0xff]
    %v2860 = vld [vmem:[%s2828 + $0xf8] sm:$0xff]
    %v2861 = vld [vmem:[%s2828 + $0x100] sm:$0xff]
    %v2862 = vld [vmem:[%s2828 + $0x108] sm:$0xff]
    %v2863 = vld [vmem:[%s2828 + $0x110] sm:$0xff]
    %v2864 = vld [vmem:[%s2828 + $0x118] sm:$0xff]
    %v2865 = vld [vmem:[%s2828 + $0x120] sm:$0xff]
    %v2866 = vld [vmem:[%s2828 + $0x128] sm:$0xff]
    %v2867 = vld [vmem:[%s2828 + $0x130] sm:$0xff]
    %v2868 = vld [vmem:[%s2828 + $0x138] sm:$0xff]
    %v2869 = vld [vmem:[%s2828 + $0x140] sm:$0xff]
    %v2870 = vld [vmem:[%s2828 + $0x148] sm:$0xff]
    %v2871 = vld [vmem:[%s2828 + $0x150] sm:$0xff]
    %v2872 = vld [vmem:[%s2828 + $0x158] sm:$0xff]
    %v2873 = vld [vmem:[%s2828 + $0x160] sm:$0xff]
    %v2874 = vld [vmem:[%s2828 + $0x168] sm:$0xff]
    %v2875 = vld [vmem:[%s2828 + $0x170] sm:$0xff]
    %v2876 = vld [vmem:[%s2828 + $0x178] sm:$0xff]
    %v2877 = vld [vmem:[%s2828 + $0x180] sm:$0xff]
    %v2878 = vld [vmem:[%s2828 + $0x188] sm:$0xff]
    %v2879 = vld [vmem:[%s2828 + $0x190] sm:$0xff]
    %v2880 = vld [vmem:[%s2828 + $0x198] sm:$0xff]
    %v2881 = vld [vmem:[%s2828 + $0x1a0] sm:$0xff]
    %v2882 = vld [vmem:[%s2828 + $0x1a8] sm:$0xff]
    %v2883 = vld [vmem:[%s2828 + $0x1b0] sm:$0xff]
    %v2884 = vld [vmem:[%s2828 + $0x1b8] sm:$0xff]
    %v2885 = vld [vmem:[%s2828 + $0x1c0] sm:$0xff]
    %v2886 = vld [vmem:[%s2828 + $0x1c8] sm:$0xff]
    %v2887 = vld [vmem:[%s2828 + $0x1d0] sm:$0xff]
    %v2888 = vld [vmem:[%s2828 + $0x1d8] sm:$0xff]
    %v2889 = vld [vmem:[%s2828 + $0x1e0] sm:$0xff]
    %v2890 = vld [vmem:[%s2828 + $0x1e8] sm:$0xff]
    %v2891 = vld [vmem:[%s2828 + $0x1f0] sm:$0xff]
    %v2892 = vld [vmem:[%s2828 + $0x1f8] sm:$0xff]
    %v2893 = vld [vmem:[#allocation3] sm:$0xfe]
    %v2894 = vld [vmem:[#allocation3 + $0x8] sm:$0xfe]
    %v2895 = vld [vmem:[#allocation3 + $0x10] sm:$0x1]
    %v2896 = vld [vmem:[#allocation3 + $0x18] sm:$0x1]
    %v2897 = vld [vmem:[#allocation3 + $0x20] sm:$0xfe]
    %v2898 = vld [vmem:[#allocation3 + $0x28] sm:$0xfe]
    %v2899 = vld [vmem:[#allocation3 + $0x30] sm:$0x1]
    %v2900 = vld [vmem:[#allocation3 + $0x38] sm:$0x1]
    %v2909 = vrot.slane %v2893, 1
    %v2910 = vrot.slane %v2895, 1
    %v2911 = vsel %vm1241, %v2909, %v2910
    %v2912 = vrot.slane %v2894, 1
    %v2913 = vrot.slane %v2896, 1
    %v2914 = vsel %vm1241, %v2912, %v2913
    %v2915 = vrot.slane %v2897, 1
    %v2916 = vrot.slane %v2899, 1
    %v2917 = vsel %vm1241, %v2915, %v2916
    %v2918 = vrot.slane %v2898, 1
    %v2919 = vrot.slane %v2900, 1
    %v2920 = vsel %vm1241, %v2918, %v2919
    %s2925 = scalar_lea.vmem [#allocation9], 3584
    %v2926 = vld [vmem:[%s2925] sm:$0xff]
    %v2927 = vld [vmem:[%s2925 + $0x8] sm:$0xff]
    %v2928 = vld [vmem:[%s2925 + $0x10] sm:$0xff]
    %v2929 = vld [vmem:[%s2925 + $0x18] sm:$0xff]
    %v2930 = vld [vmem:[%s2925 + $0x20] sm:$0xff]
    %v2931 = vld [vmem:[%s2925 + $0x28] sm:$0xff]
    %v2932 = vld [vmem:[%s2925 + $0x30] sm:$0xff]
    %v2933 = vld [vmem:[%s2925 + $0x38] sm:$0xff]
    %v2934 = vld [vmem:[%s2925 + $0x40] sm:$0xff]
    %v2935 = vld [vmem:[%s2925 + $0x48] sm:$0xff]
    %v2936 = vld [vmem:[%s2925 + $0x50] sm:$0xff]
    %v2937 = vld [vmem:[%s2925 + $0x58] sm:$0xff]
    %v2938 = vld [vmem:[%s2925 + $0x60] sm:$0xff]
    %v2939 = vld [vmem:[%s2925 + $0x68] sm:$0xff]
    %v2940 = vld [vmem:[%s2925 + $0x70] sm:$0xff]
    %v2941 = vld [vmem:[%s2925 + $0x78] sm:$0xff]
    %v2942 = vld [vmem:[%s2925 + $0x80] sm:$0xff]
    %v2943 = vld [vmem:[%s2925 + $0x88] sm:$0xff]
    %v2944 = vld [vmem:[%s2925 + $0x90] sm:$0xff]
    %v2945 = vld [vmem:[%s2925 + $0x98] sm:$0xff]
    %v2946 = vld [vmem:[%s2925 + $0xa0] sm:$0xff]
    %v2947 = vld [vmem:[%s2925 + $0xa8] sm:$0xff]
    %v2948 = vld [vmem:[%s2925 + $0xb0] sm:$0xff]
    %v2949 = vld [vmem:[%s2925 + $0xb8] sm:$0xff]
    %v2950 = vld [vmem:[%s2925 + $0xc0] sm:$0xff]
    %v2951 = vld [vmem:[%s2925 + $0xc8] sm:$0xff]
    %v2952 = vld [vmem:[%s2925 + $0xd0] sm:$0xff]
    %v2953 = vld [vmem:[%s2925 + $0xd8] sm:$0xff]
    %v2954 = vld [vmem:[%s2925 + $0xe0] sm:$0xff]
    %v2955 = vld [vmem:[%s2925 + $0xe8] sm:$0xff]
    %v2956 = vld [vmem:[%s2925 + $0xf0] sm:$0xff]
    %v2957 = vld [vmem:[%s2925 + $0xf8] sm:$0xff]
    %v2958 = vld [vmem:[%s2925 + $0x100] sm:$0xff]
    %v2959 = vld [vmem:[%s2925 + $0x108] sm:$0xff]
    %v2960 = vld [vmem:[%s2925 + $0x110] sm:$0xff]
    %v2961 = vld [vmem:[%s2925 + $0x118] sm:$0xff]
    %v2962 = vld [vmem:[%s2925 + $0x120] sm:$0xff]
    %v2963 = vld [vmem:[%s2925 + $0x128] sm:$0xff]
    %v2964 = vld [vmem:[%s2925 + $0x130] sm:$0xff]
    %v2965 = vld [vmem:[%s2925 + $0x138] sm:$0xff]
    %v2966 = vld [vmem:[%s2925 + $0x140] sm:$0xff]
    %v2967 = vld [vmem:[%s2925 + $0x148] sm:$0xff]
    %v2968 = vld [vmem:[%s2925 + $0x150] sm:$0xff]
    %v2969 = vld [vmem:[%s2925 + $0x158] sm:$0xff]
    %v2970 = vld [vmem:[%s2925 + $0x160] sm:$0xff]
    %v2971 = vld [vmem:[%s2925 + $0x168] sm:$0xff]
    %v2972 = vld [vmem:[%s2925 + $0x170] sm:$0xff]
    %v2973 = vld [vmem:[%s2925 + $0x178] sm:$0xff]
    %v2974 = vld [vmem:[%s2925 + $0x180] sm:$0xff]
    %v2975 = vld [vmem:[%s2925 + $0x188] sm:$0xff]
    %v2976 = vld [vmem:[%s2925 + $0x190] sm:$0xff]
    %v2977 = vld [vmem:[%s2925 + $0x198] sm:$0xff]
    %v2978 = vld [vmem:[%s2925 + $0x1a0] sm:$0xff]
    %v2979 = vld [vmem:[%s2925 + $0x1a8] sm:$0xff]
    %v2980 = vld [vmem:[%s2925 + $0x1b0] sm:$0xff]
    %v2981 = vld [vmem:[%s2925 + $0x1b8] sm:$0xff]
    %v2982 = vld [vmem:[%s2925 + $0x1c0] sm:$0xff]
    %v2983 = vld [vmem:[%s2925 + $0x1c8] sm:$0xff]
    %v2984 = vld [vmem:[%s2925 + $0x1d0] sm:$0xff]
    %v2985 = vld [vmem:[%s2925 + $0x1d8] sm:$0xff]
    %v2986 = vld [vmem:[%s2925 + $0x1e0] sm:$0xff]
    %v2987 = vld [vmem:[%s2925 + $0x1e8] sm:$0xff]
    %v2988 = vld [vmem:[%s2925 + $0x1f0] sm:$0xff]
    %v2989 = vld [vmem:[%s2925 + $0x1f8] sm:$0xff]
    %2990 = vmatprep.subr.mxu0 %v2957
    %2991 = vmatpush1.msra.mxu0 %v2956
    %2992 = vmatprep.subr.mxu0 %v2955
    %2993 = vmatpush1.msra.mxu0 %v2954
    %2994 = vmatprep.subr.mxu0 %v2953
    %2995 = vmatpush1.msra.mxu0 %v2952
    %2996 = vmatprep.subr.mxu0 %v2951
    %2997 = vmatpush1.msra.mxu0 %v2950
    %2998 = vmatprep.subr.mxu0 %v2949
    %2999 = vmatpush1.msra.mxu0 %v2948
    %3000 = vmatprep.subr.mxu0 %v2947
    %3001 = vmatpush1.msra.mxu0 %v2946
    %3002 = vmatprep.subr.mxu0 %v2945
    %3003 = vmatpush1.msra.mxu0 %v2944
    %3004 = vmatprep.subr.mxu0 %v2943
    %3005 = vmatpush1.msra.mxu0 %v2942
    %3006 = vmatprep.subr.mxu0 %v2941
    %3007 = vmatpush1.msra.mxu0 %v2940
    %3008 = vmatprep.subr.mxu0 %v2939
    %3009 = vmatpush1.msra.mxu0 %v2938
    %3010 = vmatprep.subr.mxu0 %v2937
    %3011 = vmatpush1.msra.mxu0 %v2936
    %3012 = vmatprep.subr.mxu0 %v2935
    %3013 = vmatpush1.msra.mxu0 %v2934
    %3014 = vmatprep.subr.mxu0 %v2933
    %3015 = vmatpush1.msra.mxu0 %v2932
    %3016 = vmatprep.subr.mxu0 %v2931
    %3017 = vmatpush1.msra.mxu0 %v2930
    %3018 = vmatprep.subr.mxu0 %v2929
    %3019 = vmatpush1.msra.mxu0 %v2928
    %3020 = vmatprep.subr.mxu0 %v2927
    %3021 = vmatpush1.msra.mxu0 %v2926
    %3022 = vmatprep.subr.mxu0 %v2989
    %3023 = vmatpush2.msra.mxu0 %v2988
    %3024 = vmatprep.subr.mxu0 %v2987
    %3025 = vmatpush2.msra.mxu0 %v2986
    %3026 = vmatprep.subr.mxu0 %v2985
    %3027 = vmatpush2.msra.mxu0 %v2984
    %3028 = vmatprep.subr.mxu0 %v2983
    %3029 = vmatpush2.msra.mxu0 %v2982
    %3030 = vmatprep.subr.mxu0 %v2981
    %3031 = vmatpush2.msra.mxu0 %v2980
    %3032 = vmatprep.subr.mxu0 %v2979
    %3033 = vmatpush2.msra.mxu0 %v2978
    %3034 = vmatprep.subr.mxu0 %v2977
    %3035 = vmatpush2.msra.mxu0 %v2976
    %3036 = vmatprep.subr.mxu0 %v2975
    %3037 = vmatpush2.msra.mxu0 %v2974
    %3038 = vmatprep.subr.mxu0 %v2973
    %3039 = vmatpush2.msra.mxu0 %v2972
    %3040 = vmatprep.subr.mxu0 %v2971
    %3041 = vmatpush2.msra.mxu0 %v2970
    %3042 = vmatprep.subr.mxu0 %v2969
    %3043 = vmatpush2.msra.mxu0 %v2968
    %3044 = vmatprep.subr.mxu0 %v2967
    %3045 = vmatpush2.msra.mxu0 %v2966
    %3046 = vmatprep.subr.mxu0 %v2965
    %3047 = vmatpush2.msra.mxu0 %v2964
    %3048 = vmatprep.subr.mxu0 %v2963
    %3049 = vmatpush2.msra.mxu0 %v2962
    %3050 = vmatprep.subr.mxu0 %v2961
    %3051 = vmatpush2.msra.mxu0 %v2960
    %3052 = vmatprep.subr.mxu0 %v2959
    %3053 = vmatpush2.msra.mxu0 %v2958
    %3054 = vmatprep.mubr.f32.mxu0 %v2914
    %3055 = vmatmul.mubr.f32.gmra.mxu0 %v2911
    %v3056 = vpop.f32.mrf.mxu0
    %v3057 = vadd.f32 0.0, %v3056
    %v3058 = vpop.f32.mrf.mxu0
    %v3059 = vadd.f32 0.0, %v3058
    %3060 = vmatprep.mubr.f32.mxu0 %v2920
    %3061 = vmatmul.mubr.f32.gmra.mxu0 %v2917
    %v3062 = vpop.f32.mrf.mxu0
    %v3063 = vadd.f32 0.0, %v3062
    %v3064 = vpop.f32.mrf.mxu0
    %v3065 = vadd.f32 0.0, %v3064
    %3066 = vdwg.mxu0
    %3067 = vmatprep.subr.mxu0 %v2860
    %3068 = vmatpush1.msra.mxu0 %v2859
    %3069 = vmatprep.subr.mxu0 %v2858
    %3070 = vmatpush1.msra.mxu0 %v2857
    %3071 = vmatprep.subr.mxu0 %v2856
    %3072 = vmatpush1.msra.mxu0 %v2855
    %3073 = vmatprep.subr.mxu0 %v2854
    %3074 = vmatpush1.msra.mxu0 %v2853
    %3075 = vmatprep.subr.mxu0 %v2852
    %3076 = vmatpush1.msra.mxu0 %v2851
    %3077 = vmatprep.subr.mxu0 %v2850
    %3078 = vmatpush1.msra.mxu0 %v2849
    %3079 = vmatprep.subr.mxu0 %v2848
    %3080 = vmatpush1.msra.mxu0 %v2847
    %3081 = vmatprep.subr.mxu0 %v2846
    %3082 = vmatpush1.msra.mxu0 %v2845
    %3083 = vmatprep.subr.mxu0 %v2844
    %3084 = vmatpush1.msra.mxu0 %v2843
    %3085 = vmatprep.subr.mxu0 %v2842
    %3086 = vmatpush1.msra.mxu0 %v2841
    %3087 = vmatprep.subr.mxu0 %v2840
    %3088 = vmatpush1.msra.mxu0 %v2839
    %3089 = vmatprep.subr.mxu0 %v2838
    %3090 = vmatpush1.msra.mxu0 %v2837
    %3091 = vmatprep.subr.mxu0 %v2836
    %3092 = vmatpush1.msra.mxu0 %v2835
    %3093 = vmatprep.subr.mxu0 %v2834
    %3094 = vmatpush1.msra.mxu0 %v2833
    %3095 = vmatprep.subr.mxu0 %v2832
    %3096 = vmatpush1.msra.mxu0 %v2831
    %3097 = vmatprep.subr.mxu0 %v2830
    %3098 = vmatpush1.msra.mxu0 %v2829
    %3099 = vmatprep.subr.mxu0 %v2892
    %3100 = vmatpush2.msra.mxu0 %v2891
    %3101 = vmatprep.subr.mxu0 %v2890
    %3102 = vmatpush2.msra.mxu0 %v2889
    %3103 = vmatprep.subr.mxu0 %v2888
    %3104 = vmatpush2.msra.mxu0 %v2887
    %3105 = vmatprep.subr.mxu0 %v2886
    %3106 = vmatpush2.msra.mxu0 %v2885
    %3107 = vmatprep.subr.mxu0 %v2884
    %3108 = vmatpush2.msra.mxu0 %v2883
    %3109 = vmatprep.subr.mxu0 %v2882
    %3110 = vmatpush2.msra.mxu0 %v2881
    %3111 = vmatprep.subr.mxu0 %v2880
    %3112 = vmatpush2.msra.mxu0 %v2879
    %3113 = vmatprep.subr.mxu0 %v2878
    %3114 = vmatpush2.msra.mxu0 %v2877
    %3115 = vmatprep.subr.mxu0 %v2876
    %3116 = vmatpush2.msra.mxu0 %v2875
    %3117 = vmatprep.subr.mxu0 %v2874
    %3118 = vmatpush2.msra.mxu0 %v2873
    %3119 = vmatprep.subr.mxu0 %v2872
    %3120 = vmatpush2.msra.mxu0 %v2871
    %3121 = vmatprep.subr.mxu0 %v2870
    %3122 = vmatpush2.msra.mxu0 %v2869
    %3123 = vmatprep.subr.mxu0 %v2868
    %3124 = vmatpush2.msra.mxu0 %v2867
    %3125 = vmatprep.subr.mxu0 %v2866
    %3126 = vmatpush2.msra.mxu0 %v2865
    %3127 = vmatprep.subr.mxu0 %v2864
    %3128 = vmatpush2.msra.mxu0 %v2863
    %3129 = vmatprep.subr.mxu0 %v2862
    %3130 = vmatpush2.msra.mxu0 %v2861
    %3131 = vmatprep.mubr.f32.mxu0 %v2825
    %3132 = vmatmul.mubr.f32.gmra.mxu0 %v2824
    %v3133 = vpop.f32.mrf.mxu0
    %v3134 = vadd.f32 %v3057, %v3133
    %v3135 = vpop.f32.mrf.mxu0
    %v3136 = vadd.f32 %v3059, %v3135
    %3137 = vmatprep.mubr.f32.mxu0 %v2827
    %3138 = vmatmul.mubr.f32.gmra.mxu0 %v2826
    %v3139 = vpop.f32.mrf.mxu0
    %v3140 = vadd.f32 %v3063, %v3139
    %v3141 = vpop.f32.mrf.mxu0
    %v3142 = vadd.f32 %v3065, %v3141
    %3143 = vdwg.mxu0
    %v3144 = vld [vmem:[#allocation3] sm:$0xfc]
    %v3145 = vld [vmem:[#allocation3 + $0x8] sm:$0xfc]
    %v3146 = vld [vmem:[#allocation3 + $0x10] sm:$0x3]
    %v3147 = vld [vmem:[#allocation3 + $0x18] sm:$0x3]
    %v3148 = vld [vmem:[#allocation3 + $0x20] sm:$0xfc]
    %v3149 = vld [vmem:[#allocation3 + $0x28] sm:$0xfc]
    %v3150 = vld [vmem:[#allocation3 + $0x30] sm:$0x3]
    %v3151 = vld [vmem:[#allocation3 + $0x38] sm:$0x3]
    %v3160 = vrot.slane %v3144, 2
    %v3161 = vrot.slane %v3146, 2
    %v3162 = vsel %vm1493, %v3160, %v3161
    %v3163 = vrot.slane %v3145, 2
    %v3164 = vrot.slane %v3147, 2
    %v3165 = vsel %vm1493, %v3163, %v3164
    %v3166 = vrot.slane %v3148, 2
    %v3167 = vrot.slane %v3150, 2
    %v3168 = vsel %vm1493, %v3166, %v3167
    %v3169 = vrot.slane %v3149, 2
    %v3170 = vrot.slane %v3151, 2
    %v3171 = vsel %vm1493, %v3169, %v3170
    %s3176 = scalar_lea.vmem [#allocation9], 4096
    %v3177 = vld [vmem:[%s3176] sm:$0xff]
    %v3178 = vld [vmem:[%s3176 + $0x8] sm:$0xff]
    %v3179 = vld [vmem:[%s3176 + $0x10] sm:$0xff]
    %v3180 = vld [vmem:[%s3176 + $0x18] sm:$0xff]
    %v3181 = vld [vmem:[%s3176 + $0x20] sm:$0xff]
    %v3182 = vld [vmem:[%s3176 + $0x28] sm:$0xff]
    %v3183 = vld [vmem:[%s3176 + $0x30] sm:$0xff]
    %v3184 = vld [vmem:[%s3176 + $0x38] sm:$0xff]
    %v3185 = vld [vmem:[%s3176 + $0x40] sm:$0xff]
    %v3186 = vld [vmem:[%s3176 + $0x48] sm:$0xff]
    %v3187 = vld [vmem:[%s3176 + $0x50] sm:$0xff]
    %v3188 = vld [vmem:[%s3176 + $0x58] sm:$0xff]
    %v3189 = vld [vmem:[%s3176 + $0x60] sm:$0xff]
    %v3190 = vld [vmem:[%s3176 + $0x68] sm:$0xff]
    %v3191 = vld [vmem:[%s3176 + $0x70] sm:$0xff]
    %v3192 = vld [vmem:[%s3176 + $0x78] sm:$0xff]
    %v3193 = vld [vmem:[%s3176 + $0x80] sm:$0xff]
    %v3194 = vld [vmem:[%s3176 + $0x88] sm:$0xff]
    %v3195 = vld [vmem:[%s3176 + $0x90] sm:$0xff]
    %v3196 = vld [vmem:[%s3176 + $0x98] sm:$0xff]
    %v3197 = vld [vmem:[%s3176 + $0xa0] sm:$0xff]
    %v3198 = vld [vmem:[%s3176 + $0xa8] sm:$0xff]
    %v3199 = vld [vmem:[%s3176 + $0xb0] sm:$0xff]
    %v3200 = vld [vmem:[%s3176 + $0xb8] sm:$0xff]
    %v3201 = vld [vmem:[%s3176 + $0xc0] sm:$0xff]
    %v3202 = vld [vmem:[%s3176 + $0xc8] sm:$0xff]
    %v3203 = vld [vmem:[%s3176 + $0xd0] sm:$0xff]
    %v3204 = vld [vmem:[%s3176 + $0xd8] sm:$0xff]
    %v3205 = vld [vmem:[%s3176 + $0xe0] sm:$0xff]
    %v3206 = vld [vmem:[%s3176 + $0xe8] sm:$0xff]
    %v3207 = vld [vmem:[%s3176 + $0xf0] sm:$0xff]
    %v3208 = vld [vmem:[%s3176 + $0xf8] sm:$0xff]
    %v3209 = vld [vmem:[%s3176 + $0x100] sm:$0xff]
    %v3210 = vld [vmem:[%s3176 + $0x108] sm:$0xff]
    %v3211 = vld [vmem:[%s3176 + $0x110] sm:$0xff]
    %v3212 = vld [vmem:[%s3176 + $0x118] sm:$0xff]
    %v3213 = vld [vmem:[%s3176 + $0x120] sm:$0xff]
    %v3214 = vld [vmem:[%s3176 + $0x128] sm:$0xff]
    %v3215 = vld [vmem:[%s3176 + $0x130] sm:$0xff]
    %v3216 = vld [vmem:[%s3176 + $0x138] sm:$0xff]
    %v3217 = vld [vmem:[%s3176 + $0x140] sm:$0xff]
    %v3218 = vld [vmem:[%s3176 + $0x148] sm:$0xff]
    %v3219 = vld [vmem:[%s3176 + $0x150] sm:$0xff]
    %v3220 = vld [vmem:[%s3176 + $0x158] sm:$0xff]
    %v3221 = vld [vmem:[%s3176 + $0x160] sm:$0xff]
    %v3222 = vld [vmem:[%s3176 + $0x168] sm:$0xff]
    %v3223 = vld [vmem:[%s3176 + $0x170] sm:$0xff]
    %v3224 = vld [vmem:[%s3176 + $0x178] sm:$0xff]
    %v3225 = vld [vmem:[%s3176 + $0x180] sm:$0xff]
    %v3226 = vld [vmem:[%s3176 + $0x188] sm:$0xff]
    %v3227 = vld [vmem:[%s3176 + $0x190] sm:$0xff]
    %v3228 = vld [vmem:[%s3176 + $0x198] sm:$0xff]
    %v3229 = vld [vmem:[%s3176 + $0x1a0] sm:$0xff]
    %v3230 = vld [vmem:[%s3176 + $0x1a8] sm:$0xff]
    %v3231 = vld [vmem:[%s3176 + $0x1b0] sm:$0xff]
    %v3232 = vld [vmem:[%s3176 + $0x1b8] sm:$0xff]
    %v3233 = vld [vmem:[%s3176 + $0x1c0] sm:$0xff]
    %v3234 = vld [vmem:[%s3176 + $0x1c8] sm:$0xff]
    %v3235 = vld [vmem:[%s3176 + $0x1d0] sm:$0xff]
    %v3236 = vld [vmem:[%s3176 + $0x1d8] sm:$0xff]
    %v3237 = vld [vmem:[%s3176 + $0x1e0] sm:$0xff]
    %v3238 = vld [vmem:[%s3176 + $0x1e8] sm:$0xff]
    %v3239 = vld [vmem:[%s3176 + $0x1f0] sm:$0xff]
    %v3240 = vld [vmem:[%s3176 + $0x1f8] sm:$0xff]
    %3241 = vmatprep.subr.mxu0 %v3208
    %3242 = vmatpush1.msra.mxu0 %v3207
    %3243 = vmatprep.subr.mxu0 %v3206
    %3244 = vmatpush1.msra.mxu0 %v3205
    %3245 = vmatprep.subr.mxu0 %v3204
    %3246 = vmatpush1.msra.mxu0 %v3203
    %3247 = vmatprep.subr.mxu0 %v3202
    %3248 = vmatpush1.msra.mxu0 %v3201
    %3249 = vmatprep.subr.mxu0 %v3200
    %3250 = vmatpush1.msra.mxu0 %v3199
    %3251 = vmatprep.subr.mxu0 %v3198
    %3252 = vmatpush1.msra.mxu0 %v3197
    %3253 = vmatprep.subr.mxu0 %v3196
    %3254 = vmatpush1.msra.mxu0 %v3195
    %3255 = vmatprep.subr.mxu0 %v3194
    %3256 = vmatpush1.msra.mxu0 %v3193
    %3257 = vmatprep.subr.mxu0 %v3192
    %3258 = vmatpush1.msra.mxu0 %v3191
    %3259 = vmatprep.subr.mxu0 %v3190
    %3260 = vmatpush1.msra.mxu0 %v3189
    %3261 = vmatprep.subr.mxu0 %v3188
    %3262 = vmatpush1.msra.mxu0 %v3187
    %3263 = vmatprep.subr.mxu0 %v3186
    %3264 = vmatpush1.msra.mxu0 %v3185
    %3265 = vmatprep.subr.mxu0 %v3184
    %3266 = vmatpush1.msra.mxu0 %v3183
    %3267 = vmatprep.subr.mxu0 %v3182
    %3268 = vmatpush1.msra.mxu0 %v3181
    %3269 = vmatprep.subr.mxu0 %v3180
    %3270 = vmatpush1.msra.mxu0 %v3179
    %3271 = vmatprep.subr.mxu0 %v3178
    %3272 = vmatpush1.msra.mxu0 %v3177
    %3273 = vmatprep.subr.mxu0 %v3240
    %3274 = vmatpush2.msra.mxu0 %v3239
    %3275 = vmatprep.subr.mxu0 %v3238
    %3276 = vmatpush2.msra.mxu0 %v3237
    %3277 = vmatprep.subr.mxu0 %v3236
    %3278 = vmatpush2.msra.mxu0 %v3235
    %3279 = vmatprep.subr.mxu0 %v3234
    %3280 = vmatpush2.msra.mxu0 %v3233
    %3281 = vmatprep.subr.mxu0 %v3232
    %3282 = vmatpush2.msra.mxu0 %v3231
    %3283 = vmatprep.subr.mxu0 %v3230
    %3284 = vmatpush2.msra.mxu0 %v3229
    %3285 = vmatprep.subr.mxu0 %v3228
    %3286 = vmatpush2.msra.mxu0 %v3227
    %3287 = vmatprep.subr.mxu0 %v3226
    %3288 = vmatpush2.msra.mxu0 %v3225
    %3289 = vmatprep.subr.mxu0 %v3224
    %3290 = vmatpush2.msra.mxu0 %v3223
    %3291 = vmatprep.subr.mxu0 %v3222
    %3292 = vmatpush2.msra.mxu0 %v3221
    %3293 = vmatprep.subr.mxu0 %v3220
    %3294 = vmatpush2.msra.mxu0 %v3219
    %3295 = vmatprep.subr.mxu0 %v3218
    %3296 = vmatpush2.msra.mxu0 %v3217
    %3297 = vmatprep.subr.mxu0 %v3216
    %3298 = vmatpush2.msra.mxu0 %v3215
    %3299 = vmatprep.subr.mxu0 %v3214
    %3300 = vmatpush2.msra.mxu0 %v3213
    %3301 = vmatprep.subr.mxu0 %v3212
    %3302 = vmatpush2.msra.mxu0 %v3211
    %3303 = vmatprep.subr.mxu0 %v3210
    %3304 = vmatpush2.msra.mxu0 %v3209
    %3305 = vmatprep.mubr.f32.mxu0 %v3165
    %3306 = vmatmul.mubr.f32.gmra.mxu0 %v3162
    %v3307 = vpop.f32.mrf.mxu0
    %v3308 = vadd.f32 0.0, %v3307
    %v3309 = vpop.f32.mrf.mxu0
    %v3310 = vadd.f32 0.0, %v3309
    %3311 = vmatprep.mubr.f32.mxu0 %v3171
    %3312 = vmatmul.mubr.f32.gmra.mxu0 %v3168
    %v3313 = vpop.f32.mrf.mxu0
    %v3314 = vadd.f32 0.0, %v3313
    %v3315 = vpop.f32.mrf.mxu0
    %v3316 = vadd.f32 0.0, %v3315
    %3317 = vdwg.mxu0
    %v3318 = vadd.f32 %v3134, %v3308
    %v3319 = vadd.f32 %v3136, %v3310
    %v3320 = vadd.f32 %v3140, %v3314
    %v3321 = vadd.f32 %v3142, %v3316
    %v3322 = vadd.f32 %v3318, %v3320
    %v3323 = vrot.slane %v3322, 4
    %v3324 = vadd.f32 %v3322, %v3323
    %v3325 = vrot.slane %v3324, 2
    %v3326 = vadd.f32 %v3324, %v3325
    %v3327 = vrot.slane %v3326, 1
    %v3328 = vadd.f32 %v3326, %v3327
    %v3329 = vadd.f32 %v3319, %v3321
    %v3330 = vrot.slane %v3329, 4
    %v3331 = vadd.f32 %v3329, %v3330
    %v3332 = vrot.slane %v3331, 2
    %v3333 = vadd.f32 %v3331, %v3332
    %v3334 = vrot.slane %v3333, 1
    %v3335 = vadd.f32 %v3333, %v3334
    %v3336 = vmul.f32 %v3318, %v3318
    %v3337 = vmul.f32 %v3319, %v3319
    %v3338 = vmul.f32 %v3320, %v3320
    %v3339 = vmul.f32 %v3321, %v3321
    %v3340 = vadd.f32 %v3336, %v3338
    %v3341 = vrot.slane %v3340, 4
    %v3342 = vadd.f32 %v3340, %v3341
    %v3343 = vrot.slane %v3342, 2
    %v3344 = vadd.f32 %v3342, %v3343
    %v3345 = vrot.slane %v3344, 1
    %v3346 = vadd.f32 %v3344, %v3345
    %v3347 = vadd.f32 %v3337, %v3339
    %v3348 = vrot.slane %v3347, 4
    %v3349 = vadd.f32 %v3347, %v3348
    %v3350 = vrot.slane %v3349, 2
    %v3351 = vadd.f32 %v3349, %v3350
    %v3352 = vrot.slane %v3351, 1
    %v3353 = vadd.f32 %v3351, %v3352
    %v3354 = vld [vmem:[#allocation14] sm:$0xff]
    %v3355 = vld [vmem:[#allocation14 + $0x8] sm:$0xff]
    %v3356 = vld [vmem:[#allocation14 + $0x10] sm:$0xff]
    %v3357 = vld [vmem:[#allocation14 + $0x18] sm:$0xff]
    %v3358 = vld [vmem:[#allocation14 + $0x20] sm:$0xff]
    %v3359 = vld [vmem:[#allocation14 + $0x28] sm:$0xff]
    %v3360 = vld [vmem:[#allocation14 + $0x30] sm:$0xff]
    %v3361 = vld [vmem:[#allocation14 + $0x38] sm:$0xff]
    %v3362 = vld [vmem:[#allocation14 + $0x40] sm:$0xff]
    %v3363 = vld [vmem:[#allocation14 + $0x48] sm:$0xff]
    %v3364 = vld [vmem:[#allocation14 + $0x50] sm:$0xff]
    %v3365 = vld [vmem:[#allocation14 + $0x58] sm:$0xff]
    %v3366 = vld [vmem:[#allocation14 + $0x60] sm:$0xff]
    %v3367 = vld [vmem:[#allocation14 + $0x68] sm:$0xff]
    %v3368 = vld [vmem:[#allocation14 + $0x70] sm:$0xff]
    %v3369 = vld [vmem:[#allocation14 + $0x78] sm:$0xff]
    %v3370 = vld [vmem:[#allocation14 + $0x80] sm:$0xff]
    %v3371 = vld [vmem:[#allocation14 + $0x88] sm:$0xff]
    %v3372 = vld [vmem:[#allocation14 + $0x90] sm:$0xff]
    %v3373 = vld [vmem:[#allocation14 + $0x98] sm:$0xff]
    %v3374 = vld [vmem:[#allocation14 + $0xa0] sm:$0xff]
    %v3375 = vld [vmem:[#allocation14 + $0xa8] sm:$0xff]
    %v3376 = vld [vmem:[#allocation14 + $0xb0] sm:$0xff]
    %v3377 = vld [vmem:[#allocation14 + $0xb8] sm:$0xff]
    %v3378 = vld [vmem:[#allocation14 + $0xc0] sm:$0xff]
    %v3379 = vld [vmem:[#allocation14 + $0xc8] sm:$0xff]
    %v3380 = vld [vmem:[#allocation14 + $0xd0] sm:$0xff]
    %v3381 = vld [vmem:[#allocation14 + $0xd8] sm:$0xff]
    %v3382 = vld [vmem:[#allocation14 + $0xe0] sm:$0xff]
    %v3383 = vld [vmem:[#allocation14 + $0xe8] sm:$0xff]
    %v3384 = vld [vmem:[#allocation14 + $0xf0] sm:$0xff]
    %v3385 = vld [vmem:[#allocation14 + $0xf8] sm:$0xff]
    %v3386 = vld [vmem:[#allocation14 + $0x100] sm:$0xff]
    %v3387 = vld [vmem:[#allocation14 + $0x108] sm:$0xff]
    %v3388 = vld [vmem:[#allocation14 + $0x110] sm:$0xff]
    %v3389 = vld [vmem:[#allocation14 + $0x118] sm:$0xff]
    %v3390 = vld [vmem:[#allocation14 + $0x120] sm:$0xff]
    %v3391 = vld [vmem:[#allocation14 + $0x128] sm:$0xff]
    %v3392 = vld [vmem:[#allocation14 + $0x130] sm:$0xff]
    %v3393 = vld [vmem:[#allocation14 + $0x138] sm:$0xff]
    %v3394 = vld [vmem:[#allocation14 + $0x140] sm:$0xff]
    %v3395 = vld [vmem:[#allocation14 + $0x148] sm:$0xff]
    %v3396 = vld [vmem:[#allocation14 + $0x150] sm:$0xff]
    %v3397 = vld [vmem:[#allocation14 + $0x158] sm:$0xff]
    %v3398 = vld [vmem:[#allocation14 + $0x160] sm:$0xff]
    %v3399 = vld [vmem:[#allocation14 + $0x168] sm:$0xff]
    %v3400 = vld [vmem:[#allocation14 + $0x170] sm:$0xff]
    %v3401 = vld [vmem:[#allocation14 + $0x178] sm:$0xff]
    %v3402 = vld [vmem:[#allocation14 + $0x180] sm:$0xff]
    %v3403 = vld [vmem:[#allocation14 + $0x188] sm:$0xff]
    %v3404 = vld [vmem:[#allocation14 + $0x190] sm:$0xff]
    %v3405 = vld [vmem:[#allocation14 + $0x198] sm:$0xff]
    %v3406 = vld [vmem:[#allocation14 + $0x1a0] sm:$0xff]
    %v3407 = vld [vmem:[#allocation14 + $0x1a8] sm:$0xff]
    %v3408 = vld [vmem:[#allocation14 + $0x1b0] sm:$0xff]
    %v3409 = vld [vmem:[#allocation14 + $0x1b8] sm:$0xff]
    %v3410 = vld [vmem:[#allocation14 + $0x1c0] sm:$0xff]
    %v3411 = vld [vmem:[#allocation14 + $0x1c8] sm:$0xff]
    %v3412 = vld [vmem:[#allocation14 + $0x1d0] sm:$0xff]
    %v3413 = vld [vmem:[#allocation14 + $0x1d8] sm:$0xff]
    %v3414 = vld [vmem:[#allocation14 + $0x1e0] sm:$0xff]
    %v3415 = vld [vmem:[#allocation14 + $0x1e8] sm:$0xff]
    %v3416 = vld [vmem:[#allocation14 + $0x1f0] sm:$0xff]
    %v3417 = vld [vmem:[#allocation14 + $0x1f8] sm:$0xff]
    %3418 = vmatprep.subr.mxu0 %v3385
    %3419 = vmatpush1.msra.mxu0 %v3384
    %3420 = vmatprep.subr.mxu0 %v3383
    %3421 = vmatpush1.msra.mxu0 %v3382
    %3422 = vmatprep.subr.mxu0 %v3381
    %3423 = vmatpush1.msra.mxu0 %v3380
    %3424 = vmatprep.subr.mxu0 %v3379
    %3425 = vmatpush1.msra.mxu0 %v3378
    %3426 = vmatprep.subr.mxu0 %v3377
    %3427 = vmatpush1.msra.mxu0 %v3376
    %3428 = vmatprep.subr.mxu0 %v3375
    %3429 = vmatpush1.msra.mxu0 %v3374
    %3430 = vmatprep.subr.mxu0 %v3373
    %3431 = vmatpush1.msra.mxu0 %v3372
    %3432 = vmatprep.subr.mxu0 %v3371
    %3433 = vmatpush1.msra.mxu0 %v3370
    %3434 = vmatprep.subr.mxu0 %v3369
    %3435 = vmatpush1.msra.mxu0 %v3368
    %3436 = vmatprep.subr.mxu0 %v3367
    %3437 = vmatpush1.msra.mxu0 %v3366
    %3438 = vmatprep.subr.mxu0 %v3365
    %3439 = vmatpush1.msra.mxu0 %v3364
    %3440 = vmatprep.subr.mxu0 %v3363
    %3441 = vmatpush1.msra.mxu0 %v3362
    %3442 = vmatprep.subr.mxu0 %v3361
    %3443 = vmatpush1.msra.mxu0 %v3360
    %3444 = vmatprep.subr.mxu0 %v3359
    %3445 = vmatpush1.msra.mxu0 %v3358
    %3446 = vmatprep.subr.mxu0 %v3357
    %3447 = vmatpush1.msra.mxu0 %v3356
    %3448 = vmatprep.subr.mxu0 %v3355
    %3449 = vmatpush1.msra.mxu0 %v3354
    %3450 = vmatprep.subr.mxu0 %v3417
    %3451 = vmatpush2.msra.mxu0 %v3416
    %3452 = vmatprep.subr.mxu0 %v3415
    %3453 = vmatpush2.msra.mxu0 %v3414
    %3454 = vmatprep.subr.mxu0 %v3413
    %3455 = vmatpush2.msra.mxu0 %v3412
    %3456 = vmatprep.subr.mxu0 %v3411
    %3457 = vmatpush2.msra.mxu0 %v3410
    %3458 = vmatprep.subr.mxu0 %v3409
    %3459 = vmatpush2.msra.mxu0 %v3408
    %3460 = vmatprep.subr.mxu0 %v3407
    %3461 = vmatpush2.msra.mxu0 %v3406
    %3462 = vmatprep.subr.mxu0 %v3405
    %3463 = vmatpush2.msra.mxu0 %v3404
    %3464 = vmatprep.subr.mxu0 %v3403
    %3465 = vmatpush2.msra.mxu0 %v3402
    %3466 = vmatprep.subr.mxu0 %v3401
    %3467 = vmatpush2.msra.mxu0 %v3400
    %3468 = vmatprep.subr.mxu0 %v3399
    %3469 = vmatpush2.msra.mxu0 %v3398
    %3470 = vmatprep.subr.mxu0 %v3397
    %3471 = vmatpush2.msra.mxu0 %v3396
    %3472 = vmatprep.subr.mxu0 %v3395
    %3473 = vmatpush2.msra.mxu0 %v3394
    %3474 = vmatprep.subr.mxu0 %v3393
    %3475 = vmatpush2.msra.mxu0 %v3392
    %3476 = vmatprep.subr.mxu0 %v3391
    %3477 = vmatpush2.msra.mxu0 %v3390
    %3478 = vmatprep.subr.mxu0 %v3389
    %3479 = vmatpush2.msra.mxu0 %v3388
    %3480 = vmatprep.subr.mxu0 %v3387
    %3481 = vmatpush2.msra.mxu0 %v3386
    %3482 = vmatprep.mubr.f32.mxu0 %v3335
    %3483 = vmatmul.mubr.f32.gmra.mxu0 %v3328
    %v3484 = vpop.f32.mrf.mxu0
    %v3485 = vadd.f32 0.0, %v3484
    %v3486 = vpop.f32.mrf.mxu0
    %v3487 = vadd.f32 0.0, %v3486
    %3488 = vdwg.mxu0
    %3489 = vmatprep.subr.mxu0 %v3385
    %3490 = vmatpush1.msra.mxu0 %v3384
    %3491 = vmatprep.subr.mxu0 %v3383
    %3492 = vmatpush1.msra.mxu0 %v3382
    %3493 = vmatprep.subr.mxu0 %v3381
    %3494 = vmatpush1.msra.mxu0 %v3380
    %3495 = vmatprep.subr.mxu0 %v3379
    %3496 = vmatpush1.msra.mxu0 %v3378
    %3497 = vmatprep.subr.mxu0 %v3377
    %3498 = vmatpush1.msra.mxu0 %v3376
    %3499 = vmatprep.subr.mxu0 %v3375
    %3500 = vmatpush1.msra.mxu0 %v3374
    %3501 = vmatprep.subr.mxu0 %v3373
    %3502 = vmatpush1.msra.mxu0 %v3372
    %3503 = vmatprep.subr.mxu0 %v3371
    %3504 = vmatpush1.msra.mxu0 %v3370
    %3505 = vmatprep.subr.mxu0 %v3369
    %3506 = vmatpush1.msra.mxu0 %v3368
    %3507 = vmatprep.subr.mxu0 %v3367
    %3508 = vmatpush1.msra.mxu0 %v3366
    %3509 = vmatprep.subr.mxu0 %v3365
    %3510 = vmatpush1.msra.mxu0 %v3364
    %3511 = vmatprep.subr.mxu0 %v3363
    %3512 = vmatpush1.msra.mxu0 %v3362
    %3513 = vmatprep.subr.mxu0 %v3361
    %3514 = vmatpush1.msra.mxu0 %v3360
    %3515 = vmatprep.subr.mxu0 %v3359
    %3516 = vmatpush1.msra.mxu0 %v3358
    %3517 = vmatprep.subr.mxu0 %v3357
    %3518 = vmatpush1.msra.mxu0 %v3356
    %3519 = vmatprep.subr.mxu0 %v3355
    %3520 = vmatpush1.msra.mxu0 %v3354
    %3521 = vmatprep.subr.mxu0 %v3417
    %3522 = vmatpush2.msra.mxu0 %v3416
    %3523 = vmatprep.subr.mxu0 %v3415
    %3524 = vmatpush2.msra.mxu0 %v3414
    %3525 = vmatprep.subr.mxu0 %v3413
    %3526 = vmatpush2.msra.mxu0 %v3412
    %3527 = vmatprep.subr.mxu0 %v3411
    %3528 = vmatpush2.msra.mxu0 %v3410
    %3529 = vmatprep.subr.mxu0 %v3409
    %3530 = vmatpush2.msra.mxu0 %v3408
    %3531 = vmatprep.subr.mxu0 %v3407
    %3532 = vmatpush2.msra.mxu0 %v3406
    %3533 = vmatprep.subr.mxu0 %v3405
    %3534 = vmatpush2.msra.mxu0 %v3404
    %3535 = vmatprep.subr.mxu0 %v3403
    %3536 = vmatpush2.msra.mxu0 %v3402
    %3537 = vmatprep.subr.mxu0 %v3401
    %3538 = vmatpush2.msra.mxu0 %v3400
    %3539 = vmatprep.subr.mxu0 %v3399
    %3540 = vmatpush2.msra.mxu0 %v3398
    %3541 = vmatprep.subr.mxu0 %v3397
    %3542 = vmatpush2.msra.mxu0 %v3396
    %3543 = vmatprep.subr.mxu0 %v3395
    %3544 = vmatpush2.msra.mxu0 %v3394
    %3545 = vmatprep.subr.mxu0 %v3393
    %3546 = vmatpush2.msra.mxu0 %v3392
    %3547 = vmatprep.subr.mxu0 %v3391
    %3548 = vmatpush2.msra.mxu0 %v3390
    %3549 = vmatprep.subr.mxu0 %v3389
    %3550 = vmatpush2.msra.mxu0 %v3388
    %3551 = vmatprep.subr.mxu0 %v3387
    %3552 = vmatpush2.msra.mxu0 %v3386
    %3553 = vmatprep.mubr.f32.mxu0 %v3353
    %3554 = vmatmul.mubr.f32.gmra.mxu0 %v3346
    %v3555 = vpop.f32.mrf.mxu0
    %v3556 = vadd.f32 0.0, %v3555
    %v3557 = vpop.f32.mrf.mxu0
    %v3558 = vadd.f32 0.0, %v3557
    %3559 = vdwg.mxu0
    %v3560 = vmul.f32 %v3485, %v3485
    %v3561 = vmul.f32 %v3487, %v3487
    %v3562 = vsub.f32 %v3556, %v3560
    %v3563 = vsub.f32 %v3558, %v3561
    %v3564 = vlaneseq
    %v3565 = vshrl.u32 %v3564, 7
    %v3566 = vsub.s32 0, %v3565
    %v3567 = vrot.slane %v3485, %v3566
    %v3568 = vlaneseq
    %v3569 = vshrl.u32 %v3568, 7
    %v3570 = vsub.s32 0, %v3569
    %v3571 = vrot.slane %v3487, %v3570
    %v3572 = vsub.f32 %v3318, %v3567
    %v3573 = vsub.f32 %v3319, %v3571
    %v3574 = vsub.f32 %v3320, %v3567
    %v3575 = vsub.f32 %v3321, %v3571
    %v3576 = vadd.f32 %v3562, 1e-05
    %v3577 = vadd.f32 %v3563, 1e-05
    %v3578 = vrsqrt.pop %v3576
    %v3579 = vrsqrt.pop %v3577
    %v3580 = vlaneseq
    %v3581 = vshrl.u32 %v3580, 7
    %v3582 = vsub.s32 0, %v3581
    %v3583 = vrot.slane %v3578, %v3582
    %v3584 = vlaneseq
    %v3585 = vshrl.u32 %v3584, 7
    %v3586 = vsub.s32 0, %v3585
    %v3587 = vrot.slane %v3579, %v3586
    %v3588 = vmul.f32 %v3572, %v3583
    %v3589 = vmul.f32 %v3573, %v3587
    %v3590 = vmul.f32 %v3574, %v3583
    %v3591 = vmul.f32 %v3575, %v3587
    %s3592 = scalar_lea.vmem [#allocation11], 3
    %v3593 = vld [vmem:[%s3592] ss:$8 sm:$0x3]
    %v3595 = vlaneseq
    %v3596 = vshrl.u32 %v3595, 7
    %v3597 = vsub.s32 0, %v3596
    %v3598 = vrot.slane %v3593, %v3597
    %v3599 = vlaneseq
    %v3600 = vshrl.u32 %v3599, 7
    %v3601 = vsub.s32 1, %v3600
    %v3602 = vrot.slane %v3593, %v3601
    %v3605 = vmul.f32 %v3588, %v3598
    %v3606 = vmul.f32 %v3589, %v3602
    %v3607 = vmul.f32 %v3590, %v3598
    %v3608 = vmul.f32 %v3591, %v3602
    %s3609 = scalar_lea.vmem [#allocation12], 3
    %v3610 = vld [vmem:[%s3609] ss:$8 sm:$0x3]
    %v3612 = vlaneseq
    %v3613 = vshrl.u32 %v3612, 7
    %v3614 = vsub.s32 0, %v3613
    %v3615 = vrot.slane %v3610, %v3614
    %v3616 = vlaneseq
    %v3617 = vshrl.u32 %v3616, 7
    %v3618 = vsub.s32 1, %v3617
    %v3619 = vrot.slane %v3610, %v3618
    %v3622 = vadd.f32 %v3605, %v3615
    %v3623 = vadd.f32 %v3606, %v3619
    %v3624 = vadd.f32 %v3607, %v3615
    %v3625 = vadd.f32 %v3608, %v3619
    %s3626 = sld [smem:[#allocation33 + $0x3]]
    %vm3627 = vcmp.ge.f32.partialorder %v3622, 0.0
    %vm3628 = vcmp.ge.f32.partialorder %v3623, 0.0
    %vm3629 = vcmp.ge.f32.partialorder %v3624, 0.0
    %vm3630 = vcmp.ge.f32.partialorder %v3625, 0.0
    %v3631 = vstv %s3626
    %v3632 = vmul.f32 %v3631, %v3622
    %v3633 = vmul.f32 %v3631, %v3623
    %v3634 = vmul.f32 %v3631, %v3624
    %v3635 = vmul.f32 %v3631, %v3625
    %v3636 = vsel %vm3627, %v3622, %v3632
    %v3637 = vsel %vm3628, %v3623, %v3633
    %v3638 = vsel %vm3629, %v3624, %v3634
    %v3639 = vsel %vm3630, %v3625, %v3635
    %v3644 = vrot.slane %v3636, 7
    %v3645 = vrot.slane %v3637, 7
    %v3646 = vrot.slane %v3638, 7
    %v3647 = vrot.slane %v3639, 7
    %3652 = vst [vmem:[#allocation3] sm:$0xfe] %v3644
    %3653 = vst [vmem:[#allocation3 + $0x8] sm:$0xfe] %v3645
    %3654 = vst [vmem:[#allocation3 + $0x10] sm:$0x1] %v3644
    %3655 = vst [vmem:[#allocation3 + $0x18] sm:$0x1] %v3645
    %3656 = vst [vmem:[#allocation3 + $0x20] sm:$0xfe] %v3646
    %3657 = vst [vmem:[#allocation3 + $0x28] sm:$0xfe] %v3647
    %3658 = vst [vmem:[#allocation3 + $0x30] sm:$0x1] %v3646
    %3659 = vst [vmem:[#allocation3 + $0x38] sm:$0x1] %v3647
    %v3660 = vld [vmem:[#allocation3] sm:$0xff]
    %v3661 = vld [vmem:[#allocation3 + $0x8] sm:$0xff]
    %v3662 = vld [vmem:[#allocation3 + $0x20] sm:$0xff]
    %v3663 = vld [vmem:[#allocation3 + $0x28] sm:$0xff]
    %s3664 = scalar_lea.vmem [#allocation9], 4608
    %v3665 = vld [vmem:[%s3664] sm:$0xff]
    %v3666 = vld [vmem:[%s3664 + $0x8] sm:$0xff]
    %v3667 = vld [vmem:[%s3664 + $0x10] sm:$0xff]
    %v3668 = vld [vmem:[%s3664 + $0x18] sm:$0xff]
    %v3669 = vld [vmem:[%s3664 + $0x20] sm:$0xff]
    %v3670 = vld [vmem:[%s3664 + $0x28] sm:$0xff]
    %v3671 = vld [vmem:[%s3664 + $0x30] sm:$0xff]
    %v3672 = vld [vmem:[%s3664 + $0x38] sm:$0xff]
    %v3673 = vld [vmem:[%s3664 + $0x40] sm:$0xff]
    %v3674 = vld [vmem:[%s3664 + $0x48] sm:$0xff]
    %v3675 = vld [vmem:[%s3664 + $0x50] sm:$0xff]
    %v3676 = vld [vmem:[%s3664 + $0x58] sm:$0xff]
    %v3677 = vld [vmem:[%s3664 + $0x60] sm:$0xff]
    %v3678 = vld [vmem:[%s3664 + $0x68] sm:$0xff]
    %v3679 = vld [vmem:[%s3664 + $0x70] sm:$0xff]
    %v3680 = vld [vmem:[%s3664 + $0x78] sm:$0xff]
    %v3681 = vld [vmem:[%s3664 + $0x80] sm:$0xff]
    %v3682 = vld [vmem:[%s3664 + $0x88] sm:$0xff]
    %v3683 = vld [vmem:[%s3664 + $0x90] sm:$0xff]
    %v3684 = vld [vmem:[%s3664 + $0x98] sm:$0xff]
    %v3685 = vld [vmem:[%s3664 + $0xa0] sm:$0xff]
    %v3686 = vld [vmem:[%s3664 + $0xa8] sm:$0xff]
    %v3687 = vld [vmem:[%s3664 + $0xb0] sm:$0xff]
    %v3688 = vld [vmem:[%s3664 + $0xb8] sm:$0xff]
    %v3689 = vld [vmem:[%s3664 + $0xc0] sm:$0xff]
    %v3690 = vld [vmem:[%s3664 + $0xc8] sm:$0xff]
    %v3691 = vld [vmem:[%s3664 + $0xd0] sm:$0xff]
    %v3692 = vld [vmem:[%s3664 + $0xd8] sm:$0xff]
    %v3693 = vld [vmem:[%s3664 + $0xe0] sm:$0xff]
    %v3694 = vld [vmem:[%s3664 + $0xe8] sm:$0xff]
    %v3695 = vld [vmem:[%s3664 + $0xf0] sm:$0xff]
    %v3696 = vld [vmem:[%s3664 + $0xf8] sm:$0xff]
    %v3697 = vld [vmem:[%s3664 + $0x100] sm:$0xff]
    %v3698 = vld [vmem:[%s3664 + $0x108] sm:$0xff]
    %v3699 = vld [vmem:[%s3664 + $0x110] sm:$0xff]
    %v3700 = vld [vmem:[%s3664 + $0x118] sm:$0xff]
    %v3701 = vld [vmem:[%s3664 + $0x120] sm:$0xff]
    %v3702 = vld [vmem:[%s3664 + $0x128] sm:$0xff]
    %v3703 = vld [vmem:[%s3664 + $0x130] sm:$0xff]
    %v3704 = vld [vmem:[%s3664 + $0x138] sm:$0xff]
    %v3705 = vld [vmem:[%s3664 + $0x140] sm:$0xff]
    %v3706 = vld [vmem:[%s3664 + $0x148] sm:$0xff]
    %v3707 = vld [vmem:[%s3664 + $0x150] sm:$0xff]
    %v3708 = vld [vmem:[%s3664 + $0x158] sm:$0xff]
    %v3709 = vld [vmem:[%s3664 + $0x160] sm:$0xff]
    %v3710 = vld [vmem:[%s3664 + $0x168] sm:$0xff]
    %v3711 = vld [vmem:[%s3664 + $0x170] sm:$0xff]
    %v3712 = vld [vmem:[%s3664 + $0x178] sm:$0xff]
    %v3713 = vld [vmem:[%s3664 + $0x180] sm:$0xff]
    %v3714 = vld [vmem:[%s3664 + $0x188] sm:$0xff]
    %v3715 = vld [vmem:[%s3664 + $0x190] sm:$0xff]
    %v3716 = vld [vmem:[%s3664 + $0x198] sm:$0xff]
    %v3717 = vld [vmem:[%s3664 + $0x1a0] sm:$0xff]
    %v3718 = vld [vmem:[%s3664 + $0x1a8] sm:$0xff]
    %v3719 = vld [vmem:[%s3664 + $0x1b0] sm:$0xff]
    %v3720 = vld [vmem:[%s3664 + $0x1b8] sm:$0xff]
    %v3721 = vld [vmem:[%s3664 + $0x1c0] sm:$0xff]
    %v3722 = vld [vmem:[%s3664 + $0x1c8] sm:$0xff]
    %v3723 = vld [vmem:[%s3664 + $0x1d0] sm:$0xff]
    %v3724 = vld [vmem:[%s3664 + $0x1d8] sm:$0xff]
    %v3725 = vld [vmem:[%s3664 + $0x1e0] sm:$0xff]
    %v3726 = vld [vmem:[%s3664 + $0x1e8] sm:$0xff]
    %v3727 = vld [vmem:[%s3664 + $0x1f0] sm:$0xff]
    %v3728 = vld [vmem:[%s3664 + $0x1f8] sm:$0xff]
    %v3729 = vld [vmem:[#allocation3] sm:$0xfe]
    %v3730 = vld [vmem:[#allocation3 + $0x8] sm:$0xfe]
    %v3731 = vld [vmem:[#allocation3 + $0x10] sm:$0x1]
    %v3732 = vld [vmem:[#allocation3 + $0x18] sm:$0x1]
    %v3733 = vld [vmem:[#allocation3 + $0x20] sm:$0xfe]
    %v3734 = vld [vmem:[#allocation3 + $0x28] sm:$0xfe]
    %v3735 = vld [vmem:[#allocation3 + $0x30] sm:$0x1]
    %v3736 = vld [vmem:[#allocation3 + $0x38] sm:$0x1]
    %v3745 = vrot.slane %v3729, 1
    %v3746 = vrot.slane %v3731, 1
    %v3747 = vsel %vm1241, %v3745, %v3746
    %v3748 = vrot.slane %v3730, 1
    %v3749 = vrot.slane %v3732, 1
    %v3750 = vsel %vm1241, %v3748, %v3749
    %v3751 = vrot.slane %v3733, 1
    %v3752 = vrot.slane %v3735, 1
    %v3753 = vsel %vm1241, %v3751, %v3752
    %v3754 = vrot.slane %v3734, 1
    %v3755 = vrot.slane %v3736, 1
    %v3756 = vsel %vm1241, %v3754, %v3755
    %s3761 = scalar_lea.vmem [#allocation9], 5120
    %v3762 = vld [vmem:[%s3761] sm:$0xff]
    %v3763 = vld [vmem:[%s3761 + $0x8] sm:$0xff]
    %v3764 = vld [vmem:[%s3761 + $0x10] sm:$0xff]
    %v3765 = vld [vmem:[%s3761 + $0x18] sm:$0xff]
    %v3766 = vld [vmem:[%s3761 + $0x20] sm:$0xff]
    %v3767 = vld [vmem:[%s3761 + $0x28] sm:$0xff]
    %v3768 = vld [vmem:[%s3761 + $0x30] sm:$0xff]
    %v3769 = vld [vmem:[%s3761 + $0x38] sm:$0xff]
    %v3770 = vld [vmem:[%s3761 + $0x40] sm:$0xff]
    %v3771 = vld [vmem:[%s3761 + $0x48] sm:$0xff]
    %v3772 = vld [vmem:[%s3761 + $0x50] sm:$0xff]
    %v3773 = vld [vmem:[%s3761 + $0x58] sm:$0xff]
    %v3774 = vld [vmem:[%s3761 + $0x60] sm:$0xff]
    %v3775 = vld [vmem:[%s3761 + $0x68] sm:$0xff]
    %v3776 = vld [vmem:[%s3761 + $0x70] sm:$0xff]
    %v3777 = vld [vmem:[%s3761 + $0x78] sm:$0xff]
    %v3778 = vld [vmem:[%s3761 + $0x80] sm:$0xff]
    %v3779 = vld [vmem:[%s3761 + $0x88] sm:$0xff]
    %v3780 = vld [vmem:[%s3761 + $0x90] sm:$0xff]
    %v3781 = vld [vmem:[%s3761 + $0x98] sm:$0xff]
    %v3782 = vld [vmem:[%s3761 + $0xa0] sm:$0xff]
    %v3783 = vld [vmem:[%s3761 + $0xa8] sm:$0xff]
    %v3784 = vld [vmem:[%s3761 + $0xb0] sm:$0xff]
    %v3785 = vld [vmem:[%s3761 + $0xb8] sm:$0xff]
    %v3786 = vld [vmem:[%s3761 + $0xc0] sm:$0xff]
    %v3787 = vld [vmem:[%s3761 + $0xc8] sm:$0xff]
    %v3788 = vld [vmem:[%s3761 + $0xd0] sm:$0xff]
    %v3789 = vld [vmem:[%s3761 + $0xd8] sm:$0xff]
    %v3790 = vld [vmem:[%s3761 + $0xe0] sm:$0xff]
    %v3791 = vld [vmem:[%s3761 + $0xe8] sm:$0xff]
    %v3792 = vld [vmem:[%s3761 + $0xf0] sm:$0xff]
    %v3793 = vld [vmem:[%s3761 + $0xf8] sm:$0xff]
    %v3794 = vld [vmem:[%s3761 + $0x100] sm:$0xff]
    %v3795 = vld [vmem:[%s3761 + $0x108] sm:$0xff]
    %v3796 = vld [vmem:[%s3761 + $0x110] sm:$0xff]
    %v3797 = vld [vmem:[%s3761 + $0x118] sm:$0xff]
    %v3798 = vld [vmem:[%s3761 + $0x120] sm:$0xff]
    %v3799 = vld [vmem:[%s3761 + $0x128] sm:$0xff]
    %v3800 = vld [vmem:[%s3761 + $0x130] sm:$0xff]
    %v3801 = vld [vmem:[%s3761 + $0x138] sm:$0xff]
    %v3802 = vld [vmem:[%s3761 + $0x140] sm:$0xff]
    %v3803 = vld [vmem:[%s3761 + $0x148] sm:$0xff]
    %v3804 = vld [vmem:[%s3761 + $0x150] sm:$0xff]
    %v3805 = vld [vmem:[%s3761 + $0x158] sm:$0xff]
    %v3806 = vld [vmem:[%s3761 + $0x160] sm:$0xff]
    %v3807 = vld [vmem:[%s3761 + $0x168] sm:$0xff]
    %v3808 = vld [vmem:[%s3761 + $0x170] sm:$0xff]
    %v3809 = vld [vmem:[%s3761 + $0x178] sm:$0xff]
    %v3810 = vld [vmem:[%s3761 + $0x180] sm:$0xff]
    %v3811 = vld [vmem:[%s3761 + $0x188] sm:$0xff]
    %v3812 = vld [vmem:[%s3761 + $0x190] sm:$0xff]
    %v3813 = vld [vmem:[%s3761 + $0x198] sm:$0xff]
    %v3814 = vld [vmem:[%s3761 + $0x1a0] sm:$0xff]
    %v3815 = vld [vmem:[%s3761 + $0x1a8] sm:$0xff]
    %v3816 = vld [vmem:[%s3761 + $0x1b0] sm:$0xff]
    %v3817 = vld [vmem:[%s3761 + $0x1b8] sm:$0xff]
    %v3818 = vld [vmem:[%s3761 + $0x1c0] sm:$0xff]
    %v3819 = vld [vmem:[%s3761 + $0x1c8] sm:$0xff]
    %v3820 = vld [vmem:[%s3761 + $0x1d0] sm:$0xff]
    %v3821 = vld [vmem:[%s3761 + $0x1d8] sm:$0xff]
    %v3822 = vld [vmem:[%s3761 + $0x1e0] sm:$0xff]
    %v3823 = vld [vmem:[%s3761 + $0x1e8] sm:$0xff]
    %v3824 = vld [vmem:[%s3761 + $0x1f0] sm:$0xff]
    %v3825 = vld [vmem:[%s3761 + $0x1f8] sm:$0xff]
    %3826 = vmatprep.subr.mxu0 %v3793
    %3827 = vmatpush1.msra.mxu0 %v3792
    %3828 = vmatprep.subr.mxu0 %v3791
    %3829 = vmatpush1.msra.mxu0 %v3790
    %3830 = vmatprep.subr.mxu0 %v3789
    %3831 = vmatpush1.msra.mxu0 %v3788
    %3832 = vmatprep.subr.mxu0 %v3787
    %3833 = vmatpush1.msra.mxu0 %v3786
    %3834 = vmatprep.subr.mxu0 %v3785
    %3835 = vmatpush1.msra.mxu0 %v3784
    %3836 = vmatprep.subr.mxu0 %v3783
    %3837 = vmatpush1.msra.mxu0 %v3782
    %3838 = vmatprep.subr.mxu0 %v3781
    %3839 = vmatpush1.msra.mxu0 %v3780
    %3840 = vmatprep.subr.mxu0 %v3779
    %3841 = vmatpush1.msra.mxu0 %v3778
    %3842 = vmatprep.subr.mxu0 %v3777
    %3843 = vmatpush1.msra.mxu0 %v3776
    %3844 = vmatprep.subr.mxu0 %v3775
    %3845 = vmatpush1.msra.mxu0 %v3774
    %3846 = vmatprep.subr.mxu0 %v3773
    %3847 = vmatpush1.msra.mxu0 %v3772
    %3848 = vmatprep.subr.mxu0 %v3771
    %3849 = vmatpush1.msra.mxu0 %v3770
    %3850 = vmatprep.subr.mxu0 %v3769
    %3851 = vmatpush1.msra.mxu0 %v3768
    %3852 = vmatprep.subr.mxu0 %v3767
    %3853 = vmatpush1.msra.mxu0 %v3766
    %3854 = vmatprep.subr.mxu0 %v3765
    %3855 = vmatpush1.msra.mxu0 %v3764
    %3856 = vmatprep.subr.mxu0 %v3763
    %3857 = vmatpush1.msra.mxu0 %v3762
    %3858 = vmatprep.subr.mxu0 %v3825
    %3859 = vmatpush2.msra.mxu0 %v3824
    %3860 = vmatprep.subr.mxu0 %v3823
    %3861 = vmatpush2.msra.mxu0 %v3822
    %3862 = vmatprep.subr.mxu0 %v3821
    %3863 = vmatpush2.msra.mxu0 %v3820
    %3864 = vmatprep.subr.mxu0 %v3819
    %3865 = vmatpush2.msra.mxu0 %v3818
    %3866 = vmatprep.subr.mxu0 %v3817
    %3867 = vmatpush2.msra.mxu0 %v3816
    %3868 = vmatprep.subr.mxu0 %v3815
    %3869 = vmatpush2.msra.mxu0 %v3814
    %3870 = vmatprep.subr.mxu0 %v3813
    %3871 = vmatpush2.msra.mxu0 %v3812
    %3872 = vmatprep.subr.mxu0 %v3811
    %3873 = vmatpush2.msra.mxu0 %v3810
    %3874 = vmatprep.subr.mxu0 %v3809
    %3875 = vmatpush2.msra.mxu0 %v3808
    %3876 = vmatprep.subr.mxu0 %v3807
    %3877 = vmatpush2.msra.mxu0 %v3806
    %3878 = vmatprep.subr.mxu0 %v3805
    %3879 = vmatpush2.msra.mxu0 %v3804
    %3880 = vmatprep.subr.mxu0 %v3803
    %3881 = vmatpush2.msra.mxu0 %v3802
    %3882 = vmatprep.subr.mxu0 %v3801
    %3883 = vmatpush2.msra.mxu0 %v3800
    %3884 = vmatprep.subr.mxu0 %v3799
    %3885 = vmatpush2.msra.mxu0 %v3798
    %3886 = vmatprep.subr.mxu0 %v3797
    %3887 = vmatpush2.msra.mxu0 %v3796
    %3888 = vmatprep.subr.mxu0 %v3795
    %3889 = vmatpush2.msra.mxu0 %v3794
    %3890 = vmatprep.mubr.f32.mxu0 %v3750
    %3891 = vmatmul.mubr.f32.gmra.mxu0 %v3747
    %v3892 = vpop.f32.mrf.mxu0
    %v3893 = vadd.f32 0.0, %v3892
    %v3894 = vpop.f32.mrf.mxu0
    %v3895 = vadd.f32 0.0, %v3894
    %3896 = vmatprep.mubr.f32.mxu0 %v3756
    %3897 = vmatmul.mubr.f32.gmra.mxu0 %v3753
    %v3898 = vpop.f32.mrf.mxu0
    %v3899 = vadd.f32 0.0, %v3898
    %v3900 = vpop.f32.mrf.mxu0
    %v3901 = vadd.f32 0.0, %v3900
    %3902 = vdwg.mxu0
    %3903 = vmatprep.subr.mxu0 %v3696
    %3904 = vmatpush1.msra.mxu0 %v3695
    %3905 = vmatprep.subr.mxu0 %v3694
    %3906 = vmatpush1.msra.mxu0 %v3693
    %3907 = vmatprep.subr.mxu0 %v3692
    %3908 = vmatpush1.msra.mxu0 %v3691
    %3909 = vmatprep.subr.mxu0 %v3690
    %3910 = vmatpush1.msra.mxu0 %v3689
    %3911 = vmatprep.subr.mxu0 %v3688
    %3912 = vmatpush1.msra.mxu0 %v3687
    %3913 = vmatprep.subr.mxu0 %v3686
    %3914 = vmatpush1.msra.mxu0 %v3685
    %3915 = vmatprep.subr.mxu0 %v3684
    %3916 = vmatpush1.msra.mxu0 %v3683
    %3917 = vmatprep.subr.mxu0 %v3682
    %3918 = vmatpush1.msra.mxu0 %v3681
    %3919 = vmatprep.subr.mxu0 %v3680
    %3920 = vmatpush1.msra.mxu0 %v3679
    %3921 = vmatprep.subr.mxu0 %v3678
    %3922 = vmatpush1.msra.mxu0 %v3677
    %3923 = vmatprep.subr.mxu0 %v3676
    %3924 = vmatpush1.msra.mxu0 %v3675
    %3925 = vmatprep.subr.mxu0 %v3674
    %3926 = vmatpush1.msra.mxu0 %v3673
    %3927 = vmatprep.subr.mxu0 %v3672
    %3928 = vmatpush1.msra.mxu0 %v3671
    %3929 = vmatprep.subr.mxu0 %v3670
    %3930 = vmatpush1.msra.mxu0 %v3669
    %3931 = vmatprep.subr.mxu0 %v3668
    %3932 = vmatpush1.msra.mxu0 %v3667
    %3933 = vmatprep.subr.mxu0 %v3666
    %3934 = vmatpush1.msra.mxu0 %v3665
    %3935 = vmatprep.subr.mxu0 %v3728
    %3936 = vmatpush2.msra.mxu0 %v3727
    %3937 = vmatprep.subr.mxu0 %v3726
    %3938 = vmatpush2.msra.mxu0 %v3725
    %3939 = vmatprep.subr.mxu0 %v3724
    %3940 = vmatpush2.msra.mxu0 %v3723
    %3941 = vmatprep.subr.mxu0 %v3722
    %3942 = vmatpush2.msra.mxu0 %v3721
    %3943 = vmatprep.subr.mxu0 %v3720
    %3944 = vmatpush2.msra.mxu0 %v3719
    %3945 = vmatprep.subr.mxu0 %v3718
    %3946 = vmatpush2.msra.mxu0 %v3717
    %3947 = vmatprep.subr.mxu0 %v3716
    %3948 = vmatpush2.msra.mxu0 %v3715
    %3949 = vmatprep.subr.mxu0 %v3714
    %3950 = vmatpush2.msra.mxu0 %v3713
    %3951 = vmatprep.subr.mxu0 %v3712
    %3952 = vmatpush2.msra.mxu0 %v3711
    %3953 = vmatprep.subr.mxu0 %v3710
    %3954 = vmatpush2.msra.mxu0 %v3709
    %3955 = vmatprep.subr.mxu0 %v3708
    %3956 = vmatpush2.msra.mxu0 %v3707
    %3957 = vmatprep.subr.mxu0 %v3706
    %3958 = vmatpush2.msra.mxu0 %v3705
    %3959 = vmatprep.subr.mxu0 %v3704
    %3960 = vmatpush2.msra.mxu0 %v3703
    %3961 = vmatprep.subr.mxu0 %v3702
    %3962 = vmatpush2.msra.mxu0 %v3701
    %3963 = vmatprep.subr.mxu0 %v3700
    %3964 = vmatpush2.msra.mxu0 %v3699
    %3965 = vmatprep.subr.mxu0 %v3698
    %3966 = vmatpush2.msra.mxu0 %v3697
    %3967 = vmatprep.mubr.f32.mxu0 %v3661
    %3968 = vmatmul.mubr.f32.gmra.mxu0 %v3660
    %v3969 = vpop.f32.mrf.mxu0
    %v3970 = vadd.f32 %v3893, %v3969
    %v3971 = vpop.f32.mrf.mxu0
    %v3972 = vadd.f32 %v3895, %v3971
    %3973 = vmatprep.mubr.f32.mxu0 %v3663
    %3974 = vmatmul.mubr.f32.gmra.mxu0 %v3662
    %v3975 = vpop.f32.mrf.mxu0
    %v3976 = vadd.f32 %v3899, %v3975
    %v3977 = vpop.f32.mrf.mxu0
    %v3978 = vadd.f32 %v3901, %v3977
    %3979 = vdwg.mxu0
    %v3980 = vld [vmem:[#allocation3] sm:$0xfc]
    %v3981 = vld [vmem:[#allocation3 + $0x8] sm:$0xfc]
    %v3982 = vld [vmem:[#allocation3 + $0x10] sm:$0x3]
    %v3983 = vld [vmem:[#allocation3 + $0x18] sm:$0x3]
    %v3984 = vld [vmem:[#allocation3 + $0x20] sm:$0xfc]
    %v3985 = vld [vmem:[#allocation3 + $0x28] sm:$0xfc]
    %v3986 = vld [vmem:[#allocation3 + $0x30] sm:$0x3]
    %v3987 = vld [vmem:[#allocation3 + $0x38] sm:$0x3]
    %v3996 = vrot.slane %v3980, 2
    %v3997 = vrot.slane %v3982, 2
    %v3998 = vsel %vm1493, %v3996, %v3997
    %v3999 = vrot.slane %v3981, 2
    %v4000 = vrot.slane %v3983, 2
    %v4001 = vsel %vm1493, %v3999, %v4000
    %v4002 = vrot.slane %v3984, 2
    %v4003 = vrot.slane %v3986, 2
    %v4004 = vsel %vm1493, %v4002, %v4003
    %v4005 = vrot.slane %v3985, 2
    %v4006 = vrot.slane %v3987, 2
    %v4007 = vsel %vm1493, %v4005, %v4006
    %s4012 = scalar_lea.vmem [#allocation9], 5632
    %v4013 = vld [vmem:[%s4012] sm:$0xff]
    %v4014 = vld [vmem:[%s4012 + $0x8] sm:$0xff]
    %v4015 = vld [vmem:[%s4012 + $0x10] sm:$0xff]
    %v4016 = vld [vmem:[%s4012 + $0x18] sm:$0xff]
    %v4017 = vld [vmem:[%s4012 + $0x20] sm:$0xff]
    %v4018 = vld [vmem:[%s4012 + $0x28] sm:$0xff]
    %v4019 = vld [vmem:[%s4012 + $0x30] sm:$0xff]
    %v4020 = vld [vmem:[%s4012 + $0x38] sm:$0xff]
    %v4021 = vld [vmem:[%s4012 + $0x40] sm:$0xff]
    %v4022 = vld [vmem:[%s4012 + $0x48] sm:$0xff]
    %v4023 = vld [vmem:[%s4012 + $0x50] sm:$0xff]
    %v4024 = vld [vmem:[%s4012 + $0x58] sm:$0xff]
    %v4025 = vld [vmem:[%s4012 + $0x60] sm:$0xff]
    %v4026 = vld [vmem:[%s4012 + $0x68] sm:$0xff]
    %v4027 = vld [vmem:[%s4012 + $0x70] sm:$0xff]
    %v4028 = vld [vmem:[%s4012 + $0x78] sm:$0xff]
    %v4029 = vld [vmem:[%s4012 + $0x80] sm:$0xff]
    %v4030 = vld [vmem:[%s4012 + $0x88] sm:$0xff]
    %v4031 = vld [vmem:[%s4012 + $0x90] sm:$0xff]
    %v4032 = vld [vmem:[%s4012 + $0x98] sm:$0xff]
    %v4033 = vld [vmem:[%s4012 + $0xa0] sm:$0xff]
    %v4034 = vld [vmem:[%s4012 + $0xa8] sm:$0xff]
    %v4035 = vld [vmem:[%s4012 + $0xb0] sm:$0xff]
    %v4036 = vld [vmem:[%s4012 + $0xb8] sm:$0xff]
    %v4037 = vld [vmem:[%s4012 + $0xc0] sm:$0xff]
    %v4038 = vld [vmem:[%s4012 + $0xc8] sm:$0xff]
    %v4039 = vld [vmem:[%s4012 + $0xd0] sm:$0xff]
    %v4040 = vld [vmem:[%s4012 + $0xd8] sm:$0xff]
    %v4041 = vld [vmem:[%s4012 + $0xe0] sm:$0xff]
    %v4042 = vld [vmem:[%s4012 + $0xe8] sm:$0xff]
    %v4043 = vld [vmem:[%s4012 + $0xf0] sm:$0xff]
    %v4044 = vld [vmem:[%s4012 + $0xf8] sm:$0xff]
    %v4045 = vld [vmem:[%s4012 + $0x100] sm:$0xff]
    %v4046 = vld [vmem:[%s4012 + $0x108] sm:$0xff]
    %v4047 = vld [vmem:[%s4012 + $0x110] sm:$0xff]
    %v4048 = vld [vmem:[%s4012 + $0x118] sm:$0xff]
    %v4049 = vld [vmem:[%s4012 + $0x120] sm:$0xff]
    %v4050 = vld [vmem:[%s4012 + $0x128] sm:$0xff]
    %v4051 = vld [vmem:[%s4012 + $0x130] sm:$0xff]
    %v4052 = vld [vmem:[%s4012 + $0x138] sm:$0xff]
    %v4053 = vld [vmem:[%s4012 + $0x140] sm:$0xff]
    %v4054 = vld [vmem:[%s4012 + $0x148] sm:$0xff]
    %v4055 = vld [vmem:[%s4012 + $0x150] sm:$0xff]
    %v4056 = vld [vmem:[%s4012 + $0x158] sm:$0xff]
    %v4057 = vld [vmem:[%s4012 + $0x160] sm:$0xff]
    %v4058 = vld [vmem:[%s4012 + $0x168] sm:$0xff]
    %v4059 = vld [vmem:[%s4012 + $0x170] sm:$0xff]
    %v4060 = vld [vmem:[%s4012 + $0x178] sm:$0xff]
    %v4061 = vld [vmem:[%s4012 + $0x180] sm:$0xff]
    %v4062 = vld [vmem:[%s4012 + $0x188] sm:$0xff]
    %v4063 = vld [vmem:[%s4012 + $0x190] sm:$0xff]
    %v4064 = vld [vmem:[%s4012 + $0x198] sm:$0xff]
    %v4065 = vld [vmem:[%s4012 + $0x1a0] sm:$0xff]
    %v4066 = vld [vmem:[%s4012 + $0x1a8] sm:$0xff]
    %v4067 = vld [vmem:[%s4012 + $0x1b0] sm:$0xff]
    %v4068 = vld [vmem:[%s4012 + $0x1b8] sm:$0xff]
    %v4069 = vld [vmem:[%s4012 + $0x1c0] sm:$0xff]
    %v4070 = vld [vmem:[%s4012 + $0x1c8] sm:$0xff]
    %v4071 = vld [vmem:[%s4012 + $0x1d0] sm:$0xff]
    %v4072 = vld [vmem:[%s4012 + $0x1d8] sm:$0xff]
    %v4073 = vld [vmem:[%s4012 + $0x1e0] sm:$0xff]
    %v4074 = vld [vmem:[%s4012 + $0x1e8] sm:$0xff]
    %v4075 = vld [vmem:[%s4012 + $0x1f0] sm:$0xff]
    %v4076 = vld [vmem:[%s4012 + $0x1f8] sm:$0xff]
    %4077 = vmatprep.subr.mxu0 %v4044
    %4078 = vmatpush1.msra.mxu0 %v4043
    %4079 = vmatprep.subr.mxu0 %v4042
    %4080 = vmatpush1.msra.mxu0 %v4041
    %4081 = vmatprep.subr.mxu0 %v4040
    %4082 = vmatpush1.msra.mxu0 %v4039
    %4083 = vmatprep.subr.mxu0 %v4038
    %4084 = vmatpush1.msra.mxu0 %v4037
    %4085 = vmatprep.subr.mxu0 %v4036
    %4086 = vmatpush1.msra.mxu0 %v4035
    %4087 = vmatprep.subr.mxu0 %v4034
    %4088 = vmatpush1.msra.mxu0 %v4033
    %4089 = vmatprep.subr.mxu0 %v4032
    %4090 = vmatpush1.msra.mxu0 %v4031
    %4091 = vmatprep.subr.mxu0 %v4030
    %4092 = vmatpush1.msra.mxu0 %v4029
    %4093 = vmatprep.subr.mxu0 %v4028
    %4094 = vmatpush1.msra.mxu0 %v4027
    %4095 = vmatprep.subr.mxu0 %v4026
    %4096 = vmatpush1.msra.mxu0 %v4025
    %4097 = vmatprep.subr.mxu0 %v4024
    %4098 = vmatpush1.msra.mxu0 %v4023
    %4099 = vmatprep.subr.mxu0 %v4022
    %4100 = vmatpush1.msra.mxu0 %v4021
    %4101 = vmatprep.subr.mxu0 %v4020
    %4102 = vmatpush1.msra.mxu0 %v4019
    %4103 = vmatprep.subr.mxu0 %v4018
    %4104 = vmatpush1.msra.mxu0 %v4017
    %4105 = vmatprep.subr.mxu0 %v4016
    %4106 = vmatpush1.msra.mxu0 %v4015
    %4107 = vmatprep.subr.mxu0 %v4014
    %4108 = vmatpush1.msra.mxu0 %v4013
    %4109 = vmatprep.subr.mxu0 %v4076
    %4110 = vmatpush2.msra.mxu0 %v4075
    %4111 = vmatprep.subr.mxu0 %v4074
    %4112 = vmatpush2.msra.mxu0 %v4073
    %4113 = vmatprep.subr.mxu0 %v4072
    %4114 = vmatpush2.msra.mxu0 %v4071
    %4115 = vmatprep.subr.mxu0 %v4070
    %4116 = vmatpush2.msra.mxu0 %v4069
    %4117 = vmatprep.subr.mxu0 %v4068
    %4118 = vmatpush2.msra.mxu0 %v4067
    %4119 = vmatprep.subr.mxu0 %v4066
    %4120 = vmatpush2.msra.mxu0 %v4065
    %4121 = vmatprep.subr.mxu0 %v4064
    %4122 = vmatpush2.msra.mxu0 %v4063
    %4123 = vmatprep.subr.mxu0 %v4062
    %4124 = vmatpush2.msra.mxu0 %v4061
    %4125 = vmatprep.subr.mxu0 %v4060
    %4126 = vmatpush2.msra.mxu0 %v4059
    %4127 = vmatprep.subr.mxu0 %v4058
    %4128 = vmatpush2.msra.mxu0 %v4057
    %4129 = vmatprep.subr.mxu0 %v4056
    %4130 = vmatpush2.msra.mxu0 %v4055
    %4131 = vmatprep.subr.mxu0 %v4054
    %4132 = vmatpush2.msra.mxu0 %v4053
    %4133 = vmatprep.subr.mxu0 %v4052
    %4134 = vmatpush2.msra.mxu0 %v4051
    %4135 = vmatprep.subr.mxu0 %v4050
    %4136 = vmatpush2.msra.mxu0 %v4049
    %4137 = vmatprep.subr.mxu0 %v4048
    %4138 = vmatpush2.msra.mxu0 %v4047
    %4139 = vmatprep.subr.mxu0 %v4046
    %4140 = vmatpush2.msra.mxu0 %v4045
    %4141 = vmatprep.mubr.f32.mxu0 %v4001
    %4142 = vmatmul.mubr.f32.gmra.mxu0 %v3998
    %v4143 = vpop.f32.mrf.mxu0
    %v4144 = vadd.f32 0.0, %v4143
    %v4145 = vpop.f32.mrf.mxu0
    %v4146 = vadd.f32 0.0, %v4145
    %4147 = vmatprep.mubr.f32.mxu0 %v4007
    %4148 = vmatmul.mubr.f32.gmra.mxu0 %v4004
    %v4149 = vpop.f32.mrf.mxu0
    %v4150 = vadd.f32 0.0, %v4149
    %v4151 = vpop.f32.mrf.mxu0
    %v4152 = vadd.f32 0.0, %v4151
    %4153 = vdwg.mxu0
    %v4154 = vadd.f32 %v3970, %v4144
    %v4155 = vadd.f32 %v3972, %v4146
    %v4156 = vadd.f32 %v3976, %v4150
    %v4157 = vadd.f32 %v3978, %v4152
    %v4158 = vadd.f32 %v4154, %v4156
    %v4159 = vrot.slane %v4158, 4
    %v4160 = vadd.f32 %v4158, %v4159
    %v4161 = vrot.slane %v4160, 2
    %v4162 = vadd.f32 %v4160, %v4161
    %v4163 = vrot.slane %v4162, 1
    %v4164 = vadd.f32 %v4162, %v4163
    %v4165 = vadd.f32 %v4155, %v4157
    %v4166 = vrot.slane %v4165, 4
    %v4167 = vadd.f32 %v4165, %v4166
    %v4168 = vrot.slane %v4167, 2
    %v4169 = vadd.f32 %v4167, %v4168
    %v4170 = vrot.slane %v4169, 1
    %v4171 = vadd.f32 %v4169, %v4170
    %v4172 = vmul.f32 %v4154, %v4154
    %v4173 = vmul.f32 %v4155, %v4155
    %v4174 = vmul.f32 %v4156, %v4156
    %v4175 = vmul.f32 %v4157, %v4157
    %v4176 = vadd.f32 %v4172, %v4174
    %v4177 = vrot.slane %v4176, 4
    %v4178 = vadd.f32 %v4176, %v4177
    %v4179 = vrot.slane %v4178, 2
    %v4180 = vadd.f32 %v4178, %v4179
    %v4181 = vrot.slane %v4180, 1
    %v4182 = vadd.f32 %v4180, %v4181
    %v4183 = vadd.f32 %v4173, %v4175
    %v4184 = vrot.slane %v4183, 4
    %v4185 = vadd.f32 %v4183, %v4184
    %v4186 = vrot.slane %v4185, 2
    %v4187 = vadd.f32 %v4185, %v4186
    %v4188 = vrot.slane %v4187, 1
    %v4189 = vadd.f32 %v4187, %v4188
    %v4190 = vld [vmem:[#allocation14] sm:$0xff]
    %v4191 = vld [vmem:[#allocation14 + $0x8] sm:$0xff]
    %v4192 = vld [vmem:[#allocation14 + $0x10] sm:$0xff]
    %v4193 = vld [vmem:[#allocation14 + $0x18] sm:$0xff]
    %v4194 = vld [vmem:[#allocation14 + $0x20] sm:$0xff]
    %v4195 = vld [vmem:[#allocation14 + $0x28] sm:$0xff]
    %v4196 = vld [vmem:[#allocation14 + $0x30] sm:$0xff]
    %v4197 = vld [vmem:[#allocation14 + $0x38] sm:$0xff]
    %v4198 = vld [vmem:[#allocation14 + $0x40] sm:$0xff]
    %v4199 = vld [vmem:[#allocation14 + $0x48] sm:$0xff]
    %v4200 = vld [vmem:[#allocation14 + $0x50] sm:$0xff]
    %v4201 = vld [vmem:[#allocation14 + $0x58] sm:$0xff]
    %v4202 = vld [vmem:[#allocation14 + $0x60] sm:$0xff]
    %v4203 = vld [vmem:[#allocation14 + $0x68] sm:$0xff]
    %v4204 = vld [vmem:[#allocation14 + $0x70] sm:$0xff]
    %v4205 = vld [vmem:[#allocation14 + $0x78] sm:$0xff]
    %v4206 = vld [vmem:[#allocation14 + $0x80] sm:$0xff]
    %v4207 = vld [vmem:[#allocation14 + $0x88] sm:$0xff]
    %v4208 = vld [vmem:[#allocation14 + $0x90] sm:$0xff]
    %v4209 = vld [vmem:[#allocation14 + $0x98] sm:$0xff]
    %v4210 = vld [vmem:[#allocation14 + $0xa0] sm:$0xff]
    %v4211 = vld [vmem:[#allocation14 + $0xa8] sm:$0xff]
    %v4212 = vld [vmem:[#allocation14 + $0xb0] sm:$0xff]
    %v4213 = vld [vmem:[#allocation14 + $0xb8] sm:$0xff]
    %v4214 = vld [vmem:[#allocation14 + $0xc0] sm:$0xff]
    %v4215 = vld [vmem:[#allocation14 + $0xc8] sm:$0xff]
    %v4216 = vld [vmem:[#allocation14 + $0xd0] sm:$0xff]
    %v4217 = vld [vmem:[#allocation14 + $0xd8] sm:$0xff]
    %v4218 = vld [vmem:[#allocation14 + $0xe0] sm:$0xff]
    %v4219 = vld [vmem:[#allocation14 + $0xe8] sm:$0xff]
    %v4220 = vld [vmem:[#allocation14 + $0xf0] sm:$0xff]
    %v4221 = vld [vmem:[#allocation14 + $0xf8] sm:$0xff]
    %v4222 = vld [vmem:[#allocation14 + $0x100] sm:$0xff]
    %v4223 = vld [vmem:[#allocation14 + $0x108] sm:$0xff]
    %v4224 = vld [vmem:[#allocation14 + $0x110] sm:$0xff]
    %v4225 = vld [vmem:[#allocation14 + $0x118] sm:$0xff]
    %v4226 = vld [vmem:[#allocation14 + $0x120] sm:$0xff]
    %v4227 = vld [vmem:[#allocation14 + $0x128] sm:$0xff]
    %v4228 = vld [vmem:[#allocation14 + $0x130] sm:$0xff]
    %v4229 = vld [vmem:[#allocation14 + $0x138] sm:$0xff]
    %v4230 = vld [vmem:[#allocation14 + $0x140] sm:$0xff]
    %v4231 = vld [vmem:[#allocation14 + $0x148] sm:$0xff]
    %v4232 = vld [vmem:[#allocation14 + $0x150] sm:$0xff]
    %v4233 = vld [vmem:[#allocation14 + $0x158] sm:$0xff]
    %v4234 = vld [vmem:[#allocation14 + $0x160] sm:$0xff]
    %v4235 = vld [vmem:[#allocation14 + $0x168] sm:$0xff]
    %v4236 = vld [vmem:[#allocation14 + $0x170] sm:$0xff]
    %v4237 = vld [vmem:[#allocation14 + $0x178] sm:$0xff]
    %v4238 = vld [vmem:[#allocation14 + $0x180] sm:$0xff]
    %v4239 = vld [vmem:[#allocation14 + $0x188] sm:$0xff]
    %v4240 = vld [vmem:[#allocation14 + $0x190] sm:$0xff]
    %v4241 = vld [vmem:[#allocation14 + $0x198] sm:$0xff]
    %v4242 = vld [vmem:[#allocation14 + $0x1a0] sm:$0xff]
    %v4243 = vld [vmem:[#allocation14 + $0x1a8] sm:$0xff]
    %v4244 = vld [vmem:[#allocation14 + $0x1b0] sm:$0xff]
    %v4245 = vld [vmem:[#allocation14 + $0x1b8] sm:$0xff]
    %v4246 = vld [vmem:[#allocation14 + $0x1c0] sm:$0xff]
    %v4247 = vld [vmem:[#allocation14 + $0x1c8] sm:$0xff]
    %v4248 = vld [vmem:[#allocation14 + $0x1d0] sm:$0xff]
    %v4249 = vld [vmem:[#allocation14 + $0x1d8] sm:$0xff]
    %v4250 = vld [vmem:[#allocation14 + $0x1e0] sm:$0xff]
    %v4251 = vld [vmem:[#allocation14 + $0x1e8] sm:$0xff]
    %v4252 = vld [vmem:[#allocation14 + $0x1f0] sm:$0xff]
    %v4253 = vld [vmem:[#allocation14 + $0x1f8] sm:$0xff]
    %4254 = vmatprep.subr.mxu0 %v4221
    %4255 = vmatpush1.msra.mxu0 %v4220
    %4256 = vmatprep.subr.mxu0 %v4219
    %4257 = vmatpush1.msra.mxu0 %v4218
    %4258 = vmatprep.subr.mxu0 %v4217
    %4259 = vmatpush1.msra.mxu0 %v4216
    %4260 = vmatprep.subr.mxu0 %v4215
    %4261 = vmatpush1.msra.mxu0 %v4214
    %4262 = vmatprep.subr.mxu0 %v4213
    %4263 = vmatpush1.msra.mxu0 %v4212
    %4264 = vmatprep.subr.mxu0 %v4211
    %4265 = vmatpush1.msra.mxu0 %v4210
    %4266 = vmatprep.subr.mxu0 %v4209
    %4267 = vmatpush1.msra.mxu0 %v4208
    %4268 = vmatprep.subr.mxu0 %v4207
    %4269 = vmatpush1.msra.mxu0 %v4206
    %4270 = vmatprep.subr.mxu0 %v4205
    %4271 = vmatpush1.msra.mxu0 %v4204
    %4272 = vmatprep.subr.mxu0 %v4203
    %4273 = vmatpush1.msra.mxu0 %v4202
    %4274 = vmatprep.subr.mxu0 %v4201
    %4275 = vmatpush1.msra.mxu0 %v4200
    %4276 = vmatprep.subr.mxu0 %v4199
    %4277 = vmatpush1.msra.mxu0 %v4198
    %4278 = vmatprep.subr.mxu0 %v4197
    %4279 = vmatpush1.msra.mxu0 %v4196
    %4280 = vmatprep.subr.mxu0 %v4195
    %4281 = vmatpush1.msra.mxu0 %v4194
    %4282 = vmatprep.subr.mxu0 %v4193
    %4283 = vmatpush1.msra.mxu0 %v4192
    %4284 = vmatprep.subr.mxu0 %v4191
    %4285 = vmatpush1.msra.mxu0 %v4190
    %4286 = vmatprep.subr.mxu0 %v4253
    %4287 = vmatpush2.msra.mxu0 %v4252
    %4288 = vmatprep.subr.mxu0 %v4251
    %4289 = vmatpush2.msra.mxu0 %v4250
    %4290 = vmatprep.subr.mxu0 %v4249
    %4291 = vmatpush2.msra.mxu0 %v4248
    %4292 = vmatprep.subr.mxu0 %v4247
    %4293 = vmatpush2.msra.mxu0 %v4246
    %4294 = vmatprep.subr.mxu0 %v4245
    %4295 = vmatpush2.msra.mxu0 %v4244
    %4296 = vmatprep.subr.mxu0 %v4243
    %4297 = vmatpush2.msra.mxu0 %v4242
    %4298 = vmatprep.subr.mxu0 %v4241
    %4299 = vmatpush2.msra.mxu0 %v4240
    %4300 = vmatprep.subr.mxu0 %v4239
    %4301 = vmatpush2.msra.mxu0 %v4238
    %4302 = vmatprep.subr.mxu0 %v4237
    %4303 = vmatpush2.msra.mxu0 %v4236
    %4304 = vmatprep.subr.mxu0 %v4235
    %4305 = vmatpush2.msra.mxu0 %v4234
    %4306 = vmatprep.subr.mxu0 %v4233
    %4307 = vmatpush2.msra.mxu0 %v4232
    %4308 = vmatprep.subr.mxu0 %v4231
    %4309 = vmatpush2.msra.mxu0 %v4230
    %4310 = vmatprep.subr.mxu0 %v4229
    %4311 = vmatpush2.msra.mxu0 %v4228
    %4312 = vmatprep.subr.mxu0 %v4227
    %4313 = vmatpush2.msra.mxu0 %v4226
    %4314 = vmatprep.subr.mxu0 %v4225
    %4315 = vmatpush2.msra.mxu0 %v4224
    %4316 = vmatprep.subr.mxu0 %v4223
    %4317 = vmatpush2.msra.mxu0 %v4222
    %4318 = vmatprep.mubr.f32.mxu0 %v4171
    %4319 = vmatmul.mubr.f32.gmra.mxu0 %v4164
    %v4320 = vpop.f32.mrf.mxu0
    %v4321 = vadd.f32 0.0, %v4320
    %v4322 = vpop.f32.mrf.mxu0
    %v4323 = vadd.f32 0.0, %v4322
    %4324 = vdwg.mxu0
    %4325 = vmatprep.subr.mxu0 %v4221
    %4326 = vmatpush1.msra.mxu0 %v4220
    %4327 = vmatprep.subr.mxu0 %v4219
    %4328 = vmatpush1.msra.mxu0 %v4218
    %4329 = vmatprep.subr.mxu0 %v4217
    %4330 = vmatpush1.msra.mxu0 %v4216
    %4331 = vmatprep.subr.mxu0 %v4215
    %4332 = vmatpush1.msra.mxu0 %v4214
    %4333 = vmatprep.subr.mxu0 %v4213
    %4334 = vmatpush1.msra.mxu0 %v4212
    %4335 = vmatprep.subr.mxu0 %v4211
    %4336 = vmatpush1.msra.mxu0 %v4210
    %4337 = vmatprep.subr.mxu0 %v4209
    %4338 = vmatpush1.msra.mxu0 %v4208
    %4339 = vmatprep.subr.mxu0 %v4207
    %4340 = vmatpush1.msra.mxu0 %v4206
    %4341 = vmatprep.subr.mxu0 %v4205
    %4342 = vmatpush1.msra.mxu0 %v4204
    %4343 = vmatprep.subr.mxu0 %v4203
    %4344 = vmatpush1.msra.mxu0 %v4202
    %4345 = vmatprep.subr.mxu0 %v4201
    %4346 = vmatpush1.msra.mxu0 %v4200
    %4347 = vmatprep.subr.mxu0 %v4199
    %4348 = vmatpush1.msra.mxu0 %v4198
    %4349 = vmatprep.subr.mxu0 %v4197
    %4350 = vmatpush1.msra.mxu0 %v4196
    %4351 = vmatprep.subr.mxu0 %v4195
    %4352 = vmatpush1.msra.mxu0 %v4194
    %4353 = vmatprep.subr.mxu0 %v4193
    %4354 = vmatpush1.msra.mxu0 %v4192
    %4355 = vmatprep.subr.mxu0 %v4191
    %4356 = vmatpush1.msra.mxu0 %v4190
    %4357 = vmatprep.subr.mxu0 %v4253
    %4358 = vmatpush2.msra.mxu0 %v4252
    %4359 = vmatprep.subr.mxu0 %v4251
    %4360 = vmatpush2.msra.mxu0 %v4250
    %4361 = vmatprep.subr.mxu0 %v4249
    %4362 = vmatpush2.msra.mxu0 %v4248
    %4363 = vmatprep.subr.mxu0 %v4247
    %4364 = vmatpush2.msra.mxu0 %v4246
    %4365 = vmatprep.subr.mxu0 %v4245
    %4366 = vmatpush2.msra.mxu0 %v4244
    %4367 = vmatprep.subr.mxu0 %v4243
    %4368 = vmatpush2.msra.mxu0 %v4242
    %4369 = vmatprep.subr.mxu0 %v4241
    %4370 = vmatpush2.msra.mxu0 %v4240
    %4371 = vmatprep.subr.mxu0 %v4239
    %4372 = vmatpush2.msra.mxu0 %v4238
    %4373 = vmatprep.subr.mxu0 %v4237
    %4374 = vmatpush2.msra.mxu0 %v4236
    %4375 = vmatprep.subr.mxu0 %v4235
    %4376 = vmatpush2.msra.mxu0 %v4234
    %4377 = vmatprep.subr.mxu0 %v4233
    %4378 = vmatpush2.msra.mxu0 %v4232
    %4379 = vmatprep.subr.mxu0 %v4231
    %4380 = vmatpush2.msra.mxu0 %v4230
    %4381 = vmatprep.subr.mxu0 %v4229
    %4382 = vmatpush2.msra.mxu0 %v4228
    %4383 = vmatprep.subr.mxu0 %v4227
    %4384 = vmatpush2.msra.mxu0 %v4226
    %4385 = vmatprep.subr.mxu0 %v4225
    %4386 = vmatpush2.msra.mxu0 %v4224
    %4387 = vmatprep.subr.mxu0 %v4223
    %4388 = vmatpush2.msra.mxu0 %v4222
    %4389 = vmatprep.mubr.f32.mxu0 %v4189
    %4390 = vmatmul.mubr.f32.gmra.mxu0 %v4182
    %v4391 = vpop.f32.mrf.mxu0
    %v4392 = vadd.f32 0.0, %v4391
    %v4393 = vpop.f32.mrf.mxu0
    %v4394 = vadd.f32 0.0, %v4393
    %4395 = vdwg.mxu0
    %v4396 = vmul.f32 %v4321, %v4321
    %v4397 = vmul.f32 %v4323, %v4323
    %v4398 = vsub.f32 %v4392, %v4396
    %v4399 = vsub.f32 %v4394, %v4397
    %v4400 = vlaneseq
    %v4401 = vshrl.u32 %v4400, 7
    %v4402 = vsub.s32 0, %v4401
    %v4403 = vrot.slane %v4321, %v4402
    %v4404 = vlaneseq
    %v4405 = vshrl.u32 %v4404, 7
    %v4406 = vsub.s32 0, %v4405
    %v4407 = vrot.slane %v4323, %v4406
    %v4408 = vsub.f32 %v4154, %v4403
    %v4409 = vsub.f32 %v4155, %v4407
    %v4410 = vsub.f32 %v4156, %v4403
    %v4411 = vsub.f32 %v4157, %v4407
    %v4412 = vadd.f32 %v4398, 1e-05
    %v4413 = vadd.f32 %v4399, 1e-05
    %v4414 = vrsqrt.pop %v4412
    %v4415 = vrsqrt.pop %v4413
    %v4416 = vlaneseq
    %v4417 = vshrl.u32 %v4416, 7
    %v4418 = vsub.s32 0, %v4417
    %v4419 = vrot.slane %v4414, %v4418
    %v4420 = vlaneseq
    %v4421 = vshrl.u32 %v4420, 7
    %v4422 = vsub.s32 0, %v4421
    %v4423 = vrot.slane %v4415, %v4422
    %v4424 = vmul.f32 %v4408, %v4419
    %v4425 = vmul.f32 %v4409, %v4423
    %v4426 = vmul.f32 %v4410, %v4419
    %v4427 = vmul.f32 %v4411, %v4423
    %s4428 = scalar_lea.vmem [#allocation11], 4
    %v4429 = vld [vmem:[%s4428] ss:$8 sm:$0x3]
    %v4431 = vlaneseq
    %v4432 = vshrl.u32 %v4431, 7
    %v4433 = vsub.s32 0, %v4432
    %v4434 = vrot.slane %v4429, %v4433
    %v4435 = vlaneseq
    %v4436 = vshrl.u32 %v4435, 7
    %v4437 = vsub.s32 1, %v4436
    %v4438 = vrot.slane %v4429, %v4437
    %v4441 = vmul.f32 %v4424, %v4434
    %v4442 = vmul.f32 %v4425, %v4438
    %v4443 = vmul.f32 %v4426, %v4434
    %v4444 = vmul.f32 %v4427, %v4438
    %s4445 = scalar_lea.vmem [#allocation12], 4
    %v4446 = vld [vmem:[%s4445] ss:$8 sm:$0x3]
    %v4448 = vlaneseq
    %v4449 = vshrl.u32 %v4448, 7
    %v4450 = vsub.s32 0, %v4449
    %v4451 = vrot.slane %v4446, %v4450
    %v4452 = vlaneseq
    %v4453 = vshrl.u32 %v4452, 7
    %v4454 = vsub.s32 1, %v4453
    %v4455 = vrot.slane %v4446, %v4454
    %v4458 = vadd.f32 %v4441, %v4451
    %v4459 = vadd.f32 %v4442, %v4455
    %v4460 = vadd.f32 %v4443, %v4451
    %v4461 = vadd.f32 %v4444, %v4455
    %v4462 = vadd.f32 %v4458, %v2800
    %v4463 = vadd.f32 %v4459, %v2801
    %v4464 = vadd.f32 %v4460, %v2802
    %v4465 = vadd.f32 %v4461, %v2803
    %v4466 = vmax.f32 %v4462, 0.0
    %v4467 = vmax.f32 %v4463, 0.0
    %v4468 = vmax.f32 %v4464, 0.0
    %v4469 = vmax.f32 %v4465, 0.0
    %v4474 = vrot.slane %v4466, 7
    %v4475 = vrot.slane %v4467, 7
    %v4476 = vrot.slane %v4468, 7
    %v4477 = vrot.slane %v4469, 7
    %4482 = vst [vmem:[#allocation3] sm:$0xfe] %v4474
    %4483 = vst [vmem:[#allocation3 + $0x8] sm:$0xfe] %v4475
    %4484 = vst [vmem:[#allocation3 + $0x10] sm:$0x1] %v4474
    %4485 = vst [vmem:[#allocation3 + $0x18] sm:$0x1] %v4475
    %4486 = vst [vmem:[#allocation3 + $0x20] sm:$0xfe] %v4476
    %4487 = vst [vmem:[#allocation3 + $0x28] sm:$0xfe] %v4477
    %4488 = vst [vmem:[#allocation3 + $0x30] sm:$0x1] %v4476
    %4489 = vst [vmem:[#allocation3 + $0x38] sm:$0x1] %v4477
    %v4490 = vld [vmem:[#allocation3] sm:$0xff]
    %v4491 = vld [vmem:[#allocation3 + $0x8] sm:$0xff]
    %v4492 = vld [vmem:[#allocation3 + $0x20] sm:$0xff]
    %v4493 = vld [vmem:[#allocation3 + $0x28] sm:$0xff]
    %s4494 = scalar_lea.vmem [#allocation9], 6144
    %v4495 = vld [vmem:[%s4494] sm:$0xff]
    %v4496 = vld [vmem:[%s4494 + $0x8] sm:$0xff]
    %v4497 = vld [vmem:[%s4494 + $0x10] sm:$0xff]
    %v4498 = vld [vmem:[%s4494 + $0x18] sm:$0xff]
    %v4499 = vld [vmem:[%s4494 + $0x20] sm:$0xff]
    %v4500 = vld [vmem:[%s4494 + $0x28] sm:$0xff]
    %v4501 = vld [vmem:[%s4494 + $0x30] sm:$0xff]
    %v4502 = vld [vmem:[%s4494 + $0x38] sm:$0xff]
    %v4503 = vld [vmem:[%s4494 + $0x40] sm:$0xff]
    %v4504 = vld [vmem:[%s4494 + $0x48] sm:$0xff]
    %v4505 = vld [vmem:[%s4494 + $0x50] sm:$0xff]
    %v4506 = vld [vmem:[%s4494 + $0x58] sm:$0xff]
    %v4507 = vld [vmem:[%s4494 + $0x60] sm:$0xff]
    %v4508 = vld [vmem:[%s4494 + $0x68] sm:$0xff]
    %v4509 = vld [vmem:[%s4494 + $0x70] sm:$0xff]
    %v4510 = vld [vmem:[%s4494 + $0x78] sm:$0xff]
    %v4511 = vld [vmem:[%s4494 + $0x80] sm:$0xff]
    %v4512 = vld [vmem:[%s4494 + $0x88] sm:$0xff]
    %v4513 = vld [vmem:[%s4494 + $0x90] sm:$0xff]
    %v4514 = vld [vmem:[%s4494 + $0x98] sm:$0xff]
    %v4515 = vld [vmem:[%s4494 + $0xa0] sm:$0xff]
    %v4516 = vld [vmem:[%s4494 + $0xa8] sm:$0xff]
    %v4517 = vld [vmem:[%s4494 + $0xb0] sm:$0xff]
    %v4518 = vld [vmem:[%s4494 + $0xb8] sm:$0xff]
    %v4519 = vld [vmem:[%s4494 + $0xc0] sm:$0xff]
    %v4520 = vld [vmem:[%s4494 + $0xc8] sm:$0xff]
    %v4521 = vld [vmem:[%s4494 + $0xd0] sm:$0xff]
    %v4522 = vld [vmem:[%s4494 + $0xd8] sm:$0xff]
    %v4523 = vld [vmem:[%s4494 + $0xe0] sm:$0xff]
    %v4524 = vld [vmem:[%s4494 + $0xe8] sm:$0xff]
    %v4525 = vld [vmem:[%s4494 + $0xf0] sm:$0xff]
    %v4526 = vld [vmem:[%s4494 + $0xf8] sm:$0xff]
    %v4527 = vld [vmem:[%s4494 + $0x100] sm:$0xff]
    %v4528 = vld [vmem:[%s4494 + $0x108] sm:$0xff]
    %v4529 = vld [vmem:[%s4494 + $0x110] sm:$0xff]
    %v4530 = vld [vmem:[%s4494 + $0x118] sm:$0xff]
    %v4531 = vld [vmem:[%s4494 + $0x120] sm:$0xff]
    %v4532 = vld [vmem:[%s4494 + $0x128] sm:$0xff]
    %v4533 = vld [vmem:[%s4494 + $0x130] sm:$0xff]
    %v4534 = vld [vmem:[%s4494 + $0x138] sm:$0xff]
    %v4535 = vld [vmem:[%s4494 + $0x140] sm:$0xff]
    %v4536 = vld [vmem:[%s4494 + $0x148] sm:$0xff]
    %v4537 = vld [vmem:[%s4494 + $0x150] sm:$0xff]
    %v4538 = vld [vmem:[%s4494 + $0x158] sm:$0xff]
    %v4539 = vld [vmem:[%s4494 + $0x160] sm:$0xff]
    %v4540 = vld [vmem:[%s4494 + $0x168] sm:$0xff]
    %v4541 = vld [vmem:[%s4494 + $0x170] sm:$0xff]
    %v4542 = vld [vmem:[%s4494 + $0x178] sm:$0xff]
    %v4543 = vld [vmem:[%s4494 + $0x180] sm:$0xff]
    %v4544 = vld [vmem:[%s4494 + $0x188] sm:$0xff]
    %v4545 = vld [vmem:[%s4494 + $0x190] sm:$0xff]
    %v4546 = vld [vmem:[%s4494 + $0x198] sm:$0xff]
    %v4547 = vld [vmem:[%s4494 + $0x1a0] sm:$0xff]
    %v4548 = vld [vmem:[%s4494 + $0x1a8] sm:$0xff]
    %v4549 = vld [vmem:[%s4494 + $0x1b0] sm:$0xff]
    %v4550 = vld [vmem:[%s4494 + $0x1b8] sm:$0xff]
    %v4551 = vld [vmem:[%s4494 + $0x1c0] sm:$0xff]
    %v4552 = vld [vmem:[%s4494 + $0x1c8] sm:$0xff]
    %v4553 = vld [vmem:[%s4494 + $0x1d0] sm:$0xff]
    %v4554 = vld [vmem:[%s4494 + $0x1d8] sm:$0xff]
    %v4555 = vld [vmem:[%s4494 + $0x1e0] sm:$0xff]
    %v4556 = vld [vmem:[%s4494 + $0x1e8] sm:$0xff]
    %v4557 = vld [vmem:[%s4494 + $0x1f0] sm:$0xff]
    %v4558 = vld [vmem:[%s4494 + $0x1f8] sm:$0xff]
    %v4559 = vld [vmem:[#allocation3] sm:$0xfe]
    %v4560 = vld [vmem:[#allocation3 + $0x8] sm:$0xfe]
    %v4561 = vld [vmem:[#allocation3 + $0x10] sm:$0x1]
    %v4562 = vld [vmem:[#allocation3 + $0x18] sm:$0x1]
    %v4563 = vld [vmem:[#allocation3 + $0x20] sm:$0xfe]
    %v4564 = vld [vmem:[#allocation3 + $0x28] sm:$0xfe]
    %v4565 = vld [vmem:[#allocation3 + $0x30] sm:$0x1]
    %v4566 = vld [vmem:[#allocation3 + $0x38] sm:$0x1]
    %v4575 = vrot.slane %v4559, 1
    %v4576 = vrot.slane %v4561, 1
    %v4577 = vsel %vm1241, %v4575, %v4576
    %v4578 = vrot.slane %v4560, 1
    %v4579 = vrot.slane %v4562, 1
    %v4580 = vsel %vm1241, %v4578, %v4579
    %v4581 = vrot.slane %v4563, 1
    %v4582 = vrot.slane %v4565, 1
    %v4583 = vsel %vm1241, %v4581, %v4582
    %v4584 = vrot.slane %v4564, 1
    %v4585 = vrot.slane %v4566, 1
    %v4586 = vsel %vm1241, %v4584, %v4585
    %s4591 = scalar_lea.vmem [#allocation9], 6656
    %v4592 = vld [vmem:[%s4591] sm:$0xff]
    %v4593 = vld [vmem:[%s4591 + $0x8] sm:$0xff]
    %v4594 = vld [vmem:[%s4591 + $0x10] sm:$0xff]
    %v4595 = vld [vmem:[%s4591 + $0x18] sm:$0xff]
    %v4596 = vld [vmem:[%s4591 + $0x20] sm:$0xff]
    %v4597 = vld [vmem:[%s4591 + $0x28] sm:$0xff]
    %v4598 = vld [vmem:[%s4591 + $0x30] sm:$0xff]
    %v4599 = vld [vmem:[%s4591 + $0x38] sm:$0xff]
    %v4600 = vld [vmem:[%s4591 + $0x40] sm:$0xff]
    %v4601 = vld [vmem:[%s4591 + $0x48] sm:$0xff]
    %v4602 = vld [vmem:[%s4591 + $0x50] sm:$0xff]
    %v4603 = vld [vmem:[%s4591 + $0x58] sm:$0xff]
    %v4604 = vld [vmem:[%s4591 + $0x60] sm:$0xff]
    %v4605 = vld [vmem:[%s4591 + $0x68] sm:$0xff]
    %v4606 = vld [vmem:[%s4591 + $0x70] sm:$0xff]
    %v4607 = vld [vmem:[%s4591 + $0x78] sm:$0xff]
    %v4608 = vld [vmem:[%s4591 + $0x80] sm:$0xff]
    %v4609 = vld [vmem:[%s4591 + $0x88] sm:$0xff]
    %v4610 = vld [vmem:[%s4591 + $0x90] sm:$0xff]
    %v4611 = vld [vmem:[%s4591 + $0x98] sm:$0xff]
    %v4612 = vld [vmem:[%s4591 + $0xa0] sm:$0xff]
    %v4613 = vld [vmem:[%s4591 + $0xa8] sm:$0xff]
    %v4614 = vld [vmem:[%s4591 + $0xb0] sm:$0xff]
    %v4615 = vld [vmem:[%s4591 + $0xb8] sm:$0xff]
    %v4616 = vld [vmem:[%s4591 + $0xc0] sm:$0xff]
    %v4617 = vld [vmem:[%s4591 + $0xc8] sm:$0xff]
    %v4618 = vld [vmem:[%s4591 + $0xd0] sm:$0xff]
    %v4619 = vld [vmem:[%s4591 + $0xd8] sm:$0xff]
    %v4620 = vld [vmem:[%s4591 + $0xe0] sm:$0xff]
    %v4621 = vld [vmem:[%s4591 + $0xe8] sm:$0xff]
    %v4622 = vld [vmem:[%s4591 + $0xf0] sm:$0xff]
    %v4623 = vld [vmem:[%s4591 + $0xf8] sm:$0xff]
    %v4624 = vld [vmem:[%s4591 + $0x100] sm:$0xff]
    %v4625 = vld [vmem:[%s4591 + $0x108] sm:$0xff]
    %v4626 = vld [vmem:[%s4591 + $0x110] sm:$0xff]
    %v4627 = vld [vmem:[%s4591 + $0x118] sm:$0xff]
    %v4628 = vld [vmem:[%s4591 + $0x120] sm:$0xff]
    %v4629 = vld [vmem:[%s4591 + $0x128] sm:$0xff]
    %v4630 = vld [vmem:[%s4591 + $0x130] sm:$0xff]
    %v4631 = vld [vmem:[%s4591 + $0x138] sm:$0xff]
    %v4632 = vld [vmem:[%s4591 + $0x140] sm:$0xff]
    %v4633 = vld [vmem:[%s4591 + $0x148] sm:$0xff]
    %v4634 = vld [vmem:[%s4591 + $0x150] sm:$0xff]
    %v4635 = vld [vmem:[%s4591 + $0x158] sm:$0xff]
    %v4636 = vld [vmem:[%s4591 + $0x160] sm:$0xff]
    %v4637 = vld [vmem:[%s4591 + $0x168] sm:$0xff]
    %v4638 = vld [vmem:[%s4591 + $0x170] sm:$0xff]
    %v4639 = vld [vmem:[%s4591 + $0x178] sm:$0xff]
    %v4640 = vld [vmem:[%s4591 + $0x180] sm:$0xff]
    %v4641 = vld [vmem:[%s4591 + $0x188] sm:$0xff]
    %v4642 = vld [vmem:[%s4591 + $0x190] sm:$0xff]
    %v4643 = vld [vmem:[%s4591 + $0x198] sm:$0xff]
    %v4644 = vld [vmem:[%s4591 + $0x1a0] sm:$0xff]
    %v4645 = vld [vmem:[%s4591 + $0x1a8] sm:$0xff]
    %v4646 = vld [vmem:[%s4591 + $0x1b0] sm:$0xff]
    %v4647 = vld [vmem:[%s4591 + $0x1b8] sm:$0xff]
    %v4648 = vld [vmem:[%s4591 + $0x1c0] sm:$0xff]
    %v4649 = vld [vmem:[%s4591 + $0x1c8] sm:$0xff]
    %v4650 = vld [vmem:[%s4591 + $0x1d0] sm:$0xff]
    %v4651 = vld [vmem:[%s4591 + $0x1d8] sm:$0xff]
    %v4652 = vld [vmem:[%s4591 + $0x1e0] sm:$0xff]
    %v4653 = vld [vmem:[%s4591 + $0x1e8] sm:$0xff]
    %v4654 = vld [vmem:[%s4591 + $0x1f0] sm:$0xff]
    %v4655 = vld [vmem:[%s4591 + $0x1f8] sm:$0xff]
    %4656 = vmatprep.subr.mxu0 %v4623
    %4657 = vmatpush1.msra.mxu0 %v4622
    %4658 = vmatprep.subr.mxu0 %v4621
    %4659 = vmatpush1.msra.mxu0 %v4620
    %4660 = vmatprep.subr.mxu0 %v4619
    %4661 = vmatpush1.msra.mxu0 %v4618
    %4662 = vmatprep.subr.mxu0 %v4617
    %4663 = vmatpush1.msra.mxu0 %v4616
    %4664 = vmatprep.subr.mxu0 %v4615
    %4665 = vmatpush1.msra.mxu0 %v4614
    %4666 = vmatprep.subr.mxu0 %v4613
    %4667 = vmatpush1.msra.mxu0 %v4612
    %4668 = vmatprep.subr.mxu0 %v4611
    %4669 = vmatpush1.msra.mxu0 %v4610
    %4670 = vmatprep.subr.mxu0 %v4609
    %4671 = vmatpush1.msra.mxu0 %v4608
    %4672 = vmatprep.subr.mxu0 %v4607
    %4673 = vmatpush1.msra.mxu0 %v4606
    %4674 = vmatprep.subr.mxu0 %v4605
    %4675 = vmatpush1.msra.mxu0 %v4604
    %4676 = vmatprep.subr.mxu0 %v4603
    %4677 = vmatpush1.msra.mxu0 %v4602
    %4678 = vmatprep.subr.mxu0 %v4601
    %4679 = vmatpush1.msra.mxu0 %v4600
    %4680 = vmatprep.subr.mxu0 %v4599
    %4681 = vmatpush1.msra.mxu0 %v4598
    %4682 = vmatprep.subr.mxu0 %v4597
    %4683 = vmatpush1.msra.mxu0 %v4596
    %4684 = vmatprep.subr.mxu0 %v4595
    %4685 = vmatpush1.msra.mxu0 %v4594
    %4686 = vmatprep.subr.mxu0 %v4593
    %4687 = vmatpush1.msra.mxu0 %v4592
    %4688 = vmatprep.subr.mxu0 %v4655
    %4689 = vmatpush2.msra.mxu0 %v4654
    %4690 = vmatprep.subr.mxu0 %v4653
    %4691 = vmatpush2.msra.mxu0 %v4652
    %4692 = vmatprep.subr.mxu0 %v4651
    %4693 = vmatpush2.msra.mxu0 %v4650
    %4694 = vmatprep.subr.mxu0 %v4649
    %4695 = vmatpush2.msra.mxu0 %v4648
    %4696 = vmatprep.subr.mxu0 %v4647
    %4697 = vmatpush2.msra.mxu0 %v4646
    %4698 = vmatprep.subr.mxu0 %v4645
    %4699 = vmatpush2.msra.mxu0 %v4644
    %4700 = vmatprep.subr.mxu0 %v4643
    %4701 = vmatpush2.msra.mxu0 %v4642
    %4702 = vmatprep.subr.mxu0 %v4641
    %4703 = vmatpush2.msra.mxu0 %v4640
    %4704 = vmatprep.subr.mxu0 %v4639
    %4705 = vmatpush2.msra.mxu0 %v4638
    %4706 = vmatprep.subr.mxu0 %v4637
    %4707 = vmatpush2.msra.mxu0 %v4636
    %4708 = vmatprep.subr.mxu0 %v4635
    %4709 = vmatpush2.msra.mxu0 %v4634
    %4710 = vmatprep.subr.mxu0 %v4633
    %4711 = vmatpush2.msra.mxu0 %v4632
    %4712 = vmatprep.subr.mxu0 %v4631
    %4713 = vmatpush2.msra.mxu0 %v4630
    %4714 = vmatprep.subr.mxu0 %v4629
    %4715 = vmatpush2.msra.mxu0 %v4628
    %4716 = vmatprep.subr.mxu0 %v4627
    %4717 = vmatpush2.msra.mxu0 %v4626
    %4718 = vmatprep.subr.mxu0 %v4625
    %4719 = vmatpush2.msra.mxu0 %v4624
    %4720 = vmatprep.mubr.f32.mxu0 %v4580
    %4721 = vmatmul.mubr.f32.gmra.mxu0 %v4577
    %v4722 = vpop.f32.mrf.mxu0
    %v4723 = vadd.f32 0.0, %v4722
    %v4724 = vpop.f32.mrf.mxu0
    %v4725 = vadd.f32 0.0, %v4724
    %4726 = vmatprep.mubr.f32.mxu0 %v4586
    %4727 = vmatmul.mubr.f32.gmra.mxu0 %v4583
    %v4728 = vpop.f32.mrf.mxu0
    %v4729 = vadd.f32 0.0, %v4728
    %v4730 = vpop.f32.mrf.mxu0
    %v4731 = vadd.f32 0.0, %v4730
    %4732 = vdwg.mxu0
    %4733 = vmatprep.subr.mxu0 %v4526
    %4734 = vmatpush1.msra.mxu0 %v4525
    %4735 = vmatprep.subr.mxu0 %v4524
    %4736 = vmatpush1.msra.mxu0 %v4523
    %4737 = vmatprep.subr.mxu0 %v4522
    %4738 = vmatpush1.msra.mxu0 %v4521
    %4739 = vmatprep.subr.mxu0 %v4520
    %4740 = vmatpush1.msra.mxu0 %v4519
    %4741 = vmatprep.subr.mxu0 %v4518
    %4742 = vmatpush1.msra.mxu0 %v4517
    %4743 = vmatprep.subr.mxu0 %v4516
    %4744 = vmatpush1.msra.mxu0 %v4515
    %4745 = vmatprep.subr.mxu0 %v4514
    %4746 = vmatpush1.msra.mxu0 %v4513
    %4747 = vmatprep.subr.mxu0 %v4512
    %4748 = vmatpush1.msra.mxu0 %v4511
    %4749 = vmatprep.subr.mxu0 %v4510
    %4750 = vmatpush1.msra.mxu0 %v4509
    %4751 = vmatprep.subr.mxu0 %v4508
    %4752 = vmatpush1.msra.mxu0 %v4507
    %4753 = vmatprep.subr.mxu0 %v4506
    %4754 = vmatpush1.msra.mxu0 %v4505
    %4755 = vmatprep.subr.mxu0 %v4504
    %4756 = vmatpush1.msra.mxu0 %v4503
    %4757 = vmatprep.subr.mxu0 %v4502
    %4758 = vmatpush1.msra.mxu0 %v4501
    %4759 = vmatprep.subr.mxu0 %v4500
    %4760 = vmatpush1.msra.mxu0 %v4499
    %4761 = vmatprep.subr.mxu0 %v4498
    %4762 = vmatpush1.msra.mxu0 %v4497
    %4763 = vmatprep.subr.mxu0 %v4496
    %4764 = vmatpush1.msra.mxu0 %v4495
    %4765 = vmatprep.subr.mxu0 %v4558
    %4766 = vmatpush2.msra.mxu0 %v4557
    %4767 = vmatprep.subr.mxu0 %v4556
    %4768 = vmatpush2.msra.mxu0 %v4555
    %4769 = vmatprep.subr.mxu0 %v4554
    %4770 = vmatpush2.msra.mxu0 %v4553
    %4771 = vmatprep.subr.mxu0 %v4552
    %4772 = vmatpush2.msra.mxu0 %v4551
    %4773 = vmatprep.subr.mxu0 %v4550
    %4774 = vmatpush2.msra.mxu0 %v4549
    %4775 = vmatprep.subr.mxu0 %v4548
    %4776 = vmatpush2.msra.mxu0 %v4547
    %4777 = vmatprep.subr.mxu0 %v4546
    %4778 = vmatpush2.msra.mxu0 %v4545
    %4779 = vmatprep.subr.mxu0 %v4544
    %4780 = vmatpush2.msra.mxu0 %v4543
    %4781 = vmatprep.subr.mxu0 %v4542
    %4782 = vmatpush2.msra.mxu0 %v4541
    %4783 = vmatprep.subr.mxu0 %v4540
    %4784 = vmatpush2.msra.mxu0 %v4539
    %4785 = vmatprep.subr.mxu0 %v4538
    %4786 = vmatpush2.msra.mxu0 %v4537
    %4787 = vmatprep.subr.mxu0 %v4536
    %4788 = vmatpush2.msra.mxu0 %v4535
    %4789 = vmatprep.subr.mxu0 %v4534
    %4790 = vmatpush2.msra.mxu0 %v4533
    %4791 = vmatprep.subr.mxu0 %v4532
    %4792 = vmatpush2.msra.mxu0 %v4531
    %4793 = vmatprep.subr.mxu0 %v4530
    %4794 = vmatpush2.msra.mxu0 %v4529
    %4795 = vmatprep.subr.mxu0 %v4528
    %4796 = vmatpush2.msra.mxu0 %v4527
    %4797 = vmatprep.mubr.f32.mxu0 %v4491
    %4798 = vmatmul.mubr.f32.gmra.mxu0 %v4490
    %v4799 = vpop.f32.mrf.mxu0
    %v4800 = vadd.f32 %v4723, %v4799
    %v4801 = vpop.f32.mrf.mxu0
    %v4802 = vadd.f32 %v4725, %v4801
    %4803 = vmatprep.mubr.f32.mxu0 %v4493
    %4804 = vmatmul.mubr.f32.gmra.mxu0 %v4492
    %v4805 = vpop.f32.mrf.mxu0
    %v4806 = vadd.f32 %v4729, %v4805
    %v4807 = vpop.f32.mrf.mxu0
    %v4808 = vadd.f32 %v4731, %v4807
    %4809 = vdwg.mxu0
    %v4810 = vld [vmem:[#allocation3] sm:$0xfc]
    %v4811 = vld [vmem:[#allocation3 + $0x8] sm:$0xfc]
    %v4812 = vld [vmem:[#allocation3 + $0x10] sm:$0x3]
    %v4813 = vld [vmem:[#allocation3 + $0x18] sm:$0x3]
    %v4814 = vld [vmem:[#allocation3 + $0x20] sm:$0xfc]
    %v4815 = vld [vmem:[#allocation3 + $0x28] sm:$0xfc]
    %v4816 = vld [vmem:[#allocation3 + $0x30] sm:$0x3]
    %v4817 = vld [vmem:[#allocation3 + $0x38] sm:$0x3]
    %v4826 = vrot.slane %v4810, 2
    %v4827 = vrot.slane %v4812, 2
    %v4828 = vsel %vm1493, %v4826, %v4827
    %v4829 = vrot.slane %v4811, 2
    %v4830 = vrot.slane %v4813, 2
    %v4831 = vsel %vm1493, %v4829, %v4830
    %v4832 = vrot.slane %v4814, 2
    %v4833 = vrot.slane %v4816, 2
    %v4834 = vsel %vm1493, %v4832, %v4833
    %v4835 = vrot.slane %v4815, 2
    %v4836 = vrot.slane %v4817, 2
    %v4837 = vsel %vm1493, %v4835, %v4836
    %s4842 = scalar_lea.vmem [#allocation9], 7168
    %v4843 = vld [vmem:[%s4842] sm:$0xff]
    %v4844 = vld [vmem:[%s4842 + $0x8] sm:$0xff]
    %v4845 = vld [vmem:[%s4842 + $0x10] sm:$0xff]
    %v4846 = vld [vmem:[%s4842 + $0x18] sm:$0xff]
    %v4847 = vld [vmem:[%s4842 + $0x20] sm:$0xff]
    %v4848 = vld [vmem:[%s4842 + $0x28] sm:$0xff]
    %v4849 = vld [vmem:[%s4842 + $0x30] sm:$0xff]
    %v4850 = vld [vmem:[%s4842 + $0x38] sm:$0xff]
    %v4851 = vld [vmem:[%s4842 + $0x40] sm:$0xff]
    %v4852 = vld [vmem:[%s4842 + $0x48] sm:$0xff]
    %v4853 = vld [vmem:[%s4842 + $0x50] sm:$0xff]
    %v4854 = vld [vmem:[%s4842 + $0x58] sm:$0xff]
    %v4855 = vld [vmem:[%s4842 + $0x60] sm:$0xff]
    %v4856 = vld [vmem:[%s4842 + $0x68] sm:$0xff]
    %v4857 = vld [vmem:[%s4842 + $0x70] sm:$0xff]
    %v4858 = vld [vmem:[%s4842 + $0x78] sm:$0xff]
    %v4859 = vld [vmem:[%s4842 + $0x80] sm:$0xff]
    %v4860 = vld [vmem:[%s4842 + $0x88] sm:$0xff]
    %v4861 = vld [vmem:[%s4842 + $0x90] sm:$0xff]
    %v4862 = vld [vmem:[%s4842 + $0x98] sm:$0xff]
    %v4863 = vld [vmem:[%s4842 + $0xa0] sm:$0xff]
    %v4864 = vld [vmem:[%s4842 + $0xa8] sm:$0xff]
    %v4865 = vld [vmem:[%s4842 + $0xb0] sm:$0xff]
    %v4866 = vld [vmem:[%s4842 + $0xb8] sm:$0xff]
    %v4867 = vld [vmem:[%s4842 + $0xc0] sm:$0xff]
    %v4868 = vld [vmem:[%s4842 + $0xc8] sm:$0xff]
    %v4869 = vld [vmem:[%s4842 + $0xd0] sm:$0xff]
    %v4870 = vld [vmem:[%s4842 + $0xd8] sm:$0xff]
    %v4871 = vld [vmem:[%s4842 + $0xe0] sm:$0xff]
    %v4872 = vld [vmem:[%s4842 + $0xe8] sm:$0xff]
    %v4873 = vld [vmem:[%s4842 + $0xf0] sm:$0xff]
    %v4874 = vld [vmem:[%s4842 + $0xf8] sm:$0xff]
    %v4875 = vld [vmem:[%s4842 + $0x100] sm:$0xff]
    %v4876 = vld [vmem:[%s4842 + $0x108] sm:$0xff]
    %v4877 = vld [vmem:[%s4842 + $0x110] sm:$0xff]
    %v4878 = vld [vmem:[%s4842 + $0x118] sm:$0xff]
    %v4879 = vld [vmem:[%s4842 + $0x120] sm:$0xff]
    %v4880 = vld [vmem:[%s4842 + $0x128] sm:$0xff]
    %v4881 = vld [vmem:[%s4842 + $0x130] sm:$0xff]
    %v4882 = vld [vmem:[%s4842 + $0x138] sm:$0xff]
    %v4883 = vld [vmem:[%s4842 + $0x140] sm:$0xff]
    %v4884 = vld [vmem:[%s4842 + $0x148] sm:$0xff]
    %v4885 = vld [vmem:[%s4842 + $0x150] sm:$0xff]
    %v4886 = vld [vmem:[%s4842 + $0x158] sm:$0xff]
    %v4887 = vld [vmem:[%s4842 + $0x160] sm:$0xff]
    %v4888 = vld [vmem:[%s4842 + $0x168] sm:$0xff]
    %v4889 = vld [vmem:[%s4842 + $0x170] sm:$0xff]
    %v4890 = vld [vmem:[%s4842 + $0x178] sm:$0xff]
    %v4891 = vld [vmem:[%s4842 + $0x180] sm:$0xff]
    %v4892 = vld [vmem:[%s4842 + $0x188] sm:$0xff]
    %v4893 = vld [vmem:[%s4842 + $0x190] sm:$0xff]
    %v4894 = vld [vmem:[%s4842 + $0x198] sm:$0xff]
    %v4895 = vld [vmem:[%s4842 + $0x1a0] sm:$0xff]
    %v4896 = vld [vmem:[%s4842 + $0x1a8] sm:$0xff]
    %v4897 = vld [vmem:[%s4842 + $0x1b0] sm:$0xff]
    %v4898 = vld [vmem:[%s4842 + $0x1b8] sm:$0xff]
    %v4899 = vld [vmem:[%s4842 + $0x1c0] sm:$0xff]
    %v4900 = vld [vmem:[%s4842 + $0x1c8] sm:$0xff]
    %v4901 = vld [vmem:[%s4842 + $0x1d0] sm:$0xff]
    %v4902 = vld [vmem:[%s4842 + $0x1d8] sm:$0xff]
    %v4903 = vld [vmem:[%s4842 + $0x1e0] sm:$0xff]
    %v4904 = vld [vmem:[%s4842 + $0x1e8] sm:$0xff]
    %v4905 = vld [vmem:[%s4842 + $0x1f0] sm:$0xff]
    %v4906 = vld [vmem:[%s4842 + $0x1f8] sm:$0xff]
    %4907 = vmatprep.subr.mxu0 %v4874
    %4908 = vmatpush1.msra.mxu0 %v4873
    %4909 = vmatprep.subr.mxu0 %v4872
    %4910 = vmatpush1.msra.mxu0 %v4871
    %4911 = vmatprep.subr.mxu0 %v4870
    %4912 = vmatpush1.msra.mxu0 %v4869
    %4913 = vmatprep.subr.mxu0 %v4868
    %4914 = vmatpush1.msra.mxu0 %v4867
    %4915 = vmatprep.subr.mxu0 %v4866
    %4916 = vmatpush1.msra.mxu0 %v4865
    %4917 = vmatprep.subr.mxu0 %v4864
    %4918 = vmatpush1.msra.mxu0 %v4863
    %4919 = vmatprep.subr.mxu0 %v4862
    %4920 = vmatpush1.msra.mxu0 %v4861
    %4921 = vmatprep.subr.mxu0 %v4860
    %4922 = vmatpush1.msra.mxu0 %v4859
    %4923 = vmatprep.subr.mxu0 %v4858
    %4924 = vmatpush1.msra.mxu0 %v4857
    %4925 = vmatprep.subr.mxu0 %v4856
    %4926 = vmatpush1.msra.mxu0 %v4855
    %4927 = vmatprep.subr.mxu0 %v4854
    %4928 = vmatpush1.msra.mxu0 %v4853
    %4929 = vmatprep.subr.mxu0 %v4852
    %4930 = vmatpush1.msra.mxu0 %v4851
    %4931 = vmatprep.subr.mxu0 %v4850
    %4932 = vmatpush1.msra.mxu0 %v4849
    %4933 = vmatprep.subr.mxu0 %v4848
    %4934 = vmatpush1.msra.mxu0 %v4847
    %4935 = vmatprep.subr.mxu0 %v4846
    %4936 = vmatpush1.msra.mxu0 %v4845
    %4937 = vmatprep.subr.mxu0 %v4844
    %4938 = vmatpush1.msra.mxu0 %v4843
    %4939 = vmatprep.subr.mxu0 %v4906
    %4940 = vmatpush2.msra.mxu0 %v4905
    %4941 = vmatprep.subr.mxu0 %v4904
    %4942 = vmatpush2.msra.mxu0 %v4903
    %4943 = vmatprep.subr.mxu0 %v4902
    %4944 = vmatpush2.msra.mxu0 %v4901
    %4945 = vmatprep.subr.mxu0 %v4900
    %4946 = vmatpush2.msra.mxu0 %v4899
    %4947 = vmatprep.subr.mxu0 %v4898
    %4948 = vmatpush2.msra.mxu0 %v4897
    %4949 = vmatprep.subr.mxu0 %v4896
    %4950 = vmatpush2.msra.mxu0 %v4895
    %4951 = vmatprep.subr.mxu0 %v4894
    %4952 = vmatpush2.msra.mxu0 %v4893
    %4953 = vmatprep.subr.mxu0 %v4892
    %4954 = vmatpush2.msra.mxu0 %v4891
    %4955 = vmatprep.subr.mxu0 %v4890
    %4956 = vmatpush2.msra.mxu0 %v4889
    %4957 = vmatprep.subr.mxu0 %v4888
    %4958 = vmatpush2.msra.mxu0 %v4887
    %4959 = vmatprep.subr.mxu0 %v4886
    %4960 = vmatpush2.msra.mxu0 %v4885
    %4961 = vmatprep.subr.mxu0 %v4884
    %4962 = vmatpush2.msra.mxu0 %v4883
    %4963 = vmatprep.subr.mxu0 %v4882
    %4964 = vmatpush2.msra.mxu0 %v4881
    %4965 = vmatprep.subr.mxu0 %v4880
    %4966 = vmatpush2.msra.mxu0 %v4879
    %4967 = vmatprep.subr.mxu0 %v4878
    %4968 = vmatpush2.msra.mxu0 %v4877
    %4969 = vmatprep.subr.mxu0 %v4876
    %4970 = vmatpush2.msra.mxu0 %v4875
    %4971 = vmatprep.mubr.f32.mxu0 %v4831
    %4972 = vmatmul.mubr.f32.gmra.mxu0 %v4828
    %v4973 = vpop.f32.mrf.mxu0
    %v4974 = vadd.f32 0.0, %v4973
    %v4975 = vpop.f32.mrf.mxu0
    %v4976 = vadd.f32 0.0, %v4975
    %4977 = vmatprep.mubr.f32.mxu0 %v4837
    %4978 = vmatmul.mubr.f32.gmra.mxu0 %v4834
    %v4979 = vpop.f32.mrf.mxu0
    %v4980 = vadd.f32 0.0, %v4979
    %v4981 = vpop.f32.mrf.mxu0
    %v4982 = vadd.f32 0.0, %v4981
    %4983 = vdwg.mxu0
    %v4984 = vadd.f32 %v4800, %v4974
    %v4985 = vadd.f32 %v4802, %v4976
    %v4986 = vadd.f32 %v4806, %v4980
    %v4987 = vadd.f32 %v4808, %v4982
    %v4988 = vadd.f32 %v4984, %v4986
    %v4989 = vrot.slane %v4988, 4
    %v4990 = vadd.f32 %v4988, %v4989
    %v4991 = vrot.slane %v4990, 2
    %v4992 = vadd.f32 %v4990, %v4991
    %v4993 = vrot.slane %v4992, 1
    %v4994 = vadd.f32 %v4992, %v4993
    %v4995 = vadd.f32 %v4985, %v4987
    %v4996 = vrot.slane %v4995, 4
    %v4997 = vadd.f32 %v4995, %v4996
    %v4998 = vrot.slane %v4997, 2
    %v4999 = vadd.f32 %v4997, %v4998
    %v5000 = vrot.slane %v4999, 1
    %v5001 = vadd.f32 %v4999, %v5000
    %v5002 = vmul.f32 %v4984, %v4984
    %v5003 = vmul.f32 %v4985, %v4985
    %v5004 = vmul.f32 %v4986, %v4986
    %v5005 = vmul.f32 %v4987, %v4987
    %v5006 = vadd.f32 %v5002, %v5004
    %v5007 = vrot.slane %v5006, 4
    %v5008 = vadd.f32 %v5006, %v5007
    %v5009 = vrot.slane %v5008, 2
    %v5010 = vadd.f32 %v5008, %v5009
    %v5011 = vrot.slane %v5010, 1
    %v5012 = vadd.f32 %v5010, %v5011
    %v5013 = vadd.f32 %v5003, %v5005
    %v5014 = vrot.slane %v5013, 4
    %v5015 = vadd.f32 %v5013, %v5014
    %v5016 = vrot.slane %v5015, 2
    %v5017 = vadd.f32 %v5015, %v5016
    %v5018 = vrot.slane %v5017, 1
    %v5019 = vadd.f32 %v5017, %v5018
    %v5020 = vld [vmem:[#allocation14] sm:$0xff]
    %v5021 = vld [vmem:[#allocation14 + $0x8] sm:$0xff]
    %v5022 = vld [vmem:[#allocation14 + $0x10] sm:$0xff]
    %v5023 = vld [vmem:[#allocation14 + $0x18] sm:$0xff]
    %v5024 = vld [vmem:[#allocation14 + $0x20] sm:$0xff]
    %v5025 = vld [vmem:[#allocation14 + $0x28] sm:$0xff]
    %v5026 = vld [vmem:[#allocation14 + $0x30] sm:$0xff]
    %v5027 = vld [vmem:[#allocation14 + $0x38] sm:$0xff]
    %v5028 = vld [vmem:[#allocation14 + $0x40] sm:$0xff]
    %v5029 = vld [vmem:[#allocation14 + $0x48] sm:$0xff]
    %v5030 = vld [vmem:[#allocation14 + $0x50] sm:$0xff]
    %v5031 = vld [vmem:[#allocation14 + $0x58] sm:$0xff]
    %v5032 = vld [vmem:[#allocation14 + $0x60] sm:$0xff]
    %v5033 = vld [vmem:[#allocation14 + $0x68] sm:$0xff]
    %v5034 = vld [vmem:[#allocation14 + $0x70] sm:$0xff]
    %v5035 = vld [vmem:[#allocation14 + $0x78] sm:$0xff]
    %v5036 = vld [vmem:[#allocation14 + $0x80] sm:$0xff]
    %v5037 = vld [vmem:[#allocation14 + $0x88] sm:$0xff]
    %v5038 = vld [vmem:[#allocation14 + $0x90] sm:$0xff]
    %v5039 = vld [vmem:[#allocation14 + $0x98] sm:$0xff]
    %v5040 = vld [vmem:[#allocation14 + $0xa0] sm:$0xff]
    %v5041 = vld [vmem:[#allocation14 + $0xa8] sm:$0xff]
    %v5042 = vld [vmem:[#allocation14 + $0xb0] sm:$0xff]
    %v5043 = vld [vmem:[#allocation14 + $0xb8] sm:$0xff]
    %v5044 = vld [vmem:[#allocation14 + $0xc0] sm:$0xff]
    %v5045 = vld [vmem:[#allocation14 + $0xc8] sm:$0xff]
    %v5046 = vld [vmem:[#allocation14 + $0xd0] sm:$0xff]
    %v5047 = vld [vmem:[#allocation14 + $0xd8] sm:$0xff]
    %v5048 = vld [vmem:[#allocation14 + $0xe0] sm:$0xff]
    %v5049 = vld [vmem:[#allocation14 + $0xe8] sm:$0xff]
    %v5050 = vld [vmem:[#allocation14 + $0xf0] sm:$0xff]
    %v5051 = vld [vmem:[#allocation14 + $0xf8] sm:$0xff]
    %v5052 = vld [vmem:[#allocation14 + $0x100] sm:$0xff]
    %v5053 = vld [vmem:[#allocation14 + $0x108] sm:$0xff]
    %v5054 = vld [vmem:[#allocation14 + $0x110] sm:$0xff]
    %v5055 = vld [vmem:[#allocation14 + $0x118] sm:$0xff]
    %v5056 = vld [vmem:[#allocation14 + $0x120] sm:$0xff]
    %v5057 = vld [vmem:[#allocation14 + $0x128] sm:$0xff]
    %v5058 = vld [vmem:[#allocation14 + $0x130] sm:$0xff]
    %v5059 = vld [vmem:[#allocation14 + $0x138] sm:$0xff]
    %v5060 = vld [vmem:[#allocation14 + $0x140] sm:$0xff]
    %v5061 = vld [vmem:[#allocation14 + $0x148] sm:$0xff]
    %v5062 = vld [vmem:[#allocation14 + $0x150] sm:$0xff]
    %v5063 = vld [vmem:[#allocation14 + $0x158] sm:$0xff]
    %v5064 = vld [vmem:[#allocation14 + $0x160] sm:$0xff]
    %v5065 = vld [vmem:[#allocation14 + $0x168] sm:$0xff]
    %v5066 = vld [vmem:[#allocation14 + $0x170] sm:$0xff]
    %v5067 = vld [vmem:[#allocation14 + $0x178] sm:$0xff]
    %v5068 = vld [vmem:[#allocation14 + $0x180] sm:$0xff]
    %v5069 = vld [vmem:[#allocation14 + $0x188] sm:$0xff]
    %v5070 = vld [vmem:[#allocation14 + $0x190] sm:$0xff]
    %v5071 = vld [vmem:[#allocation14 + $0x198] sm:$0xff]
    %v5072 = vld [vmem:[#allocation14 + $0x1a0] sm:$0xff]
    %v5073 = vld [vmem:[#allocation14 + $0x1a8] sm:$0xff]
    %v5074 = vld [vmem:[#allocation14 + $0x1b0] sm:$0xff]
    %v5075 = vld [vmem:[#allocation14 + $0x1b8] sm:$0xff]
    %v5076 = vld [vmem:[#allocation14 + $0x1c0] sm:$0xff]
    %v5077 = vld [vmem:[#allocation14 + $0x1c8] sm:$0xff]
    %v5078 = vld [vmem:[#allocation14 + $0x1d0] sm:$0xff]
    %v5079 = vld [vmem:[#allocation14 + $0x1d8] sm:$0xff]
    %v5080 = vld [vmem:[#allocation14 + $0x1e0] sm:$0xff]
    %v5081 = vld [vmem:[#allocation14 + $0x1e8] sm:$0xff]
    %v5082 = vld [vmem:[#allocation14 + $0x1f0] sm:$0xff]
    %v5083 = vld [vmem:[#allocation14 + $0x1f8] sm:$0xff]
    %5084 = vmatprep.subr.mxu0 %v5051
    %5085 = vmatpush1.msra.mxu0 %v5050
    %5086 = vmatprep.subr.mxu0 %v5049
    %5087 = vmatpush1.msra.mxu0 %v5048
    %5088 = vmatprep.subr.mxu0 %v5047
    %5089 = vmatpush1.msra.mxu0 %v5046
    %5090 = vmatprep.subr.mxu0 %v5045
    %5091 = vmatpush1.msra.mxu0 %v5044
    %5092 = vmatprep.subr.mxu0 %v5043
    %5093 = vmatpush1.msra.mxu0 %v5042
    %5094 = vmatprep.subr.mxu0 %v5041
    %5095 = vmatpush1.msra.mxu0 %v5040
    %5096 = vmatprep.subr.mxu0 %v5039
    %5097 = vmatpush1.msra.mxu0 %v5038
    %5098 = vmatprep.subr.mxu0 %v5037
    %5099 = vmatpush1.msra.mxu0 %v5036
    %5100 = vmatprep.subr.mxu0 %v5035
    %5101 = vmatpush1.msra.mxu0 %v5034
    %5102 = vmatprep.subr.mxu0 %v5033
    %5103 = vmatpush1.msra.mxu0 %v5032
    %5104 = vmatprep.subr.mxu0 %v5031
    %5105 = vmatpush1.msra.mxu0 %v5030
    %5106 = vmatprep.subr.mxu0 %v5029
    %5107 = vmatpush1.msra.mxu0 %v5028
    %5108 = vmatprep.subr.mxu0 %v5027
    %5109 = vmatpush1.msra.mxu0 %v5026
    %5110 = vmatprep.subr.mxu0 %v5025
    %5111 = vmatpush1.msra.mxu0 %v5024
    %5112 = vmatprep.subr.mxu0 %v5023
    %5113 = vmatpush1.msra.mxu0 %v5022
    %5114 = vmatprep.subr.mxu0 %v5021
    %5115 = vmatpush1.msra.mxu0 %v5020
    %5116 = vmatprep.subr.mxu0 %v5083
    %5117 = vmatpush2.msra.mxu0 %v5082
    %5118 = vmatprep.subr.mxu0 %v5081
    %5119 = vmatpush2.msra.mxu0 %v5080
    %5120 = vmatprep.subr.mxu0 %v5079
    %5121 = vmatpush2.msra.mxu0 %v5078
    %5122 = vmatprep.subr.mxu0 %v5077
    %5123 = vmatpush2.msra.mxu0 %v5076
    %5124 = vmatprep.subr.mxu0 %v5075
    %5125 = vmatpush2.msra.mxu0 %v5074
    %5126 = vmatprep.subr.mxu0 %v5073
    %5127 = vmatpush2.msra.mxu0 %v5072
    %5128 = vmatprep.subr.mxu0 %v5071
    %5129 = vmatpush2.msra.mxu0 %v5070
    %5130 = vmatprep.subr.mxu0 %v5069
    %5131 = vmatpush2.msra.mxu0 %v5068
    %5132 = vmatprep.subr.mxu0 %v5067
    %5133 = vmatpush2.msra.mxu0 %v5066
    %5134 = vmatprep.subr.mxu0 %v5065
    %5135 = vmatpush2.msra.mxu0 %v5064
    %5136 = vmatprep.subr.mxu0 %v5063
    %5137 = vmatpush2.msra.mxu0 %v5062
    %5138 = vmatprep.subr.mxu0 %v5061
    %5139 = vmatpush2.msra.mxu0 %v5060
    %5140 = vmatprep.subr.mxu0 %v5059
    %5141 = vmatpush2.msra.mxu0 %v5058
    %5142 = vmatprep.subr.mxu0 %v5057
    %5143 = vmatpush2.msra.mxu0 %v5056
    %5144 = vmatprep.subr.mxu0 %v5055
    %5145 = vmatpush2.msra.mxu0 %v5054
    %5146 = vmatprep.subr.mxu0 %v5053
    %5147 = vmatpush2.msra.mxu0 %v5052
    %5148 = vmatprep.mubr.f32.mxu0 %v5001
    %5149 = vmatmul.mubr.f32.gmra.mxu0 %v4994
    %v5150 = vpop.f32.mrf.mxu0
    %v5151 = vadd.f32 0.0, %v5150
    %v5152 = vpop.f32.mrf.mxu0
    %v5153 = vadd.f32 0.0, %v5152
    %5154 = vdwg.mxu0
    %5155 = vmatprep.subr.mxu0 %v5051
    %5156 = vmatpush1.msra.mxu0 %v5050
    %5157 = vmatprep.subr.mxu0 %v5049
    %5158 = vmatpush1.msra.mxu0 %v5048
    %5159 = vmatprep.subr.mxu0 %v5047
    %5160 = vmatpush1.msra.mxu0 %v5046
    %5161 = vmatprep.subr.mxu0 %v5045
    %5162 = vmatpush1.msra.mxu0 %v5044
    %5163 = vmatprep.subr.mxu0 %v5043
    %5164 = vmatpush1.msra.mxu0 %v5042
    %5165 = vmatprep.subr.mxu0 %v5041
    %5166 = vmatpush1.msra.mxu0 %v5040
    %5167 = vmatprep.subr.mxu0 %v5039
    %5168 = vmatpush1.msra.mxu0 %v5038
    %5169 = vmatprep.subr.mxu0 %v5037
    %5170 = vmatpush1.msra.mxu0 %v5036
    %5171 = vmatprep.subr.mxu0 %v5035
    %5172 = vmatpush1.msra.mxu0 %v5034
    %5173 = vmatprep.subr.mxu0 %v5033
    %5174 = vmatpush1.msra.mxu0 %v5032
    %5175 = vmatprep.subr.mxu0 %v5031
    %5176 = vmatpush1.msra.mxu0 %v5030
    %5177 = vmatprep.subr.mxu0 %v5029
    %5178 = vmatpush1.msra.mxu0 %v5028
    %5179 = vmatprep.subr.mxu0 %v5027
    %5180 = vmatpush1.msra.mxu0 %v5026
    %5181 = vmatprep.subr.mxu0 %v5025
    %5182 = vmatpush1.msra.mxu0 %v5024
    %5183 = vmatprep.subr.mxu0 %v5023
    %5184 = vmatpush1.msra.mxu0 %v5022
    %5185 = vmatprep.subr.mxu0 %v5021
    %5186 = vmatpush1.msra.mxu0 %v5020
    %5187 = vmatprep.subr.mxu0 %v5083
    %5188 = vmatpush2.msra.mxu0 %v5082
    %5189 = vmatprep.subr.mxu0 %v5081
    %5190 = vmatpush2.msra.mxu0 %v5080
    %5191 = vmatprep.subr.mxu0 %v5079
    %5192 = vmatpush2.msra.mxu0 %v5078
    %5193 = vmatprep.subr.mxu0 %v5077
    %5194 = vmatpush2.msra.mxu0 %v5076
    %5195 = vmatprep.subr.mxu0 %v5075
    %5196 = vmatpush2.msra.mxu0 %v5074
    %5197 = vmatprep.subr.mxu0 %v5073
    %5198 = vmatpush2.msra.mxu0 %v5072
    %5199 = vmatprep.subr.mxu0 %v5071
    %5200 = vmatpush2.msra.mxu0 %v5070
    %5201 = vmatprep.subr.mxu0 %v5069
    %5202 = vmatpush2.msra.mxu0 %v5068
    %5203 = vmatprep.subr.mxu0 %v5067
    %5204 = vmatpush2.msra.mxu0 %v5066
    %5205 = vmatprep.subr.mxu0 %v5065
    %5206 = vmatpush2.msra.mxu0 %v5064
    %5207 = vmatprep.subr.mxu0 %v5063
    %5208 = vmatpush2.msra.mxu0 %v5062
    %5209 = vmatprep.subr.mxu0 %v5061
    %5210 = vmatpush2.msra.mxu0 %v5060
    %5211 = vmatprep.subr.mxu0 %v5059
    %5212 = vmatpush2.msra.mxu0 %v5058
    %5213 = vmatprep.subr.mxu0 %v5057
    %5214 = vmatpush2.msra.mxu0 %v5056
    %5215 = vmatprep.subr.mxu0 %v5055
    %5216 = vmatpush2.msra.mxu0 %v5054
    %5217 = vmatprep.subr.mxu0 %v5053
    %5218 = vmatpush2.msra.mxu0 %v5052
    %5219 = vmatprep.mubr.f32.mxu0 %v5019
    %5220 = vmatmul.mubr.f32.gmra.mxu0 %v5012
    %v5221 = vpop.f32.mrf.mxu0
    %v5222 = vadd.f32 0.0, %v5221
    %v5223 = vpop.f32.mrf.mxu0
    %v5224 = vadd.f32 0.0, %v5223
    %5225 = vdwg.mxu0
    %v5226 = vmul.f32 %v5151, %v5151
    %v5227 = vmul.f32 %v5153, %v5153
    %v5228 = vsub.f32 %v5222, %v5226
    %v5229 = vsub.f32 %v5224, %v5227
    %v5230 = vlaneseq
    %v5231 = vshrl.u32 %v5230, 7
    %v5232 = vsub.s32 0, %v5231
    %v5233 = vrot.slane %v5151, %v5232
    %v5234 = vlaneseq
    %v5235 = vshrl.u32 %v5234, 7
    %v5236 = vsub.s32 0, %v5235
    %v5237 = vrot.slane %v5153, %v5236
    %v5238 = vsub.f32 %v4984, %v5233
    %v5239 = vsub.f32 %v4985, %v5237
    %v5240 = vsub.f32 %v4986, %v5233
    %v5241 = vsub.f32 %v4987, %v5237
    %v5242 = vadd.f32 %v5228, 1e-05
    %v5243 = vadd.f32 %v5229, 1e-05
    %v5244 = vrsqrt.pop %v5242
    %v5245 = vrsqrt.pop %v5243
    %v5246 = vlaneseq
    %v5247 = vshrl.u32 %v5246, 7
    %v5248 = vsub.s32 0, %v5247
    %v5249 = vrot.slane %v5244, %v5248
    %v5250 = vlaneseq
    %v5251 = vshrl.u32 %v5250, 7
    %v5252 = vsub.s32 0, %v5251
    %v5253 = vrot.slane %v5245, %v5252
    %v5254 = vmul.f32 %v5238, %v5249
    %v5255 = vmul.f32 %v5239, %v5253
    %v5256 = vmul.f32 %v5240, %v5249
    %v5257 = vmul.f32 %v5241, %v5253
    %s5258 = scalar_lea.vmem [#allocation11], 5
    %v5259 = vld [vmem:[%s5258] ss:$8 sm:$0x3]
    %v5261 = vlaneseq
    %v5262 = vshrl.u32 %v5261, 7
    %v5263 = vsub.s32 0, %v5262
    %v5264 = vrot.slane %v5259, %v5263
    %v5265 = vlaneseq
    %v5266 = vshrl.u32 %v5265, 7
    %v5267 = vsub.s32 1, %v5266
    %v5268 = vrot.slane %v5259, %v5267
    %v5271 = vmul.f32 %v5254, %v5264
    %v5272 = vmul.f32 %v5255, %v5268
    %v5273 = vmul.f32 %v5256, %v5264
    %v5274 = vmul.f32 %v5257, %v5268
    %s5275 = scalar_lea.vmem [#allocation12], 5
    %v5276 = vld [vmem:[%s5275] ss:$8 sm:$0x3]
    %v5278 = vlaneseq
    %v5279 = vshrl.u32 %v5278, 7
    %v5280 = vsub.s32 0, %v5279
    %v5281 = vrot.slane %v5276, %v5280
    %v5282 = vlaneseq
    %v5283 = vshrl.u32 %v5282, 7
    %v5284 = vsub.s32 1, %v5283
    %v5285 = vrot.slane %v5276, %v5284
    %v5288 = vadd.f32 %v5271, %v5281
    %v5289 = vadd.f32 %v5272, %v5285
    %v5290 = vadd.f32 %v5273, %v5281
    %v5291 = vadd.f32 %v5274, %v5285
    %s5292 = sld [smem:[#allocation33 + $0x5]]
    %vm5293 = vcmp.ge.f32.partialorder %v5288, 0.0
    %vm5294 = vcmp.ge.f32.partialorder %v5289, 0.0
    %vm5295 = vcmp.ge.f32.partialorder %v5290, 0.0
    %vm5296 = vcmp.ge.f32.partialorder %v5291, 0.0
    %v5297 = vstv %s5292
    %v5298 = vmul.f32 %v5297, %v5288
    %v5299 = vmul.f32 %v5297, %v5289
    %v5300 = vmul.f32 %v5297, %v5290
    %v5301 = vmul.f32 %v5297, %v5291
    %v5302 = vsel %vm5293, %v5288, %v5298
    %v5303 = vsel %vm5294, %v5289, %v5299
    %v5304 = vsel %vm5295, %v5290, %v5300
    %v5305 = vsel %vm5296, %v5291, %v5301
    %v5310 = vrot.slane %v5302, 7
    %v5311 = vrot.slane %v5303, 7
    %v5312 = vrot.slane %v5304, 7
    %v5313 = vrot.slane %v5305, 7
    %5318 = vst [vmem:[#allocation3] sm:$0xfe] %v5310
    %5319 = vst [vmem:[#allocation3 + $0x8] sm:$0xfe] %v5311
    %5320 = vst [vmem:[#allocation3 + $0x10] sm:$0x1] %v5310
    %5321 = vst [vmem:[#allocation3 + $0x18] sm:$0x1] %v5311
    %5322 = vst [vmem:[#allocation3 + $0x20] sm:$0xfe] %v5312
    %5323 = vst [vmem:[#allocation3 + $0x28] sm:$0xfe] %v5313
    %5324 = vst [vmem:[#allocation3 + $0x30] sm:$0x1] %v5312
    %5325 = vst [vmem:[#allocation3 + $0x38] sm:$0x1] %v5313
    %v5326 = vld [vmem:[#allocation3] sm:$0xff]
    %v5327 = vld [vmem:[#allocation3 + $0x8] sm:$0xff]
    %v5328 = vld [vmem:[#allocation3 + $0x20] sm:$0xff]
    %v5329 = vld [vmem:[#allocation3 + $0x28] sm:$0xff]
    %s5330 = scalar_lea.vmem [#allocation9], 7680
    %v5331 = vld [vmem:[%s5330] sm:$0xff]
    %v5332 = vld [vmem:[%s5330 + $0x8] sm:$0xff]
    %v5333 = vld [vmem:[%s5330 + $0x10] sm:$0xff]
    %v5334 = vld [vmem:[%s5330 + $0x18] sm:$0xff]
    %v5335 = vld [vmem:[%s5330 + $0x20] sm:$0xff]
    %v5336 = vld [vmem:[%s5330 + $0x28] sm:$0xff]
    %v5337 = vld [vmem:[%s5330 + $0x30] sm:$0xff]
    %v5338 = vld [vmem:[%s5330 + $0x38] sm:$0xff]
    %v5339 = vld [vmem:[%s5330 + $0x40] sm:$0xff]
    %v5340 = vld [vmem:[%s5330 + $0x48] sm:$0xff]
    %v5341 = vld [vmem:[%s5330 + $0x50] sm:$0xff]
    %v5342 = vld [vmem:[%s5330 + $0x58] sm:$0xff]
    %v5343 = vld [vmem:[%s5330 + $0x60] sm:$0xff]
    %v5344 = vld [vmem:[%s5330 + $0x68] sm:$0xff]
    %v5345 = vld [vmem:[%s5330 + $0x70] sm:$0xff]
    %v5346 = vld [vmem:[%s5330 + $0x78] sm:$0xff]
    %v5347 = vld [vmem:[%s5330 + $0x80] sm:$0xff]
    %v5348 = vld [vmem:[%s5330 + $0x88] sm:$0xff]
    %v5349 = vld [vmem:[%s5330 + $0x90] sm:$0xff]
    %v5350 = vld [vmem:[%s5330 + $0x98] sm:$0xff]
    %v5351 = vld [vmem:[%s5330 + $0xa0] sm:$0xff]
    %v5352 = vld [vmem:[%s5330 + $0xa8] sm:$0xff]
    %v5353 = vld [vmem:[%s5330 + $0xb0] sm:$0xff]
    %v5354 = vld [vmem:[%s5330 + $0xb8] sm:$0xff]
    %v5355 = vld [vmem:[%s5330 + $0xc0] sm:$0xff]
    %v5356 = vld [vmem:[%s5330 + $0xc8] sm:$0xff]
    %v5357 = vld [vmem:[%s5330 + $0xd0] sm:$0xff]
    %v5358 = vld [vmem:[%s5330 + $0xd8] sm:$0xff]
    %v5359 = vld [vmem:[%s5330 + $0xe0] sm:$0xff]
    %v5360 = vld [vmem:[%s5330 + $0xe8] sm:$0xff]
    %v5361 = vld [vmem:[%s5330 + $0xf0] sm:$0xff]
    %v5362 = vld [vmem:[%s5330 + $0xf8] sm:$0xff]
    %v5363 = vld [vmem:[%s5330 + $0x100] sm:$0xff]
    %v5364 = vld [vmem:[%s5330 + $0x108] sm:$0xff]
    %v5365 = vld [vmem:[%s5330 + $0x110] sm:$0xff]
    %v5366 = vld [vmem:[%s5330 + $0x118] sm:$0xff]
    %v5367 = vld [vmem:[%s5330 + $0x120] sm:$0xff]
    %v5368 = vld [vmem:[%s5330 + $0x128] sm:$0xff]
    %v5369 = vld [vmem:[%s5330 + $0x130] sm:$0xff]
    %v5370 = vld [vmem:[%s5330 + $0x138] sm:$0xff]
    %v5371 = vld [vmem:[%s5330 + $0x140] sm:$0xff]
    %v5372 = vld [vmem:[%s5330 + $0x148] sm:$0xff]
    %v5373 = vld [vmem:[%s5330 + $0x150] sm:$0xff]
    %v5374 = vld [vmem:[%s5330 + $0x158] sm:$0xff]
    %v5375 = vld [vmem:[%s5330 + $0x160] sm:$0xff]
    %v5376 = vld [vmem:[%s5330 + $0x168] sm:$0xff]
    %v5377 = vld [vmem:[%s5330 + $0x170] sm:$0xff]
    %v5378 = vld [vmem:[%s5330 + $0x178] sm:$0xff]
    %v5379 = vld [vmem:[%s5330 + $0x180] sm:$0xff]
    %v5380 = vld [vmem:[%s5330 + $0x188] sm:$0xff]
    %v5381 = vld [vmem:[%s5330 + $0x190] sm:$0xff]
    %v5382 = vld [vmem:[%s5330 + $0x198] sm:$0xff]
    %v5383 = vld [vmem:[%s5330 + $0x1a0] sm:$0xff]
    %v5384 = vld [vmem:[%s5330 + $0x1a8] sm:$0xff]
    %v5385 = vld [vmem:[%s5330 + $0x1b0] sm:$0xff]
    %v5386 = vld [vmem:[%s5330 + $0x1b8] sm:$0xff]
    %v5387 = vld [vmem:[%s5330 + $0x1c0] sm:$0xff]
    %v5388 = vld [vmem:[%s5330 + $0x1c8] sm:$0xff]
    %v5389 = vld [vmem:[%s5330 + $0x1d0] sm:$0xff]
    %v5390 = vld [vmem:[%s5330 + $0x1d8] sm:$0xff]
    %v5391 = vld [vmem:[%s5330 + $0x1e0] sm:$0xff]
    %v5392 = vld [vmem:[%s5330 + $0x1e8] sm:$0xff]
    %v5393 = vld [vmem:[%s5330 + $0x1f0] sm:$0xff]
    %v5394 = vld [vmem:[%s5330 + $0x1f8] sm:$0xff]
    %v5395 = vld [vmem:[#allocation3] sm:$0xfe]
    %v5396 = vld [vmem:[#allocation3 + $0x8] sm:$0xfe]
    %v5397 = vld [vmem:[#allocation3 + $0x10] sm:$0x1]
    %v5398 = vld [vmem:[#allocation3 + $0x18] sm:$0x1]
    %v5399 = vld [vmem:[#allocation3 + $0x20] sm:$0xfe]
    %v5400 = vld [vmem:[#allocation3 + $0x28] sm:$0xfe]
    %v5401 = vld [vmem:[#allocation3 + $0x30] sm:$0x1]
    %v5402 = vld [vmem:[#allocation3 + $0x38] sm:$0x1]
    %v5411 = vrot.slane %v5395, 1
    %v5412 = vrot.slane %v5397, 1
    %v5413 = vsel %vm1241, %v5411, %v5412
    %v5414 = vrot.slane %v5396, 1
    %v5415 = vrot.slane %v5398, 1
    %v5416 = vsel %vm1241, %v5414, %v5415
    %v5417 = vrot.slane %v5399, 1
    %v5418 = vrot.slane %v5401, 1
    %v5419 = vsel %vm1241, %v5417, %v5418
    %v5420 = vrot.slane %v5400, 1
    %v5421 = vrot.slane %v5402, 1
    %v5422 = vsel %vm1241, %v5420, %v5421
    %s5427 = scalar_lea.vmem [#allocation9], 8192
    %v5428 = vld [vmem:[%s5427] sm:$0xff]
    %v5429 = vld [vmem:[%s5427 + $0x8] sm:$0xff]
    %v5430 = vld [vmem:[%s5427 + $0x10] sm:$0xff]
    %v5431 = vld [vmem:[%s5427 + $0x18] sm:$0xff]
    %v5432 = vld [vmem:[%s5427 + $0x20] sm:$0xff]
    %v5433 = vld [vmem:[%s5427 + $0x28] sm:$0xff]
    %v5434 = vld [vmem:[%s5427 + $0x30] sm:$0xff]
    %v5435 = vld [vmem:[%s5427 + $0x38] sm:$0xff]
    %v5436 = vld [vmem:[%s5427 + $0x40] sm:$0xff]
    %v5437 = vld [vmem:[%s5427 + $0x48] sm:$0xff]
    %v5438 = vld [vmem:[%s5427 + $0x50] sm:$0xff]
    %v5439 = vld [vmem:[%s5427 + $0x58] sm:$0xff]
    %v5440 = vld [vmem:[%s5427 + $0x60] sm:$0xff]
    %v5441 = vld [vmem:[%s5427 + $0x68] sm:$0xff]
    %v5442 = vld [vmem:[%s5427 + $0x70] sm:$0xff]
    %v5443 = vld [vmem:[%s5427 + $0x78] sm:$0xff]
    %v5444 = vld [vmem:[%s5427 + $0x80] sm:$0xff]
    %v5445 = vld [vmem:[%s5427 + $0x88] sm:$0xff]
    %v5446 = vld [vmem:[%s5427 + $0x90] sm:$0xff]
    %v5447 = vld [vmem:[%s5427 + $0x98] sm:$0xff]
    %v5448 = vld [vmem:[%s5427 + $0xa0] sm:$0xff]
    %v5449 = vld [vmem:[%s5427 + $0xa8] sm:$0xff]
    %v5450 = vld [vmem:[%s5427 + $0xb0] sm:$0xff]
    %v5451 = vld [vmem:[%s5427 + $0xb8] sm:$0xff]
    %v5452 = vld [vmem:[%s5427 + $0xc0] sm:$0xff]
    %v5453 = vld [vmem:[%s5427 + $0xc8] sm:$0xff]
    %v5454 = vld [vmem:[%s5427 + $0xd0] sm:$0xff]
    %v5455 = vld [vmem:[%s5427 + $0xd8] sm:$0xff]
    %v5456 = vld [vmem:[%s5427 + $0xe0] sm:$0xff]
    %v5457 = vld [vmem:[%s5427 + $0xe8] sm:$0xff]
    %v5458 = vld [vmem:[%s5427 + $0xf0] sm:$0xff]
    %v5459 = vld [vmem:[%s5427 + $0xf8] sm:$0xff]
    %v5460 = vld [vmem:[%s5427 + $0x100] sm:$0xff]
    %v5461 = vld [vmem:[%s5427 + $0x108] sm:$0xff]
    %v5462 = vld [vmem:[%s5427 + $0x110] sm:$0xff]
    %v5463 = vld [vmem:[%s5427 + $0x118] sm:$0xff]
    %v5464 = vld [vmem:[%s5427 + $0x120] sm:$0xff]
    %v5465 = vld [vmem:[%s5427 + $0x128] sm:$0xff]
    %v5466 = vld [vmem:[%s5427 + $0x130] sm:$0xff]
    %v5467 = vld [vmem:[%s5427 + $0x138] sm:$0xff]
    %v5468 = vld [vmem:[%s5427 + $0x140] sm:$0xff]
    %v5469 = vld [vmem:[%s5427 + $0x148] sm:$0xff]
    %v5470 = vld [vmem:[%s5427 + $0x150] sm:$0xff]
    %v5471 = vld [vmem:[%s5427 + $0x158] sm:$0xff]
    %v5472 = vld [vmem:[%s5427 + $0x160] sm:$0xff]
    %v5473 = vld [vmem:[%s5427 + $0x168] sm:$0xff]
    %v5474 = vld [vmem:[%s5427 + $0x170] sm:$0xff]
    %v5475 = vld [vmem:[%s5427 + $0x178] sm:$0xff]
    %v5476 = vld [vmem:[%s5427 + $0x180] sm:$0xff]
    %v5477 = vld [vmem:[%s5427 + $0x188] sm:$0xff]
    %v5478 = vld [vmem:[%s5427 + $0x190] sm:$0xff]
    %v5479 = vld [vmem:[%s5427 + $0x198] sm:$0xff]
    %v5480 = vld [vmem:[%s5427 + $0x1a0] sm:$0xff]
    %v5481 = vld [vmem:[%s5427 + $0x1a8] sm:$0xff]
    %v5482 = vld [vmem:[%s5427 + $0x1b0] sm:$0xff]
    %v5483 = vld [vmem:[%s5427 + $0x1b8] sm:$0xff]
    %v5484 = vld [vmem:[%s5427 + $0x1c0] sm:$0xff]
    %v5485 = vld [vmem:[%s5427 + $0x1c8] sm:$0xff]
    %v5486 = vld [vmem:[%s5427 + $0x1d0] sm:$0xff]
    %v5487 = vld [vmem:[%s5427 + $0x1d8] sm:$0xff]
    %v5488 = vld [vmem:[%s5427 + $0x1e0] sm:$0xff]
    %v5489 = vld [vmem:[%s5427 + $0x1e8] sm:$0xff]
    %v5490 = vld [vmem:[%s5427 + $0x1f0] sm:$0xff]
    %v5491 = vld [vmem:[%s5427 + $0x1f8] sm:$0xff]
    %5492 = vmatprep.subr.mxu0 %v5459
    %5493 = vmatpush1.msra.mxu0 %v5458
    %5494 = vmatprep.subr.mxu0 %v5457
    %5495 = vmatpush1.msra.mxu0 %v5456
    %5496 = vmatprep.subr.mxu0 %v5455
    %5497 = vmatpush1.msra.mxu0 %v5454
    %5498 = vmatprep.subr.mxu0 %v5453
    %5499 = vmatpush1.msra.mxu0 %v5452
    %5500 = vmatprep.subr.mxu0 %v5451
    %5501 = vmatpush1.msra.mxu0 %v5450
    %5502 = vmatprep.subr.mxu0 %v5449
    %5503 = vmatpush1.msra.mxu0 %v5448
    %5504 = vmatprep.subr.mxu0 %v5447
    %5505 = vmatpush1.msra.mxu0 %v5446
    %5506 = vmatprep.subr.mxu0 %v5445
    %5507 = vmatpush1.msra.mxu0 %v5444
    %5508 = vmatprep.subr.mxu0 %v5443
    %5509 = vmatpush1.msra.mxu0 %v5442
    %5510 = vmatprep.subr.mxu0 %v5441
    %5511 = vmatpush1.msra.mxu0 %v5440
    %5512 = vmatprep.subr.mxu0 %v5439
    %5513 = vmatpush1.msra.mxu0 %v5438
    %5514 = vmatprep.subr.mxu0 %v5437
    %5515 = vmatpush1.msra.mxu0 %v5436
    %5516 = vmatprep.subr.mxu0 %v5435
    %5517 = vmatpush1.msra.mxu0 %v5434
    %5518 = vmatprep.subr.mxu0 %v5433
    %5519 = vmatpush1.msra.mxu0 %v5432
    %5520 = vmatprep.subr.mxu0 %v5431
    %5521 = vmatpush1.msra.mxu0 %v5430
    %5522 = vmatprep.subr.mxu0 %v5429
    %5523 = vmatpush1.msra.mxu0 %v5428
    %5524 = vmatprep.subr.mxu0 %v5491
    %5525 = vmatpush2.msra.mxu0 %v5490
    %5526 = vmatprep.subr.mxu0 %v5489
    %5527 = vmatpush2.msra.mxu0 %v5488
    %5528 = vmatprep.subr.mxu0 %v5487
    %5529 = vmatpush2.msra.mxu0 %v5486
    %5530 = vmatprep.subr.mxu0 %v5485
    %5531 = vmatpush2.msra.mxu0 %v5484
    %5532 = vmatprep.subr.mxu0 %v5483
    %5533 = vmatpush2.msra.mxu0 %v5482
    %5534 = vmatprep.subr.mxu0 %v5481
    %5535 = vmatpush2.msra.mxu0 %v5480
    %5536 = vmatprep.subr.mxu0 %v5479
    %5537 = vmatpush2.msra.mxu0 %v5478
    %5538 = vmatprep.subr.mxu0 %v5477
    %5539 = vmatpush2.msra.mxu0 %v5476
    %5540 = vmatprep.subr.mxu0 %v5475
    %5541 = vmatpush2.msra.mxu0 %v5474
    %5542 = vmatprep.subr.mxu0 %v5473
    %5543 = vmatpush2.msra.mxu0 %v5472
    %5544 = vmatprep.subr.mxu0 %v5471
    %5545 = vmatpush2.msra.mxu0 %v5470
    %5546 = vmatprep.subr.mxu0 %v5469
    %5547 = vmatpush2.msra.mxu0 %v5468
    %5548 = vmatprep.subr.mxu0 %v5467
    %5549 = vmatpush2.msra.mxu0 %v5466
    %5550 = vmatprep.subr.mxu0 %v5465
    %5551 = vmatpush2.msra.mxu0 %v5464
    %5552 = vmatprep.subr.mxu0 %v5463
    %5553 = vmatpush2.msra.mxu0 %v5462
    %5554 = vmatprep.subr.mxu0 %v5461
    %5555 = vmatpush2.msra.mxu0 %v5460
    %5556 = vmatprep.mubr.f32.mxu0 %v5416
    %5557 = vmatmul.mubr.f32.gmra.mxu0 %v5413
    %v5558 = vpop.f32.mrf.mxu0
    %v5559 = vadd.f32 0.0, %v5558
    %v5560 = vpop.f32.mrf.mxu0
    %v5561 = vadd.f32 0.0, %v5560
    %5562 = vmatprep.mubr.f32.mxu0 %v5422
    %5563 = vmatmul.mubr.f32.gmra.mxu0 %v5419
    %v5564 = vpop.f32.mrf.mxu0
    %v5565 = vadd.f32 0.0, %v5564
    %v5566 = vpop.f32.mrf.mxu0
    %v5567 = vadd.f32 0.0, %v5566
    %5568 = vdwg.mxu0
    %5569 = vmatprep.subr.mxu0 %v5362
    %5570 = vmatpush1.msra.mxu0 %v5361
    %5571 = vmatprep.subr.mxu0 %v5360
    %5572 = vmatpush1.msra.mxu0 %v5359
    %5573 = vmatprep.subr.mxu0 %v5358
    %5574 = vmatpush1.msra.mxu0 %v5357
    %5575 = vmatprep.subr.mxu0 %v5356
    %5576 = vmatpush1.msra.mxu0 %v5355
    %5577 = vmatprep.subr.mxu0 %v5354
    %5578 = vmatpush1.msra.mxu0 %v5353
    %5579 = vmatprep.subr.mxu0 %v5352
    %5580 = vmatpush1.msra.mxu0 %v5351
    %5581 = vmatprep.subr.mxu0 %v5350
    %5582 = vmatpush1.msra.mxu0 %v5349
    %5583 = vmatprep.subr.mxu0 %v5348
    %5584 = vmatpush1.msra.mxu0 %v5347
    %5585 = vmatprep.subr.mxu0 %v5346
    %5586 = vmatpush1.msra.mxu0 %v5345
    %5587 = vmatprep.subr.mxu0 %v5344
    %5588 = vmatpush1.msra.mxu0 %v5343
    %5589 = vmatprep.subr.mxu0 %v5342
    %5590 = vmatpush1.msra.mxu0 %v5341
    %5591 = vmatprep.subr.mxu0 %v5340
    %5592 = vmatpush1.msra.mxu0 %v5339
    %5593 = vmatprep.subr.mxu0 %v5338
    %5594 = vmatpush1.msra.mxu0 %v5337
    %5595 = vmatprep.subr.mxu0 %v5336
    %5596 = vmatpush1.msra.mxu0 %v5335
    %5597 = vmatprep.subr.mxu0 %v5334
    %5598 = vmatpush1.msra.mxu0 %v5333
    %5599 = vmatprep.subr.mxu0 %v5332
    %5600 = vmatpush1.msra.mxu0 %v5331
    %5601 = vmatprep.subr.mxu0 %v5394
    %5602 = vmatpush2.msra.mxu0 %v5393
    %5603 = vmatprep.subr.mxu0 %v5392
    %5604 = vmatpush2.msra.mxu0 %v5391
    %5605 = vmatprep.subr.mxu0 %v5390
    %5606 = vmatpush2.msra.mxu0 %v5389
    %5607 = vmatprep.subr.mxu0 %v5388
    %5608 = vmatpush2.msra.mxu0 %v5387
    %5609 = vmatprep.subr.mxu0 %v5386
    %5610 = vmatpush2.msra.mxu0 %v5385
    %5611 = vmatprep.subr.mxu0 %v5384
    %5612 = vmatpush2.msra.mxu0 %v5383
    %5613 = vmatprep.subr.mxu0 %v5382
    %5614 = vmatpush2.msra.mxu0 %v5381
    %5615 = vmatprep.subr.mxu0 %v5380
    %5616 = vmatpush2.msra.mxu0 %v5379
    %5617 = vmatprep.subr.mxu0 %v5378
    %5618 = vmatpush2.msra.mxu0 %v5377
    %5619 = vmatprep.subr.mxu0 %v5376
    %5620 = vmatpush2.msra.mxu0 %v5375
    %5621 = vmatprep.subr.mxu0 %v5374
    %5622 = vmatpush2.msra.mxu0 %v5373
    %5623 = vmatprep.subr.mxu0 %v5372
    %5624 = vmatpush2.msra.mxu0 %v5371
    %5625 = vmatprep.subr.mxu0 %v5370
    %5626 = vmatpush2.msra.mxu0 %v5369
    %5627 = vmatprep.subr.mxu0 %v5368
    %5628 = vmatpush2.msra.mxu0 %v5367
    %5629 = vmatprep.subr.mxu0 %v5366
    %5630 = vmatpush2.msra.mxu0 %v5365
    %5631 = vmatprep.subr.mxu0 %v5364
    %5632 = vmatpush2.msra.mxu0 %v5363
    %5633 = vmatprep.mubr.f32.mxu0 %v5327
    %5634 = vmatmul.mubr.f32.gmra.mxu0 %v5326
    %v5635 = vpop.f32.mrf.mxu0
    %v5636 = vadd.f32 %v5559, %v5635
    %v5637 = vpop.f32.mrf.mxu0
    %v5638 = vadd.f32 %v5561, %v5637
    %5639 = vmatprep.mubr.f32.mxu0 %v5329
    %5640 = vmatmul.mubr.f32.gmra.mxu0 %v5328
    %v5641 = vpop.f32.mrf.mxu0
    %v5642 = vadd.f32 %v5565, %v5641
    %v5643 = vpop.f32.mrf.mxu0
    %v5644 = vadd.f32 %v5567, %v5643
    %5645 = vdwg.mxu0
    %v5646 = vld [vmem:[#allocation3] sm:$0xfc]
    %v5647 = vld [vmem:[#allocation3 + $0x8] sm:$0xfc]
    %v5648 = vld [vmem:[#allocation3 + $0x10] sm:$0x3]
    %v5649 = vld [vmem:[#allocation3 + $0x18] sm:$0x3]
    %v5650 = vld [vmem:[#allocation3 + $0x20] sm:$0xfc]
    %v5651 = vld [vmem:[#allocation3 + $0x28] sm:$0xfc]
    %v5652 = vld [vmem:[#allocation3 + $0x30] sm:$0x3]
    %v5653 = vld [vmem:[#allocation3 + $0x38] sm:$0x3]
    %v5662 = vrot.slane %v5646, 2
    %v5663 = vrot.slane %v5648, 2
    %v5664 = vsel %vm1493, %v5662, %v5663
    %v5665 = vrot.slane %v5647, 2
    %v5666 = vrot.slane %v5649, 2
    %v5667 = vsel %vm1493, %v5665, %v5666
    %v5668 = vrot.slane %v5650, 2
    %v5669 = vrot.slane %v5652, 2
    %v5670 = vsel %vm1493, %v5668, %v5669
    %v5671 = vrot.slane %v5651, 2
    %v5672 = vrot.slane %v5653, 2
    %v5673 = vsel %vm1493, %v5671, %v5672
    %s5678 = scalar_lea.vmem [#allocation9], 8704
    %v5679 = vld [vmem:[%s5678] sm:$0xff]
    %v5680 = vld [vmem:[%s5678 + $0x8] sm:$0xff]
    %v5681 = vld [vmem:[%s5678 + $0x10] sm:$0xff]
    %v5682 = vld [vmem:[%s5678 + $0x18] sm:$0xff]
    %v5683 = vld [vmem:[%s5678 + $0x20] sm:$0xff]
    %v5684 = vld [vmem:[%s5678 + $0x28] sm:$0xff]
    %v5685 = vld [vmem:[%s5678 + $0x30] sm:$0xff]
    %v5686 = vld [vmem:[%s5678 + $0x38] sm:$0xff]
    %v5687 = vld [vmem:[%s5678 + $0x40] sm:$0xff]
    %v5688 = vld [vmem:[%s5678 + $0x48] sm:$0xff]
    %v5689 = vld [vmem:[%s5678 + $0x50] sm:$0xff]
    %v5690 = vld [vmem:[%s5678 + $0x58] sm:$0xff]
    %v5691 = vld [vmem:[%s5678 + $0x60] sm:$0xff]
    %v5692 = vld [vmem:[%s5678 + $0x68] sm:$0xff]
    %v5693 = vld [vmem:[%s5678 + $0x70] sm:$0xff]
    %v5694 = vld [vmem:[%s5678 + $0x78] sm:$0xff]
    %v5695 = vld [vmem:[%s5678 + $0x80] sm:$0xff]
    %v5696 = vld [vmem:[%s5678 + $0x88] sm:$0xff]
    %v5697 = vld [vmem:[%s5678 + $0x90] sm:$0xff]
    %v5698 = vld [vmem:[%s5678 + $0x98] sm:$0xff]
    %v5699 = vld [vmem:[%s5678 + $0xa0] sm:$0xff]
    %v5700 = vld [vmem:[%s5678 + $0xa8] sm:$0xff]
    %v5701 = vld [vmem:[%s5678 + $0xb0] sm:$0xff]
    %v5702 = vld [vmem:[%s5678 + $0xb8] sm:$0xff]
    %v5703 = vld [vmem:[%s5678 + $0xc0] sm:$0xff]
    %v5704 = vld [vmem:[%s5678 + $0xc8] sm:$0xff]
    %v5705 = vld [vmem:[%s5678 + $0xd0] sm:$0xff]
    %v5706 = vld [vmem:[%s5678 + $0xd8] sm:$0xff]
    %v5707 = vld [vmem:[%s5678 + $0xe0] sm:$0xff]
    %v5708 = vld [vmem:[%s5678 + $0xe8] sm:$0xff]
    %v5709 = vld [vmem:[%s5678 + $0xf0] sm:$0xff]
    %v5710 = vld [vmem:[%s5678 + $0xf8] sm:$0xff]
    %v5711 = vld [vmem:[%s5678 + $0x100] sm:$0xff]
    %v5712 = vld [vmem:[%s5678 + $0x108] sm:$0xff]
    %v5713 = vld [vmem:[%s5678 + $0x110] sm:$0xff]
    %v5714 = vld [vmem:[%s5678 + $0x118] sm:$0xff]
    %v5715 = vld [vmem:[%s5678 + $0x120] sm:$0xff]
    %v5716 = vld [vmem:[%s5678 + $0x128] sm:$0xff]
    %v5717 = vld [vmem:[%s5678 + $0x130] sm:$0xff]
    %v5718 = vld [vmem:[%s5678 + $0x138] sm:$0xff]
    %v5719 = vld [vmem:[%s5678 + $0x140] sm:$0xff]
    %v5720 = vld [vmem:[%s5678 + $0x148] sm:$0xff]
    %v5721 = vld [vmem:[%s5678 + $0x150] sm:$0xff]
    %v5722 = vld [vmem:[%s5678 + $0x158] sm:$0xff]
    %v5723 = vld [vmem:[%s5678 + $0x160] sm:$0xff]
    %v5724 = vld [vmem:[%s5678 + $0x168] sm:$0xff]
    %v5725 = vld [vmem:[%s5678 + $0x170] sm:$0xff]
    %v5726 = vld [vmem:[%s5678 + $0x178] sm:$0xff]
    %v5727 = vld [vmem:[%s5678 + $0x180] sm:$0xff]
    %v5728 = vld [vmem:[%s5678 + $0x188] sm:$0xff]
    %v5729 = vld [vmem:[%s5678 + $0x190] sm:$0xff]
    %v5730 = vld [vmem:[%s5678 + $0x198] sm:$0xff]
    %v5731 = vld [vmem:[%s5678 + $0x1a0] sm:$0xff]
    %v5732 = vld [vmem:[%s5678 + $0x1a8] sm:$0xff]
    %v5733 = vld [vmem:[%s5678 + $0x1b0] sm:$0xff]
    %v5734 = vld [vmem:[%s5678 + $0x1b8] sm:$0xff]
    %v5735 = vld [vmem:[%s5678 + $0x1c0] sm:$0xff]
    %v5736 = vld [vmem:[%s5678 + $0x1c8] sm:$0xff]
    %v5737 = vld [vmem:[%s5678 + $0x1d0] sm:$0xff]
    %v5738 = vld [vmem:[%s5678 + $0x1d8] sm:$0xff]
    %v5739 = vld [vmem:[%s5678 + $0x1e0] sm:$0xff]
    %v5740 = vld [vmem:[%s5678 + $0x1e8] sm:$0xff]
    %v5741 = vld [vmem:[%s5678 + $0x1f0] sm:$0xff]
    %v5742 = vld [vmem:[%s5678 + $0x1f8] sm:$0xff]
    %5743 = vmatprep.subr.mxu0 %v5710
    %5744 = vmatpush1.msra.mxu0 %v5709
    %5745 = vmatprep.subr.mxu0 %v5708
    %5746 = vmatpush1.msra.mxu0 %v5707
    %5747 = vmatprep.subr.mxu0 %v5706
    %5748 = vmatpush1.msra.mxu0 %v5705
    %5749 = vmatprep.subr.mxu0 %v5704
    %5750 = vmatpush1.msra.mxu0 %v5703
    %5751 = vmatprep.subr.mxu0 %v5702
    %5752 = vmatpush1.msra.mxu0 %v5701
    %5753 = vmatprep.subr.mxu0 %v5700
    %5754 = vmatpush1.msra.mxu0 %v5699
    %5755 = vmatprep.subr.mxu0 %v5698
    %5756 = vmatpush1.msra.mxu0 %v5697
    %5757 = vmatprep.subr.mxu0 %v5696
    %5758 = vmatpush1.msra.mxu0 %v5695
    %5759 = vmatprep.subr.mxu0 %v5694
    %5760 = vmatpush1.msra.mxu0 %v5693
    %5761 = vmatprep.subr.mxu0 %v5692
    %5762 = vmatpush1.msra.mxu0 %v5691
    %5763 = vmatprep.subr.mxu0 %v5690
    %5764 = vmatpush1.msra.mxu0 %v5689
    %5765 = vmatprep.subr.mxu0 %v5688
    %5766 = vmatpush1.msra.mxu0 %v5687
    %5767 = vmatprep.subr.mxu0 %v5686
    %5768 = vmatpush1.msra.mxu0 %v5685
    %5769 = vmatprep.subr.mxu0 %v5684
    %5770 = vmatpush1.msra.mxu0 %v5683
    %5771 = vmatprep.subr.mxu0 %v5682
    %5772 = vmatpush1.msra.mxu0 %v5681
    %5773 = vmatprep.subr.mxu0 %v5680
    %5774 = vmatpush1.msra.mxu0 %v5679
    %5775 = vmatprep.subr.mxu0 %v5742
    %5776 = vmatpush2.msra.mxu0 %v5741
    %5777 = vmatprep.subr.mxu0 %v5740
    %5778 = vmatpush2.msra.mxu0 %v5739
    %5779 = vmatprep.subr.mxu0 %v5738
    %5780 = vmatpush2.msra.mxu0 %v5737
    %5781 = vmatprep.subr.mxu0 %v5736
    %5782 = vmatpush2.msra.mxu0 %v5735
    %5783 = vmatprep.subr.mxu0 %v5734
    %5784 = vmatpush2.msra.mxu0 %v5733
    %5785 = vmatprep.subr.mxu0 %v5732
    %5786 = vmatpush2.msra.mxu0 %v5731
    %5787 = vmatprep.subr.mxu0 %v5730
    %5788 = vmatpush2.msra.mxu0 %v5729
    %5789 = vmatprep.subr.mxu0 %v5728
    %5790 = vmatpush2.msra.mxu0 %v5727
    %5791 = vmatprep.subr.mxu0 %v5726
    %5792 = vmatpush2.msra.mxu0 %v5725
    %5793 = vmatprep.subr.mxu0 %v5724
    %5794 = vmatpush2.msra.mxu0 %v5723
    %5795 = vmatprep.subr.mxu0 %v5722
    %5796 = vmatpush2.msra.mxu0 %v5721
    %5797 = vmatprep.subr.mxu0 %v5720
    %5798 = vmatpush2.msra.mxu0 %v5719
    %5799 = vmatprep.subr.mxu0 %v5718
    %5800 = vmatpush2.msra.mxu0 %v5717
    %5801 = vmatprep.subr.mxu0 %v5716
    %5802 = vmatpush2.msra.mxu0 %v5715
    %5803 = vmatprep.subr.mxu0 %v5714
    %5804 = vmatpush2.msra.mxu0 %v5713
    %5805 = vmatprep.subr.mxu0 %v5712
    %5806 = vmatpush2.msra.mxu0 %v5711
    %5807 = vmatprep.mubr.f32.mxu0 %v5667
    %5808 = vmatmul.mubr.f32.gmra.mxu0 %v5664
    %v5809 = vpop.f32.mrf.mxu0
    %v5810 = vadd.f32 0.0, %v5809
    %v5811 = vpop.f32.mrf.mxu0
    %v5812 = vadd.f32 0.0, %v5811
    %5813 = vmatprep.mubr.f32.mxu0 %v5673
    %5814 = vmatmul.mubr.f32.gmra.mxu0 %v5670
    %v5815 = vpop.f32.mrf.mxu0
    %v5816 = vadd.f32 0.0, %v5815
    %v5817 = vpop.f32.mrf.mxu0
    %v5818 = vadd.f32 0.0, %v5817
    %5819 = vdwg.mxu0
    %v5820 = vadd.f32 %v5636, %v5810
    %v5821 = vadd.f32 %v5638, %v5812
    %v5822 = vadd.f32 %v5642, %v5816
    %v5823 = vadd.f32 %v5644, %v5818
    %v5824 = vadd.f32 %v5820, %v5822
    %v5825 = vrot.slane %v5824, 4
    %v5826 = vadd.f32 %v5824, %v5825
    %v5827 = vrot.slane %v5826, 2
    %v5828 = vadd.f32 %v5826, %v5827
    %v5829 = vrot.slane %v5828, 1
    %v5830 = vadd.f32 %v5828, %v5829
    %v5831 = vadd.f32 %v5821, %v5823
    %v5832 = vrot.slane %v5831, 4
    %v5833 = vadd.f32 %v5831, %v5832
    %v5834 = vrot.slane %v5833, 2
    %v5835 = vadd.f32 %v5833, %v5834
    %v5836 = vrot.slane %v5835, 1
    %v5837 = vadd.f32 %v5835, %v5836
    %v5838 = vmul.f32 %v5820, %v5820
    %v5839 = vmul.f32 %v5821, %v5821
    %v5840 = vmul.f32 %v5822, %v5822
    %v5841 = vmul.f32 %v5823, %v5823
    %v5842 = vadd.f32 %v5838, %v5840
    %v5843 = vrot.slane %v5842, 4
    %v5844 = vadd.f32 %v5842, %v5843
    %v5845 = vrot.slane %v5844, 2
    %v5846 = vadd.f32 %v5844, %v5845
    %v5847 = vrot.slane %v5846, 1
    %v5848 = vadd.f32 %v5846, %v5847
    %v5849 = vadd.f32 %v5839, %v5841
    %v5850 = vrot.slane %v5849, 4
    %v5851 = vadd.f32 %v5849, %v5850
    %v5852 = vrot.slane %v5851, 2
    %v5853 = vadd.f32 %v5851, %v5852
    %v5854 = vrot.slane %v5853, 1
    %v5855 = vadd.f32 %v5853, %v5854
    %v5856 = vld [vmem:[#allocation14] sm:$0xff]
    %v5857 = vld [vmem:[#allocation14 + $0x8] sm:$0xff]
    %v5858 = vld [vmem:[#allocation14 + $0x10] sm:$0xff]
    %v5859 = vld [vmem:[#allocation14 + $0x18] sm:$0xff]
    %v5860 = vld [vmem:[#allocation14 + $0x20] sm:$0xff]
    %v5861 = vld [vmem:[#allocation14 + $0x28] sm:$0xff]
    %v5862 = vld [vmem:[#allocation14 + $0x30] sm:$0xff]
    %v5863 = vld [vmem:[#allocation14 + $0x38] sm:$0xff]
    %v5864 = vld [vmem:[#allocation14 + $0x40] sm:$0xff]
    %v5865 = vld [vmem:[#allocation14 + $0x48] sm:$0xff]
    %v5866 = vld [vmem:[#allocation14 + $0x50] sm:$0xff]
    %v5867 = vld [vmem:[#allocation14 + $0x58] sm:$0xff]
    %v5868 = vld [vmem:[#allocation14 + $0x60] sm:$0xff]
    %v5869 = vld [vmem:[#allocation14 + $0x68] sm:$0xff]
    %v5870 = vld [vmem:[#allocation14 + $0x70] sm:$0xff]
    %v5871 = vld [vmem:[#allocation14 + $0x78] sm:$0xff]
    %v5872 = vld [vmem:[#allocation14 + $0x80] sm:$0xff]
    %v5873 = vld [vmem:[#allocation14 + $0x88] sm:$0xff]
    %v5874 = vld [vmem:[#allocation14 + $0x90] sm:$0xff]
    %v5875 = vld [vmem:[#allocation14 + $0x98] sm:$0xff]
    %v5876 = vld [vmem:[#allocation14 + $0xa0] sm:$0xff]
    %v5877 = vld [vmem:[#allocation14 + $0xa8] sm:$0xff]
    %v5878 = vld [vmem:[#allocation14 + $0xb0] sm:$0xff]
    %v5879 = vld [vmem:[#allocation14 + $0xb8] sm:$0xff]
    %v5880 = vld [vmem:[#allocation14 + $0xc0] sm:$0xff]
    %v5881 = vld [vmem:[#allocation14 + $0xc8] sm:$0xff]
    %v5882 = vld [vmem:[#allocation14 + $0xd0] sm:$0xff]
    %v5883 = vld [vmem:[#allocation14 + $0xd8] sm:$0xff]
    %v5884 = vld [vmem:[#allocation14 + $0xe0] sm:$0xff]
    %v5885 = vld [vmem:[#allocation14 + $0xe8] sm:$0xff]
    %v5886 = vld [vmem:[#allocation14 + $0xf0] sm:$0xff]
    %v5887 = vld [vmem:[#allocation14 + $0xf8] sm:$0xff]
    %v5888 = vld [vmem:[#allocation14 + $0x100] sm:$0xff]
    %v5889 = vld [vmem:[#allocation14 + $0x108] sm:$0xff]
    %v5890 = vld [vmem:[#allocation14 + $0x110] sm:$0xff]
    %v5891 = vld [vmem:[#allocation14 + $0x118] sm:$0xff]
    %v5892 = vld [vmem:[#allocation14 + $0x120] sm:$0xff]
    %v5893 = vld [vmem:[#allocation14 + $0x128] sm:$0xff]
    %v5894 = vld [vmem:[#allocation14 + $0x130] sm:$0xff]
    %v5895 = vld [vmem:[#allocation14 + $0x138] sm:$0xff]
    %v5896 = vld [vmem:[#allocation14 + $0x140] sm:$0xff]
    %v5897 = vld [vmem:[#allocation14 + $0x148] sm:$0xff]
    %v5898 = vld [vmem:[#allocation14 + $0x150] sm:$0xff]
    %v5899 = vld [vmem:[#allocation14 + $0x158] sm:$0xff]
    %v5900 = vld [vmem:[#allocation14 + $0x160] sm:$0xff]
    %v5901 = vld [vmem:[#allocation14 + $0x168] sm:$0xff]
    %v5902 = vld [vmem:[#allocation14 + $0x170] sm:$0xff]
    %v5903 = vld [vmem:[#allocation14 + $0x178] sm:$0xff]
    %v5904 = vld [vmem:[#allocation14 + $0x180] sm:$0xff]
    %v5905 = vld [vmem:[#allocation14 + $0x188] sm:$0xff]
    %v5906 = vld [vmem:[#allocation14 + $0x190] sm:$0xff]
    %v5907 = vld [vmem:[#allocation14 + $0x198] sm:$0xff]
    %v5908 = vld [vmem:[#allocation14 + $0x1a0] sm:$0xff]
    %v5909 = vld [vmem:[#allocation14 + $0x1a8] sm:$0xff]
    %v5910 = vld [vmem:[#allocation14 + $0x1b0] sm:$0xff]
    %v5911 = vld [vmem:[#allocation14 + $0x1b8] sm:$0xff]
    %v5912 = vld [vmem:[#allocation14 + $0x1c0] sm:$0xff]
    %v5913 = vld [vmem:[#allocation14 + $0x1c8] sm:$0xff]
    %v5914 = vld [vmem:[#allocation14 + $0x1d0] sm:$0xff]
    %v5915 = vld [vmem:[#allocation14 + $0x1d8] sm:$0xff]
    %v5916 = vld [vmem:[#allocation14 + $0x1e0] sm:$0xff]
    %v5917 = vld [vmem:[#allocation14 + $0x1e8] sm:$0xff]
    %v5918 = vld [vmem:[#allocation14 + $0x1f0] sm:$0xff]
    %v5919 = vld [vmem:[#allocation14 + $0x1f8] sm:$0xff]
    %5920 = vmatprep.subr.mxu0 %v5887
    %5921 = vmatpush1.msra.mxu0 %v5886
    %5922 = vmatprep.subr.mxu0 %v5885
    %5923 = vmatpush1.msra.mxu0 %v5884
    %5924 = vmatprep.subr.mxu0 %v5883
    %5925 = vmatpush1.msra.mxu0 %v5882
    %5926 = vmatprep.subr.mxu0 %v5881
    %5927 = vmatpush1.msra.mxu0 %v5880
    %5928 = vmatprep.subr.mxu0 %v5879
    %5929 = vmatpush1.msra.mxu0 %v5878
    %5930 = vmatprep.subr.mxu0 %v5877
    %5931 = vmatpush1.msra.mxu0 %v5876
    %5932 = vmatprep.subr.mxu0 %v5875
    %5933 = vmatpush1.msra.mxu0 %v5874
    %5934 = vmatprep.subr.mxu0 %v5873
    %5935 = vmatpush1.msra.mxu0 %v5872
    %5936 = vmatprep.subr.mxu0 %v5871
    %5937 = vmatpush1.msra.mxu0 %v5870
    %5938 = vmatprep.subr.mxu0 %v5869
    %5939 = vmatpush1.msra.mxu0 %v5868
    %5940 = vmatprep.subr.mxu0 %v5867
    %5941 = vmatpush1.msra.mxu0 %v5866
    %5942 = vmatprep.subr.mxu0 %v5865
    %5943 = vmatpush1.msra.mxu0 %v5864
    %5944 = vmatprep.subr.mxu0 %v5863
    %5945 = vmatpush1.msra.mxu0 %v5862
    %5946 = vmatprep.subr.mxu0 %v5861
    %5947 = vmatpush1.msra.mxu0 %v5860
    %5948 = vmatprep.subr.mxu0 %v5859
    %5949 = vmatpush1.msra.mxu0 %v5858
    %5950 = vmatprep.subr.mxu0 %v5857
    %5951 = vmatpush1.msra.mxu0 %v5856
    %5952 = vmatprep.subr.mxu0 %v5919
    %5953 = vmatpush2.msra.mxu0 %v5918
    %5954 = vmatprep.subr.mxu0 %v5917
    %5955 = vmatpush2.msra.mxu0 %v5916
    %5956 = vmatprep.subr.mxu0 %v5915
    %5957 = vmatpush2.msra.mxu0 %v5914
    %5958 = vmatprep.subr.mxu0 %v5913
    %5959 = vmatpush2.msra.mxu0 %v5912
    %5960 = vmatprep.subr.mxu0 %v5911
    %5961 = vmatpush2.msra.mxu0 %v5910
    %5962 = vmatprep.subr.mxu0 %v5909
    %5963 = vmatpush2.msra.mxu0 %v5908
    %5964 = vmatprep.subr.mxu0 %v5907
    %5965 = vmatpush2.msra.mxu0 %v5906
    %5966 = vmatprep.subr.mxu0 %v5905
    %5967 = vmatpush2.msra.mxu0 %v5904
    %5968 = vmatprep.subr.mxu0 %v5903
    %5969 = vmatpush2.msra.mxu0 %v5902
    %5970 = vmatprep.subr.mxu0 %v5901
    %5971 = vmatpush2.msra.mxu0 %v5900
    %5972 = vmatprep.subr.mxu0 %v5899
    %5973 = vmatpush2.msra.mxu0 %v5898
    %5974 = vmatprep.subr.mxu0 %v5897
    %5975 = vmatpush2.msra.mxu0 %v5896
    %5976 = vmatprep.subr.mxu0 %v5895
    %5977 = vmatpush2.msra.mxu0 %v5894
    %5978 = vmatprep.subr.mxu0 %v5893
    %5979 = vmatpush2.msra.mxu0 %v5892
    %5980 = vmatprep.subr.mxu0 %v5891
    %5981 = vmatpush2.msra.mxu0 %v5890
    %5982 = vmatprep.subr.mxu0 %v5889
    %5983 = vmatpush2.msra.mxu0 %v5888
    %5984 = vmatprep.mubr.f32.mxu0 %v5837
    %5985 = vmatmul.mubr.f32.gmra.mxu0 %v5830
    %v5986 = vpop.f32.mrf.mxu0
    %v5987 = vadd.f32 0.0, %v5986
    %v5988 = vpop.f32.mrf.mxu0
    %v5989 = vadd.f32 0.0, %v5988
    %5990 = vdwg.mxu0
    %5991 = vmatprep.subr.mxu0 %v5887
    %5992 = vmatpush1.msra.mxu0 %v5886
    %5993 = vmatprep.subr.mxu0 %v5885
    %5994 = vmatpush1.msra.mxu0 %v5884
    %5995 = vmatprep.subr.mxu0 %v5883
    %5996 = vmatpush1.msra.mxu0 %v5882
    %5997 = vmatprep.subr.mxu0 %v5881
    %5998 = vmatpush1.msra.mxu0 %v5880
    %5999 = vmatprep.subr.mxu0 %v5879
    %6000 = vmatpush1.msra.mxu0 %v5878
    %6001 = vmatprep.subr.mxu0 %v5877
    %6002 = vmatpush1.msra.mxu0 %v5876
    %6003 = vmatprep.subr.mxu0 %v5875
    %6004 = vmatpush1.msra.mxu0 %v5874
    %6005 = vmatprep.subr.mxu0 %v5873
    %6006 = vmatpush1.msra.mxu0 %v5872
    %6007 = vmatprep.subr.mxu0 %v5871
    %6008 = vmatpush1.msra.mxu0 %v5870
    %6009 = vmatprep.subr.mxu0 %v5869
    %6010 = vmatpush1.msra.mxu0 %v5868
    %6011 = vmatprep.subr.mxu0 %v5867
    %6012 = vmatpush1.msra.mxu0 %v5866
    %6013 = vmatprep.subr.mxu0 %v5865
    %6014 = vmatpush1.msra.mxu0 %v5864
    %6015 = vmatprep.subr.mxu0 %v5863
    %6016 = vmatpush1.msra.mxu0 %v5862
    %6017 = vmatprep.subr.mxu0 %v5861
    %6018 = vmatpush1.msra.mxu0 %v5860
    %6019 = vmatprep.subr.mxu0 %v5859
    %6020 = vmatpush1.msra.mxu0 %v5858
    %6021 = vmatprep.subr.mxu0 %v5857
    %6022 = vmatpush1.msra.mxu0 %v5856
    %6023 = vmatprep.subr.mxu0 %v5919
    %6024 = vmatpush2.msra.mxu0 %v5918
    %6025 = vmatprep.subr.mxu0 %v5917
    %6026 = vmatpush2.msra.mxu0 %v5916
    %6027 = vmatprep.subr.mxu0 %v5915
    %6028 = vmatpush2.msra.mxu0 %v5914
    %6029 = vmatprep.subr.mxu0 %v5913
    %6030 = vmatpush2.msra.mxu0 %v5912
    %6031 = vmatprep.subr.mxu0 %v5911
    %6032 = vmatpush2.msra.mxu0 %v5910
    %6033 = vmatprep.subr.mxu0 %v5909
    %6034 = vmatpush2.msra.mxu0 %v5908
    %6035 = vmatprep.subr.mxu0 %v5907
    %6036 = vmatpush2.msra.mxu0 %v5906
    %6037 = vmatprep.subr.mxu0 %v5905
    %6038 = vmatpush2.msra.mxu0 %v5904
    %6039 = vmatprep.subr.mxu0 %v5903
    %6040 = vmatpush2.msra.mxu0 %v5902
    %6041 = vmatprep.subr.mxu0 %v5901
    %6042 = vmatpush2.msra.mxu0 %v5900
    %6043 = vmatprep.subr.mxu0 %v5899
    %6044 = vmatpush2.msra.mxu0 %v5898
    %6045 = vmatprep.subr.mxu0 %v5897
    %6046 = vmatpush2.msra.mxu0 %v5896
    %6047 = vmatprep.subr.mxu0 %v5895
    %6048 = vmatpush2.msra.mxu0 %v5894
    %6049 = vmatprep.subr.mxu0 %v5893
    %6050 = vmatpush2.msra.mxu0 %v5892
    %6051 = vmatprep.subr.mxu0 %v5891
    %6052 = vmatpush2.msra.mxu0 %v5890
    %6053 = vmatprep.subr.mxu0 %v5889
    %6054 = vmatpush2.msra.mxu0 %v5888
    %6055 = vmatprep.mubr.f32.mxu0 %v5855
    %6056 = vmatmul.mubr.f32.gmra.mxu0 %v5848
    %v6057 = vpop.f32.mrf.mxu0
    %v6058 = vadd.f32 0.0, %v6057
    %v6059 = vpop.f32.mrf.mxu0
    %v6060 = vadd.f32 0.0, %v6059
    %6061 = vdwg.mxu0
    %v6062 = vmul.f32 %v5987, %v5987
    %v6063 = vmul.f32 %v5989, %v5989
    %v6064 = vsub.f32 %v6058, %v6062
    %v6065 = vsub.f32 %v6060, %v6063
    %v6066 = vlaneseq
    %v6067 = vshrl.u32 %v6066, 7
    %v6068 = vsub.s32 0, %v6067
    %v6069 = vrot.slane %v5987, %v6068
    %v6070 = vlaneseq
    %v6071 = vshrl.u32 %v6070, 7
    %v6072 = vsub.s32 0, %v6071
    %v6073 = vrot.slane %v5989, %v6072
    %v6074 = vsub.f32 %v5820, %v6069
    %v6075 = vsub.f32 %v5821, %v6073
    %v6076 = vsub.f32 %v5822, %v6069
    %v6077 = vsub.f32 %v5823, %v6073
    %v6078 = vadd.f32 %v6064, 1e-05
    %v6079 = vadd.f32 %v6065, 1e-05
    %v6080 = vrsqrt.pop %v6078
    %v6081 = vrsqrt.pop %v6079
    %v6082 = vlaneseq
    %v6083 = vshrl.u32 %v6082, 7
    %v6084 = vsub.s32 0, %v6083
    %v6085 = vrot.slane %v6080, %v6084
    %v6086 = vlaneseq
    %v6087 = vshrl.u32 %v6086, 7
    %v6088 = vsub.s32 0, %v6087
    %v6089 = vrot.slane %v6081, %v6088
    %v6090 = vmul.f32 %v6074, %v6085
    %v6091 = vmul.f32 %v6075, %v6089
    %v6092 = vmul.f32 %v6076, %v6085
    %v6093 = vmul.f32 %v6077, %v6089
    %s6094 = scalar_lea.vmem [#allocation11], 6
    %v6095 = vld [vmem:[%s6094] ss:$8 sm:$0x3]
    %v6097 = vlaneseq
    %v6098 = vshrl.u32 %v6097, 7
    %v6099 = vsub.s32 0, %v6098
    %v6100 = vrot.slane %v6095, %v6099
    %v6101 = vlaneseq
    %v6102 = vshrl.u32 %v6101, 7
    %v6103 = vsub.s32 1, %v6102
    %v6104 = vrot.slane %v6095, %v6103
    %v6107 = vmul.f32 %v6090, %v6100
    %v6108 = vmul.f32 %v6091, %v6104
    %v6109 = vmul.f32 %v6092, %v6100
    %v6110 = vmul.f32 %v6093, %v6104
    %s6111 = scalar_lea.vmem [#allocation12], 6
    %v6112 = vld [vmem:[%s6111] ss:$8 sm:$0x3]
    %v6114 = vlaneseq
    %v6115 = vshrl.u32 %v6114, 7
    %v6116 = vsub.s32 0, %v6115
    %v6117 = vrot.slane %v6112, %v6116
    %v6118 = vlaneseq
    %v6119 = vshrl.u32 %v6118, 7
    %v6120 = vsub.s32 1, %v6119
    %v6121 = vrot.slane %v6112, %v6120
    %v6124 = vadd.f32 %v6107, %v6117
    %v6125 = vadd.f32 %v6108, %v6121
    %v6126 = vadd.f32 %v6109, %v6117
    %v6127 = vadd.f32 %v6110, %v6121
    %v6128 = vadd.f32 %v6124, %v4466
    %v6129 = vadd.f32 %v6125, %v4467
    %v6130 = vadd.f32 %v6126, %v4468
    %v6131 = vadd.f32 %v6127, %v4469
    %v6132 = vmax.f32 %v6128, 0.0
    %v6133 = vmax.f32 %v6129, 0.0
    %v6134 = vmax.f32 %v6130, 0.0
    %v6135 = vmax.f32 %v6131, 0.0
    %v6140 = vrot.slane %v6132, 7
    %v6141 = vrot.slane %v6133, 7
    %v6142 = vrot.slane %v6134, 7
    %v6143 = vrot.slane %v6135, 7
    %6148 = vst [vmem:[#allocation3] sm:$0xfe] %v6140
    %6149 = vst [vmem:[#allocation3 + $0x8] sm:$0xfe] %v6141
    %6150 = vst [vmem:[#allocation3 + $0x10] sm:$0x1] %v6140
    %6151 = vst [vmem:[#allocation3 + $0x18] sm:$0x1] %v6141
    %6152 = vst [vmem:[#allocation3 + $0x20] sm:$0xfe] %v6142
    %6153 = vst [vmem:[#allocation3 + $0x28] sm:$0xfe] %v6143
    %6154 = vst [vmem:[#allocation3 + $0x30] sm:$0x1] %v6142
    %6155 = vst [vmem:[#allocation3 + $0x38] sm:$0x1] %v6143
    %v6156 = vld [vmem:[#allocation3] sm:$0xff]
    %v6157 = vld [vmem:[#allocation3 + $0x8] sm:$0xff]
    %v6158 = vld [vmem:[#allocation3 + $0x20] sm:$0xff]
    %v6159 = vld [vmem:[#allocation3 + $0x28] sm:$0xff]
    %s6160 = scalar_lea.vmem [#allocation9], 9216
    %v6161 = vld [vmem:[%s6160] sm:$0xff]
    %v6162 = vld [vmem:[%s6160 + $0x8] sm:$0xff]
    %v6163 = vld [vmem:[%s6160 + $0x10] sm:$0xff]
    %v6164 = vld [vmem:[%s6160 + $0x18] sm:$0xff]
    %v6165 = vld [vmem:[%s6160 + $0x20] sm:$0xff]
    %v6166 = vld [vmem:[%s6160 + $0x28] sm:$0xff]
    %v6167 = vld [vmem:[%s6160 + $0x30] sm:$0xff]
    %v6168 = vld [vmem:[%s6160 + $0x38] sm:$0xff]
    %v6169 = vld [vmem:[%s6160 + $0x40] sm:$0xff]
    %v6170 = vld [vmem:[%s6160 + $0x48] sm:$0xff]
    %v6171 = vld [vmem:[%s6160 + $0x50] sm:$0xff]
    %v6172 = vld [vmem:[%s6160 + $0x58] sm:$0xff]
    %v6173 = vld [vmem:[%s6160 + $0x60] sm:$0xff]
    %v6174 = vld [vmem:[%s6160 + $0x68] sm:$0xff]
    %v6175 = vld [vmem:[%s6160 + $0x70] sm:$0xff]
    %v6176 = vld [vmem:[%s6160 + $0x78] sm:$0xff]
    %v6177 = vld [vmem:[%s6160 + $0x80] sm:$0xff]
    %v6178 = vld [vmem:[%s6160 + $0x88] sm:$0xff]
    %v6179 = vld [vmem:[%s6160 + $0x90] sm:$0xff]
    %v6180 = vld [vmem:[%s6160 + $0x98] sm:$0xff]
    %v6181 = vld [vmem:[%s6160 + $0xa0] sm:$0xff]
    %v6182 = vld [vmem:[%s6160 + $0xa8] sm:$0xff]
    %v6183 = vld [vmem:[%s6160 + $0xb0] sm:$0xff]
    %v6184 = vld [vmem:[%s6160 + $0xb8] sm:$0xff]
    %v6185 = vld [vmem:[%s6160 + $0xc0] sm:$0xff]
    %v6186 = vld [vmem:[%s6160 + $0xc8] sm:$0xff]
    %v6187 = vld [vmem:[%s6160 + $0xd0] sm:$0xff]
    %v6188 = vld [vmem:[%s6160 + $0xd8] sm:$0xff]
    %v6189 = vld [vmem:[%s6160 + $0xe0] sm:$0xff]
    %v6190 = vld [vmem:[%s6160 + $0xe8] sm:$0xff]
    %v6191 = vld [vmem:[%s6160 + $0xf0] sm:$0xff]
    %v6192 = vld [vmem:[%s6160 + $0xf8] sm:$0xff]
    %v6193 = vld [vmem:[%s6160 + $0x100] sm:$0xff]
    %v6194 = vld [vmem:[%s6160 + $0x108] sm:$0xff]
    %v6195 = vld [vmem:[%s6160 + $0x110] sm:$0xff]
    %v6196 = vld [vmem:[%s6160 + $0x118] sm:$0xff]
    %v6197 = vld [vmem:[%s6160 + $0x120] sm:$0xff]
    %v6198 = vld [vmem:[%s6160 + $0x128] sm:$0xff]
    %v6199 = vld [vmem:[%s6160 + $0x130] sm:$0xff]
    %v6200 = vld [vmem:[%s6160 + $0x138] sm:$0xff]
    %v6201 = vld [vmem:[%s6160 + $0x140] sm:$0xff]
    %v6202 = vld [vmem:[%s6160 + $0x148] sm:$0xff]
    %v6203 = vld [vmem:[%s6160 + $0x150] sm:$0xff]
    %v6204 = vld [vmem:[%s6160 + $0x158] sm:$0xff]
    %v6205 = vld [vmem:[%s6160 + $0x160] sm:$0xff]
    %v6206 = vld [vmem:[%s6160 + $0x168] sm:$0xff]
    %v6207 = vld [vmem:[%s6160 + $0x170] sm:$0xff]
    %v6208 = vld [vmem:[%s6160 + $0x178] sm:$0xff]
    %v6209 = vld [vmem:[%s6160 + $0x180] sm:$0xff]
    %v6210 = vld [vmem:[%s6160 + $0x188] sm:$0xff]
    %v6211 = vld [vmem:[%s6160 + $0x190] sm:$0xff]
    %v6212 = vld [vmem:[%s6160 + $0x198] sm:$0xff]
    %v6213 = vld [vmem:[%s6160 + $0x1a0] sm:$0xff]
    %v6214 = vld [vmem:[%s6160 + $0x1a8] sm:$0xff]
    %v6215 = vld [vmem:[%s6160 + $0x1b0] sm:$0xff]
    %v6216 = vld [vmem:[%s6160 + $0x1b8] sm:$0xff]
    %v6217 = vld [vmem:[%s6160 + $0x1c0] sm:$0xff]
    %v6218 = vld [vmem:[%s6160 + $0x1c8] sm:$0xff]
    %v6219 = vld [vmem:[%s6160 + $0x1d0] sm:$0xff]
    %v6220 = vld [vmem:[%s6160 + $0x1d8] sm:$0xff]
    %v6221 = vld [vmem:[%s6160 + $0x1e0] sm:$0xff]
    %v6222 = vld [vmem:[%s6160 + $0x1e8] sm:$0xff]
    %v6223 = vld [vmem:[%s6160 + $0x1f0] sm:$0xff]
    %v6224 = vld [vmem:[%s6160 + $0x1f8] sm:$0xff]
    %v6225 = vld [vmem:[#allocation3] sm:$0xfe]
    %v6226 = vld [vmem:[#allocation3 + $0x8] sm:$0xfe]
    %v6227 = vld [vmem:[#allocation3 + $0x10] sm:$0x1]
    %v6228 = vld [vmem:[#allocation3 + $0x18] sm:$0x1]
    %v6229 = vld [vmem:[#allocation3 + $0x20] sm:$0xfe]
    %v6230 = vld [vmem:[#allocation3 + $0x28] sm:$0xfe]
    %v6231 = vld [vmem:[#allocation3 + $0x30] sm:$0x1]
    %v6232 = vld [vmem:[#allocation3 + $0x38] sm:$0x1]
    %v6241 = vrot.slane %v6225, 1
    %v6242 = vrot.slane %v6227, 1
    %v6243 = vsel %vm1241, %v6241, %v6242
    %v6244 = vrot.slane %v6226, 1
    %v6245 = vrot.slane %v6228, 1
    %v6246 = vsel %vm1241, %v6244, %v6245
    %v6247 = vrot.slane %v6229, 1
    %v6248 = vrot.slane %v6231, 1
    %v6249 = vsel %vm1241, %v6247, %v6248
    %v6250 = vrot.slane %v6230, 1
    %v6251 = vrot.slane %v6232, 1
    %v6252 = vsel %vm1241, %v6250, %v6251
    %s6257 = scalar_lea.vmem [#allocation9], 9728
    %v6258 = vld [vmem:[%s6257] sm:$0xff]
    %v6259 = vld [vmem:[%s6257 + $0x8] sm:$0xff]
    %v6260 = vld [vmem:[%s6257 + $0x10] sm:$0xff]
    %v6261 = vld [vmem:[%s6257 + $0x18] sm:$0xff]
    %v6262 = vld [vmem:[%s6257 + $0x20] sm:$0xff]
    %v6263 = vld [vmem:[%s6257 + $0x28] sm:$0xff]
    %v6264 = vld [vmem:[%s6257 + $0x30] sm:$0xff]
    %v6265 = vld [vmem:[%s6257 + $0x38] sm:$0xff]
    %v6266 = vld [vmem:[%s6257 + $0x40] sm:$0xff]
    %v6267 = vld [vmem:[%s6257 + $0x48] sm:$0xff]
    %v6268 = vld [vmem:[%s6257 + $0x50] sm:$0xff]
    %v6269 = vld [vmem:[%s6257 + $0x58] sm:$0xff]
    %v6270 = vld [vmem:[%s6257 + $0x60] sm:$0xff]
    %v6271 = vld [vmem:[%s6257 + $0x68] sm:$0xff]
    %v6272 = vld [vmem:[%s6257 + $0x70] sm:$0xff]
    %v6273 = vld [vmem:[%s6257 + $0x78] sm:$0xff]
    %v6274 = vld [vmem:[%s6257 + $0x80] sm:$0xff]
    %v6275 = vld [vmem:[%s6257 + $0x88] sm:$0xff]
    %v6276 = vld [vmem:[%s6257 + $0x90] sm:$0xff]
    %v6277 = vld [vmem:[%s6257 + $0x98] sm:$0xff]
    %v6278 = vld [vmem:[%s6257 + $0xa0] sm:$0xff]
    %v6279 = vld [vmem:[%s6257 + $0xa8] sm:$0xff]
    %v6280 = vld [vmem:[%s6257 + $0xb0] sm:$0xff]
    %v6281 = vld [vmem:[%s6257 + $0xb8] sm:$0xff]
    %v6282 = vld [vmem:[%s6257 + $0xc0] sm:$0xff]
    %v6283 = vld [vmem:[%s6257 + $0xc8] sm:$0xff]
    %v6284 = vld [vmem:[%s6257 + $0xd0] sm:$0xff]
    %v6285 = vld [vmem:[%s6257 + $0xd8] sm:$0xff]
    %v6286 = vld [vmem:[%s6257 + $0xe0] sm:$0xff]
    %v6287 = vld [vmem:[%s6257 + $0xe8] sm:$0xff]
    %v6288 = vld [vmem:[%s6257 + $0xf0] sm:$0xff]
    %v6289 = vld [vmem:[%s6257 + $0xf8] sm:$0xff]
    %v6290 = vld [vmem:[%s6257 + $0x100] sm:$0xff]
    %v6291 = vld [vmem:[%s6257 + $0x108] sm:$0xff]
    %v6292 = vld [vmem:[%s6257 + $0x110] sm:$0xff]
    %v6293 = vld [vmem:[%s6257 + $0x118] sm:$0xff]
    %v6294 = vld [vmem:[%s6257 + $0x120] sm:$0xff]
    %v6295 = vld [vmem:[%s6257 + $0x128] sm:$0xff]
    %v6296 = vld [vmem:[%s6257 + $0x130] sm:$0xff]
    %v6297 = vld [vmem:[%s6257 + $0x138] sm:$0xff]
    %v6298 = vld [vmem:[%s6257 + $0x140] sm:$0xff]
    %v6299 = vld [vmem:[%s6257 + $0x148] sm:$0xff]
    %v6300 = vld [vmem:[%s6257 + $0x150] sm:$0xff]
    %v6301 = vld [vmem:[%s6257 + $0x158] sm:$0xff]
    %v6302 = vld [vmem:[%s6257 + $0x160] sm:$0xff]
    %v6303 = vld [vmem:[%s6257 + $0x168] sm:$0xff]
    %v6304 = vld [vmem:[%s6257 + $0x170] sm:$0xff]
    %v6305 = vld [vmem:[%s6257 + $0x178] sm:$0xff]
    %v6306 = vld [vmem:[%s6257 + $0x180] sm:$0xff]
    %v6307 = vld [vmem:[%s6257 + $0x188] sm:$0xff]
    %v6308 = vld [vmem:[%s6257 + $0x190] sm:$0xff]
    %v6309 = vld [vmem:[%s6257 + $0x198] sm:$0xff]
    %v6310 = vld [vmem:[%s6257 + $0x1a0] sm:$0xff]
    %v6311 = vld [vmem:[%s6257 + $0x1a8] sm:$0xff]
    %v6312 = vld [vmem:[%s6257 + $0x1b0] sm:$0xff]
    %v6313 = vld [vmem:[%s6257 + $0x1b8] sm:$0xff]
    %v6314 = vld [vmem:[%s6257 + $0x1c0] sm:$0xff]
    %v6315 = vld [vmem:[%s6257 + $0x1c8] sm:$0xff]
    %v6316 = vld [vmem:[%s6257 + $0x1d0] sm:$0xff]
    %v6317 = vld [vmem:[%s6257 + $0x1d8] sm:$0xff]
    %v6318 = vld [vmem:[%s6257 + $0x1e0] sm:$0xff]
    %v6319 = vld [vmem:[%s6257 + $0x1e8] sm:$0xff]
    %v6320 = vld [vmem:[%s6257 + $0x1f0] sm:$0xff]
    %v6321 = vld [vmem:[%s6257 + $0x1f8] sm:$0xff]
    %6322 = vmatprep.subr.mxu0 %v6289
    %6323 = vmatpush1.msra.mxu0 %v6288
    %6324 = vmatprep.subr.mxu0 %v6287
    %6325 = vmatpush1.msra.mxu0 %v6286
    %6326 = vmatprep.subr.mxu0 %v6285
    %6327 = vmatpush1.msra.mxu0 %v6284
    %6328 = vmatprep.subr.mxu0 %v6283
    %6329 = vmatpush1.msra.mxu0 %v6282
    %6330 = vmatprep.subr.mxu0 %v6281
    %6331 = vmatpush1.msra.mxu0 %v6280
    %6332 = vmatprep.subr.mxu0 %v6279
    %6333 = vmatpush1.msra.mxu0 %v6278
    %6334 = vmatprep.subr.mxu0 %v6277
    %6335 = vmatpush1.msra.mxu0 %v6276
    %6336 = vmatprep.subr.mxu0 %v6275
    %6337 = vmatpush1.msra.mxu0 %v6274
    %6338 = vmatprep.subr.mxu0 %v6273
    %6339 = vmatpush1.msra.mxu0 %v6272
    %6340 = vmatprep.subr.mxu0 %v6271
    %6341 = vmatpush1.msra.mxu0 %v6270
    %6342 = vmatprep.subr.mxu0 %v6269
    %6343 = vmatpush1.msra.mxu0 %v6268
    %6344 = vmatprep.subr.mxu0 %v6267
    %6345 = vmatpush1.msra.mxu0 %v6266
    %6346 = vmatprep.subr.mxu0 %v6265
    %6347 = vmatpush1.msra.mxu0 %v6264
    %6348 = vmatprep.subr.mxu0 %v6263
    %6349 = vmatpush1.msra.mxu0 %v6262
    %6350 = vmatprep.subr.mxu0 %v6261
    %6351 = vmatpush1.msra.mxu0 %v6260
    %6352 = vmatprep.subr.mxu0 %v6259
    %6353 = vmatpush1.msra.mxu0 %v6258
    %6354 = vmatprep.subr.mxu0 %v6321
    %6355 = vmatpush2.msra.mxu0 %v6320
    %6356 = vmatprep.subr.mxu0 %v6319
    %6357 = vmatpush2.msra.mxu0 %v6318
    %6358 = vmatprep.subr.mxu0 %v6317
    %6359 = vmatpush2.msra.mxu0 %v6316
    %6360 = vmatprep.subr.mxu0 %v6315
    %6361 = vmatpush2.msra.mxu0 %v6314
    %6362 = vmatprep.subr.mxu0 %v6313
    %6363 = vmatpush2.msra.mxu0 %v6312
    %6364 = vmatprep.subr.mxu0 %v6311
    %6365 = vmatpush2.msra.mxu0 %v6310
    %6366 = vmatprep.subr.mxu0 %v6309
    %6367 = vmatpush2.msra.mxu0 %v6308
    %6368 = vmatprep.subr.mxu0 %v6307
    %6369 = vmatpush2.msra.mxu0 %v6306
    %6370 = vmatprep.subr.mxu0 %v6305
    %6371 = vmatpush2.msra.mxu0 %v6304
    %6372 = vmatprep.subr.mxu0 %v6303
    %6373 = vmatpush2.msra.mxu0 %v6302
    %6374 = vmatprep.subr.mxu0 %v6301
    %6375 = vmatpush2.msra.mxu0 %v6300
    %6376 = vmatprep.subr.mxu0 %v6299
    %6377 = vmatpush2.msra.mxu0 %v6298
    %6378 = vmatprep.subr.mxu0 %v6297
    %6379 = vmatpush2.msra.mxu0 %v6296
    %6380 = vmatprep.subr.mxu0 %v6295
    %6381 = vmatpush2.msra.mxu0 %v6294
    %6382 = vmatprep.subr.mxu0 %v6293
    %6383 = vmatpush2.msra.mxu0 %v6292
    %6384 = vmatprep.subr.mxu0 %v6291
    %6385 = vmatpush2.msra.mxu0 %v6290
    %6386 = vmatprep.mubr.f32.mxu0 %v6246
    %6387 = vmatmul.mubr.f32.gmra.mxu0 %v6243
    %v6388 = vpop.f32.mrf.mxu0
    %v6389 = vadd.f32 0.0, %v6388
    %v6390 = vpop.f32.mrf.mxu0
    %v6391 = vadd.f32 0.0, %v6390
    %6392 = vmatprep.mubr.f32.mxu0 %v6252
    %6393 = vmatmul.mubr.f32.gmra.mxu0 %v6249
    %v6394 = vpop.f32.mrf.mxu0
    %v6395 = vadd.f32 0.0, %v6394
    %v6396 = vpop.f32.mrf.mxu0
    %v6397 = vadd.f32 0.0, %v6396
    %6398 = vdwg.mxu0
    %6399 = vmatprep.subr.mxu0 %v6192
    %6400 = vmatpush1.msra.mxu0 %v6191
    %6401 = vmatprep.subr.mxu0 %v6190
    %6402 = vmatpush1.msra.mxu0 %v6189
    %6403 = vmatprep.subr.mxu0 %v6188
    %6404 = vmatpush1.msra.mxu0 %v6187
    %6405 = vmatprep.subr.mxu0 %v6186
    %6406 = vmatpush1.msra.mxu0 %v6185
    %6407 = vmatprep.subr.mxu0 %v6184
    %6408 = vmatpush1.msra.mxu0 %v6183
    %6409 = vmatprep.subr.mxu0 %v6182
    %6410 = vmatpush1.msra.mxu0 %v6181
    %6411 = vmatprep.subr.mxu0 %v6180
    %6412 = vmatpush1.msra.mxu0 %v6179
    %6413 = vmatprep.subr.mxu0 %v6178
    %6414 = vmatpush1.msra.mxu0 %v6177
    %6415 = vmatprep.subr.mxu0 %v6176
    %6416 = vmatpush1.msra.mxu0 %v6175
    %6417 = vmatprep.subr.mxu0 %v6174
    %6418 = vmatpush1.msra.mxu0 %v6173
    %6419 = vmatprep.subr.mxu0 %v6172
    %6420 = vmatpush1.msra.mxu0 %v6171
    %6421 = vmatprep.subr.mxu0 %v6170
    %6422 = vmatpush1.msra.mxu0 %v6169
    %6423 = vmatprep.subr.mxu0 %v6168
    %6424 = vmatpush1.msra.mxu0 %v6167
    %6425 = vmatprep.subr.mxu0 %v6166
    %6426 = vmatpush1.msra.mxu0 %v6165
    %6427 = vmatprep.subr.mxu0 %v6164
    %6428 = vmatpush1.msra.mxu0 %v6163
    %6429 = vmatprep.subr.mxu0 %v6162
    %6430 = vmatpush1.msra.mxu0 %v6161
    %6431 = vmatprep.subr.mxu0 %v6224
    %6432 = vmatpush2.msra.mxu0 %v6223
    %6433 = vmatprep.subr.mxu0 %v6222
    %6434 = vmatpush2.msra.mxu0 %v6221
    %6435 = vmatprep.subr.mxu0 %v6220
    %6436 = vmatpush2.msra.mxu0 %v6219
    %6437 = vmatprep.subr.mxu0 %v6218
    %6438 = vmatpush2.msra.mxu0 %v6217
    %6439 = vmatprep.subr.mxu0 %v6216
    %6440 = vmatpush2.msra.mxu0 %v6215
    %6441 = vmatprep.subr.mxu0 %v6214
    %6442 = vmatpush2.msra.mxu0 %v6213
    %6443 = vmatprep.subr.mxu0 %v6212
    %6444 = vmatpush2.msra.mxu0 %v6211
    %6445 = vmatprep.subr.mxu0 %v6210
    %6446 = vmatpush2.msra.mxu0 %v6209
    %6447 = vmatprep.subr.mxu0 %v6208
    %6448 = vmatpush2.msra.mxu0 %v6207
    %6449 = vmatprep.subr.mxu0 %v6206
    %6450 = vmatpush2.msra.mxu0 %v6205
    %6451 = vmatprep.subr.mxu0 %v6204
    %6452 = vmatpush2.msra.mxu0 %v6203
    %6453 = vmatprep.subr.mxu0 %v6202
    %6454 = vmatpush2.msra.mxu0 %v6201
    %6455 = vmatprep.subr.mxu0 %v6200
    %6456 = vmatpush2.msra.mxu0 %v6199
    %6457 = vmatprep.subr.mxu0 %v6198
    %6458 = vmatpush2.msra.mxu0 %v6197
    %6459 = vmatprep.subr.mxu0 %v6196
    %6460 = vmatpush2.msra.mxu0 %v6195
    %6461 = vmatprep.subr.mxu0 %v6194
    %6462 = vmatpush2.msra.mxu0 %v6193
    %6463 = vmatprep.mubr.f32.mxu0 %v6157
    %6464 = vmatmul.mubr.f32.gmra.mxu0 %v6156
    %v6465 = vpop.f32.mrf.mxu0
    %v6466 = vadd.f32 %v6389, %v6465
    %v6467 = vpop.f32.mrf.mxu0
    %v6468 = vadd.f32 %v6391, %v6467
    %6469 = vmatprep.mubr.f32.mxu0 %v6159
    %6470 = vmatmul.mubr.f32.gmra.mxu0 %v6158
    %v6471 = vpop.f32.mrf.mxu0
    %v6472 = vadd.f32 %v6395, %v6471
    %v6473 = vpop.f32.mrf.mxu0
    %v6474 = vadd.f32 %v6397, %v6473
    %6475 = vdwg.mxu0
    %v6476 = vld [vmem:[#allocation3] sm:$0xfc]
    %v6477 = vld [vmem:[#allocation3 + $0x8] sm:$0xfc]
    %v6478 = vld [vmem:[#allocation3 + $0x10] sm:$0x3]
    %v6479 = vld [vmem:[#allocation3 + $0x18] sm:$0x3]
    %v6480 = vld [vmem:[#allocation3 + $0x20] sm:$0xfc]
    %v6481 = vld [vmem:[#allocation3 + $0x28] sm:$0xfc]
    %v6482 = vld [vmem:[#allocation3 + $0x30] sm:$0x3]
    %v6483 = vld [vmem:[#allocation3 + $0x38] sm:$0x3]
    %v6492 = vrot.slane %v6476, 2
    %v6493 = vrot.slane %v6478, 2
    %v6494 = vsel %vm1493, %v6492, %v6493
    %v6495 = vrot.slane %v6477, 2
    %v6496 = vrot.slane %v6479, 2
    %v6497 = vsel %vm1493, %v6495, %v6496
    %v6498 = vrot.slane %v6480, 2
    %v6499 = vrot.slane %v6482, 2
    %v6500 = vsel %vm1493, %v6498, %v6499
    %v6501 = vrot.slane %v6481, 2
    %v6502 = vrot.slane %v6483, 2
    %v6503 = vsel %vm1493, %v6501, %v6502
    %s6508 = scalar_lea.vmem [#allocation9], 10240
    %v6509 = vld [vmem:[%s6508] sm:$0xff]
    %v6510 = vld [vmem:[%s6508 + $0x8] sm:$0xff]
    %v6511 = vld [vmem:[%s6508 + $0x10] sm:$0xff]
    %v6512 = vld [vmem:[%s6508 + $0x18] sm:$0xff]
    %v6513 = vld [vmem:[%s6508 + $0x20] sm:$0xff]
    %v6514 = vld [vmem:[%s6508 + $0x28] sm:$0xff]
    %v6515 = vld [vmem:[%s6508 + $0x30] sm:$0xff]
    %v6516 = vld [vmem:[%s6508 + $0x38] sm:$0xff]
    %v6517 = vld [vmem:[%s6508 + $0x40] sm:$0xff]
    %v6518 = vld [vmem:[%s6508 + $0x48] sm:$0xff]
    %v6519 = vld [vmem:[%s6508 + $0x50] sm:$0xff]
    %v6520 = vld [vmem:[%s6508 + $0x58] sm:$0xff]
    %v6521 = vld [vmem:[%s6508 + $0x60] sm:$0xff]
    %v6522 = vld [vmem:[%s6508 + $0x68] sm:$0xff]
    %v6523 = vld [vmem:[%s6508 + $0x70] sm:$0xff]
    %v6524 = vld [vmem:[%s6508 + $0x78] sm:$0xff]
    %v6525 = vld [vmem:[%s6508 + $0x80] sm:$0xff]
    %v6526 = vld [vmem:[%s6508 + $0x88] sm:$0xff]
    %v6527 = vld [vmem:[%s6508 + $0x90] sm:$0xff]
    %v6528 = vld [vmem:[%s6508 + $0x98] sm:$0xff]
    %v6529 = vld [vmem:[%s6508 + $0xa0] sm:$0xff]
    %v6530 = vld [vmem:[%s6508 + $0xa8] sm:$0xff]
    %v6531 = vld [vmem:[%s6508 + $0xb0] sm:$0xff]
    %v6532 = vld [vmem:[%s6508 + $0xb8] sm:$0xff]
    %v6533 = vld [vmem:[%s6508 + $0xc0] sm:$0xff]
    %v6534 = vld [vmem:[%s6508 + $0xc8] sm:$0xff]
    %v6535 = vld [vmem:[%s6508 + $0xd0] sm:$0xff]
    %v6536 = vld [vmem:[%s6508 + $0xd8] sm:$0xff]
    %v6537 = vld [vmem:[%s6508 + $0xe0] sm:$0xff]
    %v6538 = vld [vmem:[%s6508 + $0xe8] sm:$0xff]
    %v6539 = vld [vmem:[%s6508 + $0xf0] sm:$0xff]
    %v6540 = vld [vmem:[%s6508 + $0xf8] sm:$0xff]
    %v6541 = vld [vmem:[%s6508 + $0x100] sm:$0xff]
    %v6542 = vld [vmem:[%s6508 + $0x108] sm:$0xff]
    %v6543 = vld [vmem:[%s6508 + $0x110] sm:$0xff]
    %v6544 = vld [vmem:[%s6508 + $0x118] sm:$0xff]
    %v6545 = vld [vmem:[%s6508 + $0x120] sm:$0xff]
    %v6546 = vld [vmem:[%s6508 + $0x128] sm:$0xff]
    %v6547 = vld [vmem:[%s6508 + $0x130] sm:$0xff]
    %v6548 = vld [vmem:[%s6508 + $0x138] sm:$0xff]
    %v6549 = vld [vmem:[%s6508 + $0x140] sm:$0xff]
    %v6550 = vld [vmem:[%s6508 + $0x148] sm:$0xff]
    %v6551 = vld [vmem:[%s6508 + $0x150] sm:$0xff]
    %v6552 = vld [vmem:[%s6508 + $0x158] sm:$0xff]
    %v6553 = vld [vmem:[%s6508 + $0x160] sm:$0xff]
    %v6554 = vld [vmem:[%s6508 + $0x168] sm:$0xff]
    %v6555 = vld [vmem:[%s6508 + $0x170] sm:$0xff]
    %v6556 = vld [vmem:[%s6508 + $0x178] sm:$0xff]
    %v6557 = vld [vmem:[%s6508 + $0x180] sm:$0xff]
    %v6558 = vld [vmem:[%s6508 + $0x188] sm:$0xff]
    %v6559 = vld [vmem:[%s6508 + $0x190] sm:$0xff]
    %v6560 = vld [vmem:[%s6508 + $0x198] sm:$0xff]
    %v6561 = vld [vmem:[%s6508 + $0x1a0] sm:$0xff]
    %v6562 = vld [vmem:[%s6508 + $0x1a8] sm:$0xff]
    %v6563 = vld [vmem:[%s6508 + $0x1b0] sm:$0xff]
    %v6564 = vld [vmem:[%s6508 + $0x1b8] sm:$0xff]
    %v6565 = vld [vmem:[%s6508 + $0x1c0] sm:$0xff]
    %v6566 = vld [vmem:[%s6508 + $0x1c8] sm:$0xff]
    %v6567 = vld [vmem:[%s6508 + $0x1d0] sm:$0xff]
    %v6568 = vld [vmem:[%s6508 + $0x1d8] sm:$0xff]
    %v6569 = vld [vmem:[%s6508 + $0x1e0] sm:$0xff]
    %v6570 = vld [vmem:[%s6508 + $0x1e8] sm:$0xff]
    %v6571 = vld [vmem:[%s6508 + $0x1f0] sm:$0xff]
    %v6572 = vld [vmem:[%s6508 + $0x1f8] sm:$0xff]
    %6573 = vmatprep.subr.mxu0 %v6540
    %6574 = vmatpush1.msra.mxu0 %v6539
    %6575 = vmatprep.subr.mxu0 %v6538
    %6576 = vmatpush1.msra.mxu0 %v6537
    %6577 = vmatprep.subr.mxu0 %v6536
    %6578 = vmatpush1.msra.mxu0 %v6535
    %6579 = vmatprep.subr.mxu0 %v6534
    %6580 = vmatpush1.msra.mxu0 %v6533
    %6581 = vmatprep.subr.mxu0 %v6532
    %6582 = vmatpush1.msra.mxu0 %v6531
    %6583 = vmatprep.subr.mxu0 %v6530
    %6584 = vmatpush1.msra.mxu0 %v6529
    %6585 = vmatprep.subr.mxu0 %v6528
    %6586 = vmatpush1.msra.mxu0 %v6527
    %6587 = vmatprep.subr.mxu0 %v6526
    %6588 = vmatpush1.msra.mxu0 %v6525
    %6589 = vmatprep.subr.mxu0 %v6524
    %6590 = vmatpush1.msra.mxu0 %v6523
    %6591 = vmatprep.subr.mxu0 %v6522
    %6592 = vmatpush1.msra.mxu0 %v6521
    %6593 = vmatprep.subr.mxu0 %v6520
    %6594 = vmatpush1.msra.mxu0 %v6519
    %6595 = vmatprep.subr.mxu0 %v6518
    %6596 = vmatpush1.msra.mxu0 %v6517
    %6597 = vmatprep.subr.mxu0 %v6516
    %6598 = vmatpush1.msra.mxu0 %v6515
    %6599 = vmatprep.subr.mxu0 %v6514
    %6600 = vmatpush1.msra.mxu0 %v6513
    %6601 = vmatprep.subr.mxu0 %v6512
    %6602 = vmatpush1.msra.mxu0 %v6511
    %6603 = vmatprep.subr.mxu0 %v6510
    %6604 = vmatpush1.msra.mxu0 %v6509
    %6605 = vmatprep.subr.mxu0 %v6572
    %6606 = vmatpush2.msra.mxu0 %v6571
    %6607 = vmatprep.subr.mxu0 %v6570
    %6608 = vmatpush2.msra.mxu0 %v6569
    %6609 = vmatprep.subr.mxu0 %v6568
    %6610 = vmatpush2.msra.mxu0 %v6567
    %6611 = vmatprep.subr.mxu0 %v6566
    %6612 = vmatpush2.msra.mxu0 %v6565
    %6613 = vmatprep.subr.mxu0 %v6564
    %6614 = vmatpush2.msra.mxu0 %v6563
    %6615 = vmatprep.subr.mxu0 %v6562
    %6616 = vmatpush2.msra.mxu0 %v6561
    %6617 = vmatprep.subr.mxu0 %v6560
    %6618 = vmatpush2.msra.mxu0 %v6559
    %6619 = vmatprep.subr.mxu0 %v6558
    %6620 = vmatpush2.msra.mxu0 %v6557
    %6621 = vmatprep.subr.mxu0 %v6556
    %6622 = vmatpush2.msra.mxu0 %v6555
    %6623 = vmatprep.subr.mxu0 %v6554
    %6624 = vmatpush2.msra.mxu0 %v6553
    %6625 = vmatprep.subr.mxu0 %v6552
    %6626 = vmatpush2.msra.mxu0 %v6551
    %6627 = vmatprep.subr.mxu0 %v6550
    %6628 = vmatpush2.msra.mxu0 %v6549
    %6629 = vmatprep.subr.mxu0 %v6548
    %6630 = vmatpush2.msra.mxu0 %v6547
    %6631 = vmatprep.subr.mxu0 %v6546
    %6632 = vmatpush2.msra.mxu0 %v6545
    %6633 = vmatprep.subr.mxu0 %v6544
    %6634 = vmatpush2.msra.mxu0 %v6543
    %6635 = vmatprep.subr.mxu0 %v6542
    %6636 = vmatpush2.msra.mxu0 %v6541
    %6637 = vmatprep.mubr.f32.mxu0 %v6497
    %6638 = vmatmul.mubr.f32.gmra.mxu0 %v6494
    %v6639 = vpop.f32.mrf.mxu0
    %v6640 = vadd.f32 0.0, %v6639
    %v6641 = vpop.f32.mrf.mxu0
    %v6642 = vadd.f32 0.0, %v6641
    %6643 = vmatprep.mubr.f32.mxu0 %v6503
    %6644 = vmatmul.mubr.f32.gmra.mxu0 %v6500
    %v6645 = vpop.f32.mrf.mxu0
    %v6646 = vadd.f32 0.0, %v6645
    %v6647 = vpop.f32.mrf.mxu0
    %v6648 = vadd.f32 0.0, %v6647
    %6649 = vdwg.mxu0
    %v6650 = vadd.f32 %v6466, %v6640
    %v6651 = vadd.f32 %v6468, %v6642
    %v6652 = vadd.f32 %v6472, %v6646
    %v6653 = vadd.f32 %v6474, %v6648
    %v6654 = vadd.f32 %v6650, %v6652
    %v6655 = vrot.slane %v6654, 4
    %v6656 = vadd.f32 %v6654, %v6655
    %v6657 = vrot.slane %v6656, 2
    %v6658 = vadd.f32 %v6656, %v6657
    %v6659 = vrot.slane %v6658, 1
    %v6660 = vadd.f32 %v6658, %v6659
    %v6661 = vadd.f32 %v6651, %v6653
    %v6662 = vrot.slane %v6661, 4
    %v6663 = vadd.f32 %v6661, %v6662
    %v6664 = vrot.slane %v6663, 2
    %v6665 = vadd.f32 %v6663, %v6664
    %v6666 = vrot.slane %v6665, 1
    %v6667 = vadd.f32 %v6665, %v6666
    %v6668 = vmul.f32 %v6650, %v6650
    %v6669 = vmul.f32 %v6651, %v6651
    %v6670 = vmul.f32 %v6652, %v6652
    %v6671 = vmul.f32 %v6653, %v6653
    %v6672 = vadd.f32 %v6668, %v6670
    %v6673 = vrot.slane %v6672, 4
    %v6674 = vadd.f32 %v6672, %v6673
    %v6675 = vrot.slane %v6674, 2
    %v6676 = vadd.f32 %v6674, %v6675
    %v6677 = vrot.slane %v6676, 1
    %v6678 = vadd.f32 %v6676, %v6677
    %v6679 = vadd.f32 %v6669, %v6671
    %v6680 = vrot.slane %v6679, 4
    %v6681 = vadd.f32 %v6679, %v6680
    %v6682 = vrot.slane %v6681, 2
    %v6683 = vadd.f32 %v6681, %v6682
    %v6684 = vrot.slane %v6683, 1
    %v6685 = vadd.f32 %v6683, %v6684
    %v6686 = vld [vmem:[#allocation14] sm:$0xff]
    %v6687 = vld [vmem:[#allocation14 + $0x8] sm:$0xff]
    %v6688 = vld [vmem:[#allocation14 + $0x10] sm:$0xff]
    %v6689 = vld [vmem:[#allocation14 + $0x18] sm:$0xff]
    %v6690 = vld [vmem:[#allocation14 + $0x20] sm:$0xff]
    %v6691 = vld [vmem:[#allocation14 + $0x28] sm:$0xff]
    %v6692 = vld [vmem:[#allocation14 + $0x30] sm:$0xff]
    %v6693 = vld [vmem:[#allocation14 + $0x38] sm:$0xff]
    %v6694 = vld [vmem:[#allocation14 + $0x40] sm:$0xff]
    %v6695 = vld [vmem:[#allocation14 + $0x48] sm:$0xff]
    %v6696 = vld [vmem:[#allocation14 + $0x50] sm:$0xff]
    %v6697 = vld [vmem:[#allocation14 + $0x58] sm:$0xff]
    %v6698 = vld [vmem:[#allocation14 + $0x60] sm:$0xff]
    %v6699 = vld [vmem:[#allocation14 + $0x68] sm:$0xff]
    %v6700 = vld [vmem:[#allocation14 + $0x70] sm:$0xff]
    %v6701 = vld [vmem:[#allocation14 + $0x78] sm:$0xff]
    %v6702 = vld [vmem:[#allocation14 + $0x80] sm:$0xff]
    %v6703 = vld [vmem:[#allocation14 + $0x88] sm:$0xff]
    %v6704 = vld [vmem:[#allocation14 + $0x90] sm:$0xff]
    %v6705 = vld [vmem:[#allocation14 + $0x98] sm:$0xff]
    %v6706 = vld [vmem:[#allocation14 + $0xa0] sm:$0xff]
    %v6707 = vld [vmem:[#allocation14 + $0xa8] sm:$0xff]
    %v6708 = vld [vmem:[#allocation14 + $0xb0] sm:$0xff]
    %v6709 = vld [vmem:[#allocation14 + $0xb8] sm:$0xff]
    %v6710 = vld [vmem:[#allocation14 + $0xc0] sm:$0xff]
    %v6711 = vld [vmem:[#allocation14 + $0xc8] sm:$0xff]
    %v6712 = vld [vmem:[#allocation14 + $0xd0] sm:$0xff]
    %v6713 = vld [vmem:[#allocation14 + $0xd8] sm:$0xff]
    %v6714 = vld [vmem:[#allocation14 + $0xe0] sm:$0xff]
    %v6715 = vld [vmem:[#allocation14 + $0xe8] sm:$0xff]
    %v6716 = vld [vmem:[#allocation14 + $0xf0] sm:$0xff]
    %v6717 = vld [vmem:[#allocation14 + $0xf8] sm:$0xff]
    %v6718 = vld [vmem:[#allocation14 + $0x100] sm:$0xff]
    %v6719 = vld [vmem:[#allocation14 + $0x108] sm:$0xff]
    %v6720 = vld [vmem:[#allocation14 + $0x110] sm:$0xff]
    %v6721 = vld [vmem:[#allocation14 + $0x118] sm:$0xff]
    %v6722 = vld [vmem:[#allocation14 + $0x120] sm:$0xff]
    %v6723 = vld [vmem:[#allocation14 + $0x128] sm:$0xff]
    %v6724 = vld [vmem:[#allocation14 + $0x130] sm:$0xff]
    %v6725 = vld [vmem:[#allocation14 + $0x138] sm:$0xff]
    %v6726 = vld [vmem:[#allocation14 + $0x140] sm:$0xff]
    %v6727 = vld [vmem:[#allocation14 + $0x148] sm:$0xff]
    %v6728 = vld [vmem:[#allocation14 + $0x150] sm:$0xff]
    %v6729 = vld [vmem:[#allocation14 + $0x158] sm:$0xff]
    %v6730 = vld [vmem:[#allocation14 + $0x160] sm:$0xff]
    %v6731 = vld [vmem:[#allocation14 + $0x168] sm:$0xff]
    %v6732 = vld [vmem:[#allocation14 + $0x170] sm:$0xff]
    %v6733 = vld [vmem:[#allocation14 + $0x178] sm:$0xff]
    %v6734 = vld [vmem:[#allocation14 + $0x180] sm:$0xff]
    %v6735 = vld [vmem:[#allocation14 + $0x188] sm:$0xff]
    %v6736 = vld [vmem:[#allocation14 + $0x190] sm:$0xff]
    %v6737 = vld [vmem:[#allocation14 + $0x198] sm:$0xff]
    %v6738 = vld [vmem:[#allocation14 + $0x1a0] sm:$0xff]
    %v6739 = vld [vmem:[#allocation14 + $0x1a8] sm:$0xff]
    %v6740 = vld [vmem:[#allocation14 + $0x1b0] sm:$0xff]
    %v6741 = vld [vmem:[#allocation14 + $0x1b8] sm:$0xff]
    %v6742 = vld [vmem:[#allocation14 + $0x1c0] sm:$0xff]
    %v6743 = vld [vmem:[#allocation14 + $0x1c8] sm:$0xff]
    %v6744 = vld [vmem:[#allocation14 + $0x1d0] sm:$0xff]
    %v6745 = vld [vmem:[#allocation14 + $0x1d8] sm:$0xff]
    %v6746 = vld [vmem:[#allocation14 + $0x1e0] sm:$0xff]
    %v6747 = vld [vmem:[#allocation14 + $0x1e8] sm:$0xff]
    %v6748 = vld [vmem:[#allocation14 + $0x1f0] sm:$0xff]
    %v6749 = vld [vmem:[#allocation14 + $0x1f8] sm:$0xff]
    %6750 = vmatprep.subr.mxu0 %v6717
    %6751 = vmatpush1.msra.mxu0 %v6716
    %6752 = vmatprep.subr.mxu0 %v6715
    %6753 = vmatpush1.msra.mxu0 %v6714
    %6754 = vmatprep.subr.mxu0 %v6713
    %6755 = vmatpush1.msra.mxu0 %v6712
    %6756 = vmatprep.subr.mxu0 %v6711
    %6757 = vmatpush1.msra.mxu0 %v6710
    %6758 = vmatprep.subr.mxu0 %v6709
    %6759 = vmatpush1.msra.mxu0 %v6708
    %6760 = vmatprep.subr.mxu0 %v6707
    %6761 = vmatpush1.msra.mxu0 %v6706
    %6762 = vmatprep.subr.mxu0 %v6705
    %6763 = vmatpush1.msra.mxu0 %v6704
    %6764 = vmatprep.subr.mxu0 %v6703
    %6765 = vmatpush1.msra.mxu0 %v6702
    %6766 = vmatprep.subr.mxu0 %v6701
    %6767 = vmatpush1.msra.mxu0 %v6700
    %6768 = vmatprep.subr.mxu0 %v6699
    %6769 = vmatpush1.msra.mxu0 %v6698
    %6770 = vmatprep.subr.mxu0 %v6697
    %6771 = vmatpush1.msra.mxu0 %v6696
    %6772 = vmatprep.subr.mxu0 %v6695
    %6773 = vmatpush1.msra.mxu0 %v6694
    %6774 = vmatprep.subr.mxu0 %v6693
    %6775 = vmatpush1.msra.mxu0 %v6692
    %6776 = vmatprep.subr.mxu0 %v6691
    %6777 = vmatpush1.msra.mxu0 %v6690
    %6778 = vmatprep.subr.mxu0 %v6689
    %6779 = vmatpush1.msra.mxu0 %v6688
    %6780 = vmatprep.subr.mxu0 %v6687
    %6781 = vmatpush1.msra.mxu0 %v6686
    %6782 = vmatprep.subr.mxu0 %v6749
    %6783 = vmatpush2.msra.mxu0 %v6748
    %6784 = vmatprep.subr.mxu0 %v6747
    %6785 = vmatpush2.msra.mxu0 %v6746
    %6786 = vmatprep.subr.mxu0 %v6745
    %6787 = vmatpush2.msra.mxu0 %v6744
    %6788 = vmatprep.subr.mxu0 %v6743
    %6789 = vmatpush2.msra.mxu0 %v6742
    %6790 = vmatprep.subr.mxu0 %v6741
    %6791 = vmatpush2.msra.mxu0 %v6740
    %6792 = vmatprep.subr.mxu0 %v6739
    %6793 = vmatpush2.msra.mxu0 %v6738
    %6794 = vmatprep.subr.mxu0 %v6737
    %6795 = vmatpush2.msra.mxu0 %v6736
    %6796 = vmatprep.subr.mxu0 %v6735
    %6797 = vmatpush2.msra.mxu0 %v6734
    %6798 = vmatprep.subr.mxu0 %v6733
    %6799 = vmatpush2.msra.mxu0 %v6732
    %6800 = vmatprep.subr.mxu0 %v6731
    %6801 = vmatpush2.msra.mxu0 %v6730
    %6802 = vmatprep.subr.mxu0 %v6729
    %6803 = vmatpush2.msra.mxu0 %v6728
    %6804 = vmatprep.subr.mxu0 %v6727
    %6805 = vmatpush2.msra.mxu0 %v6726
    %6806 = vmatprep.subr.mxu0 %v6725
    %6807 = vmatpush2.msra.mxu0 %v6724
    %6808 = vmatprep.subr.mxu0 %v6723
    %6809 = vmatpush2.msra.mxu0 %v6722
    %6810 = vmatprep.subr.mxu0 %v6721
    %6811 = vmatpush2.msra.mxu0 %v6720
    %6812 = vmatprep.subr.mxu0 %v6719
    %6813 = vmatpush2.msra.mxu0 %v6718
    %6814 = vmatprep.mubr.f32.mxu0 %v6667
    %6815 = vmatmul.mubr.f32.gmra.mxu0 %v6660
    %v6816 = vpop.f32.mrf.mxu0
    %v6817 = vadd.f32 0.0, %v6816
    %v6818 = vpop.f32.mrf.mxu0
    %v6819 = vadd.f32 0.0, %v6818
    %6820 = vdwg.mxu0
    %6821 = vmatprep.subr.mxu0 %v6717
    %6822 = vmatpush1.msra.mxu0 %v6716
    %6823 = vmatprep.subr.mxu0 %v6715
    %6824 = vmatpush1.msra.mxu0 %v6714
    %6825 = vmatprep.subr.mxu0 %v6713
    %6826 = vmatpush1.msra.mxu0 %v6712
    %6827 = vmatprep.subr.mxu0 %v6711
    %6828 = vmatpush1.msra.mxu0 %v6710
    %6829 = vmatprep.subr.mxu0 %v6709
    %6830 = vmatpush1.msra.mxu0 %v6708
    %6831 = vmatprep.subr.mxu0 %v6707
    %6832 = vmatpush1.msra.mxu0 %v6706
    %6833 = vmatprep.subr.mxu0 %v6705
    %6834 = vmatpush1.msra.mxu0 %v6704
    %6835 = vmatprep.subr.mxu0 %v6703
    %6836 = vmatpush1.msra.mxu0 %v6702
    %6837 = vmatprep.subr.mxu0 %v6701
    %6838 = vmatpush1.msra.mxu0 %v6700
    %6839 = vmatprep.subr.mxu0 %v6699
    %6840 = vmatpush1.msra.mxu0 %v6698
    %6841 = vmatprep.subr.mxu0 %v6697
    %6842 = vmatpush1.msra.mxu0 %v6696
    %6843 = vmatprep.subr.mxu0 %v6695
    %6844 = vmatpush1.msra.mxu0 %v6694
    %6845 = vmatprep.subr.mxu0 %v6693
    %6846 = vmatpush1.msra.mxu0 %v6692
    %6847 = vmatprep.subr.mxu0 %v6691
    %6848 = vmatpush1.msra.mxu0 %v6690
    %6849 = vmatprep.subr.mxu0 %v6689
    %6850 = vmatpush1.msra.mxu0 %v6688
    %6851 = vmatprep.subr.mxu0 %v6687
    %6852 = vmatpush1.msra.mxu0 %v6686
    %6853 = vmatprep.subr.mxu0 %v6749
    %6854 = vmatpush2.msra.mxu0 %v6748
    %6855 = vmatprep.subr.mxu0 %v6747
    %6856 = vmatpush2.msra.mxu0 %v6746
    %6857 = vmatprep.subr.mxu0 %v6745
    %6858 = vmatpush2.msra.mxu0 %v6744
    %6859 = vmatprep.subr.mxu0 %v6743
    %6860 = vmatpush2.msra.mxu0 %v6742
    %6861 = vmatprep.subr.mxu0 %v6741
    %6862 = vmatpush2.msra.mxu0 %v6740
    %6863 = vmatprep.subr.mxu0 %v6739
    %6864 = vmatpush2.msra.mxu0 %v6738
    %6865 = vmatprep.subr.mxu0 %v6737
    %6866 = vmatpush2.msra.mxu0 %v6736
    %6867 = vmatprep.subr.mxu0 %v6735
    %6868 = vmatpush2.msra.mxu0 %v6734
    %6869 = vmatprep.subr.mxu0 %v6733
    %6870 = vmatpush2.msra.mxu0 %v6732
    %6871 = vmatprep.subr.mxu0 %v6731
    %6872 = vmatpush2.msra.mxu0 %v6730
    %6873 = vmatprep.subr.mxu0 %v6729
    %6874 = vmatpush2.msra.mxu0 %v6728
    %6875 = vmatprep.subr.mxu0 %v6727
    %6876 = vmatpush2.msra.mxu0 %v6726
    %6877 = vmatprep.subr.mxu0 %v6725
    %6878 = vmatpush2.msra.mxu0 %v6724
    %6879 = vmatprep.subr.mxu0 %v6723
    %6880 = vmatpush2.msra.mxu0 %v6722
    %6881 = vmatprep.subr.mxu0 %v6721
    %6882 = vmatpush2.msra.mxu0 %v6720
    %6883 = vmatprep.subr.mxu0 %v6719
    %6884 = vmatpush2.msra.mxu0 %v6718
    %6885 = vmatprep.mubr.f32.mxu0 %v6685
    %6886 = vmatmul.mubr.f32.gmra.mxu0 %v6678
    %v6887 = vpop.f32.mrf.mxu0
    %v6888 = vadd.f32 0.0, %v6887
    %v6889 = vpop.f32.mrf.mxu0
    %v6890 = vadd.f32 0.0, %v6889
    %6891 = vdwg.mxu0
    %v6892 = vmul.f32 %v6817, %v6817
    %v6893 = vmul.f32 %v6819, %v6819
    %v6894 = vsub.f32 %v6888, %v6892
    %v6895 = vsub.f32 %v6890, %v6893
    %v6896 = vlaneseq
    %v6897 = vshrl.u32 %v6896, 7
    %v6898 = vsub.s32 0, %v6897
    %v6899 = vrot.slane %v6817, %v6898
    %v6900 = vlaneseq
    %v6901 = vshrl.u32 %v6900, 7
    %v6902 = vsub.s32 0, %v6901
    %v6903 = vrot.slane %v6819, %v6902
    %v6904 = vsub.f32 %v6650, %v6899
    %v6905 = vsub.f32 %v6651, %v6903
    %v6906 = vsub.f32 %v6652, %v6899
    %v6907 = vsub.f32 %v6653, %v6903
    %v6908 = vadd.f32 %v6894, 1e-05
    %v6909 = vadd.f32 %v6895, 1e-05
    %v6910 = vrsqrt.pop %v6908
    %v6911 = vrsqrt.pop %v6909
    %v6912 = vlaneseq
    %v6913 = vshrl.u32 %v6912, 7
    %v6914 = vsub.s32 0, %v6913
    %v6915 = vrot.slane %v6910, %v6914
    %v6916 = vlaneseq
    %v6917 = vshrl.u32 %v6916, 7
    %v6918 = vsub.s32 0, %v6917
    %v6919 = vrot.slane %v6911, %v6918
    %v6920 = vmul.f32 %v6904, %v6915
    %v6921 = vmul.f32 %v6905, %v6919
    %v6922 = vmul.f32 %v6906, %v6915
    %v6923 = vmul.f32 %v6907, %v6919
    %s6924 = scalar_lea.vmem [#allocation11], 7
    %v6925 = vld [vmem:[%s6924] ss:$8 sm:$0x3]
    %v6927 = vlaneseq
    %v6928 = vshrl.u32 %v6927, 7
    %v6929 = vsub.s32 0, %v6928
    %v6930 = vrot.slane %v6925, %v6929
    %v6931 = vlaneseq
    %v6932 = vshrl.u32 %v6931, 7
    %v6933 = vsub.s32 1, %v6932
    %v6934 = vrot.slane %v6925, %v6933
    %v6937 = vmul.f32 %v6920, %v6930
    %v6938 = vmul.f32 %v6921, %v6934
    %v6939 = vmul.f32 %v6922, %v6930
    %v6940 = vmul.f32 %v6923, %v6934
    %s6941 = scalar_lea.vmem [#allocation12], 7
    %v6942 = vld [vmem:[%s6941] ss:$8 sm:$0x3]
    %v6944 = vlaneseq
    %v6945 = vshrl.u32 %v6944, 7
    %v6946 = vsub.s32 0, %v6945
    %v6947 = vrot.slane %v6942, %v6946
    %v6948 = vlaneseq
    %v6949 = vshrl.u32 %v6948, 7
    %v6950 = vsub.s32 1, %v6949
    %v6951 = vrot.slane %v6942, %v6950
    %v6954 = vadd.f32 %v6937, %v6947
    %v6955 = vadd.f32 %v6938, %v6951
    %v6956 = vadd.f32 %v6939, %v6947
    %v6957 = vadd.f32 %v6940, %v6951
    %s6958 = sld [smem:[#allocation33 + $0x7]]
    %vm6959 = vcmp.ge.f32.partialorder %v6954, 0.0
    %vm6960 = vcmp.ge.f32.partialorder %v6955, 0.0
    %vm6961 = vcmp.ge.f32.partialorder %v6956, 0.0
    %vm6962 = vcmp.ge.f32.partialorder %v6957, 0.0
    %v6963 = vstv %s6958
    %v6964 = vmul.f32 %v6963, %v6954
    %v6965 = vmul.f32 %v6963, %v6955
    %v6966 = vmul.f32 %v6963, %v6956
    %v6967 = vmul.f32 %v6963, %v6957
    %v6968 = vsel %vm6959, %v6954, %v6964
    %v6969 = vsel %vm6960, %v6955, %v6965
    %v6970 = vsel %vm6961, %v6956, %v6966
    %v6971 = vsel %vm6962, %v6957, %v6967
    %v6976 = vrot.slane %v6968, 7
    %v6977 = vrot.slane %v6969, 7
    %v6978 = vrot.slane %v6970, 7
    %v6979 = vrot.slane %v6971, 7
    %6984 = vst [vmem:[#allocation3] sm:$0xfe] %v6976
    %6985 = vst [vmem:[#allocation3 + $0x8] sm:$0xfe] %v6977
    %6986 = vst [vmem:[#allocation3 + $0x10] sm:$0x1] %v6976
    %6987 = vst [vmem:[#allocation3 + $0x18] sm:$0x1] %v6977
    %6988 = vst [vmem:[#allocation3 + $0x20] sm:$0xfe] %v6978
    %6989 = vst [vmem:[#allocation3 + $0x28] sm:$0xfe] %v6979
    %6990 = vst [vmem:[#allocation3 + $0x30] sm:$0x1] %v6978
    %6991 = vst [vmem:[#allocation3 + $0x38] sm:$0x1] %v6979
    %v6992 = vld [vmem:[#allocation3] sm:$0xff]
    %v6993 = vld [vmem:[#allocation3 + $0x8] sm:$0xff]
    %v6994 = vld [vmem:[#allocation3 + $0x20] sm:$0xff]
    %v6995 = vld [vmem:[#allocation3 + $0x28] sm:$0xff]
    %s6996 = scalar_lea.vmem [#allocation9], 10752
    %v6997 = vld [vmem:[%s6996] sm:$0xff]
    %v6998 = vld [vmem:[%s6996 + $0x8] sm:$0xff]
    %v6999 = vld [vmem:[%s6996 + $0x10] sm:$0xff]
    %v7000 = vld [vmem:[%s6996 + $0x18] sm:$0xff]
    %v7001 = vld [vmem:[%s6996 + $0x20] sm:$0xff]
    %v7002 = vld [vmem:[%s6996 + $0x28] sm:$0xff]
    %v7003 = vld [vmem:[%s6996 + $0x30] sm:$0xff]
    %v7004 = vld [vmem:[%s6996 + $0x38] sm:$0xff]
    %v7005 = vld [vmem:[%s6996 + $0x40] sm:$0xff]
    %v7006 = vld [vmem:[%s6996 + $0x48] sm:$0xff]
    %v7007 = vld [vmem:[%s6996 + $0x50] sm:$0xff]
    %v7008 = vld [vmem:[%s6996 + $0x58] sm:$0xff]
    %v7009 = vld [vmem:[%s6996 + $0x60] sm:$0xff]
    %v7010 = vld [vmem:[%s6996 + $0x68] sm:$0xff]
    %v7011 = vld [vmem:[%s6996 + $0x70] sm:$0xff]
    %v7012 = vld [vmem:[%s6996 + $0x78] sm:$0xff]
    %v7013 = vld [vmem:[%s6996 + $0x80] sm:$0xff]
    %v7014 = vld [vmem:[%s6996 + $0x88] sm:$0xff]
    %v7015 = vld [vmem:[%s6996 + $0x90] sm:$0xff]
    %v7016 = vld [vmem:[%s6996 + $0x98] sm:$0xff]
    %v7017 = vld [vmem:[%s6996 + $0xa0] sm:$0xff]
    %v7018 = vld [vmem:[%s6996 + $0xa8] sm:$0xff]
    %v7019 = vld [vmem:[%s6996 + $0xb0] sm:$0xff]
    %v7020 = vld [vmem:[%s6996 + $0xb8] sm:$0xff]
    %v7021 = vld [vmem:[%s6996 + $0xc0] sm:$0xff]
    %v7022 = vld [vmem:[%s6996 + $0xc8] sm:$0xff]
    %v7023 = vld [vmem:[%s6996 + $0xd0] sm:$0xff]
    %v7024 = vld [vmem:[%s6996 + $0xd8] sm:$0xff]
    %v7025 = vld [vmem:[%s6996 + $0xe0] sm:$0xff]
    %v7026 = vld [vmem:[%s6996 + $0xe8] sm:$0xff]
    %v7027 = vld [vmem:[%s6996 + $0xf0] sm:$0xff]
    %v7028 = vld [vmem:[%s6996 + $0xf8] sm:$0xff]
    %v7029 = vld [vmem:[%s6996 + $0x100] sm:$0xff]
    %v7030 = vld [vmem:[%s6996 + $0x108] sm:$0xff]
    %v7031 = vld [vmem:[%s6996 + $0x110] sm:$0xff]
    %v7032 = vld [vmem:[%s6996 + $0x118] sm:$0xff]
    %v7033 = vld [vmem:[%s6996 + $0x120] sm:$0xff]
    %v7034 = vld [vmem:[%s6996 + $0x128] sm:$0xff]
    %v7035 = vld [vmem:[%s6996 + $0x130] sm:$0xff]
    %v7036 = vld [vmem:[%s6996 + $0x138] sm:$0xff]
    %v7037 = vld [vmem:[%s6996 + $0x140] sm:$0xff]
    %v7038 = vld [vmem:[%s6996 + $0x148] sm:$0xff]
    %v7039 = vld [vmem:[%s6996 + $0x150] sm:$0xff]
    %v7040 = vld [vmem:[%s6996 + $0x158] sm:$0xff]
    %v7041 = vld [vmem:[%s6996 + $0x160] sm:$0xff]
    %v7042 = vld [vmem:[%s6996 + $0x168] sm:$0xff]
    %v7043 = vld [vmem:[%s6996 + $0x170] sm:$0xff]
    %v7044 = vld [vmem:[%s6996 + $0x178] sm:$0xff]
    %v7045 = vld [vmem:[%s6996 + $0x180] sm:$0xff]
    %v7046 = vld [vmem:[%s6996 + $0x188] sm:$0xff]
    %v7047 = vld [vmem:[%s6996 + $0x190] sm:$0xff]
    %v7048 = vld [vmem:[%s6996 + $0x198] sm:$0xff]
    %v7049 = vld [vmem:[%s6996 + $0x1a0] sm:$0xff]
    %v7050 = vld [vmem:[%s6996 + $0x1a8] sm:$0xff]
    %v7051 = vld [vmem:[%s6996 + $0x1b0] sm:$0xff]
    %v7052 = vld [vmem:[%s6996 + $0x1b8] sm:$0xff]
    %v7053 = vld [vmem:[%s6996 + $0x1c0] sm:$0xff]
    %v7054 = vld [vmem:[%s6996 + $0x1c8] sm:$0xff]
    %v7055 = vld [vmem:[%s6996 + $0x1d0] sm:$0xff]
    %v7056 = vld [vmem:[%s6996 + $0x1d8] sm:$0xff]
    %v7057 = vld [vmem:[%s6996 + $0x1e0] sm:$0xff]
    %v7058 = vld [vmem:[%s6996 + $0x1e8] sm:$0xff]
    %v7059 = vld [vmem:[%s6996 + $0x1f0] sm:$0xff]
    %v7060 = vld [vmem:[%s6996 + $0x1f8] sm:$0xff]
    %v7061 = vld [vmem:[#allocation3] sm:$0xfe]
    %v7062 = vld [vmem:[#allocation3 + $0x8] sm:$0xfe]
    %v7063 = vld [vmem:[#allocation3 + $0x10] sm:$0x1]
    %v7064 = vld [vmem:[#allocation3 + $0x18] sm:$0x1]
    %v7065 = vld [vmem:[#allocation3 + $0x20] sm:$0xfe]
    %v7066 = vld [vmem:[#allocation3 + $0x28] sm:$0xfe]
    %v7067 = vld [vmem:[#allocation3 + $0x30] sm:$0x1]
    %v7068 = vld [vmem:[#allocation3 + $0x38] sm:$0x1]
    %v7077 = vrot.slane %v7061, 1
    %v7078 = vrot.slane %v7063, 1
    %v7079 = vsel %vm1241, %v7077, %v7078
    %v7080 = vrot.slane %v7062, 1
    %v7081 = vrot.slane %v7064, 1
    %v7082 = vsel %vm1241, %v7080, %v7081
    %v7083 = vrot.slane %v7065, 1
    %v7084 = vrot.slane %v7067, 1
    %v7085 = vsel %vm1241, %v7083, %v7084
    %v7086 = vrot.slane %v7066, 1
    %v7087 = vrot.slane %v7068, 1
    %v7088 = vsel %vm1241, %v7086, %v7087
    %s7093 = scalar_lea.vmem [#allocation9], 11264
    %v7094 = vld [vmem:[%s7093] sm:$0xff]
    %v7095 = vld [vmem:[%s7093 + $0x8] sm:$0xff]
    %v7096 = vld [vmem:[%s7093 + $0x10] sm:$0xff]
    %v7097 = vld [vmem:[%s7093 + $0x18] sm:$0xff]
    %v7098 = vld [vmem:[%s7093 + $0x20] sm:$0xff]
    %v7099 = vld [vmem:[%s7093 + $0x28] sm:$0xff]
    %v7100 = vld [vmem:[%s7093 + $0x30] sm:$0xff]
    %v7101 = vld [vmem:[%s7093 + $0x38] sm:$0xff]
    %v7102 = vld [vmem:[%s7093 + $0x40] sm:$0xff]
    %v7103 = vld [vmem:[%s7093 + $0x48] sm:$0xff]
    %v7104 = vld [vmem:[%s7093 + $0x50] sm:$0xff]
    %v7105 = vld [vmem:[%s7093 + $0x58] sm:$0xff]
    %v7106 = vld [vmem:[%s7093 + $0x60] sm:$0xff]
    %v7107 = vld [vmem:[%s7093 + $0x68] sm:$0xff]
    %v7108 = vld [vmem:[%s7093 + $0x70] sm:$0xff]
    %v7109 = vld [vmem:[%s7093 + $0x78] sm:$0xff]
    %v7110 = vld [vmem:[%s7093 + $0x80] sm:$0xff]
    %v7111 = vld [vmem:[%s7093 + $0x88] sm:$0xff]
    %v7112 = vld [vmem:[%s7093 + $0x90] sm:$0xff]
    %v7113 = vld [vmem:[%s7093 + $0x98] sm:$0xff]
    %v7114 = vld [vmem:[%s7093 + $0xa0] sm:$0xff]
    %v7115 = vld [vmem:[%s7093 + $0xa8] sm:$0xff]
    %v7116 = vld [vmem:[%s7093 + $0xb0] sm:$0xff]
    %v7117 = vld [vmem:[%s7093 + $0xb8] sm:$0xff]
    %v7118 = vld [vmem:[%s7093 + $0xc0] sm:$0xff]
    %v7119 = vld [vmem:[%s7093 + $0xc8] sm:$0xff]
    %v7120 = vld [vmem:[%s7093 + $0xd0] sm:$0xff]
    %v7121 = vld [vmem:[%s7093 + $0xd8] sm:$0xff]
    %v7122 = vld [vmem:[%s7093 + $0xe0] sm:$0xff]
    %v7123 = vld [vmem:[%s7093 + $0xe8] sm:$0xff]
    %v7124 = vld [vmem:[%s7093 + $0xf0] sm:$0xff]
    %v7125 = vld [vmem:[%s7093 + $0xf8] sm:$0xff]
    %v7126 = vld [vmem:[%s7093 + $0x100] sm:$0xff]
    %v7127 = vld [vmem:[%s7093 + $0x108] sm:$0xff]
    %v7128 = vld [vmem:[%s7093 + $0x110] sm:$0xff]
    %v7129 = vld [vmem:[%s7093 + $0x118] sm:$0xff]
    %v7130 = vld [vmem:[%s7093 + $0x120] sm:$0xff]
    %v7131 = vld [vmem:[%s7093 + $0x128] sm:$0xff]
    %v7132 = vld [vmem:[%s7093 + $0x130] sm:$0xff]
    %v7133 = vld [vmem:[%s7093 + $0x138] sm:$0xff]
    %v7134 = vld [vmem:[%s7093 + $0x140] sm:$0xff]
    %v7135 = vld [vmem:[%s7093 + $0x148] sm:$0xff]
    %v7136 = vld [vmem:[%s7093 + $0x150] sm:$0xff]
    %v7137 = vld [vmem:[%s7093 + $0x158] sm:$0xff]
    %v7138 = vld [vmem:[%s7093 + $0x160] sm:$0xff]
    %v7139 = vld [vmem:[%s7093 + $0x168] sm:$0xff]
    %v7140 = vld [vmem:[%s7093 + $0x170] sm:$0xff]
    %v7141 = vld [vmem:[%s7093 + $0x178] sm:$0xff]
    %v7142 = vld [vmem:[%s7093 + $0x180] sm:$0xff]
    %v7143 = vld [vmem:[%s7093 + $0x188] sm:$0xff]
    %v7144 = vld [vmem:[%s7093 + $0x190] sm:$0xff]
    %v7145 = vld [vmem:[%s7093 + $0x198] sm:$0xff]
    %v7146 = vld [vmem:[%s7093 + $0x1a0] sm:$0xff]
    %v7147 = vld [vmem:[%s7093 + $0x1a8] sm:$0xff]
    %v7148 = vld [vmem:[%s7093 + $0x1b0] sm:$0xff]
    %v7149 = vld [vmem:[%s7093 + $0x1b8] sm:$0xff]
    %v7150 = vld [vmem:[%s7093 + $0x1c0] sm:$0xff]
    %v7151 = vld [vmem:[%s7093 + $0x1c8] sm:$0xff]
    %v7152 = vld [vmem:[%s7093 + $0x1d0] sm:$0xff]
    %v7153 = vld [vmem:[%s7093 + $0x1d8] sm:$0xff]
    %v7154 = vld [vmem:[%s7093 + $0x1e0] sm:$0xff]
    %v7155 = vld [vmem:[%s7093 + $0x1e8] sm:$0xff]
    %v7156 = vld [vmem:[%s7093 + $0x1f0] sm:$0xff]
    %v7157 = vld [vmem:[%s7093 + $0x1f8] sm:$0xff]
    %7158 = vmatprep.subr.mxu0 %v7125
    %7159 = vmatpush1.msra.mxu0 %v7124
    %7160 = vmatprep.subr.mxu0 %v7123
    %7161 = vmatpush1.msra.mxu0 %v7122
    %7162 = vmatprep.subr.mxu0 %v7121
    %7163 = vmatpush1.msra.mxu0 %v7120
    %7164 = vmatprep.subr.mxu0 %v7119
    %7165 = vmatpush1.msra.mxu0 %v7118
    %7166 = vmatprep.subr.mxu0 %v7117
    %7167 = vmatpush1.msra.mxu0 %v7116
    %7168 = vmatprep.subr.mxu0 %v7115
    %7169 = vmatpush1.msra.mxu0 %v7114
    %7170 = vmatprep.subr.mxu0 %v7113
    %7171 = vmatpush1.msra.mxu0 %v7112
    %7172 = vmatprep.subr.mxu0 %v7111
    %7173 = vmatpush1.msra.mxu0 %v7110
    %7174 = vmatprep.subr.mxu0 %v7109
    %7175 = vmatpush1.msra.mxu0 %v7108
    %7176 = vmatprep.subr.mxu0 %v7107
    %7177 = vmatpush1.msra.mxu0 %v7106
    %7178 = vmatprep.subr.mxu0 %v7105
    %7179 = vmatpush1.msra.mxu0 %v7104
    %7180 = vmatprep.subr.mxu0 %v7103
    %7181 = vmatpush1.msra.mxu0 %v7102
    %7182 = vmatprep.subr.mxu0 %v7101
    %7183 = vmatpush1.msra.mxu0 %v7100
    %7184 = vmatprep.subr.mxu0 %v7099
    %7185 = vmatpush1.msra.mxu0 %v7098
    %7186 = vmatprep.subr.mxu0 %v7097
    %7187 = vmatpush1.msra.mxu0 %v7096
    %7188 = vmatprep.subr.mxu0 %v7095
    %7189 = vmatpush1.msra.mxu0 %v7094
    %7190 = vmatprep.subr.mxu0 %v7157
    %7191 = vmatpush2.msra.mxu0 %v7156
    %7192 = vmatprep.subr.mxu0 %v7155
    %7193 = vmatpush2.msra.mxu0 %v7154
    %7194 = vmatprep.subr.mxu0 %v7153
    %7195 = vmatpush2.msra.mxu0 %v7152
    %7196 = vmatprep.subr.mxu0 %v7151
    %7197 = vmatpush2.msra.mxu0 %v7150
    %7198 = vmatprep.subr.mxu0 %v7149
    %7199 = vmatpush2.msra.mxu0 %v7148
    %7200 = vmatprep.subr.mxu0 %v7147
    %7201 = vmatpush2.msra.mxu0 %v7146
    %7202 = vmatprep.subr.mxu0 %v7145
    %7203 = vmatpush2.msra.mxu0 %v7144
    %7204 = vmatprep.subr.mxu0 %v7143
    %7205 = vmatpush2.msra.mxu0 %v7142
    %7206 = vmatprep.subr.mxu0 %v7141
    %7207 = vmatpush2.msra.mxu0 %v7140
    %7208 = vmatprep.subr.mxu0 %v7139
    %7209 = vmatpush2.msra.mxu0 %v7138
    %7210 = vmatprep.subr.mxu0 %v7137
    %7211 = vmatpush2.msra.mxu0 %v7136
    %7212 = vmatprep.subr.mxu0 %v7135
    %7213 = vmatpush2.msra.mxu0 %v7134
    %7214 = vmatprep.subr.mxu0 %v7133
    %7215 = vmatpush2.msra.mxu0 %v7132
    %7216 = vmatprep.subr.mxu0 %v7131
    %7217 = vmatpush2.msra.mxu0 %v7130
    %7218 = vmatprep.subr.mxu0 %v7129
    %7219 = vmatpush2.msra.mxu0 %v7128
    %7220 = vmatprep.subr.mxu0 %v7127
    %7221 = vmatpush2.msra.mxu0 %v7126
    %7222 = vmatprep.mubr.f32.mxu0 %v7082
    %7223 = vmatmul.mubr.f32.gmra.mxu0 %v7079
    %v7224 = vpop.f32.mrf.mxu0
    %v7225 = vadd.f32 0.0, %v7224
    %v7226 = vpop.f32.mrf.mxu0
    %v7227 = vadd.f32 0.0, %v7226
    %7228 = vmatprep.mubr.f32.mxu0 %v7088
    %7229 = vmatmul.mubr.f32.gmra.mxu0 %v7085
    %v7230 = vpop.f32.mrf.mxu0
    %v7231 = vadd.f32 0.0, %v7230
    %v7232 = vpop.f32.mrf.mxu0
    %v7233 = vadd.f32 0.0, %v7232
    %7234 = vdwg.mxu0
    %7235 = vmatprep.subr.mxu0 %v7028
    %7236 = vmatpush1.msra.mxu0 %v7027
    %7237 = vmatprep.subr.mxu0 %v7026
    %7238 = vmatpush1.msra.mxu0 %v7025
    %7239 = vmatprep.subr.mxu0 %v7024
    %7240 = vmatpush1.msra.mxu0 %v7023
    %7241 = vmatprep.subr.mxu0 %v7022
    %7242 = vmatpush1.msra.mxu0 %v7021
    %7243 = vmatprep.subr.mxu0 %v7020
    %7244 = vmatpush1.msra.mxu0 %v7019
    %7245 = vmatprep.subr.mxu0 %v7018
    %7246 = vmatpush1.msra.mxu0 %v7017
    %7247 = vmatprep.subr.mxu0 %v7016
    %7248 = vmatpush1.msra.mxu0 %v7015
    %7249 = vmatprep.subr.mxu0 %v7014
    %7250 = vmatpush1.msra.mxu0 %v7013
    %7251 = vmatprep.subr.mxu0 %v7012
    %7252 = vmatpush1.msra.mxu0 %v7011
    %7253 = vmatprep.subr.mxu0 %v7010
    %7254 = vmatpush1.msra.mxu0 %v7009
    %7255 = vmatprep.subr.mxu0 %v7008
    %7256 = vmatpush1.msra.mxu0 %v7007
    %7257 = vmatprep.subr.mxu0 %v7006
    %7258 = vmatpush1.msra.mxu0 %v7005
    %7259 = vmatprep.subr.mxu0 %v7004
    %7260 = vmatpush1.msra.mxu0 %v7003
    %7261 = vmatprep.subr.mxu0 %v7002
    %7262 = vmatpush1.msra.mxu0 %v7001
    %7263 = vmatprep.subr.mxu0 %v7000
    %7264 = vmatpush1.msra.mxu0 %v6999
    %7265 = vmatprep.subr.mxu0 %v6998
    %7266 = vmatpush1.msra.mxu0 %v6997
    %7267 = vmatprep.subr.mxu0 %v7060
    %7268 = vmatpush2.msra.mxu0 %v7059
    %7269 = vmatprep.subr.mxu0 %v7058
    %7270 = vmatpush2.msra.mxu0 %v7057
    %7271 = vmatprep.subr.mxu0 %v7056
    %7272 = vmatpush2.msra.mxu0 %v7055
    %7273 = vmatprep.subr.mxu0 %v7054
    %7274 = vmatpush2.msra.mxu0 %v7053
    %7275 = vmatprep.subr.mxu0 %v7052
    %7276 = vmatpush2.msra.mxu0 %v7051
    %7277 = vmatprep.subr.mxu0 %v7050
    %7278 = vmatpush2.msra.mxu0 %v7049
    %7279 = vmatprep.subr.mxu0 %v7048
    %7280 = vmatpush2.msra.mxu0 %v7047
    %7281 = vmatprep.subr.mxu0 %v7046
    %7282 = vmatpush2.msra.mxu0 %v7045
    %7283 = vmatprep.subr.mxu0 %v7044
    %7284 = vmatpush2.msra.mxu0 %v7043
    %7285 = vmatprep.subr.mxu0 %v7042
    %7286 = vmatpush2.msra.mxu0 %v7041
    %7287 = vmatprep.subr.mxu0 %v7040
    %7288 = vmatpush2.msra.mxu0 %v7039
    %7289 = vmatprep.subr.mxu0 %v7038
    %7290 = vmatpush2.msra.mxu0 %v7037
    %7291 = vmatprep.subr.mxu0 %v7036
    %7292 = vmatpush2.msra.mxu0 %v7035
    %7293 = vmatprep.subr.mxu0 %v7034
    %7294 = vmatpush2.msra.mxu0 %v7033
    %7295 = vmatprep.subr.mxu0 %v7032
    %7296 = vmatpush2.msra.mxu0 %v7031
    %7297 = vmatprep.subr.mxu0 %v7030
    %7298 = vmatpush2.msra.mxu0 %v7029
    %7299 = vmatprep.mubr.f32.mxu0 %v6993
    %7300 = vmatmul.mubr.f32.gmra.mxu0 %v6992
    %v7301 = vpop.f32.mrf.mxu0
    %v7302 = vadd.f32 %v7225, %v7301
    %v7303 = vpop.f32.mrf.mxu0
    %v7304 = vadd.f32 %v7227, %v7303
    %7305 = vmatprep.mubr.f32.mxu0 %v6995
    %7306 = vmatmul.mubr.f32.gmra.mxu0 %v6994
    %v7307 = vpop.f32.mrf.mxu0
    %v7308 = vadd.f32 %v7231, %v7307
    %v7309 = vpop.f32.mrf.mxu0
    %v7310 = vadd.f32 %v7233, %v7309
    %7311 = vdwg.mxu0
    %v7312 = vld [vmem:[#allocation3] sm:$0xfc]
    %v7313 = vld [vmem:[#allocation3 + $0x8] sm:$0xfc]
    %v7314 = vld [vmem:[#allocation3 + $0x10] sm:$0x3]
    %v7315 = vld [vmem:[#allocation3 + $0x18] sm:$0x3]
    %v7316 = vld [vmem:[#allocation3 + $0x20] sm:$0xfc]
    %v7317 = vld [vmem:[#allocation3 + $0x28] sm:$0xfc]
    %v7318 = vld [vmem:[#allocation3 + $0x30] sm:$0x3]
    %v7319 = vld [vmem:[#allocation3 + $0x38] sm:$0x3]
    %v7328 = vrot.slane %v7312, 2
    %v7329 = vrot.slane %v7314, 2
    %v7330 = vsel %vm1493, %v7328, %v7329
    %v7331 = vrot.slane %v7313, 2
    %v7332 = vrot.slane %v7315, 2
    %v7333 = vsel %vm1493, %v7331, %v7332
    %v7334 = vrot.slane %v7316, 2
    %v7335 = vrot.slane %v7318, 2
    %v7336 = vsel %vm1493, %v7334, %v7335
    %v7337 = vrot.slane %v7317, 2
    %v7338 = vrot.slane %v7319, 2
    %v7339 = vsel %vm1493, %v7337, %v7338
    %s7344 = scalar_lea.vmem [#allocation9], 11776
    %v7345 = vld [vmem:[%s7344] sm:$0xff]
    %v7346 = vld [vmem:[%s7344 + $0x8] sm:$0xff]
    %v7347 = vld [vmem:[%s7344 + $0x10] sm:$0xff]
    %v7348 = vld [vmem:[%s7344 + $0x18] sm:$0xff]
    %v7349 = vld [vmem:[%s7344 + $0x20] sm:$0xff]
    %v7350 = vld [vmem:[%s7344 + $0x28] sm:$0xff]
    %v7351 = vld [vmem:[%s7344 + $0x30] sm:$0xff]
    %v7352 = vld [vmem:[%s7344 + $0x38] sm:$0xff]
    %v7353 = vld [vmem:[%s7344 + $0x40] sm:$0xff]
    %v7354 = vld [vmem:[%s7344 + $0x48] sm:$0xff]
    %v7355 = vld [vmem:[%s7344 + $0x50] sm:$0xff]
    %v7356 = vld [vmem:[%s7344 + $0x58] sm:$0xff]
    %v7357 = vld [vmem:[%s7344 + $0x60] sm:$0xff]
    %v7358 = vld [vmem:[%s7344 + $0x68] sm:$0xff]
    %v7359 = vld [vmem:[%s7344 + $0x70] sm:$0xff]
    %v7360 = vld [vmem:[%s7344 + $0x78] sm:$0xff]
    %v7361 = vld [vmem:[%s7344 + $0x80] sm:$0xff]
    %v7362 = vld [vmem:[%s7344 + $0x88] sm:$0xff]
    %v7363 = vld [vmem:[%s7344 + $0x90] sm:$0xff]
    %v7364 = vld [vmem:[%s7344 + $0x98] sm:$0xff]
    %v7365 = vld [vmem:[%s7344 + $0xa0] sm:$0xff]
    %v7366 = vld [vmem:[%s7344 + $0xa8] sm:$0xff]
    %v7367 = vld [vmem:[%s7344 + $0xb0] sm:$0xff]
    %v7368 = vld [vmem:[%s7344 + $0xb8] sm:$0xff]
    %v7369 = vld [vmem:[%s7344 + $0xc0] sm:$0xff]
    %v7370 = vld [vmem:[%s7344 + $0xc8] sm:$0xff]
    %v7371 = vld [vmem:[%s7344 + $0xd0] sm:$0xff]
    %v7372 = vld [vmem:[%s7344 + $0xd8] sm:$0xff]
    %v7373 = vld [vmem:[%s7344 + $0xe0] sm:$0xff]
    %v7374 = vld [vmem:[%s7344 + $0xe8] sm:$0xff]
    %v7375 = vld [vmem:[%s7344 + $0xf0] sm:$0xff]
    %v7376 = vld [vmem:[%s7344 + $0xf8] sm:$0xff]
    %v7377 = vld [vmem:[%s7344 + $0x100] sm:$0xff]
    %v7378 = vld [vmem:[%s7344 + $0x108] sm:$0xff]
    %v7379 = vld [vmem:[%s7344 + $0x110] sm:$0xff]
    %v7380 = vld [vmem:[%s7344 + $0x118] sm:$0xff]
    %v7381 = vld [vmem:[%s7344 + $0x120] sm:$0xff]
    %v7382 = vld [vmem:[%s7344 + $0x128] sm:$0xff]
    %v7383 = vld [vmem:[%s7344 + $0x130] sm:$0xff]
    %v7384 = vld [vmem:[%s7344 + $0x138] sm:$0xff]
    %v7385 = vld [vmem:[%s7344 + $0x140] sm:$0xff]
    %v7386 = vld [vmem:[%s7344 + $0x148] sm:$0xff]
    %v7387 = vld [vmem:[%s7344 + $0x150] sm:$0xff]
    %v7388 = vld [vmem:[%s7344 + $0x158] sm:$0xff]
    %v7389 = vld [vmem:[%s7344 + $0x160] sm:$0xff]
    %v7390 = vld [vmem:[%s7344 + $0x168] sm:$0xff]
    %v7391 = vld [vmem:[%s7344 + $0x170] sm:$0xff]
    %v7392 = vld [vmem:[%s7344 + $0x178] sm:$0xff]
    %v7393 = vld [vmem:[%s7344 + $0x180] sm:$0xff]
    %v7394 = vld [vmem:[%s7344 + $0x188] sm:$0xff]
    %v7395 = vld [vmem:[%s7344 + $0x190] sm:$0xff]
    %v7396 = vld [vmem:[%s7344 + $0x198] sm:$0xff]
    %v7397 = vld [vmem:[%s7344 + $0x1a0] sm:$0xff]
    %v7398 = vld [vmem:[%s7344 + $0x1a8] sm:$0xff]
    %v7399 = vld [vmem:[%s7344 + $0x1b0] sm:$0xff]
    %v7400 = vld [vmem:[%s7344 + $0x1b8] sm:$0xff]
    %v7401 = vld [vmem:[%s7344 + $0x1c0] sm:$0xff]
    %v7402 = vld [vmem:[%s7344 + $0x1c8] sm:$0xff]
    %v7403 = vld [vmem:[%s7344 + $0x1d0] sm:$0xff]
    %v7404 = vld [vmem:[%s7344 + $0x1d8] sm:$0xff]
    %v7405 = vld [vmem:[%s7344 + $0x1e0] sm:$0xff]
    %v7406 = vld [vmem:[%s7344 + $0x1e8] sm:$0xff]
    %v7407 = vld [vmem:[%s7344 + $0x1f0] sm:$0xff]
    %v7408 = vld [vmem:[%s7344 + $0x1f8] sm:$0xff]
    %7409 = vmatprep.subr.mxu0 %v7376
    %7410 = vmatpush1.msra.mxu0 %v7375
    %7411 = vmatprep.subr.mxu0 %v7374
    %7412 = vmatpush1.msra.mxu0 %v7373
    %7413 = vmatprep.subr.mxu0 %v7372
    %7414 = vmatpush1.msra.mxu0 %v7371
    %7415 = vmatprep.subr.mxu0 %v7370
    %7416 = vmatpush1.msra.mxu0 %v7369
    %7417 = vmatprep.subr.mxu0 %v7368
    %7418 = vmatpush1.msra.mxu0 %v7367
    %7419 = vmatprep.subr.mxu0 %v7366
    %7420 = vmatpush1.msra.mxu0 %v7365
    %7421 = vmatprep.subr.mxu0 %v7364
    %7422 = vmatpush1.msra.mxu0 %v7363
    %7423 = vmatprep.subr.mxu0 %v7362
    %7424 = vmatpush1.msra.mxu0 %v7361
    %7425 = vmatprep.subr.mxu0 %v7360
    %7426 = vmatpush1.msra.mxu0 %v7359
    %7427 = vmatprep.subr.mxu0 %v7358
    %7428 = vmatpush1.msra.mxu0 %v7357
    %7429 = vmatprep.subr.mxu0 %v7356
    %7430 = vmatpush1.msra.mxu0 %v7355
    %7431 = vmatprep.subr.mxu0 %v7354
    %7432 = vmatpush1.msra.mxu0 %v7353
    %7433 = vmatprep.subr.mxu0 %v7352
    %7434 = vmatpush1.msra.mxu0 %v7351
    %7435 = vmatprep.subr.mxu0 %v7350
    %7436 = vmatpush1.msra.mxu0 %v7349
    %7437 = vmatprep.subr.mxu0 %v7348
    %7438 = vmatpush1.msra.mxu0 %v7347
    %7439 = vmatprep.subr.mxu0 %v7346
    %7440 = vmatpush1.msra.mxu0 %v7345
    %7441 = vmatprep.subr.mxu0 %v7408
    %7442 = vmatpush2.msra.mxu0 %v7407
    %7443 = vmatprep.subr.mxu0 %v7406
    %7444 = vmatpush2.msra.mxu0 %v7405
    %7445 = vmatprep.subr.mxu0 %v7404
    %7446 = vmatpush2.msra.mxu0 %v7403
    %7447 = vmatprep.subr.mxu0 %v7402
    %7448 = vmatpush2.msra.mxu0 %v7401
    %7449 = vmatprep.subr.mxu0 %v7400
    %7450 = vmatpush2.msra.mxu0 %v7399
    %7451 = vmatprep.subr.mxu0 %v7398
    %7452 = vmatpush2.msra.mxu0 %v7397
    %7453 = vmatprep.subr.mxu0 %v7396
    %7454 = vmatpush2.msra.mxu0 %v7395
    %7455 = vmatprep.subr.mxu0 %v7394
    %7456 = vmatpush2.msra.mxu0 %v7393
    %7457 = vmatprep.subr.mxu0 %v7392
    %7458 = vmatpush2.msra.mxu0 %v7391
    %7459 = vmatprep.subr.mxu0 %v7390
    %7460 = vmatpush2.msra.mxu0 %v7389
    %7461 = vmatprep.subr.mxu0 %v7388
    %7462 = vmatpush2.msra.mxu0 %v7387
    %7463 = vmatprep.subr.mxu0 %v7386
    %7464 = vmatpush2.msra.mxu0 %v7385
    %7465 = vmatprep.subr.mxu0 %v7384
    %7466 = vmatpush2.msra.mxu0 %v7383
    %7467 = vmatprep.subr.mxu0 %v7382
    %7468 = vmatpush2.msra.mxu0 %v7381
    %7469 = vmatprep.subr.mxu0 %v7380
    %7470 = vmatpush2.msra.mxu0 %v7379
    %7471 = vmatprep.subr.mxu0 %v7378
    %7472 = vmatpush2.msra.mxu0 %v7377
    %7473 = vmatprep.mubr.f32.mxu0 %v7333
    %7474 = vmatmul.mubr.f32.gmra.mxu0 %v7330
    %v7475 = vpop.f32.mrf.mxu0
    %v7476 = vadd.f32 0.0, %v7475
    %v7477 = vpop.f32.mrf.mxu0
    %v7478 = vadd.f32 0.0, %v7477
    %7479 = vmatprep.mubr.f32.mxu0 %v7339
    %7480 = vmatmul.mubr.f32.gmra.mxu0 %v7336
    %v7481 = vpop.f32.mrf.mxu0
    %v7482 = vadd.f32 0.0, %v7481
    %v7483 = vpop.f32.mrf.mxu0
    %v7484 = vadd.f32 0.0, %v7483
    %7485 = vdwg.mxu0
    %v7486 = vadd.f32 %v7302, %v7476
    %v7487 = vadd.f32 %v7304, %v7478
    %v7488 = vadd.f32 %v7308, %v7482
    %v7489 = vadd.f32 %v7310, %v7484
    %v7490 = vadd.f32 %v7486, %v7488
    %v7491 = vrot.slane %v7490, 4
    %v7492 = vadd.f32 %v7490, %v7491
    %v7493 = vrot.slane %v7492, 2
    %v7494 = vadd.f32 %v7492, %v7493
    %v7495 = vrot.slane %v7494, 1
    %v7496 = vadd.f32 %v7494, %v7495
    %v7497 = vadd.f32 %v7487, %v7489
    %v7498 = vrot.slane %v7497, 4
    %v7499 = vadd.f32 %v7497, %v7498
    %v7500 = vrot.slane %v7499, 2
    %v7501 = vadd.f32 %v7499, %v7500
    %v7502 = vrot.slane %v7501, 1
    %v7503 = vadd.f32 %v7501, %v7502
    %v7504 = vmul.f32 %v7486, %v7486
    %v7505 = vmul.f32 %v7487, %v7487
    %v7506 = vmul.f32 %v7488, %v7488
    %v7507 = vmul.f32 %v7489, %v7489
    %v7508 = vadd.f32 %v7504, %v7506
    %v7509 = vrot.slane %v7508, 4
    %v7510 = vadd.f32 %v7508, %v7509
    %v7511 = vrot.slane %v7510, 2
    %v7512 = vadd.f32 %v7510, %v7511
    %v7513 = vrot.slane %v7512, 1
    %v7514 = vadd.f32 %v7512, %v7513
    %v7515 = vadd.f32 %v7505, %v7507
    %v7516 = vrot.slane %v7515, 4
    %v7517 = vadd.f32 %v7515, %v7516
    %v7518 = vrot.slane %v7517, 2
    %v7519 = vadd.f32 %v7517, %v7518
    %v7520 = vrot.slane %v7519, 1
    %v7521 = vadd.f32 %v7519, %v7520
    %v7522 = vld [vmem:[#allocation14] sm:$0xff]
    %v7523 = vld [vmem:[#allocation14 + $0x8] sm:$0xff]
    %v7524 = vld [vmem:[#allocation14 + $0x10] sm:$0xff]
    %v7525 = vld [vmem:[#allocation14 + $0x18] sm:$0xff]
    %v7526 = vld [vmem:[#allocation14 + $0x20] sm:$0xff]
    %v7527 = vld [vmem:[#allocation14 + $0x28] sm:$0xff]
    %v7528 = vld [vmem:[#allocation14 + $0x30] sm:$0xff]
    %v7529 = vld [vmem:[#allocation14 + $0x38] sm:$0xff]
    %v7530 = vld [vmem:[#allocation14 + $0x40] sm:$0xff]
    %v7531 = vld [vmem:[#allocation14 + $0x48] sm:$0xff]
    %v7532 = vld [vmem:[#allocation14 + $0x50] sm:$0xff]
    %v7533 = vld [vmem:[#allocation14 + $0x58] sm:$0xff]
    %v7534 = vld [vmem:[#allocation14 + $0x60] sm:$0xff]
    %v7535 = vld [vmem:[#allocation14 + $0x68] sm:$0xff]
    %v7536 = vld [vmem:[#allocation14 + $0x70] sm:$0xff]
    %v7537 = vld [vmem:[#allocation14 + $0x78] sm:$0xff]
    %v7538 = vld [vmem:[#allocation14 + $0x80] sm:$0xff]
    %v7539 = vld [vmem:[#allocation14 + $0x88] sm:$0xff]
    %v7540 = vld [vmem:[#allocation14 + $0x90] sm:$0xff]
    %v7541 = vld [vmem:[#allocation14 + $0x98] sm:$0xff]
    %v7542 = vld [vmem:[#allocation14 + $0xa0] sm:$0xff]
    %v7543 = vld [vmem:[#allocation14 + $0xa8] sm:$0xff]
    %v7544 = vld [vmem:[#allocation14 + $0xb0] sm:$0xff]
    %v7545 = vld [vmem:[#allocation14 + $0xb8] sm:$0xff]
    %v7546 = vld [vmem:[#allocation14 + $0xc0] sm:$0xff]
    %v7547 = vld [vmem:[#allocation14 + $0xc8] sm:$0xff]
    %v7548 = vld [vmem:[#allocation14 + $0xd0] sm:$0xff]
    %v7549 = vld [vmem:[#allocation14 + $0xd8] sm:$0xff]
    %v7550 = vld [vmem:[#allocation14 + $0xe0] sm:$0xff]
    %v7551 = vld [vmem:[#allocation14 + $0xe8] sm:$0xff]
    %v7552 = vld [vmem:[#allocation14 + $0xf0] sm:$0xff]
    %v7553 = vld [vmem:[#allocation14 + $0xf8] sm:$0xff]
    %v7554 = vld [vmem:[#allocation14 + $0x100] sm:$0xff]
    %v7555 = vld [vmem:[#allocation14 + $0x108] sm:$0xff]
    %v7556 = vld [vmem:[#allocation14 + $0x110] sm:$0xff]
    %v7557 = vld [vmem:[#allocation14 + $0x118] sm:$0xff]
    %v7558 = vld [vmem:[#allocation14 + $0x120] sm:$0xff]
    %v7559 = vld [vmem:[#allocation14 + $0x128] sm:$0xff]
    %v7560 = vld [vmem:[#allocation14 + $0x130] sm:$0xff]
    %v7561 = vld [vmem:[#allocation14 + $0x138] sm:$0xff]
    %v7562 = vld [vmem:[#allocation14 + $0x140] sm:$0xff]
    %v7563 = vld [vmem:[#allocation14 + $0x148] sm:$0xff]
    %v7564 = vld [vmem:[#allocation14 + $0x150] sm:$0xff]
    %v7565 = vld [vmem:[#allocation14 + $0x158] sm:$0xff]
    %v7566 = vld [vmem:[#allocation14 + $0x160] sm:$0xff]
    %v7567 = vld [vmem:[#allocation14 + $0x168] sm:$0xff]
    %v7568 = vld [vmem:[#allocation14 + $0x170] sm:$0xff]
    %v7569 = vld [vmem:[#allocation14 + $0x178] sm:$0xff]
    %v7570 = vld [vmem:[#allocation14 + $0x180] sm:$0xff]
    %v7571 = vld [vmem:[#allocation14 + $0x188] sm:$0xff]
    %v7572 = vld [vmem:[#allocation14 + $0x190] sm:$0xff]
    %v7573 = vld [vmem:[#allocation14 + $0x198] sm:$0xff]
    %v7574 = vld [vmem:[#allocation14 + $0x1a0] sm:$0xff]
    %v7575 = vld [vmem:[#allocation14 + $0x1a8] sm:$0xff]
    %v7576 = vld [vmem:[#allocation14 + $0x1b0] sm:$0xff]
    %v7577 = vld [vmem:[#allocation14 + $0x1b8] sm:$0xff]
    %v7578 = vld [vmem:[#allocation14 + $0x1c0] sm:$0xff]
    %v7579 = vld [vmem:[#allocation14 + $0x1c8] sm:$0xff]
    %v7580 = vld [vmem:[#allocation14 + $0x1d0] sm:$0xff]
    %v7581 = vld [vmem:[#allocation14 + $0x1d8] sm:$0xff]
    %v7582 = vld [vmem:[#allocation14 + $0x1e0] sm:$0xff]
    %v7583 = vld [vmem:[#allocation14 + $0x1e8] sm:$0xff]
    %v7584 = vld [vmem:[#allocation14 + $0x1f0] sm:$0xff]
    %v7585 = vld [vmem:[#allocation14 + $0x1f8] sm:$0xff]
    %7586 = vmatprep.subr.mxu0 %v7553
    %7587 = vmatpush1.msra.mxu0 %v7552
    %7588 = vmatprep.subr.mxu0 %v7551
    %7589 = vmatpush1.msra.mxu0 %v7550
    %7590 = vmatprep.subr.mxu0 %v7549
    %7591 = vmatpush1.msra.mxu0 %v7548
    %7592 = vmatprep.subr.mxu0 %v7547
    %7593 = vmatpush1.msra.mxu0 %v7546
    %7594 = vmatprep.subr.mxu0 %v7545
    %7595 = vmatpush1.msra.mxu0 %v7544
    %7596 = vmatprep.subr.mxu0 %v7543
    %7597 = vmatpush1.msra.mxu0 %v7542
    %7598 = vmatprep.subr.mxu0 %v7541
    %7599 = vmatpush1.msra.mxu0 %v7540
    %7600 = vmatprep.subr.mxu0 %v7539
    %7601 = vmatpush1.msra.mxu0 %v7538
    %7602 = vmatprep.subr.mxu0 %v7537
    %7603 = vmatpush1.msra.mxu0 %v7536
    %7604 = vmatprep.subr.mxu0 %v7535
    %7605 = vmatpush1.msra.mxu0 %v7534
    %7606 = vmatprep.subr.mxu0 %v7533
    %7607 = vmatpush1.msra.mxu0 %v7532
    %7608 = vmatprep.subr.mxu0 %v7531
    %7609 = vmatpush1.msra.mxu0 %v7530
    %7610 = vmatprep.subr.mxu0 %v7529
    %7611 = vmatpush1.msra.mxu0 %v7528
    %7612 = vmatprep.subr.mxu0 %v7527
    %7613 = vmatpush1.msra.mxu0 %v7526
    %7614 = vmatprep.subr.mxu0 %v7525
    %7615 = vmatpush1.msra.mxu0 %v7524
    %7616 = vmatprep.subr.mxu0 %v7523
    %7617 = vmatpush1.msra.mxu0 %v7522
    %7618 = vmatprep.subr.mxu0 %v7585
    %7619 = vmatpush2.msra.mxu0 %v7584
    %7620 = vmatprep.subr.mxu0 %v7583
    %7621 = vmatpush2.msra.mxu0 %v7582
    %7622 = vmatprep.subr.mxu0 %v7581
    %7623 = vmatpush2.msra.mxu0 %v7580
    %7624 = vmatprep.subr.mxu0 %v7579
    %7625 = vmatpush2.msra.mxu0 %v7578
    %7626 = vmatprep.subr.mxu0 %v7577
    %7627 = vmatpush2.msra.mxu0 %v7576
    %7628 = vmatprep.subr.mxu0 %v7575
    %7629 = vmatpush2.msra.mxu0 %v7574
    %7630 = vmatprep.subr.mxu0 %v7573
    %7631 = vmatpush2.msra.mxu0 %v7572
    %7632 = vmatprep.subr.mxu0 %v7571
    %7633 = vmatpush2.msra.mxu0 %v7570
    %7634 = vmatprep.subr.mxu0 %v7569
    %7635 = vmatpush2.msra.mxu0 %v7568
    %7636 = vmatprep.subr.mxu0 %v7567
    %7637 = vmatpush2.msra.mxu0 %v7566
    %7638 = vmatprep.subr.mxu0 %v7565
    %7639 = vmatpush2.msra.mxu0 %v7564
    %7640 = vmatprep.subr.mxu0 %v7563
    %7641 = vmatpush2.msra.mxu0 %v7562
    %7642 = vmatprep.subr.mxu0 %v7561
    %7643 = vmatpush2.msra.mxu0 %v7560
    %7644 = vmatprep.subr.mxu0 %v7559
    %7645 = vmatpush2.msra.mxu0 %v7558
    %7646 = vmatprep.subr.mxu0 %v7557
    %7647 = vmatpush2.msra.mxu0 %v7556
    %7648 = vmatprep.subr.mxu0 %v7555
    %7649 = vmatpush2.msra.mxu0 %v7554
    %7650 = vmatprep.mubr.f32.mxu0 %v7503
    %7651 = vmatmul.mubr.f32.gmra.mxu0 %v7496
    %v7652 = vpop.f32.mrf.mxu0
    %v7653 = vadd.f32 0.0, %v7652
    %v7654 = vpop.f32.mrf.mxu0
    %v7655 = vadd.f32 0.0, %v7654
    %7656 = vdwg.mxu0
    %7657 = vmatprep.subr.mxu0 %v7553
    %7658 = vmatpush1.msra.mxu0 %v7552
    %7659 = vmatprep.subr.mxu0 %v7551
    %7660 = vmatpush1.msra.mxu0 %v7550
    %7661 = vmatprep.subr.mxu0 %v7549
    %7662 = vmatpush1.msra.mxu0 %v7548
    %7663 = vmatprep.subr.mxu0 %v7547
    %7664 = vmatpush1.msra.mxu0 %v7546
    %7665 = vmatprep.subr.mxu0 %v7545
    %7666 = vmatpush1.msra.mxu0 %v7544
    %7667 = vmatprep.subr.mxu0 %v7543
    %7668 = vmatpush1.msra.mxu0 %v7542
    %7669 = vmatprep.subr.mxu0 %v7541
    %7670 = vmatpush1.msra.mxu0 %v7540
    %7671 = vmatprep.subr.mxu0 %v7539
    %7672 = vmatpush1.msra.mxu0 %v7538
    %7673 = vmatprep.subr.mxu0 %v7537
    %7674 = vmatpush1.msra.mxu0 %v7536
    %7675 = vmatprep.subr.mxu0 %v7535
    %7676 = vmatpush1.msra.mxu0 %v7534
    %7677 = vmatprep.subr.mxu0 %v7533
    %7678 = vmatpush1.msra.mxu0 %v7532
    %7679 = vmatprep.subr.mxu0 %v7531
    %7680 = vmatpush1.msra.mxu0 %v7530
    %7681 = vmatprep.subr.mxu0 %v7529
    %7682 = vmatpush1.msra.mxu0 %v7528
    %7683 = vmatprep.subr.mxu0 %v7527
    %7684 = vmatpush1.msra.mxu0 %v7526
    %7685 = vmatprep.subr.mxu0 %v7525
    %7686 = vmatpush1.msra.mxu0 %v7524
    %7687 = vmatprep.subr.mxu0 %v7523
    %7688 = vmatpush1.msra.mxu0 %v7522
    %7689 = vmatprep.subr.mxu0 %v7585
    %7690 = vmatpush2.msra.mxu0 %v7584
    %7691 = vmatprep.subr.mxu0 %v7583
    %7692 = vmatpush2.msra.mxu0 %v7582
    %7693 = vmatprep.subr.mxu0 %v7581
    %7694 = vmatpush2.msra.mxu0 %v7580
    %7695 = vmatprep.subr.mxu0 %v7579
    %7696 = vmatpush2.msra.mxu0 %v7578
    %7697 = vmatprep.subr.mxu0 %v7577
    %7698 = vmatpush2.msra.mxu0 %v7576
    %7699 = vmatprep.subr.mxu0 %v7575
    %7700 = vmatpush2.msra.mxu0 %v7574
    %7701 = vmatprep.subr.mxu0 %v7573
    %7702 = vmatpush2.msra.mxu0 %v7572
    %7703 = vmatprep.subr.mxu0 %v7571
    %7704 = vmatpush2.msra.mxu0 %v7570
    %7705 = vmatprep.subr.mxu0 %v7569
    %7706 = vmatpush2.msra.mxu0 %v7568
    %7707 = vmatprep.subr.mxu0 %v7567
    %7708 = vmatpush2.msra.mxu0 %v7566
    %7709 = vmatprep.subr.mxu0 %v7565
    %7710 = vmatpush2.msra.mxu0 %v7564
    %7711 = vmatprep.subr.mxu0 %v7563
    %7712 = vmatpush2.msra.mxu0 %v7562
    %7713 = vmatprep.subr.mxu0 %v7561
    %7714 = vmatpush2.msra.mxu0 %v7560
    %7715 = vmatprep.subr.mxu0 %v7559
    %7716 = vmatpush2.msra.mxu0 %v7558
    %7717 = vmatprep.subr.mxu0 %v7557
    %7718 = vmatpush2.msra.mxu0 %v7556
    %7719 = vmatprep.subr.mxu0 %v7555
    %7720 = vmatpush2.msra.mxu0 %v7554
    %7721 = vmatprep.mubr.f32.mxu0 %v7521
    %7722 = vmatmul.mubr.f32.gmra.mxu0 %v7514
    %v7723 = vpop.f32.mrf.mxu0
    %v7724 = vadd.f32 0.0, %v7723
    %v7725 = vpop.f32.mrf.mxu0
    %v7726 = vadd.f32 0.0, %v7725
    %7727 = vdwg.mxu0
    %v7728 = vmul.f32 %v7653, %v7653
    %v7729 = vmul.f32 %v7655, %v7655
    %v7730 = vsub.f32 %v7724, %v7728
    %v7731 = vsub.f32 %v7726, %v7729
    %v7732 = vlaneseq
    %v7733 = vshrl.u32 %v7732, 7
    %v7734 = vsub.s32 0, %v7733
    %v7735 = vrot.slane %v7653, %v7734
    %v7736 = vlaneseq
    %v7737 = vshrl.u32 %v7736, 7
    %v7738 = vsub.s32 0, %v7737
    %v7739 = vrot.slane %v7655, %v7738
    %v7740 = vsub.f32 %v7486, %v7735
    %v7741 = vsub.f32 %v7487, %v7739
    %v7742 = vsub.f32 %v7488, %v7735
    %v7743 = vsub.f32 %v7489, %v7739
    %v7744 = vadd.f32 %v7730, 1e-05
    %v7745 = vadd.f32 %v7731, 1e-05
    %v7746 = vrsqrt.pop %v7744
    %v7747 = vrsqrt.pop %v7745
    %v7748 = vlaneseq
    %v7749 = vshrl.u32 %v7748, 7
    %v7750 = vsub.s32 0, %v7749
    %v7751 = vrot.slane %v7746, %v7750
    %v7752 = vlaneseq
    %v7753 = vshrl.u32 %v7752, 7
    %v7754 = vsub.s32 0, %v7753
    %v7755 = vrot.slane %v7747, %v7754
    %v7756 = vmul.f32 %v7740, %v7751
    %v7757 = vmul.f32 %v7741, %v7755
    %v7758 = vmul.f32 %v7742, %v7751
    %v7759 = vmul.f32 %v7743, %v7755
    %s7760 = scalar_lea.vmem [#allocation11], 16
    %v7761 = vld [vmem:[%s7760] ss:$8 sm:$0x3]
    %v7763 = vlaneseq
    %v7764 = vshrl.u32 %v7763, 7
    %v7765 = vsub.s32 0, %v7764
    %v7766 = vrot.slane %v7761, %v7765
    %v7767 = vlaneseq
    %v7768 = vshrl.u32 %v7767, 7
    %v7769 = vsub.s32 1, %v7768
    %v7770 = vrot.slane %v7761, %v7769
    %v7773 = vmul.f32 %v7756, %v7766
    %v7774 = vmul.f32 %v7757, %v7770
    %v7775 = vmul.f32 %v7758, %v7766
    %v7776 = vmul.f32 %v7759, %v7770
    %s7777 = scalar_lea.vmem [#allocation12], 16
    %v7778 = vld [vmem:[%s7777] ss:$8 sm:$0x3]
    %v7780 = vlaneseq
    %v7781 = vshrl.u32 %v7780, 7
    %v7782 = vsub.s32 0, %v7781
    %v7783 = vrot.slane %v7778, %v7782
    %v7784 = vlaneseq
    %v7785 = vshrl.u32 %v7784, 7
    %v7786 = vsub.s32 1, %v7785
    %v7787 = vrot.slane %v7778, %v7786
    %v7790 = vadd.f32 %v7773, %v7783
    %v7791 = vadd.f32 %v7774, %v7787
    %v7792 = vadd.f32 %v7775, %v7783
    %v7793 = vadd.f32 %v7776, %v7787
    %v7794 = vadd.f32 %v7790, %v6132
    %v7795 = vadd.f32 %v7791, %v6133
    %v7796 = vadd.f32 %v7792, %v6134
    %v7797 = vadd.f32 %v7793, %v6135
    %v7798 = vmax.f32 %v7794, 0.0
    %v7799 = vmax.f32 %v7795, 0.0
    %v7800 = vmax.f32 %v7796, 0.0
    %v7801 = vmax.f32 %v7797, 0.0
    %v7802 = vld [vmem:[%s6] sm:$0xff]
    %v7803 = vld [vmem:[%s6 + $0x8] sm:$0xff]
    %v7804 = vld [vmem:[%s6 + $0x10] sm:$0xff]
    %v7805 = vld [vmem:[%s6 + $0x18] sm:$0xff]
    %v7806 = vld [vmem:[%s6 + $0x20] sm:$0xff]
    %v7807 = vld [vmem:[%s6 + $0x28] sm:$0xff]
    %v7808 = vld [vmem:[%s6 + $0x30] sm:$0xff]
    %v7809 = vld [vmem:[%s6 + $0x38] sm:$0xff]
    %v7810 = vld [vmem:[%s6 + $0x40] sm:$0xff]
    %v7811 = vld [vmem:[%s6 + $0x48] sm:$0xff]
    %v7812 = vld [vmem:[%s6 + $0x50] sm:$0xff]
    %v7813 = vld [vmem:[%s6 + $0x58] sm:$0xff]
    %v7814 = vld [vmem:[%s6 + $0x60] sm:$0xff]
    %v7815 = vld [vmem:[%s6 + $0x68] sm:$0xff]
    %v7816 = vld [vmem:[%s6 + $0x70] sm:$0xff]
    %v7817 = vld [vmem:[%s6 + $0x78] sm:$0xff]
    %v7818 = vld [vmem:[%s6 + $0x80] sm:$0xff]
    %v7819 = vld [vmem:[%s6 + $0x88] sm:$0xff]
    %v7820 = vld [vmem:[%s6 + $0x90] sm:$0xff]
    %v7821 = vld [vmem:[%s6 + $0x98] sm:$0xff]
    %v7822 = vld [vmem:[%s6 + $0xa0] sm:$0xff]
    %v7823 = vld [vmem:[%s6 + $0xa8] sm:$0xff]
    %v7824 = vld [vmem:[%s6 + $0xb0] sm:$0xff]
    %v7825 = vld [vmem:[%s6 + $0xb8] sm:$0xff]
    %v7826 = vld [vmem:[%s6 + $0xc0] sm:$0xff]
    %v7827 = vld [vmem:[%s6 + $0xc8] sm:$0xff]
    %v7828 = vld [vmem:[%s6 + $0xd0] sm:$0xff]
    %v7829 = vld [vmem:[%s6 + $0xd8] sm:$0xff]
    %v7830 = vld [vmem:[%s6 + $0xe0] sm:$0xff]
    %v7831 = vld [vmem:[%s6 + $0xe8] sm:$0xff]
    %v7832 = vld [vmem:[%s6 + $0xf0] sm:$0xff]
    %v7833 = vld [vmem:[%s6 + $0xf8] sm:$0xff]
    %7834 = vmatprep.subr.mxu0 0.0
    %7835 = vmatpush1.msra.mxu0 %v7817
    %7836 = vmatprep.subr.mxu0 0.0
    %7837 = vmatpush1.msra.mxu0 %v7816
    %7838 = vmatprep.subr.mxu0 0.0
    %7839 = vmatpush1.msra.mxu0 %v7815
    %7840 = vmatprep.subr.mxu0 0.0
    %7841 = vmatpush1.msra.mxu0 %v7814
    %7842 = vmatprep.subr.mxu0 0.0
    %7843 = vmatpush1.msra.mxu0 %v7813
    %7844 = vmatprep.subr.mxu0 0.0
    %7845 = vmatpush1.msra.mxu0 %v7812
    %7846 = vmatprep.subr.mxu0 0.0
    %7847 = vmatpush1.msra.mxu0 %v7811
    %7848 = vmatprep.subr.mxu0 0.0
    %7849 = vmatpush1.msra.mxu0 %v7810
    %7850 = vmatprep.subr.mxu0 0.0
    %7851 = vmatpush1.msra.mxu0 %v7809
    %7852 = vmatprep.subr.mxu0 0.0
    %7853 = vmatpush1.msra.mxu0 %v7808
    %7854 = vmatprep.subr.mxu0 0.0
    %7855 = vmatpush1.msra.mxu0 %v7807
    %7856 = vmatprep.subr.mxu0 0.0
    %7857 = vmatpush1.msra.mxu0 %v7806
    %7858 = vmatprep.subr.mxu0 0.0
    %7859 = vmatpush1.msra.mxu0 %v7805
    %7860 = vmatprep.subr.mxu0 0.0
    %7861 = vmatpush1.msra.mxu0 %v7804
    %7862 = vmatprep.subr.mxu0 0.0
    %7863 = vmatpush1.msra.mxu0 %v7803
    %7864 = vmatprep.subr.mxu0 0.0
    %7865 = vmatpush1.msra.mxu0 %v7802
    %7866 = vmatprep.subr.mxu0 0.0
    %7867 = vmatpush2.msra.mxu0 %v7833
    %7868 = vmatprep.subr.mxu0 0.0
    %7869 = vmatpush2.msra.mxu0 %v7832
    %7870 = vmatprep.subr.mxu0 0.0
    %7871 = vmatpush2.msra.mxu0 %v7831
    %7872 = vmatprep.subr.mxu0 0.0
    %7873 = vmatpush2.msra.mxu0 %v7830
    %7874 = vmatprep.subr.mxu0 0.0
    %7875 = vmatpush2.msra.mxu0 %v7829
    %7876 = vmatprep.subr.mxu0 0.0
    %7877 = vmatpush2.msra.mxu0 %v7828
    %7878 = vmatprep.subr.mxu0 0.0
    %7879 = vmatpush2.msra.mxu0 %v7827
    %7880 = vmatprep.subr.mxu0 0.0
    %7881 = vmatpush2.msra.mxu0 %v7826
    %7882 = vmatprep.subr.mxu0 0.0
    %7883 = vmatpush2.msra.mxu0 %v7825
    %7884 = vmatprep.subr.mxu0 0.0
    %7885 = vmatpush2.msra.mxu0 %v7824
    %7886 = vmatprep.subr.mxu0 0.0
    %7887 = vmatpush2.msra.mxu0 %v7823
    %7888 = vmatprep.subr.mxu0 0.0
    %7889 = vmatpush2.msra.mxu0 %v7822
    %7890 = vmatprep.subr.mxu0 0.0
    %7891 = vmatpush2.msra.mxu0 %v7821
    %7892 = vmatprep.subr.mxu0 0.0
    %7893 = vmatpush2.msra.mxu0 %v7820
    %7894 = vmatprep.subr.mxu0 0.0
    %7895 = vmatpush2.msra.mxu0 %v7819
    %7896 = vmatprep.subr.mxu0 0.0
    %7897 = vmatpush2.msra.mxu0 %v7818
    %7898 = vmatprep.mubr.f32.mxu0 %v7799
    %7899 = vmatmul.mubr.f32.gmra.mxu0 %v7798
    %v7900 = vpop.f32.mrf.mxu0
    %v7901 = vadd.f32 0.0, %v7900
    %v7902 = vpop.f32.mrf.mxu0
    %7903 = vmatprep.mubr.f32.mxu0 %v7801
    %7904 = vmatmul.mubr.f32.gmra.mxu0 %v7800
    %v7905 = vpop.f32.mrf.mxu0
    %v7906 = vadd.f32 0.0, %v7905
    %v7907 = vpop.f32.mrf.mxu0
    %7908 = vdwg.mxu0
    %vm7909 = vcmask 64512
    %v7910 = vsel %vm7909, %v7901, 0.0
    %v7911 = vsel %vm7909, %v7906, 0.0
    %v7912 = vadd.f32 %v7910, %v7911
    %v7913 = vrot.slane %v7912, 4
    %v7914 = vadd.f32 %v7912, %v7913
    %v7915 = vrot.slane %v7914, 2
    %v7916 = vadd.f32 %v7914, %v7915
    %v7917 = vrot.slane %v7916, 1
    %v7918 = vadd.f32 %v7916, %v7917
    %v7919 = vmul.f32 %v7901, %v7901
    %v7920 = vmul.f32 %v7906, %v7906
    %v7921 = vsel %vm7909, %v7919, 0.0
    %v7922 = vsel %vm7909, %v7920, 0.0
    %v7923 = vadd.f32 %v7921, %v7922
    %v7924 = vrot.slane %v7923, 4
    %v7925 = vadd.f32 %v7923, %v7924
    %v7926 = vrot.slane %v7925, 2
    %v7927 = vadd.f32 %v7925, %v7926
    %v7928 = vrot.slane %v7927, 1
    %v7929 = vadd.f32 %v7927, %v7928
    %v7930 = vld [vmem:[#allocation15] sm:$0xff]
    %v7932 = vsel %vm7909, %v7918, 0
    %7934 = vmatprep.subr.mxu0 0.0
    %7935 = vmatpush1.msra.mxu0 0.0
    %7936 = vmatprep.subr.mxu0 0.0
    %7937 = vmatpush1.msra.mxu0 0.0
    %7938 = vmatprep.subr.mxu0 0.0
    %7939 = vmatpush1.msra.mxu0 0.0
    %7940 = vmatprep.subr.mxu0 0.0
    %7941 = vmatpush1.msra.mxu0 0.0
    %7942 = vmatprep.subr.mxu0 0.0
    %7943 = vmatpush1.msra.mxu0 0.0
    %7944 = vmatprep.subr.mxu0 0.0
    %7945 = vmatpush1.msra.mxu0 0.0
    %7946 = vmatprep.subr.mxu0 0.0
    %7947 = vmatpush1.msra.mxu0 0.0
    %7948 = vmatprep.subr.mxu0 0.0
    %7949 = vmatpush1.msra.mxu0 0.0
    %7950 = vmatprep.subr.mxu0 0.0
    %7951 = vmatpush1.msra.mxu0 0.0
    %7952 = vmatprep.subr.mxu0 0.0
    %7953 = vmatpush1.msra.mxu0 0.0
    %7954 = vmatprep.subr.mxu0 0.0
    %7955 = vmatpush1.msra.mxu0 0.0
    %7956 = vmatprep.subr.mxu0 0.0
    %7957 = vmatpush1.msra.mxu0 0.0
    %7958 = vmatprep.subr.mxu0 0.0
    %7959 = vmatpush1.msra.mxu0 0.0
    %7960 = vmatprep.subr.mxu0 0.0
    %7961 = vmatpush1.msra.mxu0 0.0
    %7962 = vmatprep.subr.mxu0 0.0
    %7963 = vmatpush1.msra.mxu0 0.0
    %7964 = vmatprep.subr.mxu0 0.0
    %7965 = vmatpush1.msra.mxu0 %v7930
    %7966 = vmatprep.subr.mxu0 0.0
    %7967 = vmatpush2.msra.mxu0 0.0
    %7968 = vmatprep.subr.mxu0 0.0
    %7969 = vmatpush2.msra.mxu0 0.0
    %7970 = vmatprep.subr.mxu0 0.0
    %7971 = vmatpush2.msra.mxu0 0.0
    %7972 = vmatprep.subr.mxu0 0.0
    %7973 = vmatpush2.msra.mxu0 0.0
    %7974 = vmatprep.subr.mxu0 0.0
    %7975 = vmatpush2.msra.mxu0 0.0
    %7976 = vmatprep.subr.mxu0 0.0
    %7977 = vmatpush2.msra.mxu0 0.0
    %7978 = vmatprep.subr.mxu0 0.0
    %7979 = vmatpush2.msra.mxu0 0.0
    %7980 = vmatprep.subr.mxu0 0.0
    %7981 = vmatpush2.msra.mxu0 0.0
    %7982 = vmatprep.subr.mxu0 0.0
    %7983 = vmatpush2.msra.mxu0 0.0
    %7984 = vmatprep.subr.mxu0 0.0
    %7985 = vmatpush2.msra.mxu0 0.0
    %7986 = vmatprep.subr.mxu0 0.0
    %7987 = vmatpush2.msra.mxu0 0.0
    %7988 = vmatprep.subr.mxu0 0.0
    %7989 = vmatpush2.msra.mxu0 0.0
    %7990 = vmatprep.subr.mxu0 0.0
    %7991 = vmatpush2.msra.mxu0 0.0
    %7992 = vmatprep.subr.mxu0 0.0
    %7993 = vmatpush2.msra.mxu0 0.0
    %7994 = vmatprep.subr.mxu0 0.0
    %7995 = vmatpush2.msra.mxu0 0.0
    %7996 = vmatprep.subr.mxu0 0.0
    %7997 = vmatpush2.msra.mxu0 0.0
    %7998 = vmatprep.mubr.f32.mxu0 0.0
    %7999 = vmatmul.mubr.f32.gmra.mxu0 %v7932
    %v8000 = vpop.f32.mrf.mxu0
    %v8001 = vadd.f32 0.0, %v8000
    %v8002 = vpop.f32.mrf.mxu0
    %8003 = vdwg.mxu0
    %v8005 = vsel %vm7909, %v7929, 0
    %8007 = vmatprep.subr.mxu0 0.0
    %8008 = vmatpush1.msra.mxu0 0.0
    %8009 = vmatprep.subr.mxu0 0.0
    %8010 = vmatpush1.msra.mxu0 0.0
    %8011 = vmatprep.subr.mxu0 0.0
    %8012 = vmatpush1.msra.mxu0 0.0
    %8013 = vmatprep.subr.mxu0 0.0
    %8014 = vmatpush1.msra.mxu0 0.0
    %8015 = vmatprep.subr.mxu0 0.0
    %8016 = vmatpush1.msra.mxu0 0.0
    %8017 = vmatprep.subr.mxu0 0.0
    %8018 = vmatpush1.msra.mxu0 0.0
    %8019 = vmatprep.subr.mxu0 0.0
    %8020 = vmatpush1.msra.mxu0 0.0
    %8021 = vmatprep.subr.mxu0 0.0
    %8022 = vmatpush1.msra.mxu0 0.0
    %8023 = vmatprep.subr.mxu0 0.0
    %8024 = vmatpush1.msra.mxu0 0.0
    %8025 = vmatprep.subr.mxu0 0.0
    %8026 = vmatpush1.msra.mxu0 0.0
    %8027 = vmatprep.subr.mxu0 0.0
    %8028 = vmatpush1.msra.mxu0 0.0
    %8029 = vmatprep.subr.mxu0 0.0
    %8030 = vmatpush1.msra.mxu0 0.0
    %8031 = vmatprep.subr.mxu0 0.0
    %8032 = vmatpush1.msra.mxu0 0.0
    %8033 = vmatprep.subr.mxu0 0.0
    %8034 = vmatpush1.msra.mxu0 0.0
    %8035 = vmatprep.subr.mxu0 0.0
    %8036 = vmatpush1.msra.mxu0 0.0
    %8037 = vmatprep.subr.mxu0 0.0
    %8038 = vmatpush1.msra.mxu0 %v7930
    %8039 = vmatprep.subr.mxu0 0.0
    %8040 = vmatpush2.msra.mxu0 0.0
    %8041 = vmatprep.subr.mxu0 0.0
    %8042 = vmatpush2.msra.mxu0 0.0
    %8043 = vmatprep.subr.mxu0 0.0
    %8044 = vmatpush2.msra.mxu0 0.0
    %8045 = vmatprep.subr.mxu0 0.0
    %8046 = vmatpush2.msra.mxu0 0.0
    %8047 = vmatprep.subr.mxu0 0.0
    %8048 = vmatpush2.msra.mxu0 0.0
    %8049 = vmatprep.subr.mxu0 0.0
    %8050 = vmatpush2.msra.mxu0 0.0
    %8051 = vmatprep.subr.mxu0 0.0
    %8052 = vmatpush2.msra.mxu0 0.0
    %8053 = vmatprep.subr.mxu0 0.0
    %8054 = vmatpush2.msra.mxu0 0.0
    %8055 = vmatprep.subr.mxu0 0.0
    %8056 = vmatpush2.msra.mxu0 0.0
    %8057 = vmatprep.subr.mxu0 0.0
    %8058 = vmatpush2.msra.mxu0 0.0
    %8059 = vmatprep.subr.mxu0 0.0
    %8060 = vmatpush2.msra.mxu0 0.0
    %8061 = vmatprep.subr.mxu0 0.0
    %8062 = vmatpush2.msra.mxu0 0.0
    %8063 = vmatprep.subr.mxu0 0.0
    %8064 = vmatpush2.msra.mxu0 0.0
    %8065 = vmatprep.subr.mxu0 0.0
    %8066 = vmatpush2.msra.mxu0 0.0
    %8067 = vmatprep.subr.mxu0 0.0
    %8068 = vmatpush2.msra.mxu0 0.0
    %8069 = vmatprep.subr.mxu0 0.0
    %8070 = vmatpush2.msra.mxu0 0.0
    %8071 = vmatprep.mubr.f32.mxu0 0.0
    %8072 = vmatmul.mubr.f32.gmra.mxu0 %v8005
    %v8073 = vpop.f32.mrf.mxu0
    %v8074 = vadd.f32 0.0, %v8073
    %v8075 = vpop.f32.mrf.mxu0
    %8076 = vdwg.mxu0
    %v8077 = vmul.f32 %v8001, %v8001
    %v8078 = vsub.f32 %v8074, %v8077
    %v8079 = vlaneseq
    %v8080 = vshrl.u32 %v8079, 7
    %v8081 = vsub.s32 0, %v8080
    %v8082 = vrot.slane %v8001, %v8081
    %v8083 = vsub.f32 %v7901, %v8082
    %v8084 = vsub.f32 %v7906, %v8082
    %v8085 = vadd.f32 %v8078, 1e-05
    %v8086 = vrsqrt.pop %v8085
    %v8087 = vlaneseq
    %v8088 = vshrl.u32 %v8087, 7
    %v8089 = vsub.s32 0, %v8088
    %v8090 = vrot.slane %v8086, %v8089
    %v8091 = vmul.f32 %v8083, %v8090
    %v8092 = vmul.f32 %v8084, %v8090
    %s8093 = sld [smem:[#allocation34]]
    %v8094 = vstv %s8093
    %v8095 = vmul.f32 %v8091, %v8094
    %v8096 = vmul.f32 %v8092, %v8094
    %s8097 = sld [smem:[#allocation34 + $0x1]]
    %v8098 = vstv %s8097
    %v8099 = vadd.f32 %v8095, %v8098
    %v8100 = vadd.f32 %v8096, %v8098
    %vm8101 = vcmp.ge.f32.partialorder %v8099, 0.0
    %vm8102 = vcmp.ge.f32.partialorder %v8100, 0.0
    %s8103 = sld [smem:[#allocation34 + $0x2]]
    %v8104 = vstv %s8103
    %v8105 = vmul.f32 %v8104, %v8099
    %v8106 = vmul.f32 %v8104, %v8100
    %v8107 = vsel %vm8101, %v8099, %v8105
    %v8108 = vsel %vm8102, %v8100, %v8106
    %v8109 = vld [vmem:[#allocation21] sm:$0xff]
    %v8111 = vsel %vm7909, %v8107, 0
    %v8114 = vsel %vm7909, %v8108, 0
    %8116 = vmatprep.subr.mxu0 0.0
    %8117 = vmatpush1.msra.mxu0 0.0
    %8118 = vmatprep.subr.mxu0 0.0
    %8119 = vmatpush1.msra.mxu0 0.0
    %8120 = vmatprep.subr.mxu0 0.0
    %8121 = vmatpush1.msra.mxu0 0.0
    %8122 = vmatprep.subr.mxu0 0.0
    %8123 = vmatpush1.msra.mxu0 0.0
    %8124 = vmatprep.subr.mxu0 0.0
    %8125 = vmatpush1.msra.mxu0 0.0
    %8126 = vmatprep.subr.mxu0 0.0
    %8127 = vmatpush1.msra.mxu0 0.0
    %8128 = vmatprep.subr.mxu0 0.0
    %8129 = vmatpush1.msra.mxu0 0.0
    %8130 = vmatprep.subr.mxu0 0.0
    %8131 = vmatpush1.msra.mxu0 0.0
    %8132 = vmatprep.subr.mxu0 0.0
    %8133 = vmatpush1.msra.mxu0 0.0
    %8134 = vmatprep.subr.mxu0 0.0
    %8135 = vmatpush1.msra.mxu0 0.0
    %8136 = vmatprep.subr.mxu0 0.0
    %8137 = vmatpush1.msra.mxu0 0.0
    %8138 = vmatprep.subr.mxu0 0.0
    %8139 = vmatpush1.msra.mxu0 0.0
    %8140 = vmatprep.subr.mxu0 0.0
    %8141 = vmatpush1.msra.mxu0 0.0
    %8142 = vmatprep.subr.mxu0 0.0
    %8143 = vmatpush1.msra.mxu0 0.0
    %8144 = vmatprep.subr.mxu0 0.0
    %8145 = vmatpush1.msra.mxu0 0.0
    %8146 = vmatprep.subr.mxu0 0.0
    %8147 = vmatpush1.msra.mxu0 %v8109
    %8148 = vmatprep.subr.mxu0 0.0
    %8149 = vmatpush2.msra.mxu0 0.0
    %8150 = vmatprep.subr.mxu0 0.0
    %8151 = vmatpush2.msra.mxu0 0.0
    %8152 = vmatprep.subr.mxu0 0.0
    %8153 = vmatpush2.msra.mxu0 0.0
    %8154 = vmatprep.subr.mxu0 0.0
    %8155 = vmatpush2.msra.mxu0 0.0
    %8156 = vmatprep.subr.mxu0 0.0
    %8157 = vmatpush2.msra.mxu0 0.0
    %8158 = vmatprep.subr.mxu0 0.0
    %8159 = vmatpush2.msra.mxu0 0.0
    %8160 = vmatprep.subr.mxu0 0.0
    %8161 = vmatpush2.msra.mxu0 0.0
    %8162 = vmatprep.subr.mxu0 0.0
    %8163 = vmatpush2.msra.mxu0 0.0
    %8164 = vmatprep.subr.mxu0 0.0
    %8165 = vmatpush2.msra.mxu0 0.0
    %8166 = vmatprep.subr.mxu0 0.0
    %8167 = vmatpush2.msra.mxu0 0.0
    %8168 = vmatprep.subr.mxu0 0.0
    %8169 = vmatpush2.msra.mxu0 0.0
    %8170 = vmatprep.subr.mxu0 0.0
    %8171 = vmatpush2.msra.mxu0 0.0
    %8172 = vmatprep.subr.mxu0 0.0
    %8173 = vmatpush2.msra.mxu0 0.0
    %8174 = vmatprep.subr.mxu0 0.0
    %8175 = vmatpush2.msra.mxu0 0.0
    %8176 = vmatprep.subr.mxu0 0.0
    %8177 = vmatpush2.msra.mxu0 0.0
    %8178 = vmatprep.subr.mxu0 0.0
    %8179 = vmatpush2.msra.mxu0 0.0
    %8180 = vmatprep.mubr.f32.mxu0 0.0
    %8181 = vmatmul.mubr.f32.gmra.mxu0 %v8111
    %v8182 = vpop.f32.mrf.mxu0
    %v8183 = vadd.f32 0.0, %v8182
    %v8184 = vpop.f32.mrf.mxu0
    %8185 = vmatprep.mubr.f32.mxu0 0.0
    %8186 = vmatmul.mubr.f32.gmra.mxu0 %v8114
    %v8187 = vpop.f32.mrf.mxu0
    %v8188 = vadd.f32 0.0, %v8187
    %v8189 = vpop.f32.mrf.mxu0
    %8190 = vdwg.mxu0
    %v8191 = vld [vmem:[#allocation23] sm:$0xff]
    %v8192 = vld [vmem:[#allocation23 + $0x8] sm:$0xff]
    %v8193 = vmul.f32 %v8183, %v8191
    %v8194 = vmul.f32 %v8188, %v8192
    %v8195 = vld [vmem:[#allocation27] sm:$0x3]
    %v8196 = vld [vmem:[#allocation29] sm:$0xff]
    %v8197 = vld [vmem:[#allocation29 + $0x8] sm:$0xff]
    %v8198 = vld [vmem:[#allocation29 + $0x10] sm:$0xff]
    %v8199 = vld [vmem:[#allocation29 + $0x18] sm:$0xff]
    %v8200 = vld [vmem:[#allocation29 + $0x20] sm:$0xff]
    %v8201 = vld [vmem:[#allocation29 + $0x28] sm:$0xff]
    %v8202 = vld [vmem:[#allocation29 + $0x30] sm:$0xff]
    %v8203 = vld [vmem:[#allocation29 + $0x38] sm:$0xff]
    %vm8204 = vcmask 523264
    %v8206 = vsel %vm8204, %v8193, 0
    %v8209 = vsel %vm8204, %v8194, 0
    %8211 = vmatprep.subr.mxu0 0.0
    %8212 = vmatpush1.msra.mxu0 0.0
    %8213 = vmatprep.subr.mxu0 0.0
    %8214 = vmatpush1.msra.mxu0 0.0
    %8215 = vmatprep.subr.mxu0 0.0
    %8216 = vmatpush1.msra.mxu0 0.0
    %8217 = vmatprep.subr.mxu0 0.0
    %8218 = vmatpush1.msra.mxu0 0.0
    %8219 = vmatprep.subr.mxu0 0.0
    %8220 = vmatpush1.msra.mxu0 0.0
    %8221 = vmatprep.subr.mxu0 0.0
    %8222 = vmatpush1.msra.mxu0 0.0
    %8223 = vmatprep.subr.mxu0 0.0
    %8224 = vmatpush1.msra.mxu0 0.0
    %8225 = vmatprep.subr.mxu0 0.0
    %8226 = vmatpush1.msra.mxu0 0.0
    %8227 = vmatprep.subr.mxu0 0.0
    %8228 = vmatpush1.msra.mxu0 %v8203
    %8229 = vmatprep.subr.mxu0 0.0
    %8230 = vmatpush1.msra.mxu0 %v8202
    %8231 = vmatprep.subr.mxu0 0.0
    %8232 = vmatpush1.msra.mxu0 %v8201
    %8233 = vmatprep.subr.mxu0 0.0
    %8234 = vmatpush1.msra.mxu0 %v8200
    %8235 = vmatprep.subr.mxu0 0.0
    %8236 = vmatpush1.msra.mxu0 %v8199
    %8237 = vmatprep.subr.mxu0 0.0
    %8238 = vmatpush1.msra.mxu0 %v8198
    %8239 = vmatprep.subr.mxu0 0.0
    %8240 = vmatpush1.msra.mxu0 %v8197
    %8241 = vmatprep.subr.mxu0 0.0
    %8242 = vmatpush1.msra.mxu0 %v8196
    %8243 = vmatprep.subr.mxu0 0.0
    %8244 = vmatpush2.msra.mxu0 0.0
    %8245 = vmatprep.subr.mxu0 0.0
    %8246 = vmatpush2.msra.mxu0 0.0
    %8247 = vmatprep.subr.mxu0 0.0
    %8248 = vmatpush2.msra.mxu0 0.0
    %8249 = vmatprep.subr.mxu0 0.0
    %8250 = vmatpush2.msra.mxu0 0.0
    %8251 = vmatprep.subr.mxu0 0.0
    %8252 = vmatpush2.msra.mxu0 0.0
    %8253 = vmatprep.subr.mxu0 0.0
    %8254 = vmatpush2.msra.mxu0 0.0
    %8255 = vmatprep.subr.mxu0 0.0
    %8256 = vmatpush2.msra.mxu0 0.0
    %8257 = vmatprep.subr.mxu0 0.0
    %8258 = vmatpush2.msra.mxu0 0.0
    %8259 = vmatprep.subr.mxu0 0.0
    %8260 = vmatpush2.msra.mxu0 0.0
    %8261 = vmatprep.subr.mxu0 0.0
    %8262 = vmatpush2.msra.mxu0 0.0
    %8263 = vmatprep.subr.mxu0 0.0
    %8264 = vmatpush2.msra.mxu0 0.0
    %8265 = vmatprep.subr.mxu0 0.0
    %8266 = vmatpush2.msra.mxu0 0.0
    %8267 = vmatprep.subr.mxu0 0.0
    %8268 = vmatpush2.msra.mxu0 0.0
    %8269 = vmatprep.subr.mxu0 0.0
    %8270 = vmatpush2.msra.mxu0 0.0
    %8271 = vmatprep.subr.mxu0 0.0
    %8272 = vmatpush2.msra.mxu0 0.0
    %8273 = vmatprep.subr.mxu0 0.0
    %8274 = vmatpush2.msra.mxu0 0.0
    %8275 = vmatprep.mubr.f32.mxu0 0.0
    %8276 = vmatmul.mubr.f32.gmra.mxu0 %v8206
    %v8277 = vpop.f32.mrf.mxu0
    %v8278 = vadd.f32 0.0, %v8277
    %v8279 = vpop.f32.mrf.mxu0
    %8280 = vmatprep.mubr.f32.mxu0 0.0
    %8281 = vmatmul.mubr.f32.gmra.mxu0 %v8209
    %v8282 = vpop.f32.mrf.mxu0
    %v8283 = vadd.f32 0.0, %v8282
    %v8284 = vpop.f32.mrf.mxu0
    %8285 = vdwg.mxu0
    %v8286 = vld [vmem:[#allocation30] sm:$0x1]
    %v8288 = vlaneseq
    %v8289 = vshrl.u32 %v8288, 7
    %v8290 = vsub.s32 0, %v8289
    %v8291 = vrot.slane %v8286, %v8290
    %vm8293 = vcmask 130048
    %v8295 = vsel %vm8293, %v8195, 0
    %8297 = vmatprep.subr.mxu0 0.0
    %8298 = vmatpush1.msra.mxu0 0.0
    %8299 = vmatprep.subr.mxu0 0.0
    %8300 = vmatpush1.msra.mxu0 0.0
    %8301 = vmatprep.subr.mxu0 0.0
    %8302 = vmatpush1.msra.mxu0 0.0
    %8303 = vmatprep.subr.mxu0 0.0
    %8304 = vmatpush1.msra.mxu0 0.0
    %8305 = vmatprep.subr.mxu0 0.0
    %8306 = vmatpush1.msra.mxu0 0.0
    %8307 = vmatprep.subr.mxu0 0.0
    %8308 = vmatpush1.msra.mxu0 0.0
    %8309 = vmatprep.subr.mxu0 0.0
    %8310 = vmatpush1.msra.mxu0 0.0
    %8311 = vmatprep.subr.mxu0 0.0
    %8312 = vmatpush1.msra.mxu0 0.0
    %8313 = vmatprep.subr.mxu0 0.0
    %8314 = vmatpush1.msra.mxu0 0.0
    %8315 = vmatprep.subr.mxu0 0.0
    %8316 = vmatpush1.msra.mxu0 0.0
    %8317 = vmatprep.subr.mxu0 0.0
    %8318 = vmatpush1.msra.mxu0 0.0
    %8319 = vmatprep.subr.mxu0 0.0
    %8320 = vmatpush1.msra.mxu0 0.0
    %8321 = vmatprep.subr.mxu0 0.0
    %8322 = vmatpush1.msra.mxu0 0.0
    %8323 = vmatprep.subr.mxu0 0.0
    %8324 = vmatpush1.msra.mxu0 0.0
    %8325 = vmatprep.subr.mxu0 0.0
    %8326 = vmatpush1.msra.mxu0 %v8283
    %8327 = vmatprep.subr.mxu0 0.0
    %8328 = vmatpush1.msra.mxu0 %v8278
    %8329 = vmatprep.subr.mxu0 0.0
    %8330 = vmatpush2.msra.mxu0 0.0
    %8331 = vmatprep.subr.mxu0 0.0
    %8332 = vmatpush2.msra.mxu0 0.0
    %8333 = vmatprep.subr.mxu0 0.0
    %8334 = vmatpush2.msra.mxu0 0.0
    %8335 = vmatprep.subr.mxu0 0.0
    %8336 = vmatpush2.msra.mxu0 0.0
    %8337 = vmatprep.subr.mxu0 0.0
    %8338 = vmatpush2.msra.mxu0 0.0
    %8339 = vmatprep.subr.mxu0 0.0
    %8340 = vmatpush2.msra.mxu0 0.0
    %8341 = vmatprep.subr.mxu0 0.0
    %8342 = vmatpush2.msra.mxu0 0.0
    %8343 = vmatprep.subr.mxu0 0.0
    %8344 = vmatpush2.msra.mxu0 0.0
    %8345 = vmatprep.subr.mxu0 0.0
    %8346 = vmatpush2.msra.mxu0 0.0
    %8347 = vmatprep.subr.mxu0 0.0
    %8348 = vmatpush2.msra.mxu0 0.0
    %8349 = vmatprep.subr.mxu0 0.0
    %8350 = vmatpush2.msra.mxu0 0.0
    %8351 = vmatprep.subr.mxu0 0.0
    %8352 = vmatpush2.msra.mxu0 0.0
    %8353 = vmatprep.subr.mxu0 0.0
    %8354 = vmatpush2.msra.mxu0 0.0
    %8355 = vmatprep.subr.mxu0 0.0
    %8356 = vmatpush2.msra.mxu0 0.0
    %8357 = vmatprep.subr.mxu0 0.0
    %8358 = vmatpush2.msra.mxu0 0.0
    %8359 = vmatprep.subr.mxu0 0.0
    %8360 = vmatpush2.msra.mxu0 0.0
    %8361 = vmatprep.mubr.f32.mxu0 0.0
    %8362 = vmatmul.mubr.f32.gmra.mxu0 %v8295
    %v8363 = vpop.f32.mrf.mxu0
    %v8364 = vadd.f32 %v8291, %v8363
    %v8365 = vpop.f32.mrf.mxu0
    %8366 = vdwg.mxu0
    %v8367 = vmax.f32 %v8364, 0.0
    %v8368 = vld [vmem:[%s19] sm:$0xff]
    %v8369 = vld [vmem:[%s19 + $0x8] sm:$0xff]
    %v8370 = vld [vmem:[%s19 + $0x10] sm:$0xff]
    %v8371 = vld [vmem:[%s19 + $0x18] sm:$0xff]
    %v8372 = vld [vmem:[%s19 + $0x20] sm:$0xff]
    %v8373 = vld [vmem:[%s19 + $0x28] sm:$0xff]
    %v8374 = vld [vmem:[%s19 + $0x30] sm:$0xff]
    %v8375 = vld [vmem:[%s19 + $0x38] sm:$0xff]
    %v8376 = vld [vmem:[%s19 + $0x40] sm:$0xff]
    %v8377 = vld [vmem:[%s19 + $0x48] sm:$0xff]
    %v8378 = vld [vmem:[%s19 + $0x50] sm:$0xff]
    %v8379 = vld [vmem:[%s19 + $0x58] sm:$0xff]
    %v8380 = vld [vmem:[%s19 + $0x60] sm:$0xff]
    %v8381 = vld [vmem:[%s19 + $0x68] sm:$0xff]
    %v8382 = vld [vmem:[%s19 + $0x70] sm:$0xff]
    %v8383 = vld [vmem:[%s19 + $0x78] sm:$0xff]
    %v8384 = vld [vmem:[#allocation4] sm:$0x1]
    %v8386 = vlaneseq
    %v8387 = vshrl.u32 %v8386, 7
    %v8388 = vsub.s32 0, %v8387
    %v8389 = vrot.slane %v8384, %v8388
    %8391 = vmatprep.subr.mxu0 0.0
    %8392 = vmatpush1.msra.mxu0 %v8383
    %8393 = vmatprep.subr.mxu0 0.0
    %8394 = vmatpush1.msra.mxu0 %v8382
    %8395 = vmatprep.subr.mxu0 0.0
    %8396 = vmatpush1.msra.mxu0 %v8381
    %8397 = vmatprep.subr.mxu0 0.0
    %8398 = vmatpush1.msra.mxu0 %v8380
    %8399 = vmatprep.subr.mxu0 0.0
    %8400 = vmatpush1.msra.mxu0 %v8379
    %8401 = vmatprep.subr.mxu0 0.0
    %8402 = vmatpush1.msra.mxu0 %v8378
    %8403 = vmatprep.subr.mxu0 0.0
    %8404 = vmatpush1.msra.mxu0 %v8377
    %8405 = vmatprep.subr.mxu0 0.0
    %8406 = vmatpush1.msra.mxu0 %v8376
    %8407 = vmatprep.subr.mxu0 0.0
    %8408 = vmatpush1.msra.mxu0 %v8375
    %8409 = vmatprep.subr.mxu0 0.0
    %8410 = vmatpush1.msra.mxu0 %v8374
    %8411 = vmatprep.subr.mxu0 0.0
    %8412 = vmatpush1.msra.mxu0 %v8373
    %8413 = vmatprep.subr.mxu0 0.0
    %8414 = vmatpush1.msra.mxu0 %v8372
    %8415 = vmatprep.subr.mxu0 0.0
    %8416 = vmatpush1.msra.mxu0 %v8371
    %8417 = vmatprep.subr.mxu0 0.0
    %8418 = vmatpush1.msra.mxu0 %v8370
    %8419 = vmatprep.subr.mxu0 0.0
    %8420 = vmatpush1.msra.mxu0 %v8369
    %8421 = vmatprep.subr.mxu0 0.0
    %8422 = vmatpush1.msra.mxu0 %v8368
    %8423 = vmatprep.subr.mxu0 0.0
    %8424 = vmatpush2.msra.mxu0 0.0
    %8425 = vmatprep.subr.mxu0 0.0
    %8426 = vmatpush2.msra.mxu0 0.0
    %8427 = vmatprep.subr.mxu0 0.0
    %8428 = vmatpush2.msra.mxu0 0.0
    %8429 = vmatprep.subr.mxu0 0.0
    %8430 = vmatpush2.msra.mxu0 0.0
    %8431 = vmatprep.subr.mxu0 0.0
    %8432 = vmatpush2.msra.mxu0 0.0
    %8433 = vmatprep.subr.mxu0 0.0
    %8434 = vmatpush2.msra.mxu0 0.0
    %8435 = vmatprep.subr.mxu0 0.0
    %8436 = vmatpush2.msra.mxu0 0.0
    %8437 = vmatprep.subr.mxu0 0.0
    %8438 = vmatpush2.msra.mxu0 0.0
    %8439 = vmatprep.subr.mxu0 0.0
    %8440 = vmatpush2.msra.mxu0 0.0
    %8441 = vmatprep.subr.mxu0 0.0
    %8442 = vmatpush2.msra.mxu0 0.0
    %8443 = vmatprep.subr.mxu0 0.0
    %8444 = vmatpush2.msra.mxu0 0.0
    %8445 = vmatprep.subr.mxu0 0.0
    %8446 = vmatpush2.msra.mxu0 0.0
    %8447 = vmatprep.subr.mxu0 0.0
    %8448 = vmatpush2.msra.mxu0 0.0
    %8449 = vmatprep.subr.mxu0 0.0
    %8450 = vmatpush2.msra.mxu0 0.0
    %8451 = vmatprep.subr.mxu0 0.0
    %8452 = vmatpush2.msra.mxu0 0.0
    %8453 = vmatprep.subr.mxu0 0.0
    %8454 = vmatpush2.msra.mxu0 0.0
    %8455 = vmatprep.mubr.f32.mxu0 0.0
    %8456 = vmatmul.mubr.f32.gmra.mxu0 %v8367
    %v8457 = vpop.f32.mrf.mxu0
    %v8458 = vadd.f32 %v8389, %v8457
    %v8459 = vpop.f32.mrf.mxu0
    %8460 = vdwg.mxu0
    %v8461 = vtanh.pop %v8458
    %vm8462 = vcmask 1024
    %8463 = vst.msk [vmem:[%s25] sm:$0x3] %vm8462, %v8461
    %v8464 = vld [vmem:[%s8] sm:$0xff]
    %v8465 = vld [vmem:[%s8 + $0x8] sm:$0xff]
    %v8466 = vld [vmem:[%s8 + $0x10] sm:$0xff]
    %v8467 = vld [vmem:[%s8 + $0x18] sm:$0xff]
    %v8468 = vld [vmem:[%s8 + $0x20] sm:$0xff]
    %v8469 = vld [vmem:[%s8 + $0x28] sm:$0xff]
    %v8470 = vld [vmem:[%s8 + $0x30] sm:$0xff]
    %v8471 = vld [vmem:[%s8 + $0x38] sm:$0xff]
    %v8472 = vld [vmem:[%s8 + $0x40] sm:$0xff]
    %v8473 = vld [vmem:[%s8 + $0x48] sm:$0xff]
    %v8474 = vld [vmem:[%s8 + $0x50] sm:$0xff]
    %v8475 = vld [vmem:[%s8 + $0x58] sm:$0xff]
    %v8476 = vld [vmem:[%s8 + $0x60] sm:$0xff]
    %v8477 = vld [vmem:[%s8 + $0x68] sm:$0xff]
    %v8478 = vld [vmem:[%s8 + $0x70] sm:$0xff]
    %v8479 = vld [vmem:[%s8 + $0x78] sm:$0xff]
    %v8480 = vld [vmem:[%s8 + $0x80] sm:$0xff]
    %v8481 = vld [vmem:[%s8 + $0x88] sm:$0xff]
    %v8482 = vld [vmem:[%s8 + $0x90] sm:$0xff]
    %v8483 = vld [vmem:[%s8 + $0x98] sm:$0xff]
    %v8484 = vld [vmem:[%s8 + $0xa0] sm:$0xff]
    %v8485 = vld [vmem:[%s8 + $0xa8] sm:$0xff]
    %v8486 = vld [vmem:[%s8 + $0xb0] sm:$0xff]
    %v8487 = vld [vmem:[%s8 + $0xb8] sm:$0xff]
    %v8488 = vld [vmem:[%s8 + $0xc0] sm:$0xff]
    %v8489 = vld [vmem:[%s8 + $0xc8] sm:$0xff]
    %v8490 = vld [vmem:[%s8 + $0xd0] sm:$0xff]
    %v8491 = vld [vmem:[%s8 + $0xd8] sm:$0xff]
    %v8492 = vld [vmem:[%s8 + $0xe0] sm:$0xff]
    %v8493 = vld [vmem:[%s8 + $0xe8] sm:$0xff]
    %v8494 = vld [vmem:[%s8 + $0xf0] sm:$0xff]
    %v8495 = vld [vmem:[%s8 + $0xf8] sm:$0xff]
    %8496 = vmatprep.subr.mxu0 0.0
    %8497 = vmatpush1.msra.mxu0 %v8479
    %8498 = vmatprep.subr.mxu0 0.0
    %8499 = vmatpush1.msra.mxu0 %v8478
    %8500 = vmatprep.subr.mxu0 0.0
    %8501 = vmatpush1.msra.mxu0 %v8477
    %8502 = vmatprep.subr.mxu0 0.0
    %8503 = vmatpush1.msra.mxu0 %v8476
    %8504 = vmatprep.subr.mxu0 0.0
    %8505 = vmatpush1.msra.mxu0 %v8475
    %8506 = vmatprep.subr.mxu0 0.0
    %8507 = vmatpush1.msra.mxu0 %v8474
    %8508 = vmatprep.subr.mxu0 0.0
    %8509 = vmatpush1.msra.mxu0 %v8473
    %8510 = vmatprep.subr.mxu0 0.0
    %8511 = vmatpush1.msra.mxu0 %v8472
    %8512 = vmatprep.subr.mxu0 0.0
    %8513 = vmatpush1.msra.mxu0 %v8471
    %8514 = vmatprep.subr.mxu0 0.0
    %8515 = vmatpush1.msra.mxu0 %v8470
    %8516 = vmatprep.subr.mxu0 0.0
    %8517 = vmatpush1.msra.mxu0 %v8469
    %8518 = vmatprep.subr.mxu0 0.0
    %8519 = vmatpush1.msra.mxu0 %v8468
    %8520 = vmatprep.subr.mxu0 0.0
    %8521 = vmatpush1.msra.mxu0 %v8467
    %8522 = vmatprep.subr.mxu0 0.0
    %8523 = vmatpush1.msra.mxu0 %v8466
    %8524 = vmatprep.subr.mxu0 0.0
    %8525 = vmatpush1.msra.mxu0 %v8465
    %8526 = vmatprep.subr.mxu0 0.0
    %8527 = vmatpush1.msra.mxu0 %v8464
    %8528 = vmatprep.subr.mxu0 0.0
    %8529 = vmatpush2.msra.mxu0 %v8495
    %8530 = vmatprep.subr.mxu0 0.0
    %8531 = vmatpush2.msra.mxu0 %v8494
    %8532 = vmatprep.subr.mxu0 0.0
    %8533 = vmatpush2.msra.mxu0 %v8493
    %8534 = vmatprep.subr.mxu0 0.0
    %8535 = vmatpush2.msra.mxu0 %v8492
    %8536 = vmatprep.subr.mxu0 0.0
    %8537 = vmatpush2.msra.mxu0 %v8491
    %8538 = vmatprep.subr.mxu0 0.0
    %8539 = vmatpush2.msra.mxu0 %v8490
    %8540 = vmatprep.subr.mxu0 0.0
    %8541 = vmatpush2.msra.mxu0 %v8489
    %8542 = vmatprep.subr.mxu0 0.0
    %8543 = vmatpush2.msra.mxu0 %v8488
    %8544 = vmatprep.subr.mxu0 0.0
    %8545 = vmatpush2.msra.mxu0 %v8487
    %8546 = vmatprep.subr.mxu0 0.0
    %8547 = vmatpush2.msra.mxu0 %v8486
    %8548 = vmatprep.subr.mxu0 0.0
    %8549 = vmatpush2.msra.mxu0 %v8485
    %8550 = vmatprep.subr.mxu0 0.0
    %8551 = vmatpush2.msra.mxu0 %v8484
    %8552 = vmatprep.subr.mxu0 0.0
    %8553 = vmatpush2.msra.mxu0 %v8483
    %8554 = vmatprep.subr.mxu0 0.0
    %8555 = vmatpush2.msra.mxu0 %v8482
    %8556 = vmatprep.subr.mxu0 0.0
    %8557 = vmatpush2.msra.mxu0 %v8481
    %8558 = vmatprep.subr.mxu0 0.0
    %8559 = vmatpush2.msra.mxu0 %v8480
    %8560 = vmatprep.mubr.f32.mxu0 %v7799
    %8561 = vmatmul.mubr.f32.gmra.mxu0 %v7798
    %v8562 = vpop.f32.mrf.mxu0
    %v8563 = vadd.f32 0.0, %v8562
    %v8564 = vpop.f32.mrf.mxu0
    %8565 = vmatprep.mubr.f32.mxu0 %v7801
    %8566 = vmatmul.mubr.f32.gmra.mxu0 %v7800
    %v8567 = vpop.f32.mrf.mxu0
    %v8568 = vadd.f32 0.0, %v8567
    %v8569 = vpop.f32.mrf.mxu0
    %8570 = vdwg.mxu0
    %v8571 = vsel %vm8293, %v8563, 0.0
    %v8572 = vsel %vm8293, %v8568, 0.0
    %v8573 = vadd.f32 %v8571, %v8572
    %v8574 = vrot.slane %v8573, 4
    %v8575 = vadd.f32 %v8573, %v8574
    %v8576 = vrot.slane %v8575, 2
    %v8577 = vadd.f32 %v8575, %v8576
    %v8578 = vrot.slane %v8577, 1
    %v8579 = vadd.f32 %v8577, %v8578
    %v8580 = vmul.f32 %v8563, %v8563
    %v8581 = vmul.f32 %v8568, %v8568
    %v8582 = vsel %vm8293, %v8580, 0.0
    %v8583 = vsel %vm8293, %v8581, 0.0
    %v8584 = vadd.f32 %v8582, %v8583
    %v8585 = vrot.slane %v8584, 4
    %v8586 = vadd.f32 %v8584, %v8585
    %v8587 = vrot.slane %v8586, 2
    %v8588 = vadd.f32 %v8586, %v8587
    %v8589 = vrot.slane %v8588, 1
    %v8590 = vadd.f32 %v8588, %v8589
    %v8591 = vld [vmem:[#allocation17] sm:$0xff]
    %v8592 = vld [vmem:[#allocation17 + $0x8] sm:$0xff]
    %v8594 = vsel %vm8293, %v8579, 0
    %8596 = vmatprep.subr.mxu0 0.0
    %8597 = vmatpush1.msra.mxu0 0.0
    %8598 = vmatprep.subr.mxu0 0.0
    %8599 = vmatpush1.msra.mxu0 0.0
    %8600 = vmatprep.subr.mxu0 0.0
    %8601 = vmatpush1.msra.mxu0 0.0
    %8602 = vmatprep.subr.mxu0 0.0
    %8603 = vmatpush1.msra.mxu0 0.0
    %8604 = vmatprep.subr.mxu0 0.0
    %8605 = vmatpush1.msra.mxu0 0.0
    %8606 = vmatprep.subr.mxu0 0.0
    %8607 = vmatpush1.msra.mxu0 0.0
    %8608 = vmatprep.subr.mxu0 0.0
    %8609 = vmatpush1.msra.mxu0 0.0
    %8610 = vmatprep.subr.mxu0 0.0
    %8611 = vmatpush1.msra.mxu0 0.0
    %8612 = vmatprep.subr.mxu0 0.0
    %8613 = vmatpush1.msra.mxu0 0.0
    %8614 = vmatprep.subr.mxu0 0.0
    %8615 = vmatpush1.msra.mxu0 0.0
    %8616 = vmatprep.subr.mxu0 0.0
    %8617 = vmatpush1.msra.mxu0 0.0
    %8618 = vmatprep.subr.mxu0 0.0
    %8619 = vmatpush1.msra.mxu0 0.0
    %8620 = vmatprep.subr.mxu0 0.0
    %8621 = vmatpush1.msra.mxu0 0.0
    %8622 = vmatprep.subr.mxu0 0.0
    %8623 = vmatpush1.msra.mxu0 0.0
    %8624 = vmatprep.subr.mxu0 0.0
    %8625 = vmatpush1.msra.mxu0 %v8592
    %8626 = vmatprep.subr.mxu0 0.0
    %8627 = vmatpush1.msra.mxu0 %v8591
    %8628 = vmatprep.subr.mxu0 0.0
    %8629 = vmatpush2.msra.mxu0 0.0
    %8630 = vmatprep.subr.mxu0 0.0
    %8631 = vmatpush2.msra.mxu0 0.0
    %8632 = vmatprep.subr.mxu0 0.0
    %8633 = vmatpush2.msra.mxu0 0.0
    %8634 = vmatprep.subr.mxu0 0.0
    %8635 = vmatpush2.msra.mxu0 0.0
    %8636 = vmatprep.subr.mxu0 0.0
    %8637 = vmatpush2.msra.mxu0 0.0
    %8638 = vmatprep.subr.mxu0 0.0
    %8639 = vmatpush2.msra.mxu0 0.0
    %8640 = vmatprep.subr.mxu0 0.0
    %8641 = vmatpush2.msra.mxu0 0.0
    %8642 = vmatprep.subr.mxu0 0.0
    %8643 = vmatpush2.msra.mxu0 0.0
    %8644 = vmatprep.subr.mxu0 0.0
    %8645 = vmatpush2.msra.mxu0 0.0
    %8646 = vmatprep.subr.mxu0 0.0
    %8647 = vmatpush2.msra.mxu0 0.0
    %8648 = vmatprep.subr.mxu0 0.0
    %8649 = vmatpush2.msra.mxu0 0.0
    %8650 = vmatprep.subr.mxu0 0.0
    %8651 = vmatpush2.msra.mxu0 0.0
    %8652 = vmatprep.subr.mxu0 0.0
    %8653 = vmatpush2.msra.mxu0 0.0
    %8654 = vmatprep.subr.mxu0 0.0
    %8655 = vmatpush2.msra.mxu0 0.0
    %8656 = vmatprep.subr.mxu0 0.0
    %8657 = vmatpush2.msra.mxu0 0.0
    %8658 = vmatprep.subr.mxu0 0.0
    %8659 = vmatpush2.msra.mxu0 0.0
    %8660 = vmatprep.mubr.f32.mxu0 0.0
    %8661 = vmatmul.mubr.f32.gmra.mxu0 %v8594
    %v8662 = vpop.f32.mrf.mxu0
    %v8663 = vadd.f32 0.0, %v8662
    %v8664 = vpop.f32.mrf.mxu0
    %8665 = vdwg.mxu0
    %v8667 = vsel %vm8293, %v8590, 0
    %8669 = vmatprep.subr.mxu0 0.0
    %8670 = vmatpush1.msra.mxu0 0.0
    %8671 = vmatprep.subr.mxu0 0.0
    %8672 = vmatpush1.msra.mxu0 0.0
    %8673 = vmatprep.subr.mxu0 0.0
    %8674 = vmatpush1.msra.mxu0 0.0
    %8675 = vmatprep.subr.mxu0 0.0
    %8676 = vmatpush1.msra.mxu0 0.0
    %8677 = vmatprep.subr.mxu0 0.0
    %8678 = vmatpush1.msra.mxu0 0.0
    %8679 = vmatprep.subr.mxu0 0.0
    %8680 = vmatpush1.msra.mxu0 0.0
    %8681 = vmatprep.subr.mxu0 0.0
    %8682 = vmatpush1.msra.mxu0 0.0
    %8683 = vmatprep.subr.mxu0 0.0
    %8684 = vmatpush1.msra.mxu0 0.0
    %8685 = vmatprep.subr.mxu0 0.0
    %8686 = vmatpush1.msra.mxu0 0.0
    %8687 = vmatprep.subr.mxu0 0.0
    %8688 = vmatpush1.msra.mxu0 0.0
    %8689 = vmatprep.subr.mxu0 0.0
    %8690 = vmatpush1.msra.mxu0 0.0
    %8691 = vmatprep.subr.mxu0 0.0
    %8692 = vmatpush1.msra.mxu0 0.0
    %8693 = vmatprep.subr.mxu0 0.0
    %8694 = vmatpush1.msra.mxu0 0.0
    %8695 = vmatprep.subr.mxu0 0.0
    %8696 = vmatpush1.msra.mxu0 0.0
    %8697 = vmatprep.subr.mxu0 0.0
    %8698 = vmatpush1.msra.mxu0 %v8592
    %8699 = vmatprep.subr.mxu0 0.0
    %8700 = vmatpush1.msra.mxu0 %v8591
    %8701 = vmatprep.subr.mxu0 0.0
    %8702 = vmatpush2.msra.mxu0 0.0
    %8703 = vmatprep.subr.mxu0 0.0
    %8704 = vmatpush2.msra.mxu0 0.0
    %8705 = vmatprep.subr.mxu0 0.0
    %8706 = vmatpush2.msra.mxu0 0.0
    %8707 = vmatprep.subr.mxu0 0.0
    %8708 = vmatpush2.msra.mxu0 0.0
    %8709 = vmatprep.subr.mxu0 0.0
    %8710 = vmatpush2.msra.mxu0 0.0
    %8711 = vmatprep.subr.mxu0 0.0
    %8712 = vmatpush2.msra.mxu0 0.0
    %8713 = vmatprep.subr.mxu0 0.0
    %8714 = vmatpush2.msra.mxu0 0.0
    %8715 = vmatprep.subr.mxu0 0.0
    %8716 = vmatpush2.msra.mxu0 0.0
    %8717 = vmatprep.subr.mxu0 0.0
    %8718 = vmatpush2.msra.mxu0 0.0
    %8719 = vmatprep.subr.mxu0 0.0
    %8720 = vmatpush2.msra.mxu0 0.0
    %8721 = vmatprep.subr.mxu0 0.0
    %8722 = vmatpush2.msra.mxu0 0.0
    %8723 = vmatprep.subr.mxu0 0.0
    %8724 = vmatpush2.msra.mxu0 0.0
    %8725 = vmatprep.subr.mxu0 0.0
    %8726 = vmatpush2.msra.mxu0 0.0
    %8727 = vmatprep.subr.mxu0 0.0
    %8728 = vmatpush2.msra.mxu0 0.0
    %8729 = vmatprep.subr.mxu0 0.0
    %8730 = vmatpush2.msra.mxu0 0.0
    %8731 = vmatprep.subr.mxu0 0.0
    %8732 = vmatpush2.msra.mxu0 0.0
    %8733 = vmatprep.mubr.f32.mxu0 0.0
    %8734 = vmatmul.mubr.f32.gmra.mxu0 %v8667
    %v8735 = vpop.f32.mrf.mxu0
    %v8736 = vadd.f32 0.0, %v8735
    %v8737 = vpop.f32.mrf.mxu0
    %8738 = vdwg.mxu0
    %v8739 = vmul.f32 %v8663, %v8663
    %v8740 = vsub.f32 %v8736, %v8739
    %v8741 = vlaneseq
    %v8742 = vshrl.u32 %v8741, 7
    %v8743 = vsub.s32 0, %v8742
    %v8744 = vrot.slane %v8663, %v8743
    %v8745 = vsub.f32 %v8563, %v8744
    %v8746 = vsub.f32 %v8568, %v8744
    %v8747 = vadd.f32 %v8740, 1e-05
    %v8748 = vrsqrt.pop %v8747
    %v8749 = vlaneseq
    %v8750 = vshrl.u32 %v8749, 7
    %v8751 = vsub.s32 0, %v8750
    %v8752 = vrot.slane %v8748, %v8751
    %v8753 = vmul.f32 %v8745, %v8752
    %v8754 = vmul.f32 %v8746, %v8752
    %v8755 = vld [vmem:[#allocation18] sm:$0x1]
    %v8757 = vlaneseq
    %v8758 = vshrl.u32 %v8757, 7
    %v8759 = vsub.s32 0, %v8758
    %v8760 = vrot.slane %v8755, %v8759
    %v8762 = vmul.f32 %v8753, %v8760
    %v8763 = vmul.f32 %v8754, %v8760
    %v8764 = vld [vmem:[#allocation20] sm:$0x1]
    %v8766 = vlaneseq
    %v8767 = vshrl.u32 %v8766, 7
    %v8768 = vsub.s32 0, %v8767
    %v8769 = vrot.slane %v8764, %v8768
    %v8771 = vadd.f32 %v8762, %v8769
    %v8772 = vadd.f32 %v8763, %v8769
    %vm8773 = vcmp.ge.f32.partialorder %v8771, 0.0
    %vm8774 = vcmp.ge.f32.partialorder %v8772, 0.0
    %s8775 = sld [smem:[#allocation34 + $0x3]]
    %v8776 = vstv %s8775
    %v8777 = vmul.f32 %v8776, %v8771
    %v8778 = vmul.f32 %v8776, %v8772
    %v8779 = vsel %vm8773, %v8771, %v8777
    %v8780 = vsel %vm8774, %v8772, %v8778
    %v8781 = vld [vmem:[#allocation24] sm:$0xff]
    %v8782 = vld [vmem:[#allocation24 + $0x8] sm:$0xff]
    %v8784 = vsel %vm8293, %v8779, 0
    %v8787 = vsel %vm8293, %v8780, 0
    %8789 = vmatprep.subr.mxu0 0.0
    %8790 = vmatpush1.msra.mxu0 0.0
    %8791 = vmatprep.subr.mxu0 0.0
    %8792 = vmatpush1.msra.mxu0 0.0
    %8793 = vmatprep.subr.mxu0 0.0
    %8794 = vmatpush1.msra.mxu0 0.0
    %8795 = vmatprep.subr.mxu0 0.0
    %8796 = vmatpush1.msra.mxu0 0.0
    %8797 = vmatprep.subr.mxu0 0.0
    %8798 = vmatpush1.msra.mxu0 0.0
    %8799 = vmatprep.subr.mxu0 0.0
    %8800 = vmatpush1.msra.mxu0 0.0
    %8801 = vmatprep.subr.mxu0 0.0
    %8802 = vmatpush1.msra.mxu0 0.0
    %8803 = vmatprep.subr.mxu0 0.0
    %8804 = vmatpush1.msra.mxu0 0.0
    %8805 = vmatprep.subr.mxu0 0.0
    %8806 = vmatpush1.msra.mxu0 0.0
    %8807 = vmatprep.subr.mxu0 0.0
    %8808 = vmatpush1.msra.mxu0 0.0
    %8809 = vmatprep.subr.mxu0 0.0
    %8810 = vmatpush1.msra.mxu0 0.0
    %8811 = vmatprep.subr.mxu0 0.0
    %8812 = vmatpush1.msra.mxu0 0.0
    %8813 = vmatprep.subr.mxu0 0.0
    %8814 = vmatpush1.msra.mxu0 0.0
    %8815 = vmatprep.subr.mxu0 0.0
    %8816 = vmatpush1.msra.mxu0 0.0
    %8817 = vmatprep.subr.mxu0 0.0
    %8818 = vmatpush1.msra.mxu0 %v8782
    %8819 = vmatprep.subr.mxu0 0.0
    %8820 = vmatpush1.msra.mxu0 %v8781
    %8821 = vmatprep.subr.mxu0 0.0
    %8822 = vmatpush2.msra.mxu0 0.0
    %8823 = vmatprep.subr.mxu0 0.0
    %8824 = vmatpush2.msra.mxu0 0.0
    %8825 = vmatprep.subr.mxu0 0.0
    %8826 = vmatpush2.msra.mxu0 0.0
    %8827 = vmatprep.subr.mxu0 0.0
    %8828 = vmatpush2.msra.mxu0 0.0
    %8829 = vmatprep.subr.mxu0 0.0
    %8830 = vmatpush2.msra.mxu0 0.0
    %8831 = vmatprep.subr.mxu0 0.0
    %8832 = vmatpush2.msra.mxu0 0.0
    %8833 = vmatprep.subr.mxu0 0.0
    %8834 = vmatpush2.msra.mxu0 0.0
    %8835 = vmatprep.subr.mxu0 0.0
    %8836 = vmatpush2.msra.mxu0 0.0
    %8837 = vmatprep.subr.mxu0 0.0
    %8838 = vmatpush2.msra.mxu0 0.0
    %8839 = vmatprep.subr.mxu0 0.0
    %8840 = vmatpush2.msra.mxu0 0.0
    %8841 = vmatprep.subr.mxu0 0.0
    %8842 = vmatpush2.msra.mxu0 0.0
    %8843 = vmatprep.subr.mxu0 0.0
    %8844 = vmatpush2.msra.mxu0 0.0
    %8845 = vmatprep.subr.mxu0 0.0
    %8846 = vmatpush2.msra.mxu0 0.0
    %8847 = vmatprep.subr.mxu0 0.0
    %8848 = vmatpush2.msra.mxu0 0.0
    %8849 = vmatprep.subr.mxu0 0.0
    %8850 = vmatpush2.msra.mxu0 0.0
    %8851 = vmatprep.subr.mxu0 0.0
    %8852 = vmatpush2.msra.mxu0 0.0
    %8853 = vmatprep.mubr.f32.mxu0 0.0
    %8854 = vmatmul.mubr.f32.gmra.mxu0 %v8784
    %v8855 = vpop.f32.mrf.mxu0
    %v8856 = vadd.f32 0.0, %v8855
    %v8857 = vpop.f32.mrf.mxu0
    %8858 = vmatprep.mubr.f32.mxu0 0.0
    %8859 = vmatmul.mubr.f32.gmra.mxu0 %v8787
    %v8860 = vpop.f32.mrf.mxu0
    %v8861 = vadd.f32 0.0, %v8860
    %v8862 = vpop.f32.mrf.mxu0
    %8863 = vdwg.mxu0
    %v8864 = vld [vmem:[#allocation26] sm:$0xff]
    %v8865 = vld [vmem:[#allocation26 + $0x8] sm:$0xff]
    %v8866 = vmul.f32 %v8856, %v8864
    %v8867 = vmul.f32 %v8861, %v8865
    %v8868 = vld [vmem:[#allocation27] sm:$0x3]
    %v8869 = vld [vmem:[%s21] sm:$0xff]
    %v8870 = vld [vmem:[%s21 + $0x8] sm:$0xff]
    %v8871 = vld [vmem:[%s21 + $0x10] sm:$0xff]
    %v8872 = vld [vmem:[%s21 + $0x18] sm:$0xff]
    %v8873 = vld [vmem:[%s21 + $0x20] sm:$0xff]
    %v8874 = vld [vmem:[%s21 + $0x28] sm:$0xff]
    %v8875 = vld [vmem:[%s21 + $0x30] sm:$0xff]
    %v8876 = vld [vmem:[%s21 + $0x38] sm:$0xff]
    %v8877 = vld [vmem:[%s21 + $0x40] sm:$0xff]
    %v8878 = vld [vmem:[%s21 + $0x48] sm:$0xff]
    %v8879 = vld [vmem:[%s21 + $0x50] sm:$0xff]
    %v8880 = vld [vmem:[%s21 + $0x58] sm:$0xff]
    %v8881 = vld [vmem:[%s21 + $0x60] sm:$0xff]
    %v8882 = vld [vmem:[%s21 + $0x68] sm:$0xff]
    %v8883 = vld [vmem:[%s21 + $0x70] sm:$0xff]
    %v8884 = vld [vmem:[%s21 + $0x78] sm:$0xff]
    %8885 = vmatprep.subr.mxu0 0.0
    %8886 = vmatpush1.msra.mxu0 %v8884
    %8887 = vmatprep.subr.mxu0 0.0
    %8888 = vmatpush1.msra.mxu0 %v8883
    %8889 = vmatprep.subr.mxu0 0.0
    %8890 = vmatpush1.msra.mxu0 %v8882
    %8891 = vmatprep.subr.mxu0 0.0
    %8892 = vmatpush1.msra.mxu0 %v8881
    %8893 = vmatprep.subr.mxu0 0.0
    %8894 = vmatpush1.msra.mxu0 %v8880
    %8895 = vmatprep.subr.mxu0 0.0
    %8896 = vmatpush1.msra.mxu0 %v8879
    %8897 = vmatprep.subr.mxu0 0.0
    %8898 = vmatpush1.msra.mxu0 %v8878
    %8899 = vmatprep.subr.mxu0 0.0
    %8900 = vmatpush1.msra.mxu0 %v8877
    %8901 = vmatprep.subr.mxu0 0.0
    %8902 = vmatpush1.msra.mxu0 %v8876
    %8903 = vmatprep.subr.mxu0 0.0
    %8904 = vmatpush1.msra.mxu0 %v8875
    %8905 = vmatprep.subr.mxu0 0.0
    %8906 = vmatpush1.msra.mxu0 %v8874
    %8907 = vmatprep.subr.mxu0 0.0
    %8908 = vmatpush1.msra.mxu0 %v8873
    %8909 = vmatprep.subr.mxu0 0.0
    %8910 = vmatpush1.msra.mxu0 %v8872
    %8911 = vmatprep.subr.mxu0 0.0
    %8912 = vmatpush1.msra.mxu0 %v8871
    %8913 = vmatprep.subr.mxu0 0.0
    %8914 = vmatpush1.msra.mxu0 %v8870
    %8915 = vmatprep.subr.mxu0 0.0
    %8916 = vmatpush1.msra.mxu0 %v8869
    %8917 = vmatprep.subr.mxu0 0.0
    %8918 = vmatpush2.msra.mxu0 0.0
    %8919 = vmatprep.subr.mxu0 0.0
    %8920 = vmatpush2.msra.mxu0 0.0
    %8921 = vmatprep.subr.mxu0 0.0
    %8922 = vmatpush2.msra.mxu0 0.0
    %8923 = vmatprep.subr.mxu0 0.0
    %8924 = vmatpush2.msra.mxu0 0.0
    %8925 = vmatprep.subr.mxu0 0.0
    %8926 = vmatpush2.msra.mxu0 0.0
    %8927 = vmatprep.subr.mxu0 0.0
    %8928 = vmatpush2.msra.mxu0 0.0
    %8929 = vmatprep.subr.mxu0 0.0
    %8930 = vmatpush2.msra.mxu0 0.0
    %8931 = vmatprep.subr.mxu0 0.0
    %8932 = vmatpush2.msra.mxu0 0.0
    %8933 = vmatprep.subr.mxu0 0.0
    %8934 = vmatpush2.msra.mxu0 0.0
    %8935 = vmatprep.subr.mxu0 0.0
    %8936 = vmatpush2.msra.mxu0 0.0
    %8937 = vmatprep.subr.mxu0 0.0
    %8938 = vmatpush2.msra.mxu0 0.0
    %8939 = vmatprep.subr.mxu0 0.0
    %8940 = vmatpush2.msra.mxu0 0.0
    %8941 = vmatprep.subr.mxu0 0.0
    %8942 = vmatpush2.msra.mxu0 0.0
    %8943 = vmatprep.subr.mxu0 0.0
    %8944 = vmatpush2.msra.mxu0 0.0
    %8945 = vmatprep.subr.mxu0 0.0
    %8946 = vmatpush2.msra.mxu0 0.0
    %8947 = vmatprep.subr.mxu0 0.0
    %8948 = vmatpush2.msra.mxu0 0.0
    %8949 = vmatprep.mubr.f32.mxu0 0.0
    %8950 = vmatmul.mubr.f32.gmra.mxu0 %v8866
    %v8951 = vpop.f32.mrf.mxu0
    %v8952 = vadd.f32 0.0, %v8951
    %v8953 = vpop.f32.mrf.mxu0
    %8954 = vmatprep.mubr.f32.mxu0 0.0
    %8955 = vmatmul.mubr.f32.gmra.mxu0 %v8867
    %v8956 = vpop.f32.mrf.mxu0
    %v8957 = vadd.f32 0.0, %v8956
    %v8958 = vpop.f32.mrf.mxu0
    %8959 = vdwg.mxu0
    %v8960 = vld [vmem:[#allocation32] sm:$0x1]
    %v8962 = vlaneseq
    %v8963 = vshrl.u32 %v8962, 7
    %v8964 = vsub.s32 0, %v8963
    %v8965 = vrot.slane %v8960, %v8964
    %v8968 = vsel %vm8293, %v8868, 0
    %8970 = vmatprep.subr.mxu0 0.0
    %8971 = vmatpush1.msra.mxu0 0.0
    %8972 = vmatprep.subr.mxu0 0.0
    %8973 = vmatpush1.msra.mxu0 0.0
    %8974 = vmatprep.subr.mxu0 0.0
    %8975 = vmatpush1.msra.mxu0 0.0
    %8976 = vmatprep.subr.mxu0 0.0
    %8977 = vmatpush1.msra.mxu0 0.0
    %8978 = vmatprep.subr.mxu0 0.0
    %8979 = vmatpush1.msra.mxu0 0.0
    %8980 = vmatprep.subr.mxu0 0.0
    %8981 = vmatpush1.msra.mxu0 0.0
    %8982 = vmatprep.subr.mxu0 0.0
    %8983 = vmatpush1.msra.mxu0 0.0
    %8984 = vmatprep.subr.mxu0 0.0
    %8985 = vmatpush1.msra.mxu0 0.0
    %8986 = vmatprep.subr.mxu0 0.0
    %8987 = vmatpush1.msra.mxu0 0.0
    %8988 = vmatprep.subr.mxu0 0.0
    %8989 = vmatpush1.msra.mxu0 0.0
    %8990 = vmatprep.subr.mxu0 0.0
    %8991 = vmatpush1.msra.mxu0 0.0
    %8992 = vmatprep.subr.mxu0 0.0
    %8993 = vmatpush1.msra.mxu0 0.0
    %8994 = vmatprep.subr.mxu0 0.0
    %8995 = vmatpush1.msra.mxu0 0.0
    %8996 = vmatprep.subr.mxu0 0.0
    %8997 = vmatpush1.msra.mxu0 0.0
    %8998 = vmatprep.subr.mxu0 0.0
    %8999 = vmatpush1.msra.mxu0 %v8957
    %9000 = vmatprep.subr.mxu0 0.0
    %9001 = vmatpush1.msra.mxu0 %v8952
    %9002 = vmatprep.subr.mxu0 0.0
    %9003 = vmatpush2.msra.mxu0 0.0
    %9004 = vmatprep.subr.mxu0 0.0
    %9005 = vmatpush2.msra.mxu0 0.0
    %9006 = vmatprep.subr.mxu0 0.0
    %9007 = vmatpush2.msra.mxu0 0.0
    %9008 = vmatprep.subr.mxu0 0.0
    %9009 = vmatpush2.msra.mxu0 0.0
    %9010 = vmatprep.subr.mxu0 0.0
    %9011 = vmatpush2.msra.mxu0 0.0
    %9012 = vmatprep.subr.mxu0 0.0
    %9013 = vmatpush2.msra.mxu0 0.0
    %9014 = vmatprep.subr.mxu0 0.0
    %9015 = vmatpush2.msra.mxu0 0.0
    %9016 = vmatprep.subr.mxu0 0.0
    %9017 = vmatpush2.msra.mxu0 0.0
    %9018 = vmatprep.subr.mxu0 0.0
    %9019 = vmatpush2.msra.mxu0 0.0
    %9020 = vmatprep.subr.mxu0 0.0
    %9021 = vmatpush2.msra.mxu0 0.0
    %9022 = vmatprep.subr.mxu0 0.0
    %9023 = vmatpush2.msra.mxu0 0.0
    %9024 = vmatprep.subr.mxu0 0.0
    %9025 = vmatpush2.msra.mxu0 0.0
    %9026 = vmatprep.subr.mxu0 0.0
    %9027 = vmatpush2.msra.mxu0 0.0
    %9028 = vmatprep.subr.mxu0 0.0
    %9029 = vmatpush2.msra.mxu0 0.0
    %9030 = vmatprep.subr.mxu0 0.0
    %9031 = vmatpush2.msra.mxu0 0.0
    %9032 = vmatprep.subr.mxu0 0.0
    %9033 = vmatpush2.msra.mxu0 0.0
    %9034 = vmatprep.mubr.f32.mxu0 0.0
    %9035 = vmatmul.mubr.f32.gmra.mxu0 %v8968
    %v9036 = vpop.f32.mrf.mxu0
    %v9037 = vadd.f32 %v8965, %v9036
    %v9038 = vpop.f32.mrf.mxu0
    %9039 = vdwg.mxu0
    %vm9040 = vcmask 525312
    %9041 = vst.msk [vmem:[#allocation36] sm:$0x3] %vm9040, %v9037
    // Predicated region
    $region178: #{alphazero_forward.1} parent=1 // pred_check
      _
    $region179: #{alphazero_forward.1} parent=1 // pred_check_branch
      %9043 = sbr.rel (0) target = $region181
    $region180: #{alphazero_forward.1} parent=1 // pred_region
      _
    $region181: #{alphazero_forward.1} parent=1 // pred_fallthru
      _
    // Predicated region
    $region182: #{alphazero_forward.1} parent=1 // pred_check
      _
    $region183: #{alphazero_forward.1} parent=1 // pred_check_branch
      %9045 = sbr.rel (0) target = $region185
    $region184: #{alphazero_forward.1} parent=1 // pred_region
      %s9047 = ssub.s32 32, 32
      %9048 = vsyncadd [#allocation7], %s9047
      %s9050 = sshll.u32 [#allocation36], 4
      %s9051 = int_to_ptr.vmem [resolvable:$true] %s9050
      %9053 = dma.vmem_to_hbm [thread:$0]  %s9051, 32, %s26, [#allocation7]
    $region185: #{alphazero_forward.1} parent=1 // pred_fallthru
      _
    // Predicated region
    $region186: #{alphazero_forward.1} parent=1 // pred_check
      _
    $region187: #{alphazero_forward.1} parent=1 // pred_check_branch
      %9055 = sbr.rel (0) target = $region189
    $region188: #{alphazero_forward.1} parent=1 // pred_region
      _
    $region189: #{alphazero_forward.1} parent=1 // pred_fallthru
      _
    // Predicated region
    $region190: #{alphazero_forward.1} parent=1 // pred_check
      _
    $region191: #{alphazero_forward.1} parent=1 // pred_check_branch
      %9057 = sbr.rel (0) target = $region193
    $region192: #{alphazero_forward.1} parent=1 // pred_region
      %9058 = dma.done [#allocation7], 32
    $region193: #{alphazero_forward.1} parent=1 // pred_fallthru
      _
    %9059 = vsyncpa [#allocation6], 1
    %9060 = vsyncpa [#allocation10], 1
    %9061 = vsyncpa [#allocation13], 1
    %9062 = vsyncpa [#allocation16], 1
    %9063 = vsyncpa [#allocation19], 1
    %9064 = vsyncpa [#allocation22], 1
    %9065 = vsyncpa [#allocation25], 1
    %9066 = vsyncpa [#allocation28], 1
    %9067 = vsyncpa [#allocation31], 1
    %9068 = vsyncpa [#allocation7], 1
    %9069 = vsyncpa [#allocation8], 1
    %9070 = vsyncpa [#allocation35], 1

</llo_original>
